<compile_context>
chip_gen: v7x
topology: tpu7x:2x2x1
jax: 0.10.0
libtpu: 0.0.40
codegen_flags: <defaults>
</compile_context>

<pallas_src>
import math
import functools

import jax
import jax.numpy as jnp
from jax import lax
from jax.experimental import pallas as pl
from jax.experimental.pallas import tpu as pltpu


def _round_up(x, m):
    return (x + m - 1) // m * m


def _tpu_budget():
    """Generation-aware (tile preference, scoped-VMEM budget, attention tile)."""
    vmem_cap = 64 * 1024 * 1024                 # conservative default (v7x-sized)
    try:
        info = pltpu.get_tpu_info()
        vmem_cap = int(getattr(info, "vmem_capacity_bytes", vmem_cap))
    except Exception:
        pass
    if vmem_cap >= 128 * 1024 * 1024:           # v5e / v6e: 128 MiB physical VMEM
        return 512, 64 * 1024 * 1024, 256
    return 256, 40 * 1024 * 1024, 128           # v7x: 64 MiB physical VMEM


_TILE_PREF, _VMEM_LIMIT, _ATTN_TILE = _tpu_budget()


def _pick_tile(dim, pref, align):
    """Largest tile <= pref (multiple of `align`) dividing round_up(dim, align)."""
    padded = _round_up(dim, align)
    t = _round_up(min(pref, padded), align)
    while padded % t:
        t -= align
    return t, padded


# ----------------------------- tiled matmul (+ fused GELU) -----------------------------

def _matmul_kernel_direct(x_ref, w_ref, o_ref):
    """f32 output path: accumulate straight into the resident output block."""
    @pl.when(pl.program_id(2) == 0)
    def _():
        o_ref[...] = jnp.zeros(o_ref.shape, o_ref.dtype)
    o_ref[...] += jnp.dot(x_ref[...], w_ref[...], preferred_element_type=jnp.float32)


def _matmul_kernel_acc(x_ref, w_ref, o_ref, acc_ref, *, apply_gelu):
    """bf16-output / fused-GELU path: f32 VMEM accumulator + epilogue."""
    @pl.when(pl.program_id(2) == 0)
    def _():
        acc_ref[...] = jnp.zeros(acc_ref.shape, acc_ref.dtype)

    acc_ref[...] += jnp.dot(x_ref[...], w_ref[...], preferred_element_type=jnp.float32)

    @pl.when(pl.program_id(2) == pl.num_programs(2) - 1)
    def _():
        y = acc_ref[...]                                    # f32
        if apply_gelu:
            c = math.sqrt(2.0 / math.pi)
            y = 0.5 * y * (1.0 + jnp.tanh(c * (y + 0.044715 * y * y * y)))
        o_ref[...] = y.astype(o_ref.dtype)


def linear(x, w, *, gelu=False, out_dtype=jnp.float32):
    """y = x @ w (+ optional fused tanh-GELU). bf16 MXU operands, f32 accumulation."""
    M, K = x.shape
    K2, N = w.shape
    assert K == K2
    tm, Mp = _pick_tile(M, _TILE_PREF, 8)
    tk, Kp = _pick_tile(K, _TILE_PREF, 128)
    tn, Np = _pick_tile(N, _TILE_PREF, 128)

    if x.dtype != jnp.bfloat16:        # never hit in this script: activations arrive bf16
        x = x.astype(jnp.bfloat16)
    if w.dtype != jnp.bfloat16:        # never hit: weights are stored bf16 at init
        w = w.astype(jnp.bfloat16)
    if (Mp, Kp) != (M, K):             # no-op for the shapes used here (tiles divide dims)
        x = jnp.pad(x, ((0, Mp - M), (0, Kp - K)))
    if (Kp, Np) != (K, N):
        w = jnp.pad(w, ((0, Kp - K), (0, Np - N)))

    use_acc = gelu or (out_dtype != jnp.float32)
    if use_acc:
        kernel = functools.partial(_matmul_kernel_acc, apply_gelu=gelu)
        scratch = [pltpu.VMEM((tm, tn), jnp.float32)]
    else:
        kernel = _matmul_kernel_direct
        scratch = []

    out = pl.pallas_call(
        kernel,
        out_shape=jax.ShapeDtypeStruct((Mp, Np), out_dtype),
        grid=(Mp // tm, Np // tn, Kp // tk),
        in_specs=[pl.BlockSpec((tm, tk), lambda i, j, k: (i, k)),
                  pl.BlockSpec((tk, tn), lambda i, j, k: (k, j))],
        out_specs=pl.BlockSpec((tm, tn), lambda i, j, k: (i, j)),
        scratch_shapes=scratch,
        compiler_params=pltpu.CompilerParams(
            dimension_semantics=("parallel", "parallel", "arbitrary"),
            vmem_limit_bytes=_VMEM_LIMIT),
    )(x, w)
    if (Mp, Np) != (M, N):
        out = out[:M, :N]
    return out


# ----------------------------- row-tiled LayerNorm -----------------------------

def _layernorm_kernel(x_ref, w_ref, b_ref, o_ref):
    x = x_ref[...]                                       # (tm, C) f32
    mean = jnp.mean(x, axis=-1, keepdims=True)
    xc = x - mean
    var = jnp.mean(xc * xc, axis=-1, keepdims=True)      # biased variance (F.layer_norm)
    inv = lax.rsqrt(var + 1e-5)
    o_ref[...] = (xc * inv * w_ref[...] + b_ref[...]).astype(o_ref.dtype)


def layernorm(x, w, b, *, out_dtype=jnp.bfloat16, tm=512):
    M, C = x.shape
    tm, Mp = _pick_tile(M, tm, 8)
    xp = jnp.pad(x, ((0, Mp - M), (0, 0))) if Mp != M else x
    out = pl.pallas_call(
        _layernorm_kernel,
        out_shape=jax.ShapeDtypeStruct((Mp, C), out_dtype),
        grid=(Mp // tm,),
        in_specs=[pl.BlockSpec((tm, C), lambda i: (i, 0)),
                  pl.BlockSpec((1, C), lambda i: (0, 0)),
                  pl.BlockSpec((1, C), lambda i: (0, 0))],
        out_specs=pl.BlockSpec((tm, C), lambda i: (i, 0)),
        compiler_params=pltpu.CompilerParams(
            dimension_semantics=("parallel",),
            vmem_limit_bytes=_VMEM_LIMIT),
    )(xp, w.reshape(1, C), b.reshape(1, C))
    return out[:M] if Mp != M else out


# ----------------------------- flash attention (RoPE + causal) -----------------------------

def _attn_kernel(q_ref, k_ref, v_ref, cosq_ref, sinq_ref, cosk_ref, sink_ref,
                 o_ref, qrot_sc, m_sc, l_sc, acc_sc, *, scale, n_heads, head_size):
    qi = pl.program_id(1)
    ki = pl.program_id(2)
    tq = q_ref.shape[1]
    tkv = k_ref.shape[1]
    h2 = head_size // 2

    @pl.when(ki == 0)
    def _():
        m_sc[...] = jnp.full(m_sc.shape, -1e30, m_sc.dtype)
        l_sc[...] = jnp.zeros(l_sc.shape, l_sc.dtype)
        acc_sc[...] = jnp.zeros(acc_sc.shape, acc_sc.dtype)
        # Hoisted, pre-scaled q-side RoPE for all heads (reused for every kv tile).
        q = q_ref[0].astype(jnp.float32)                 # (tq, C)
        cos_q = cosq_ref[...] * scale                    # fold softmax scale into q
        sin_q = sinq_ref[...] * scale
        for h in range(n_heads):
            base = h * head_size
            qe = q[:, base:base + h2]
            qo = q[:, base + h2:base + head_size]
            qrot_sc[:, base:base + h2] = (qe * cos_q - qo * sin_q).astype(qrot_sc.dtype)
            qrot_sc[:, base + h2:base + head_size] = (qo * cos_q + qe * sin_q).astype(qrot_sc.dtype)

    def process_tile(masked):
        k = k_ref[0].astype(jnp.float32)                 # (tkv, C)
        v = v_ref[0]                                     # (tkv, C) bf16 — used directly
        cos_k = cosk_ref[...]                            # (tkv, h2)
        sin_k = sink_ref[...]
        if masked:
            row = qi * tq + lax.broadcasted_iota(jnp.int32, (tq, tkv), 0)
            col = ki * tkv + lax.broadcasted_iota(jnp.int32, (tq, tkv), 1)
            causal = col <= row
        for h in range(n_heads):                         # static unroll over heads
            base = h * head_size
            ke = k[:, base:base + h2]
            ko = k[:, base + h2:base + head_size]
            # RoPE: features pre-de-interleaved to [even | odd] via attn_wt folding.
            kre = (ke * cos_k - ko * sin_k).astype(jnp.bfloat16)     # (tkv, h2)
            kro = (ko * cos_k + ke * sin_k).astype(jnp.bfloat16)
            qre = qrot_sc[:, base:base + h2]                         # (tq, h2) bf16, scaled
            qro = qrot_sc[:, base + h2:base + head_size]
            # Two half-width dots (no lane-misaligned concat); scale already in q.
            s = lax.dot_general(qre, kre, (((1,), (1,)), ((), ())),
                                preferred_element_type=jnp.float32)
            s = s + lax.dot_general(qro, kro, (((1,), (1,)), ((), ())),
                                    preferred_element_type=jnp.float32)
            if masked:
                s = jnp.where(causal, s, -1e30)

            m_prev = m_sc[h]                                         # (tq, 1)
            m_new = jnp.maximum(m_prev, jnp.max(s, axis=-1, keepdims=True))
            alpha = jnp.exp(m_prev - m_new)
            p = jnp.exp(s - m_new)
            l_sc[h] = alpha * l_sc[h] + jnp.sum(p, axis=-1, keepdims=True)
            acc_sc[h] = alpha * acc_sc[h] + jnp.dot(
                p.astype(jnp.bfloat16), v[:, base:base + head_size],
                preferred_element_type=jnp.float32)
            m_sc[h] = m_new

    @pl.when(ki < qi)            # strictly-past tile: no mask / select needed
    def _():
        process_tile(masked=False)

    @pl.when(ki == qi)           # diagonal tile: causal mask, then finalize + store
    def _():
        process_tile(masked=True)
        inv_l = pl.reciprocal(l_sc[...], approx=True)                # (H, tq, 1)
        parts = [acc_sc[h] * inv_l[h] for h in range(n_heads)]
        o_ref[0] = jnp.concatenate(parts, axis=-1).astype(o_ref.dtype)
    # ki > qi: fully-future tile — compute skipped; its KV DMA is elided by the
    # clamped index_map (block index repeats min(ki, qi) == qi).


def attention(qkv, cos, sin, n_heads, head_size, tile=None):
    """qkv: (B, T, 3C) bf16, q/k per-head features pre-de-interleaved [even|odd]."""
    B, T, C3 = qkv.shape
    C = C3 // 3
    h2 = head_size // 2
    t = _ATTN_TILE if tile is None else tile
    t = _round_up(min(t, _round_up(T, 8)), 8)
    Tp = _round_up(T, t)

    if Tp != T:
        qkv = jnp.pad(qkv, ((0, 0), (0, Tp - T), (0, 0)))
        cos = jnp.pad(cos, ((0, Tp - T), (0, 0)))
        sin = jnp.pad(sin, ((0, Tp - T), (0, 0)))
    nt = Tp // t

    kern = functools.partial(_attn_kernel, scale=1.0 / math.sqrt(head_size),
                             n_heads=n_heads, head_size=head_size)
    out = pl.pallas_call(
        kern,
        out_shape=jax.ShapeDtypeStruct((B, Tp, C), jnp.bfloat16),
        grid=(B, nt, nt),
        in_specs=[
            # q / k / v read directly out of the fused qkv tensor (last-dim block index).
            pl.BlockSpec((1, t, C), lambda b, qi, ki: (b, qi, 0)),
            pl.BlockSpec((1, t, C), lambda b, qi, ki: (b, jnp.minimum(ki, qi), 1)),
            pl.BlockSpec((1, t, C), lambda b, qi, ki: (b, jnp.minimum(ki, qi), 2)),
            pl.BlockSpec((t, h2), lambda b, qi, ki: (qi, 0)),
            pl.BlockSpec((t, h2), lambda b, qi, ki: (qi, 0)),
            pl.BlockSpec((t, h2), lambda b, qi, ki: (jnp.minimum(ki, qi), 0)),
            pl.BlockSpec((t, h2), lambda b, qi, ki: (jnp.minimum(ki, qi), 0)),
        ],
        out_specs=pl.BlockSpec((1, t, C), lambda b, qi, ki: (b, qi, 0)),
        scratch_shapes=[pltpu.VMEM((t, C), jnp.bfloat16),            # rotated, scaled q
                        pltpu.VMEM((n_heads, t, 1), jnp.float32),    # m
                        pltpu.VMEM((n_heads, t, 1), jnp.float32),    # l
                        pltpu.VMEM((n_heads, t, head_size), jnp.float32)],  # acc
        compiler_params=pltpu.CompilerParams(
            dimension_semantics=("parallel", "parallel", "arbitrary"),
            vmem_limit_bytes=_VMEM_LIMIT),
    )(qkv, qkv, qkv, cos, sin, cos, sin)
    return out[:, :T, :] if Tp != T else out


# ----------------------------- model assembly -----------------------------

def block_forward(x, p, cos, sin, n_heads, attn_tile=None):
    B, T, C = x.shape
    hs = C // n_heads

    # --- attention ---
    xn = layernorm(x.reshape(B * T, C), p['ln1_w'], p['ln1_b'])          # bf16
    qkv = linear(xn, p['attn_wt'], out_dtype=jnp.bfloat16)               # (B*T, 3C) bf16
    y = attention(qkv.reshape(B, T, 3 * C), cos, sin, n_heads, hs, tile=attn_tile)
    x = x + linear(y.reshape(B * T, C), p['proj_wt']).reshape(B, T, C)   # f32 residual

    # --- MLP ---
    xn2 = layernorm(x.reshape(B * T, C), p['ln2_w'], p['ln2_b'])         # bf16
    h1 = linear(xn2, p['fc_wt'], gelu=True, out_dtype=jnp.bfloat16)      # (B*T, 4C) bf16
    x = x + linear(h1, p['mlp_proj_wt']).reshape(B, T, C)
    return x


def jamo_forward(idx, params, cfg):
    B, T = idx.shape
    C, H = cfg['n_embd'], cfg['n_heads']
    x = params['wte'][idx]                            # token embedding gather (glue)
    cos = params['rope_cos'][:T]                      # (T, hs//2)
    sin = params['rope_sin'][:T]
    for p in params['blocks']:
        x = block_forward(x, p, cos, sin, H, attn_tile=cfg.get('attn_tile'))
    xf = layernorm(x.reshape(B * T, C), params['lnf_w'], params['lnf_b'])   # bf16
    logits = linear(xf, params['lm_head_wt'])         # weight-tied lm_head, pre-transposed
    return logits.reshape(B, T, -1)


# ----------------------------- parameter init -----------------------------

def init_params(key, cfg):
    C, V, L = cfg['n_embd'], cfg['vocab_size'], cfg['n_layer']
    H, BS = cfg['n_heads'], cfg['block_size']
    hs = C // H
    std = 0.02
    proj_std = 0.02 / math.sqrt(2 * L)
    keys = jax.random.split(key, 1 + 4 * L)

    wte = std * jax.random.normal(keys[0], (V, C), jnp.float32)

    # permutation that de-interleaves each head's features into [even | odd]
    head_perm = jnp.concatenate([jnp.arange(0, hs, 2), jnp.arange(1, hs, 2)])
    perm = (jnp.arange(H)[:, None] * hs + head_perm[None, :]).reshape(-1)   # (C,)

    blocks, ref_blocks = [], []
    for l in range(L):
        k1, k2, k3, k4 = keys[1 + 4 * l: 1 + 4 * (l + 1)]
        attn_w = std * jax.random.normal(k1, (3 * C, C), jnp.float32)       # torch (out,in)
        proj_w = proj_std * jax.random.normal(k2, (C, C), jnp.float32)
        fc_w = std * jax.random.normal(k3, (4 * C, C), jnp.float32)
        mproj_w = proj_std * jax.random.normal(k4, (C, 4 * C), jnp.float32)

        attn_wt = attn_w.T                                                  # (C, 3C)
        # fold the RoPE de-interleave permutation into the q and k output columns
        attn_wt_folded = jnp.concatenate([attn_wt[:, :C][:, perm],
                                          attn_wt[:, C:2 * C][:, perm],
                                          attn_wt[:, 2 * C:]], axis=1)

        ln1_w = jnp.ones((C,), jnp.float32); ln1_b = jnp.zeros((C,), jnp.float32)
        ln2_w = jnp.ones((C,), jnp.float32); ln2_b = jnp.zeros((C,), jnp.float32)

        blocks.append(dict(
            ln1_w=ln1_w, ln1_b=ln1_b,
            attn_wt=attn_wt_folded.astype(jnp.bfloat16),
            proj_wt=proj_w.T.astype(jnp.bfloat16),
            ln2_w=ln2_w, ln2_b=ln2_b,
            fc_wt=fc_w.T.astype(jnp.bfloat16),
            mlp_proj_wt=mproj_w.T.astype(jnp.bfloat16)))
        ref_blocks.append(dict(
            ln1_w=ln1_w, ln1_b=ln1_b, attn_wt=attn_wt, proj_wt=proj_w.T,
            ln2_w=ln2_w, ln2_b=ln2_b, fc_wt=fc_w.T, mlp_proj_wt=mproj_w.T))

    # RoPE cache, same recipe as build_rope_cache (float32 path)
    theta = 1.0 / (10000.0 ** (jnp.arange(0, hs, 2, dtype=jnp.float32) / hs))
    idx_theta = jnp.outer(jnp.arange(BS, dtype=jnp.float32), theta)         # (BS, hs//2)
    rope_cos, rope_sin = jnp.cos(idx_theta), jnp.sin(idx_theta)

    lnf_w = jnp.ones((C,), jnp.float32); lnf_b = jnp.zeros((C,), jnp.float32)

    params = dict(wte=wte, lm_head_wt=wte.T.astype(jnp.bfloat16), blocks=blocks,
                  lnf_w=lnf_w, lnf_b=lnf_b, rope_cos=rope_cos, rope_sin=rope_sin)
    ref_params = dict(wte=wte, blocks=ref_blocks, lnf_w=lnf_w, lnf_b=lnf_b,
                      rope_cos=rope_cos, rope_sin=rope_sin)
    return params, ref_params


# ----------------------------- pure-JAX reference (validation only) -----------------------------

def _ln_ref(x, w, b):
    m = jnp.mean(x, axis=-1, keepdims=True)
    v = jnp.mean(jnp.square(x - m), axis=-1, keepdims=True)
    return (x - m) * lax.rsqrt(v + 1e-5) * w + b


def _gelu_ref(x):
    return 0.5 * x * (1.0 + jnp.tanh(math.sqrt(2.0 / math.pi) * (x + 0.044715 * x ** 3)))


def _rope_ref(x, cos, sin):
    B, T, H, hs = x.shape
    xs = x.reshape(B, T, H, hs // 2, 2)
    c = cos[None, :, None, :]
    s = sin[None, :, None, :]
    out = jnp.stack([xs[..., 0] * c - xs[..., 1] * s,
                     xs[..., 1] * c + xs[..., 0] * s], axis=-1)
    return out.reshape(B, T, H, hs)


def reference_forward(idx, ref, cfg):
    B, T = idx.shape
    C, H = cfg['n_embd'], cfg['n_heads']
    hs = C // H
    x = ref['wte'][idx]
    cos, sin = ref['rope_cos'][:T], ref['rope_sin'][:T]
    mask = jnp.tril(jnp.ones((T, T), bool))
    for p in ref['blocks']:
        xn = _ln_ref(x, p['ln1_w'], p['ln1_b'])
        q, k, v = jnp.split(xn @ p['attn_wt'], 3, axis=-1)
        q = _rope_ref(q.reshape(B, T, H, hs), cos, sin)
        k = _rope_ref(k.reshape(B, T, H, hs), cos, sin)
        v = v.reshape(B, T, H, hs)
        s = jnp.einsum('bqhd,bkhd->bhqk', q, k) / math.sqrt(hs)
        s = jnp.where(mask[None, None], s, -jnp.inf)
        a = jax.nn.softmax(s, axis=-1)
        y = jnp.einsum('bhqk,bkhd->bqhd', a, v).reshape(B, T, C)
        x = x + y @ p['proj_wt']
        xn2 = _ln_ref(x, p['ln2_w'], p['ln2_b'])
        x = x + _gelu_ref(xn2 @ p['fc_wt']) @ p['mlp_proj_wt']
    xf = _ln_ref(x, ref['lnf_w'], ref['lnf_b'])
    return xf @ ref['wte'].T


# ----------------------------- main -----------------------------

if __name__ == "__main__":
    cfg = dict(n_layer=2, n_heads=4, n_embd=128, vocab_size=256, block_size=32,
               dropout=0.0, attn_tile=8)        # small tile so the flash kv loop is exercised
    key = jax.random.PRNGKey(0)
    pkey, ikey = jax.random.split(key)
    params, ref_params = init_params(pkey, cfg)

    B, T = 2, 16
    idx = jax.random.randint(ikey, (B, T), 0, cfg['vocab_size'], dtype=jnp.int32)

    fwd = jax.jit(lambda tok: jamo_forward(tok, params, cfg))
    logits = fwd(idx)
    jax.block_until_ready(logits)
    assert logits.shape == (B, T, cfg['vocab_size'])
    assert bool(jnp.all(jnp.isfinite(logits)))

    # validate against a pure-JAX reference of the original PyTorch math
    ref_logits = reference_forward(idx, ref_params, cfg)
    err = float(jnp.max(jnp.abs(logits - ref_logits)))
    assert err < 5e-2, f"max abs error vs reference: {err}"

    print("KERNEL_OK")
</pallas_src>

<mosaic_0001>
module attributes {stable_mosaic.version = 11 : i64} {
  func.func @_matmul_kernel_acc(%arg0: i32, %arg1: i32, %arg2: i32, %arg3: memref<32x128xbf16, #tpu.memory_space<vmem>>, %arg4: memref<128x128xbf16, #tpu.memory_space<vmem>>, %arg5: memref<32x128xbf16, #tpu.memory_space<vmem>>, %arg6: memref<32x128xf32, #tpu.memory_space<vmem>>) attributes {dimension_semantics = [#tpu.dimension_semantics<parallel>, #tpu.dimension_semantics<parallel>, #tpu.dimension_semantics<arbitrary>], iteration_bounds = array<i64: 1, 3, 1>, scalar_prefetch = 0 : i64, scratch_operands = 1 : i64, tpu.core_type = #tpu.core_type<tc>, window_params = [{transform_indices = @transform_0, window_bounds = array<i64: 32, 128>}, {transform_indices = @transform_1, window_bounds = array<i64: 128, 128>}, {transform_indices = @transform_2, window_bounds = array<i64: 32, 128>}]} {
    %c0_i32 = arith.constant 0 : i32
    %0 = arith.cmpi eq, %arg2, %c0_i32 : i32
    %1 = arith.extui %0 : i1 to i32
    %c0_i32_0 = arith.constant 0 : i32
    %2 = arith.cmpi ne, %1, %c0_i32_0 : i32
    scf.if %2 {
      %cst_10 = arith.constant 0.000000e+00 : f32
      %12 = vector.broadcast %cst_10 : f32 to vector<32x128xf32>
      %c0_11 = arith.constant 0 : index
      %c0_12 = arith.constant 0 : index
      %13 = vector.load %arg6[%c0_11, %c0_12] : memref<32x128xf32, #tpu.memory_space<vmem>>, vector<32x128xf32>
      tpu.vector_store %arg6[%c0_11, %c0_12], %12 {strides = array<i32>} : memref<32x128xf32, #tpu.memory_space<vmem>>, vector<32x128xf32>,
    } else {
    }
    %c0 = arith.constant 0 : index
    %c0_1 = arith.constant 0 : index
    %3 = vector.load %arg6[%c0, %c0_1] : memref<32x128xf32, #tpu.memory_space<vmem>>, vector<32x128xf32>
    %c0_2 = arith.constant 0 : index
    %c0_3 = arith.constant 0 : index
    %4 = vector.load %arg3[%c0_2, %c0_3] : memref<32x128xbf16, #tpu.memory_space<vmem>>, vector<32x128xbf16>
    %c0_4 = arith.constant 0 : index
    %c0_5 = arith.constant 0 : index
    %5 = vector.load %arg4[%c0_4, %c0_5] : memref<128x128xbf16, #tpu.memory_space<vmem>>, vector<128x128xbf16>
    %cst = arith.constant dense<0.000000e+00> : vector<32x128xf32>
    %6 = tpu.matmul %4, %5, %cst {dimension_numbers = #tpu.dot_dimension_numbers<[1], [0], [0], [1], [0, 0, 1, 1], [], []>} : vector<32x128xbf16>, vector<128x128xbf16>, vector<32x128xf32> -> vector<32x128xf32>
    %7 = arith.addf %3, %6 : vector<32x128xf32>
    %c0_6 = arith.constant 0 : index
    %c0_7 = arith.constant 0 : index
    %8 = vector.load %arg6[%c0_6, %c0_7] : memref<32x128xf32, #tpu.memory_space<vmem>>, vector<32x128xf32>
    tpu.vector_store %arg6[%c0_6, %c0_7], %7 {strides = array<i32>} : memref<32x128xf32, #tpu.memory_space<vmem>>, vector<32x128xf32>,
    %c0_i32_8 = arith.constant 0 : i32
    %9 = arith.cmpi eq, %arg2, %c0_i32_8 : i32
    %10 = arith.extui %9 : i1 to i32
    %c0_i32_9 = arith.constant 0 : i32
    %11 = arith.cmpi ne, %10, %c0_i32_9 : i32
    scf.if %11 {
      %c0_10 = arith.constant 0 : index
      %c0_11 = arith.constant 0 : index
      %12 = vector.load %arg6[%c0_10, %c0_11] : memref<32x128xf32, #tpu.memory_space<vmem>>, vector<32x128xf32>
      %13 = arith.truncf %12 : vector<32x128xf32> to vector<32x128xbf16>
      %c0_12 = arith.constant 0 : index
      %c0_13 = arith.constant 0 : index
      %14 = vector.load %arg5[%c0_12, %c0_13] : memref<32x128xbf16, #tpu.memory_space<vmem>>, vector<32x128xbf16>
      tpu.vector_store %arg5[%c0_12, %c0_13], %13 {strides = array<i32>} : memref<32x128xbf16, #tpu.memory_space<vmem>>, vector<32x128xbf16>,
    } else {
    }
    return
  }
  func.func @transform_0(%arg0: i32, %arg1: i32, %arg2: i32) -> (i32, i32) {
    %c0_i32 = arith.constant 0 : i32
    return %arg0, %arg2 : i32, i32
  }
  func.func @transform_1(%arg0: i32, %arg1: i32, %arg2: i32) -> (i32, i32) {
    %c0_i32 = arith.constant 0 : i32
    return %arg2, %arg1 : i32, i32
  }
  func.func @transform_2(%arg0: i32, %arg1: i32, %arg2: i32) -> (i32, i32) {
    %c0_i32 = arith.constant 0 : i32
    return %arg0, %arg1 : i32, i32
  }
}

module attributes {stable_mosaic.version = 11 : i64} {
  func.func @_layernorm_kernel(%arg0: i32, %arg1: memref<32x128xf32, #tpu.memory_space<vmem>>, %arg2: memref<1x128xf32, #tpu.memory_space<vmem>>, %arg3: memref<1x128xf32, #tpu.memory_space<vmem>>, %arg4: memref<32x128xbf16, #tpu.memory_space<vmem>>) attributes {dimension_semantics = [#tpu.dimension_semantics<parallel>], iteration_bounds = array<i64: 1>, scalar_prefetch = 0 : i64, scratch_operands = 0 : i64, tpu.core_type = #tpu.core_type<tc>, window_params = [{transform_indices = @transform_0, window_bounds = array<i64: 32, 128>}, {pipeline_mode = #tpu.pipeline_mode<synchronous>, transform_indices = @transform_1, window_bounds = array<i64: 1, 128>}, {pipeline_mode = #tpu.pipeline_mode<synchronous>, transform_indices = @transform_2, window_bounds = array<i64: 1, 128>}, {transform_indices = @transform_3, window_bounds = array<i64: 32, 128>}]} {
    %c0 = arith.constant 0 : index
    %c0_0 = arith.constant 0 : index
    %0 = vector.load %arg1[%c0, %c0_0] : memref<32x128xf32, #tpu.memory_space<vmem>>, vector<32x128xf32>
    %cst = arith.constant dense<0.000000e+00> : vector<32xf32>
    %1 = vector.multi_reduction <add>, %0, %cst [1] : vector<32x128xf32> to vector<32xf32>
    %2 = vector.shape_cast %1 : vector<32xf32> to vector<32x1xf32>
    %cst_1 = arith.constant 1.280000e+02 : f32
    %3 = vector.broadcast %cst_1 : f32 to vector<32x1xf32>
    %4 = arith.divf %2, %3 : vector<32x1xf32>
    %5 = vector.broadcast %4 : vector<32x1xf32> to vector<32x128xf32>
    %6 = arith.subf %0, %5 : vector<32x128xf32>
    %7 = arith.mulf %6, %6 : vector<32x128xf32>
    %cst_2 = arith.constant dense<0.000000e+00> : vector<32xf32>
    %8 = vector.multi_reduction <add>, %7, %cst_2 [1] : vector<32x128xf32> to vector<32xf32>
    %9 = vector.shape_cast %8 : vector<32xf32> to vector<32x1xf32>
    %cst_3 = arith.constant 1.280000e+02 : f32
    %10 = vector.broadcast %cst_3 : f32 to vector<32x1xf32>
    %11 = arith.divf %9, %10 : vector<32x1xf32>
    %cst_4 = arith.constant 9.99999974E-6 : f32
    %12 = vector.broadcast %cst_4 : f32 to vector<32x1xf32>
    %13 = arith.addf %11, %12 : vector<32x1xf32>
    %14 = math.rsqrt %13 : vector<32x1xf32>
    %15 = vector.broadcast %14 : vector<32x1xf32> to vector<32x128xf32>
    %16 = arith.mulf %6, %15 : vector<32x128xf32>
    %c0_5 = arith.constant 0 : index
    %c0_6 = arith.constant 0 : index
    %17 = vector.load %arg2[%c0_5, %c0_6] : memref<1x128xf32, #tpu.memory_space<vmem>>, vector<1x128xf32>
    %18 = vector.broadcast %17 : vector<1x128xf32> to vector<32x128xf32>
    %19 = arith.mulf %16, %18 : vector<32x128xf32>
    %c0_7 = arith.constant 0 : index
    %c0_8 = arith.constant 0 : index
    %20 = vector.load %arg3[%c0_7, %c0_8] : memref<1x128xf32, #tpu.memory_space<vmem>>, vector<1x128xf32>
    %21 = vector.broadcast %20 : vector<1x128xf32> to vector<32x128xf32>
    %22 = arith.addf %19, %21 : vector<32x128xf32>
    %23 = arith.truncf %22 : vector<32x128xf32> to vector<32x128xbf16>
    %c0_9 = arith.constant 0 : index
    %c0_10 = arith.constant 0 : index
    %24 = vector.load %arg4[%c0_9, %c0_10] : memref<32x128xbf16, #tpu.memory_space<vmem>>, vector<32x128xbf16>
    tpu.vector_store %arg4[%c0_9, %c0_10], %23 {strides = array<i32>} : memref<32x128xbf16, #tpu.memory_space<vmem>>, vector<32x128xbf16>,
    return
  }
  func.func @transform_0(%arg0: i32) -> (i32, i32) {
    %c0_i32 = arith.constant 0 : i32
    %c0_i32_0 = arith.constant 0 : i32
    return %arg0, %c0_i32 : i32, i32
  }
  func.func @transform_1(%arg0: i32) -> (i32, i32) {
    %c0_i32 = arith.constant 0 : i32
    %c0_i32_0 = arith.constant 0 : i32
    %c0_i32_1 = arith.constant 0 : i32
    return %c0_i32, %c0_i32_0 : i32, i32
  }
  func.func @transform_2(%arg0: i32) -> (i32, i32) {
    %c0_i32 = arith.constant 0 : i32
    %c0_i32_0 = arith.constant 0 : i32
    %c0_i32_1 = arith.constant 0 : i32
    return %c0_i32, %c0_i32_0 : i32, i32
  }
  func.func @transform_3(%arg0: i32) -> (i32, i32) {
    %c0_i32 = arith.constant 0 : i32
    %c0_i32_0 = arith.constant 0 : i32
    return %arg0, %c0_i32 : i32, i32
  }
}

module attributes {stable_mosaic.version = 11 : i64} {
  func.func @_attn_kernel(%arg0: i32, %arg1: i32, %arg2: i32, %arg3: memref<1x8x128xbf16, #tpu.memory_space<vmem>>, %arg4: memref<1x8x128xbf16, #tpu.memory_space<vmem>>, %arg5: memref<1x8x128xbf16, #tpu.memory_space<vmem>>, %arg6: memref<8x16xf32, #tpu.memory_space<vmem>>, %arg7: memref<8x16xf32, #tpu.memory_space<vmem>>, %arg8: memref<8x16xf32, #tpu.memory_space<vmem>>, %arg9: memref<8x16xf32, #tpu.memory_space<vmem>>, %arg10: memref<1x8x128xbf16, #tpu.memory_space<vmem>>, %arg11: memref<8x128xbf16, #tpu.memory_space<vmem>>, %arg12: memref<4x8x1xf32, #tpu.memory_space<vmem>>, %arg13: memref<4x8x1xf32, #tpu.memory_space<vmem>>, %arg14: memref<4x8x32xf32, #tpu.memory_space<vmem>>) attributes {dimension_semantics = [#tpu.dimension_semantics<parallel>, #tpu.dimension_semantics<parallel>, #tpu.dimension_semantics<arbitrary>], iteration_bounds = array<i64: 2, 2, 2>, scalar_prefetch = 0 : i64, scratch_operands = 4 : i64, tpu.core_type = #tpu.core_type<tc>, window_params = [{transform_indices = @transform_0, window_bounds = array<i64: 1, 8, 128>}, {transform_indices = @transform_1, window_bounds = array<i64: 1, 8, 128>}, {transform_indices = @transform_2, window_bounds = array<i64: 1, 8, 128>}, {transform_indices = @transform_3, window_bounds = array<i64: 8, 16>}, {transform_indices = @transform_4, window_bounds = array<i64: 8, 16>}, {transform_indices = @transform_5, window_bounds = array<i64: 8, 16>}, {transform_indices = @transform_6, window_bounds = array<i64: 8, 16>}, {transform_indices = @transform_7, window_bounds = array<i64: 1, 8, 128>}]} {
    %c0_i32 = arith.constant 0 : i32
    %0 = arith.cmpi eq, %arg2, %c0_i32 : i32
    %1 = arith.extui %0 : i1 to i32
    %c0_i32_0 = arith.constant 0 : i32
    %2 = arith.cmpi ne, %1, %c0_i32_0 : i32
    scf.if %2 {
      %cst = arith.constant -1.000000e+30 : f32
      %9 = vector.broadcast %cst : f32 to vector<4x8x1xf32>
      %c0 = arith.constant 0 : index
      %c0_3 = arith.constant 0 : index
      %c0_4 = arith.constant 0 : index
      %10 = vector.load %arg12[%c0, %c0_3, %c0_4] : memref<4x8x1xf32, #tpu.memory_space<vmem>>, vector<4x8x1xf32>
      tpu.vector_store %arg12[%c0, %c0_3, %c0_4], %9 {strides = array<i32>} : memref<4x8x1xf32, #tpu.memory_space<vmem>>, vector<4x8x1xf32>,
      %cst_5 = arith.constant 0.000000e+00 : f32
      %11 = vector.broadcast %cst_5 : f32 to vector<4x8x1xf32>
      %c0_6 = arith.constant 0 : index
      %c0_7 = arith.constant 0 : index
      %c0_8 = arith.constant 0 : index
      %12 = vector.load %arg13[%c0_6, %c0_7, %c0_8] : memref<4x8x1xf32, #tpu.memory_space<vmem>>, vector<4x8x1xf32>
      tpu.vector_store %arg13[%c0_6, %c0_7, %c0_8], %11 {strides = array<i32>} : memref<4x8x1xf32, #tpu.memory_space<vmem>>, vector<4x8x1xf32>,
      %cst_9 = arith.constant 0.000000e+00 : f32
      %13 = vector.broadcast %cst_9 : f32 to vector<4x8x32xf32>
      %c0_10 = arith.constant 0 : index
      %c0_11 = arith.constant 0 : index
      %c0_12 = arith.constant 0 : index
      %14 = vector.load %arg14[%c0_10, %c0_11, %c0_12] : memref<4x8x32xf32, #tpu.memory_space<vmem>>, vector<4x8x32xf32>
      tpu.vector_store %arg14[%c0_10, %c0_11, %c0_12], %13 {strides = array<i32>} : memref<4x8x32xf32, #tpu.memory_space<vmem>>, vector<4x8x32xf32>,
      %c0_13 = arith.constant 0 : index
      %c0_14 = arith.constant 0 : index
      %c0_15 = arith.constant 0 : index
      %15 = vector.load %arg3[%c0_13, %c0_14, %c0_15] : memref<1x8x128xbf16, #tpu.memory_space<vmem>>, vector<1x8x128xbf16>
      %16 = vector.shape_cast %15 : vector<1x8x128xbf16> to vector<8x128xbf16>
      %17 = arith.extf %16 : vector<8x128xbf16> to vector<8x128xf32>
      %c0_16 = arith.constant 0 : index
      %c0_17 = arith.constant 0 : index
      %18 = vector.load %arg6[%c0_16, %c0_17] : memref<8x16xf32, #tpu.memory_space<vmem>>, vector<8x16xf32>
      %cst_18 = arith.constant 0.176776692 : f32
      %19 = vector.broadcast %cst_18 : f32 to vector<8x16xf32>
      %20 = arith.mulf %18, %19 : vector<8x16xf32>
      %c0_19 = arith.constant 0 : index
      %c0_20 = arith.constant 0 : index
      %21 = vector.load %arg7[%c0_19, %c0_20] : memref<8x16xf32, #tpu.memory_space<vmem>>, vector<8x16xf32>
      %cst_21 = arith.constant 0.176776692 : f32
      %22 = vector.broadcast %cst_21 : f32 to vector<8x16xf32>
      %23 = arith.mulf %21, %22 : vector<8x16xf32>
      %24 = vector.extract_strided_slice %17 {offsets = [0, 0], sizes = [8, 16], strides = [1, 1]} : vector<8x128xf32> to vector<8x16xf32>
      %25 = vector.extract_strided_slice %17 {offsets = [0, 16], sizes = [8, 16], strides = [1, 1]} : vector<8x128xf32> to vector<8x16xf32>
      %26 = arith.mulf %24, %20 : vector<8x16xf32>
      %27 = arith.mulf %25, %23 : vector<8x16xf32>
      %28 = arith.subf %26, %27 : vector<8x16xf32>
      %29 = arith.truncf %28 : vector<8x16xf32> to vector<8x16xbf16>
      %c0_22 = arith.constant 0 : index
      %c0_23 = arith.constant 0 : index
      %30 = vector.load %arg11[%c0_22, %c0_23] : memref<8x128xbf16, #tpu.memory_space<vmem>>, vector<8x16xbf16>
      tpu.vector_store %arg11[%c0_22, %c0_23], %29 {strides = array<i32>} : memref<8x128xbf16, #tpu.memory_space<vmem>>, vector<8x16xbf16>,
      %31 = arith.mulf %25, %20 : vector<8x16xf32>
      %32 = arith.mulf %24, %23 : vector<8x16xf32>
      %33 = arith.addf %31, %32 : vector<8x16xf32>
      %34 = arith.truncf %33 : vector<8x16xf32> to vector<8x16xbf16>
      %c0_24 = arith.constant 0 : index
      %c16 = arith.constant 16 : index
      %35 = vector.load %arg11[%c0_24, %c16] : memref<8x128xbf16, #tpu.memory_space<vmem>>, vector<8x16xbf16>
      tpu.vector_store %arg11[%c0_24, %c16], %34 {strides = array<i32>} : memref<8x128xbf16, #tpu.memory_space<vmem>>, vector<8x16xbf16>,
      %36 = vector.extract_strided_slice %17 {offsets = [0, 32], sizes = [8, 16], strides = [1, 1]} : vector<8x128xf32> to vector<8x16xf32>
      %37 = vector.extract_strided_slice %17 {offsets = [0, 48], sizes = [8, 16], strides = [1, 1]} : vector<8x128xf32> to vector<8x16xf32>
      %38 = arith.mulf %36, %20 : vector<8x16xf32>
      %39 = arith.mulf %37, %23 : vector<8x16xf32>
      %40 = arith.subf %38, %39 : vector<8x16xf32>
      %41 = arith.truncf %40 : vector<8x16xf32> to vector<8x16xbf16>
      %c0_25 = arith.constant 0 : index
      %c32 = arith.constant 32 : index
      %42 = vector.load %arg11[%c0_25, %c32] : memref<8x128xbf16, #tpu.memory_space<vmem>>, vector<8x16xbf16>
      tpu.vector_store %arg11[%c0_25, %c32], %41 {strides = array<i32>} : memref<8x128xbf16, #tpu.memory_space<vmem>>, vector<8x16xbf16>,
      %43 = arith.mulf %37, %20 : vector<8x16xf32>
      %44 = arith.mulf %36, %23 : vector<8x16xf32>
      %45 = arith.addf %43, %44 : vector<8x16xf32>
      %46 = arith.truncf %45 : vector<8x16xf32> to vector<8x16xbf16>
      %c0_26 = arith.constant 0 : index
      %c48 = arith.constant 48 : index
      %47 = vector.load %arg11[%c0_26, %c48] : memref<8x128xbf16, #tpu.memory_space<vmem>>, vector<8x16xbf16>
      tpu.vector_store %arg11[%c0_26, %c48], %46 {strides = array<i32>} : memref<8x128xbf16, #tpu.memory_space<vmem>>, vector<8x16xbf16>,
      %48 = vector.extract_strided_slice %17 {offsets = [0, 64], sizes = [8, 16], strides = [1, 1]} : vector<8x128xf32> to vector<8x16xf32>
      %49 = vector.extract_strided_slice %17 {offsets = [0, 80], sizes = [8, 16], strides = [1, 1]} : vector<8x128xf32> to vector<8x16xf32>
      %50 = arith.mulf %48, %20 : vector<8x16xf32>
      %51 = arith.mulf %49, %23 : vector<8x16xf32>
      %52 = arith.subf %50, %51 : vector<8x16xf32>
      %53 = arith.truncf %52 : vector<8x16xf32> to vector<8x16xbf16>
      %c0_27 = arith.constant 0 : index
      %c64 = arith.constant 64 : index
      %54 = vector.load %arg11[%c0_27, %c64] : memref<8x128xbf16, #tpu.memory_space<vmem>>, vector<8x16xbf16>
      tpu.vector_store %arg11[%c0_27, %c64], %53 {strides = array<i32>} : memref<8x128xbf16, #tpu.memory_space<vmem>>, vector<8x16xbf16>,
      %55 = arith.mulf %49, %20 : vector<8x16xf32>
      %56 = arith.mulf %48, %23 : vector<8x16xf32>
      %57 = arith.addf %55, %56 : vector<8x16xf32>
      %58 = arith.truncf %57 : vector<8x16xf32> to vector<8x16xbf16>
      %c0_28 = arith.constant 0 : index
      %c80 = arith.constant 80 : index
      %59 = vector.load %arg11[%c0_28, %c80] : memref<8x128xbf16, #tpu.memory_space<vmem>>, vector<8x16xbf16>
      tpu.vector_store %arg11[%c0_28, %c80], %58 {strides = array<i32>} : memref<8x128xbf16, #tpu.memory_space<vmem>>, vector<8x16xbf16>,
      %60 = vector.extract_strided_slice %17 {offsets = [0, 96], sizes = [8, 16], strides = [1, 1]} : vector<8x128xf32> to vector<8x16xf32>
      %61 = vector.extract_strided_slice %17 {offsets = [0, 112], sizes = [8, 16], strides = [1, 1]} : vector<8x128xf32> to vector<8x16xf32>
      %62 = arith.mulf %60, %20 : vector<8x16xf32>
      %63 = arith.mulf %61, %23 : vector<8x16xf32>
      %64 = arith.subf %62, %63 : vector<8x16xf32>
      %65 = arith.truncf %64 : vector<8x16xf32> to vector<8x16xbf16>
      %c0_29 = arith.constant 0 : index
      %c96 = arith.constant 96 : index
      %66 = vector.load %arg11[%c0_29, %c96] : memref<8x128xbf16, #tpu.memory_space<vmem>>, vector<8x16xbf16>
      tpu.vector_store %arg11[%c0_29, %c96], %65 {strides = array<i32>} : memref<8x128xbf16, #tpu.memory_space<vmem>>, vector<8x16xbf16>,
      %67 = arith.mulf %61, %20 : vector<8x16xf32>
      %68 = arith.mulf %60, %23 : vector<8x16xf32>
      %69 = arith.addf %67, %68 : vector<8x16xf32>
      %70 = arith.truncf %69 : vector<8x16xf32> to vector<8x16xbf16>
      %c0_30 = arith.constant 0 : index
      %c112 = arith.constant 112 : index
      %71 = vector.load %arg11[%c0_30, %c112] : memref<8x128xbf16, #tpu.memory_space<vmem>>, vector<8x16xbf16>
      tpu.vector_store %arg11[%c0_30, %c112], %70 {strides = array<i32>} : memref<8x128xbf16, #tpu.memory_space<vmem>>, vector<8x16xbf16>,
    } else {
    }
    %3 = arith.cmpi slt, %arg2, %arg1 : i32
    %4 = arith.extui %3 : i1 to i32
    %c0_i32_1 = arith.constant 0 : i32
    %5 = arith.cmpi ne, %4, %c0_i32_1 : i32
    scf.if %5 {
      %c0 = arith.constant 0 : index
      %c0_3 = arith.constant 0 : index
      %c0_4 = arith.constant 0 : index
      %9 = vector.load %arg4[%c0, %c0_3, %c0_4] : memref<1x8x128xbf16, #tpu.memory_space<vmem>>, vector<1x8x128xbf16>
      %10 = vector.shape_cast %9 : vector<1x8x128xbf16> to vector<8x128xbf16>
      %11 = arith.extf %10 : vector<8x128xbf16> to vector<8x128xf32>
      %c0_5 = arith.constant 0 : index
      %c0_6 = arith.constant 0 : index
      %c0_7 = arith.constant 0 : index
      %12 = vector.load %arg5[%c0_5, %c0_6, %c0_7] : memref<1x8x128xbf16, #tpu.memory_space<vmem>>, vector<1x8x128xbf16>
      %13 = vector.shape_cast %12 : vector<1x8x128xbf16> to vector<8x128xbf16>
      %c0_8 = arith.constant 0 : index
      %c0_9 = arith.constant 0 : index
      %14 = vector.load %arg8[%c0_8, %c0_9] : memref<8x16xf32, #tpu.memory_space<vmem>>, vector<8x16xf32>
      %c0_10 = arith.constant 0 : index
      %c0_11 = arith.constant 0 : index
      %15 = vector.load %arg9[%c0_10, %c0_11] : memref<8x16xf32, #tpu.memory_space<vmem>>, vector<8x16xf32>
      %16 = vector.extract_strided_slice %11 {offsets = [0, 0], sizes = [8, 16], strides = [1, 1]} : vector<8x128xf32> to vector<8x16xf32>
      %17 = vector.extract_strided_slice %11 {offsets = [0, 16], sizes = [8, 16], strides = [1, 1]} : vector<8x128xf32> to vector<8x16xf32>
      %18 = arith.mulf %16, %14 : vector<8x16xf32>
      %19 = arith.mulf %17, %15 : vector<8x16xf32>
      %20 = arith.subf %18, %19 : vector<8x16xf32>
      %21 = arith.truncf %20 : vector<8x16xf32> to vector<8x16xbf16>
      %22 = arith.mulf %17, %14 : vector<8x16xf32>
      %23 = arith.mulf %16, %15 : vector<8x16xf32>
      %24 = arith.addf %22, %23 : vector<8x16xf32>
      %25 = arith.truncf %24 : vector<8x16xf32> to vector<8x16xbf16>
      %c0_12 = arith.constant 0 : index
      %c0_13 = arith.constant 0 : index
      %26 = vector.load %arg11[%c0_12, %c0_13] : memref<8x128xbf16, #tpu.memory_space<vmem>>, vector<8x16xbf16>
      %c0_14 = arith.constant 0 : index
      %c16 = arith.constant 16 : index
      %27 = vector.load %arg11[%c0_14, %c16] : memref<8x128xbf16, #tpu.memory_space<vmem>>, vector<8x16xbf16>
      %cst = arith.constant dense<0.000000e+00> : vector<8x8xf32>
      %28 = tpu.matmul %26, %21, %cst {dimension_numbers = #tpu.dot_dimension_numbers<[1], [1], [0], [0], [0, 0, 1, 0], [], []>} : vector<8x16xbf16>, vector<8x16xbf16>, vector<8x8xf32> -> vector<8x8xf32>
      %cst_15 = arith.constant dense<0.000000e+00> : vector<8x8xf32>
      %29 = tpu.matmul %27, %25, %cst_15 {dimension_numbers = #tpu.dot_dimension_numbers<[1], [1], [0], [0], [0, 0, 1, 0], [], []>} : vector<8x16xbf16>, vector<8x16xbf16>, vector<8x8xf32> -> vector<8x8xf32>
      %30 = arith.addf %28, %29 : vector<8x8xf32>
      %c0_16 = arith.constant 0 : index
      %c0_17 = arith.constant 0 : index
      %c0_18 = arith.constant 0 : index
      %31 = vector.load %arg12[%c0_16, %c0_17, %c0_18] : memref<4x8x1xf32, #tpu.memory_space<vmem>>, vector<1x8x1xf32>
      %32 = vector.shape_cast %31 : vector<1x8x1xf32> to vector<8x1xf32>
      %cst_19 = arith.constant dense<0xFF800000> : vector<8xf32>
      %33 = vector.multi_reduction <maximumf>, %30, %cst_19 [1] : vector<8x8xf32> to vector<8xf32>
      %34 = vector.shape_cast %33 : vector<8xf32> to vector<8x1xf32>
      %35 = arith.maximumf %32, %34 : vector<8x1xf32>
      %36 = arith.subf %32, %35 : vector<8x1xf32>
      %37 = math.exp %36 : vector<8x1xf32>
      %38 = vector.broadcast %35 : vector<8x1xf32> to vector<8x8xf32>
      %39 = arith.subf %30, %38 : vector<8x8xf32>
      %40 = math.exp %39 : vector<8x8xf32>
      %c0_20 = arith.constant 0 : index
      %c0_21 = arith.constant 0 : index
      %c0_22 = arith.constant 0 : index
      %41 = vector.load %arg13[%c0_20, %c0_21, %c0_22] : memref<4x8x1xf32, #tpu.memory_space<vmem>>, vector<1x8x1xf32>
      %42 = vector.shape_cast %41 : vector<1x8x1xf32> to vector<8x1xf32>
      %43 = arith.mulf %37, %42 : vector<8x1xf32>
      %cst_23 = arith.constant dense<0.000000e+00> : vector<8xf32>
      %44 = vector.multi_reduction <add>, %40, %cst_23 [1] : vector<8x8xf32> to vector<8xf32>
      %45 = vector.shape_cast %44 : vector<8xf32> to vector<8x1xf32>
      %46 = arith.addf %43, %45 : vector<8x1xf32>
      %c0_24 = arith.constant 0 : index
      %c0_25 = arith.constant 0 : index
      %c0_26 = arith.constant 0 : index
      %47 = vector.load %arg13[%c0_24, %c0_25, %c0_26] : memref<4x8x1xf32, #tpu.memory_space<vmem>>, vector<1x8x1xf32>
      %48 = vector.shape_cast %47 : vector<1x8x1xf32> to vector<8x1xf32>
      %49 = vector.shape_cast %46 : vector<8x1xf32> to vector<1x8x1xf32>
      tpu.vector_store %arg13[%c0_24, %c0_25, %c0_26], %49 {strides = array<i32>} : memref<4x8x1xf32, #tpu.memory_space<vmem>>, vector<1x8x1xf32>,
      %c0_27 = arith.constant 0 : index
      %c0_28 = arith.constant 0 : index
      %c0_29 = arith.constant 0 : index
      %50 = vector.load %arg14[%c0_27, %c0_28, %c0_29] : memref<4x8x32xf32, #tpu.memory_space<vmem>>, vector<1x8x32xf32>
      %51 = vector.shape_cast %50 : vector<1x8x32xf32> to vector<8x32xf32>
      %52 = vector.broadcast %37 : vector<8x1xf32> to vector<8x32xf32>
      %53 = arith.mulf %52, %51 : vector<8x32xf32>
      %54 = arith.truncf %40 : vector<8x8xf32> to vector<8x8xbf16>
      %55 = vector.extract_strided_slice %13 {offsets = [0, 0], sizes = [8, 32], strides = [1, 1]} : vector<8x128xbf16> to vector<8x32xbf16>
      %cst_30 = arith.constant dense<0.000000e+00> : vector<8x32xf32>
      %56 = tpu.matmul %54, %55, %cst_30 {dimension_numbers = #tpu.dot_dimension_numbers<[1], [0], [0], [1], [0, 0, 1, 1], [], []>} : vector<8x8xbf16>, vector<8x32xbf16>, vector<8x32xf32> -> vector<8x32xf32>
      %57 = arith.addf %53, %56 : vector<8x32xf32>
      %c0_31 = arith.constant 0 : index
      %c0_32 = arith.constant 0 : index
      %c0_33 = arith.constant 0 : index
      %58 = vector.load %arg14[%c0_31, %c0_32, %c0_33] : memref<4x8x32xf32, #tpu.memory_space<vmem>>, vector<1x8x32xf32>
      %59 = vector.shape_cast %58 : vector<1x8x32xf32> to vector<8x32xf32>
      %60 = vector.shape_cast %57 : vector<8x32xf32> to vector<1x8x32xf32>
      tpu.vector_store %arg14[%c0_31, %c0_32, %c0_33], %60 {strides = array<i32>} : memref<4x8x32xf32, #tpu.memory_space<vmem>>, vector<1x8x32xf32>,
      %c0_34 = arith.constant 0 : index
      %c0_35 = arith.constant 0 : index
      %c0_36 = arith.constant 0 : index
      %61 = vector.load %arg12[%c0_34, %c0_35, %c0_36] : memref<4x8x1xf32, #tpu.memory_space<vmem>>, vector<1x8x1xf32>
      %62 = vector.shape_cast %61 : vector<1x8x1xf32> to vector<8x1xf32>
      %63 = vector.shape_cast %35 : vector<8x1xf32> to vector<1x8x1xf32>
      tpu.vector_store %arg12[%c0_34, %c0_35, %c0_36], %63 {strides = array<i32>} : memref<4x8x1xf32, #tpu.memory_space<vmem>>, vector<1x8x1xf32>,
      %64 = vector.extract_strided_slice %11 {offsets = [0, 32], sizes = [8, 16], strides = [1, 1]} : vector<8x128xf32> to vector<8x16xf32>
      %65 = vector.extract_strided_slice %11 {offsets = [0, 48], sizes = [8, 16], strides = [1, 1]} : vector<8x128xf32> to vector<8x16xf32>
      %66 = arith.mulf %64, %14 : vector<8x16xf32>
      %67 = arith.mulf %65, %15 : vector<8x16xf32>
      %68 = arith.subf %66, %67 : vector<8x16xf32>
      %69 = arith.truncf %68 : vector<8x16xf32> to vector<8x16xbf16>
      %70 = arith.mulf %65, %14 : vector<8x16xf32>
      %71 = arith.mulf %64, %15 : vector<8x16xf32>
      %72 = arith.addf %70, %71 : vector<8x16xf32>
      %73 = arith.truncf %72 : vector<8x16xf32> to vector<8x16xbf16>
      %c0_37 = arith.constant 0 : index
      %c32 = arith.constant 32 : index
      %74 = vector.load %arg11[%c0_37, %c32] : memref<8x128xbf16, #tpu.memory_space<vmem>>, vector<8x16xbf16>
      %c0_38 = arith.constant 0 : index
      %c48 = arith.constant 48 : index
      %75 = vector.load %arg11[%c0_38, %c48] : memref<8x128xbf16, #tpu.memory_space<vmem>>, vector<8x16xbf16>
      %cst_39 = arith.constant dense<0.000000e+00> : vector<8x8xf32>
      %76 = tpu.matmul %74, %69, %cst_39 {dimension_numbers = #tpu.dot_dimension_numbers<[1], [1], [0], [0], [0, 0, 1, 0], [], []>} : vector<8x16xbf16>, vector<8x16xbf16>, vector<8x8xf32> -> vector<8x8xf32>
      %cst_40 = arith.constant dense<0.000000e+00> : vector<8x8xf32>
      %77 = tpu.matmul %75, %73, %cst_40 {dimension_numbers = #tpu.dot_dimension_numbers<[1], [1], [0], [0], [0, 0, 1, 0], [], []>} : vector<8x16xbf16>, vector<8x16xbf16>, vector<8x8xf32> -> vector<8x8xf32>
      %78 = arith.addf %76, %77 : vector<8x8xf32>
      %c1 = arith.constant 1 : index
      %c0_41 = arith.constant 0 : index
      %c0_42 = arith.constant 0 : index
      %79 = vector.load %arg12[%c1, %c0_41, %c0_42] : memref<4x8x1xf32, #tpu.memory_space<vmem>>, vector<1x8x1xf32>
      %80 = vector.shape_cast %79 : vector<1x8x1xf32> to vector<8x1xf32>
      %cst_43 = arith.constant dense<0xFF800000> : vector<8xf32>
      %81 = vector.multi_reduction <maximumf>, %78, %cst_43 [1] : vector<8x8xf32> to vector<8xf32>
      %82 = vector.shape_cast %81 : vector<8xf32> to vector<8x1xf32>
      %83 = arith.maximumf %80, %82 : vector<8x1xf32>
      %84 = arith.subf %80, %83 : vector<8x1xf32>
      %85 = math.exp %84 : vector<8x1xf32>
      %86 = vector.broadcast %83 : vector<8x1xf32> to vector<8x8xf32>
      %87 = arith.subf %78, %86 : vector<8x8xf32>
      %88 = math.exp %87 : vector<8x8xf32>
      %c1_44 = arith.constant 1 : index
      %c0_45 = arith.constant 0 : index
      %c0_46 = arith.constant 0 : index
      %89 = vector.load %arg13[%c1_44, %c0_45, %c0_46] : memref<4x8x1xf32, #tpu.memory_space<vmem>>, vector<1x8x1xf32>
      %90 = vector.shape_cast %89 : vector<1x8x1xf32> to vector<8x1xf32>
      %91 = arith.mulf %85, %90 : vector<8x1xf32>
      %cst_47 = arith.constant dense<0.000000e+00> : vector<8xf32>
      %92 = vector.multi_reduction <add>, %88, %cst_47 [1] : vector<8x8xf32> to vector<8xf32>
      %93 = vector.shape_cast %92 : vector<8xf32> to vector<8x1xf32>
      %94 = arith.addf %91, %93 : vector<8x1xf32>
      %c1_48 = arith.constant 1 : index
      %c0_49 = arith.constant 0 : index
      %c0_50 = arith.constant 0 : index
      %95 = vector.load %arg13[%c1_48, %c0_49, %c0_50] : memref<4x8x1xf32, #tpu.memory_space<vmem>>, vector<1x8x1xf32>
      %96 = vector.shape_cast %95 : vector<1x8x1xf32> to vector<8x1xf32>
      %97 = vector.shape_cast %94 : vector<8x1xf32> to vector<1x8x1xf32>
      tpu.vector_store %arg13[%c1_48, %c0_49, %c0_50], %97 {strides = array<i32>} : memref<4x8x1xf32, #tpu.memory_space<vmem>>, vector<1x8x1xf32>,
      %c1_51 = arith.constant 1 : index
      %c0_52 = arith.constant 0 : index
      %c0_53 = arith.constant 0 : index
      %98 = vector.load %arg14[%c1_51, %c0_52, %c0_53] : memref<4x8x32xf32, #tpu.memory_space<vmem>>, vector<1x8x32xf32>
      %99 = vector.shape_cast %98 : vector<1x8x32xf32> to vector<8x32xf32>
      %100 = vector.broadcast %85 : vector<8x1xf32> to vector<8x32xf32>
      %101 = arith.mulf %100, %99 : vector<8x32xf32>
      %102 = arith.truncf %88 : vector<8x8xf32> to vector<8x8xbf16>
      %103 = vector.extract_strided_slice %13 {offsets = [0, 32], sizes = [8, 32], strides = [1, 1]} : vector<8x128xbf16> to vector<8x32xbf16>
      %cst_54 = arith.constant dense<0.000000e+00> : vector<8x32xf32>
      %104 = tpu.matmul %102, %103, %cst_54 {dimension_numbers = #tpu.dot_dimension_numbers<[1], [0], [0], [1], [0, 0, 1, 1], [], []>} : vector<8x8xbf16>, vector<8x32xbf16>, vector<8x32xf32> -> vector<8x32xf32>
      %105 = arith.addf %101, %104 : vector<8x32xf32>
      %c1_55 = arith.constant 1 : index
      %c0_56 = arith.constant 0 : index
      %c0_57 = arith.constant 0 : index
      %106 = vector.load %arg14[%c1_55, %c0_56, %c0_57] : memref<4x8x32xf32, #tpu.memory_space<vmem>>, vector<1x8x32xf32>
      %107 = vector.shape_cast %106 : vector<1x8x32xf32> to vector<8x32xf32>
      %108 = vector.shape_cast %105 : vector<8x32xf32> to vector<1x8x32xf32>
      tpu.vector_store %arg14[%c1_55, %c0_56, %c0_57], %108 {strides = array<i32>} : memref<4x8x32xf32, #tpu.memory_space<vmem>>, vector<1x8x32xf32>,
      %c1_58 = arith.constant 1 : index
      %c0_59 = arith.constant 0 : index
      %c0_60 = arith.constant 0 : index
      %109 = vector.load %arg12[%c1_58, %c0_59, %c0_60] : memref<4x8x1xf32, #tpu.memory_space<vmem>>, vector<1x8x1xf32>
      %110 = vector.shape_cast %109 : vector<1x8x1xf32> to vector<8x1xf32>
      %111 = vector.shape_cast %83 : vector<8x1xf32> to vector<1x8x1xf32>
      tpu.vector_store %arg12[%c1_58, %c0_59, %c0_60], %111 {strides = array<i32>} : memref<4x8x1xf32, #tpu.memory_space<vmem>>, vector<1x8x1xf32>,
      %112 = vector.extract_strided_slice %11 {offsets = [0, 64], sizes = [8, 16], strides = [1, 1]} : vector<8x128xf32> to vector<8x16xf32>
      %113 = vector.extract_strided_slice %11 {offsets = [0, 80], sizes = [8, 16], strides = [1, 1]} : vector<8x128xf32> to vector<8x16xf32>
      %114 = arith.mulf %112, %14 : vector<8x16xf32>
      %115 = arith.mulf %113, %15 : vector<8x16xf32>
      %116 = arith.subf %114, %115 : vector<8x16xf32>
      %117 = arith.truncf %116 : vector<8x16xf32> to vector<8x16xbf16>
      %118 = arith.mulf %113, %14 : vector<8x16xf32>
      %119 = arith.mulf %112, %15 : vector<8x16xf32>
      %120 = arith.addf %118, %119 : vector<8x16xf32>
      %121 = arith.truncf %120 : vector<8x16xf32> to vector<8x16xbf16>
      %c0_61 = arith.constant 0 : index
      %c64 = arith.constant 64 : index
      %122 = vector.load %arg11[%c0_61, %c64] : memref<8x128xbf16, #tpu.memory_space<vmem>>, vector<8x16xbf16>
      %c0_62 = arith.constant 0 : index
      %c80 = arith.constant 80 : index
      %123 = vector.load %arg11[%c0_62, %c80] : memref<8x128xbf16, #tpu.memory_space<vmem>>, vector<8x16xbf16>
      %cst_63 = arith.constant dense<0.000000e+00> : vector<8x8xf32>
      %124 = tpu.matmul %122, %117, %cst_63 {dimension_numbers = #tpu.dot_dimension_numbers<[1], [1], [0], [0], [0, 0, 1, 0], [], []>} : vector<8x16xbf16>, vector<8x16xbf16>, vector<8x8xf32> -> vector<8x8xf32>
      %cst_64 = arith.constant dense<0.000000e+00> : vector<8x8xf32>
      %125 = tpu.matmul %123, %121, %cst_64 {dimension_numbers = #tpu.dot_dimension_numbers<[1], [1], [0], [0], [0, 0, 1, 0], [], []>} : vector<8x16xbf16>, vector<8x16xbf16>, vector<8x8xf32> -> vector<8x8xf32>
      %126 = arith.addf %124, %125 : vector<8x8xf32>
      %c2 = arith.constant 2 : index
      %c0_65 = arith.constant 0 : index
      %c0_66 = arith.constant 0 : index
      %127 = vector.load %arg12[%c2, %c0_65, %c0_66] : memref<4x8x1xf32, #tpu.memory_space<vmem>>, vector<1x8x1xf32>
      %128 = vector.shape_cast %127 : vector<1x8x1xf32> to vector<8x1xf32>
      %cst_67 = arith.constant dense<0xFF800000> : vector<8xf32>
      %129 = vector.multi_reduction <maximumf>, %126, %cst_67 [1] : vector<8x8xf32> to vector<8xf32>
      %130 = vector.shape_cast %129 : vector<8xf32> to vector<8x1xf32>
      %131 = arith.maximumf %128, %130 : vector<8x1xf32>
      %132 = arith.subf %128, %131 : vector<8x1xf32>
      %133 = math.exp %132 : vector<8x1xf32>
      %134 = vector.broadcast %131 : vector<8x1xf32> to vector<8x8xf32>
      %135 = arith.subf %126, %134 : vector<8x8xf32>
      %136 = math.exp %135 : vector<8x8xf32>
      %c2_68 = arith.constant 2 : index
      %c0_69 = arith.constant 0 : index
      %c0_70 = arith.constant 0 : index
      %137 = vector.load %arg13[%c2_68, %c0_69, %c0_70] : memref<4x8x1xf32, #tpu.memory_space<vmem>>, vector<1x8x1xf32>
      %138 = vector.shape_cast %137 : vector<1x8x1xf32> to vector<8x1xf32>
      %139 = arith.mulf %133, %138 : vector<8x1xf32>
      %cst_71 = arith.constant dense<0.000000e+00> : vector<8xf32>
      %140 = vector.multi_reduction <add>, %136, %cst_71 [1] : vector<8x8xf32> to vector<8xf32>
      %141 = vector.shape_cast %140 : vector<8xf32> to vector<8x1xf32>
      %142 = arith.addf %139, %141 : vector<8x1xf32>
      %c2_72 = arith.constant 2 : index
      %c0_73 = arith.constant 0 : index
      %c0_74 = arith.constant 0 : index
      %143 = vector.load %arg13[%c2_72, %c0_73, %c0_74] : memref<4x8x1xf32, #tpu.memory_space<vmem>>, vector<1x8x1xf32>
      %144 = vector.shape_cast %143 : vector<1x8x1xf32> to vector<8x1xf32>
      %145 = vector.shape_cast %142 : vector<8x1xf32> to vector<1x8x1xf32>
      tpu.vector_store %arg13[%c2_72, %c0_73, %c0_74], %145 {strides = array<i32>} : memref<4x8x1xf32, #tpu.memory_space<vmem>>, vector<1x8x1xf32>,
      %c2_75 = arith.constant 2 : index
      %c0_76 = arith.constant 0 : index
      %c0_77 = arith.constant 0 : index
      %146 = vector.load %arg14[%c2_75, %c0_76, %c0_77] : memref<4x8x32xf32, #tpu.memory_space<vmem>>, vector<1x8x32xf32>
      %147 = vector.shape_cast %146 : vector<1x8x32xf32> to vector<8x32xf32>
      %148 = vector.broadcast %133 : vector<8x1xf32> to vector<8x32xf32>
      %149 = arith.mulf %148, %147 : vector<8x32xf32>
      %150 = arith.truncf %136 : vector<8x8xf32> to vector<8x8xbf16>
      %151 = vector.extract_strided_slice %13 {offsets = [0, 64], sizes = [8, 32], strides = [1, 1]} : vector<8x128xbf16> to vector<8x32xbf16>
      %cst_78 = arith.constant dense<0.000000e+00> : vector<8x32xf32>
      %152 = tpu.matmul %150, %151, %cst_78 {dimension_numbers = #tpu.dot_dimension_numbers<[1], [0], [0], [1], [0, 0, 1, 1], [], []>} : vector<8x8xbf16>, vector<8x32xbf16>, vector<8x32xf32> -> vector<8x32xf32>
      %153 = arith.addf %149, %152 : vector<8x32xf32>
      %c2_79 = arith.constant 2 : index
      %c0_80 = arith.constant 0 : index
      %c0_81 = arith.constant 0 : index
      %154 = vector.load %arg14[%c2_79, %c0_80, %c0_81] : memref<4x8x32xf32, #tpu.memory_space<vmem>>, vector<1x8x32xf32>
      %155 = vector.shape_cast %154 : vector<1x8x32xf32> to vector<8x32xf32>
      %156 = vector.shape_cast %153 : vector<8x32xf32> to vector<1x8x32xf32>
      tpu.vector_store %arg14[%c2_79, %c0_80, %c0_81], %156 {strides = array<i32>} : memref<4x8x32xf32, #tpu.memory_space<vmem>>, vector<1x8x32xf32>,
      %c2_82 = arith.constant 2 : index
      %c0_83 = arith.constant 0 : index
      %c0_84 = arith.constant 0 : index
      %157 = vector.load %arg12[%c2_82, %c0_83, %c0_84] : memref<4x8x1xf32, #tpu.memory_space<vmem>>, vector<1x8x1xf32>
      %158 = vector.shape_cast %157 : vector<1x8x1xf32> to vector<8x1xf32>
      %159 = vector.shape_cast %131 : vector<8x1xf32> to vector<1x8x1xf32>
      tpu.vector_store %arg12[%c2_82, %c0_83, %c0_84], %159 {strides = array<i32>} : memref<4x8x1xf32, #tpu.memory_space<vmem>>, vector<1x8x1xf32>,
      %160 = vector.extract_strided_slice %11 {offsets = [0, 96], sizes = [8, 16], strides = [1, 1]} : vector<8x128xf32> to vector<8x16xf32>
      %161 = vector.extract_strided_slice %11 {offsets = [0, 112], sizes = [8, 16], strides = [1, 1]} : vector<8x128xf32> to vector<8x16xf32>
      %162 = arith.mulf %160, %14 : vector<8x16xf32>
      %163 = arith.mulf %161, %15 : vector<8x16xf32>
      %164 = arith.subf %162, %163 : vector<8x16xf32>
      %165 = arith.truncf %164 : vector<8x16xf32> to vector<8x16xbf16>
      %166 = arith.mulf %161, %14 : vector<8x16xf32>
      %167 = arith.mulf %160, %15 : vector<8x16xf32>
      %168 = arith.addf %166, %167 : vector<8x16xf32>
      %169 = arith.truncf %168 : vector<8x16xf32> to vector<8x16xbf16>
      %c0_85 = arith.constant 0 : index
      %c96 = arith.constant 96 : index
      %170 = vector.load %arg11[%c0_85, %c96] : memref<8x128xbf16, #tpu.memory_space<vmem>>, vector<8x16xbf16>
      %c0_86 = arith.constant 0 : index
      %c112 = arith.constant 112 : index
      %171 = vector.load %arg11[%c0_86, %c112] : memref<8x128xbf16, #tpu.memory_space<vmem>>, vector<8x16xbf16>
      %cst_87 = arith.constant dense<0.000000e+00> : vector<8x8xf32>
      %172 = tpu.matmul %170, %165, %cst_87 {dimension_numbers = #tpu.dot_dimension_numbers<[1], [1], [0], [0], [0, 0, 1, 0], [], []>} : vector<8x16xbf16>, vector<8x16xbf16>, vector<8x8xf32> -> vector<8x8xf32>
      %cst_88 = arith.constant dense<0.000000e+00> : vector<8x8xf32>
      %173 = tpu.matmul %171, %169, %cst_88 {dimension_numbers = #tpu.dot_dimension_numbers<[1], [1], [0], [0], [0, 0, 1, 0], [], []>} : vector<8x16xbf16>, vector<8x16xbf16>, vector<8x8xf32> -> vector<8x8xf32>
      %174 = arith.addf %172, %173 : vector<8x8xf32>
      %c3 = arith.constant 3 : index
      %c0_89 = arith.constant 0 : index
      %c0_90 = arith.constant 0 : index
      %175 = vector.load %arg12[%c3, %c0_89, %c0_90] : memref<4x8x1xf32, #tpu.memory_space<vmem>>, vector<1x8x1xf32>
      %176 = vector.shape_cast %175 : vector<1x8x1xf32> to vector<8x1xf32>
      %cst_91 = arith.constant dense<0xFF800000> : vector<8xf32>
      %177 = vector.multi_reduction <maximumf>, %174, %cst_91 [1] : vector<8x8xf32> to vector<8xf32>
      %178 = vector.shape_cast %177 : vector<8xf32> to vector<8x1xf32>
      %179 = arith.maximumf %176, %178 : vector<8x1xf32>
      %180 = arith.subf %176, %179 : vector<8x1xf32>
      %181 = math.exp %180 : vector<8x1xf32>
      %182 = vector.broadcast %179 : vector<8x1xf32> to vector<8x8xf32>
      %183 = arith.subf %174, %182 : vector<8x8xf32>
      %184 = math.exp %183 : vector<8x8xf32>
      %c3_92 = arith.constant 3 : index
      %c0_93 = arith.constant 0 : index
      %c0_94 = arith.constant 0 : index
      %185 = vector.load %arg13[%c3_92, %c0_93, %c0_94] : memref<4x8x1xf32, #tpu.memory_space<vmem>>, vector<1x8x1xf32>
      %186 = vector.shape_cast %185 : vector<1x8x1xf32> to vector<8x1xf32>
      %187 = arith.mulf %181, %186 : vector<8x1xf32>
      %cst_95 = arith.constant dense<0.000000e+00> : vector<8xf32>
      %188 = vector.multi_reduction <add>, %184, %cst_95 [1] : vector<8x8xf32> to vector<8xf32>
      %189 = vector.shape_cast %188 : vector<8xf32> to vector<8x1xf32>
      %190 = arith.addf %187, %189 : vector<8x1xf32>
      %c3_96 = arith.constant 3 : index
      %c0_97 = arith.constant 0 : index
      %c0_98 = arith.constant 0 : index
      %191 = vector.load %arg13[%c3_96, %c0_97, %c0_98] : memref<4x8x1xf32, #tpu.memory_space<vmem>>, vector<1x8x1xf32>
      %192 = vector.shape_cast %191 : vector<1x8x1xf32> to vector<8x1xf32>
      %193 = vector.shape_cast %190 : vector<8x1xf32> to vector<1x8x1xf32>
      tpu.vector_store %arg13[%c3_96, %c0_97, %c0_98], %193 {strides = array<i32>} : memref<4x8x1xf32, #tpu.memory_space<vmem>>, vector<1x8x1xf32>,
      %c3_99 = arith.constant 3 : index
      %c0_100 = arith.constant 0 : index
      %c0_101 = arith.constant 0 : index
      %194 = vector.load %arg14[%c3_99, %c0_100, %c0_101] : memref<4x8x32xf32, #tpu.memory_space<vmem>>, vector<1x8x32xf32>
      %195 = vector.shape_cast %194 : vector<1x8x32xf32> to vector<8x32xf32>
      %196 = vector.broadcast %181 : vector<8x1xf32> to vector<8x32xf32>
      %197 = arith.mulf %196, %195 : vector<8x32xf32>
      %198 = arith.truncf %184 : vector<8x8xf32> to vector<8x8xbf16>
      %199 = vector.extract_strided_slice %13 {offsets = [0, 96], sizes = [8, 32], strides = [1, 1]} : vector<8x128xbf16> to vector<8x32xbf16>
      %cst_102 = arith.constant dense<0.000000e+00> : vector<8x32xf32>
      %200 = tpu.matmul %198, %199, %cst_102 {dimension_numbers = #tpu.dot_dimension_numbers<[1], [0], [0], [1], [0, 0, 1, 1], [], []>} : vector<8x8xbf16>, vector<8x32xbf16>, vector<8x32xf32> -> vector<8x32xf32>
      %201 = arith.addf %197, %200 : vector<8x32xf32>
      %c3_103 = arith.constant 3 : index
      %c0_104 = arith.constant 0 : index
      %c0_105 = arith.constant 0 : index
      %202 = vector.load %arg14[%c3_103, %c0_104, %c0_105] : memref<4x8x32xf32, #tpu.memory_space<vmem>>, vector<1x8x32xf32>
      %203 = vector.shape_cast %202 : vector<1x8x32xf32> to vector<8x32xf32>
      %204 = vector.shape_cast %201 : vector<8x32xf32> to vector<1x8x32xf32>
      tpu.vector_store %arg14[%c3_103, %c0_104, %c0_105], %204 {strides = array<i32>} : memref<4x8x32xf32, #tpu.memory_space<vmem>>, vector<1x8x32xf32>,
      %c3_106 = arith.constant 3 : index
      %c0_107 = arith.constant 0 : index
      %c0_108 = arith.constant 0 : index
      %205 = vector.load %arg12[%c3_106, %c0_107, %c0_108] : memref<4x8x1xf32, #tpu.memory_space<vmem>>, vector<1x8x1xf32>
      %206 = vector.shape_cast %205 : vector<1x8x1xf32> to vector<8x1xf32>
      %207 = vector.shape_cast %179 : vector<8x1xf32> to vector<1x8x1xf32>
      tpu.vector_store %arg12[%c3_106, %c0_107, %c0_108], %207 {strides = array<i32>} : memref<4x8x1xf32, #tpu.memory_space<vmem>>, vector<1x8x1xf32>,
    } else {
    }
    %6 = arith.cmpi eq, %arg2, %arg1 : i32
    %7 = arith.extui %6 : i1 to i32
    %c0_i32_2 = arith.constant 0 : i32
    %8 = arith.cmpi ne, %7, %c0_i32_2 : i32
    scf.if %8 {
      %c0 = arith.constant 0 : index
      %c0_3 = arith.constant 0 : index
      %c0_4 = arith.constant 0 : index
      %9 = vector.load %arg4[%c0, %c0_3, %c0_4] : memref<1x8x128xbf16, #tpu.memory_space<vmem>>, vector<1x8x128xbf16>
      %10 = vector.shape_cast %9 : vector<1x8x128xbf16> to vector<8x128xbf16>
      %11 = arith.extf %10 : vector<8x128xbf16> to vector<8x128xf32>
      %c0_5 = arith.constant 0 : index
      %c0_6 = arith.constant 0 : index
      %c0_7 = arith.constant 0 : index
      %12 = vector.load %arg5[%c0_5, %c0_6, %c0_7] : memref<1x8x128xbf16, #tpu.memory_space<vmem>>, vector<1x8x128xbf16>
      %13 = vector.shape_cast %12 : vector<1x8x128xbf16> to vector<8x128xbf16>
      %c0_8 = arith.constant 0 : index
      %c0_9 = arith.constant 0 : index
      %14 = vector.load %arg8[%c0_8, %c0_9] : memref<8x16xf32, #tpu.memory_space<vmem>>, vector<8x16xf32>
      %c0_10 = arith.constant 0 : index
      %c0_11 = arith.constant 0 : index
      %15 = vector.load %arg9[%c0_10, %c0_11] : memref<8x16xf32, #tpu.memory_space<vmem>>, vector<8x16xf32>
      %c8_i32 = arith.constant 8 : i32
      %16 = arith.muli %arg1, %c8_i32 : i32
      %17 = tpu.iota {dimensions = array<i32: 0>} : vector<8x8xi32>
      %18 = vector.broadcast %16 : i32 to vector<8x8xi32>
      %19 = arith.addi %18, %17 : vector<8x8xi32>
      %c8_i32_12 = arith.constant 8 : i32
      %20 = arith.muli %arg2, %c8_i32_12 : i32
      %21 = tpu.iota {dimensions = array<i32: 1>} : vector<8x8xi32>
      %22 = vector.broadcast %20 : i32 to vector<8x8xi32>
      %23 = arith.addi %22, %21 : vector<8x8xi32>
      %24 = arith.cmpi sle, %23, %19 : vector<8x8xi32>
      %25 = vector.extract_strided_slice %11 {offsets = [0, 0], sizes = [8, 16], strides = [1, 1]} : vector<8x128xf32> to vector<8x16xf32>
      %26 = vector.extract_strided_slice %11 {offsets = [0, 16], sizes = [8, 16], strides = [1, 1]} : vector<8x128xf32> to vector<8x16xf32>
      %27 = arith.mulf %25, %14 : vector<8x16xf32>
      %28 = arith.mulf %26, %15 : vector<8x16xf32>
      %29 = arith.subf %27, %28 : vector<8x16xf32>
      %30 = arith.truncf %29 : vector<8x16xf32> to vector<8x16xbf16>
      %31 = arith.mulf %26, %14 : vector<8x16xf32>
      %32 = arith.mulf %25, %15 : vector<8x16xf32>
      %33 = arith.addf %31, %32 : vector<8x16xf32>
      %34 = arith.truncf %33 : vector<8x16xf32> to vector<8x16xbf16>
      %c0_13 = arith.constant 0 : index
      %c0_14 = arith.constant 0 : index
      %35 = vector.load %arg11[%c0_13, %c0_14] : memref<8x128xbf16, #tpu.memory_space<vmem>>, vector<8x16xbf16>
      %c0_15 = arith.constant 0 : index
      %c16 = arith.constant 16 : index
      %36 = vector.load %arg11[%c0_15, %c16] : memref<8x128xbf16, #tpu.memory_space<vmem>>, vector<8x16xbf16>
      %cst = arith.constant dense<0.000000e+00> : vector<8x8xf32>
      %37 = tpu.matmul %35, %30, %cst {dimension_numbers = #tpu.dot_dimension_numbers<[1], [1], [0], [0], [0, 0, 1, 0], [], []>} : vector<8x16xbf16>, vector<8x16xbf16>, vector<8x8xf32> -> vector<8x8xf32>
      %cst_16 = arith.constant dense<0.000000e+00> : vector<8x8xf32>
      %38 = tpu.matmul %36, %34, %cst_16 {dimension_numbers = #tpu.dot_dimension_numbers<[1], [1], [0], [0], [0, 0, 1, 0], [], []>} : vector<8x16xbf16>, vector<8x16xbf16>, vector<8x8xf32> -> vector<8x8xf32>
      %39 = arith.addf %37, %38 : vector<8x8xf32>
      %cst_17 = arith.constant -1.000000e+30 : f32
      %40 = vector.broadcast %cst_17 : f32 to vector<8x8xf32>
      %41 = arith.select %24, %39, %40 : vector<8x8xi1>, vector<8x8xf32>
      %c0_18 = arith.constant 0 : index
      %c0_19 = arith.constant 0 : index
      %c0_20 = arith.constant 0 : index
      %42 = vector.load %arg12[%c0_18, %c0_19, %c0_20] : memref<4x8x1xf32, #tpu.memory_space<vmem>>, vector<1x8x1xf32>
      %43 = vector.shape_cast %42 : vector<1x8x1xf32> to vector<8x1xf32>
      %cst_21 = arith.constant dense<0xFF800000> : vector<8xf32>
      %44 = vector.multi_reduction <maximumf>, %41, %cst_21 [1] : vector<8x8xf32> to vector<8xf32>
      %45 = vector.shape_cast %44 : vector<8xf32> to vector<8x1xf32>
      %46 = arith.maximumf %43, %45 : vector<8x1xf32>
      %47 = arith.subf %43, %46 : vector<8x1xf32>
      %48 = math.exp %47 : vector<8x1xf32>
      %49 = vector.broadcast %46 : vector<8x1xf32> to vector<8x8xf32>
      %50 = arith.subf %41, %49 : vector<8x8xf32>
      %51 = math.exp %50 : vector<8x8xf32>
      %c0_22 = arith.constant 0 : index
      %c0_23 = arith.constant 0 : index
      %c0_24 = arith.constant 0 : index
      %52 = vector.load %arg13[%c0_22, %c0_23, %c0_24] : memref<4x8x1xf32, #tpu.memory_space<vmem>>, vector<1x8x1xf32>
      %53 = vector.shape_cast %52 : vector<1x8x1xf32> to vector<8x1xf32>
      %54 = arith.mulf %48, %53 : vector<8x1xf32>
      %cst_25 = arith.constant dense<0.000000e+00> : vector<8xf32>
      %55 = vector.multi_reduction <add>, %51, %cst_25 [1] : vector<8x8xf32> to vector<8xf32>
      %56 = vector.shape_cast %55 : vector<8xf32> to vector<8x1xf32>
      %57 = arith.addf %54, %56 : vector<8x1xf32>
      %c0_26 = arith.constant 0 : index
      %c0_27 = arith.constant 0 : index
      %c0_28 = arith.constant 0 : index
      %58 = vector.load %arg13[%c0_26, %c0_27, %c0_28] : memref<4x8x1xf32, #tpu.memory_space<vmem>>, vector<1x8x1xf32>
      %59 = vector.shape_cast %58 : vector<1x8x1xf32> to vector<8x1xf32>
      %60 = vector.shape_cast %57 : vector<8x1xf32> to vector<1x8x1xf32>
      tpu.vector_store %arg13[%c0_26, %c0_27, %c0_28], %60 {strides = array<i32>} : memref<4x8x1xf32, #tpu.memory_space<vmem>>, vector<1x8x1xf32>,
      %c0_29 = arith.constant 0 : index
      %c0_30 = arith.constant 0 : index
      %c0_31 = arith.constant 0 : index
      %61 = vector.load %arg14[%c0_29, %c0_30, %c0_31] : memref<4x8x32xf32, #tpu.memory_space<vmem>>, vector<1x8x32xf32>
      %62 = vector.shape_cast %61 : vector<1x8x32xf32> to vector<8x32xf32>
      %63 = vector.broadcast %48 : vector<8x1xf32> to vector<8x32xf32>
      %64 = arith.mulf %63, %62 : vector<8x32xf32>
      %65 = arith.truncf %51 : vector<8x8xf32> to vector<8x8xbf16>
      %66 = vector.extract_strided_slice %13 {offsets = [0, 0], sizes = [8, 32], strides = [1, 1]} : vector<8x128xbf16> to vector<8x32xbf16>
      %cst_32 = arith.constant dense<0.000000e+00> : vector<8x32xf32>
      %67 = tpu.matmul %65, %66, %cst_32 {dimension_numbers = #tpu.dot_dimension_numbers<[1], [0], [0], [1], [0, 0, 1, 1], [], []>} : vector<8x8xbf16>, vector<8x32xbf16>, vector<8x32xf32> -> vector<8x32xf32>
      %68 = arith.addf %64, %67 : vector<8x32xf32>
      %c0_33 = arith.constant 0 : index
      %c0_34 = arith.constant 0 : index
      %c0_35 = arith.constant 0 : index
      %69 = vector.load %arg14[%c0_33, %c0_34, %c0_35] : memref<4x8x32xf32, #tpu.memory_space<vmem>>, vector<1x8x32xf32>
      %70 = vector.shape_cast %69 : vector<1x8x32xf32> to vector<8x32xf32>
      %71 = vector.shape_cast %68 : vector<8x32xf32> to vector<1x8x32xf32>
      tpu.vector_store %arg14[%c0_33, %c0_34, %c0_35], %71 {strides = array<i32>} : memref<4x8x32xf32, #tpu.memory_space<vmem>>, vector<1x8x32xf32>,
      %c0_36 = arith.constant 0 : index
      %c0_37 = arith.constant 0 : index
      %c0_38 = arith.constant 0 : index
      %72 = vector.load %arg12[%c0_36, %c0_37, %c0_38] : memref<4x8x1xf32, #tpu.memory_space<vmem>>, vector<1x8x1xf32>
      %73 = vector.shape_cast %72 : vector<1x8x1xf32> to vector<8x1xf32>
      %74 = vector.shape_cast %46 : vector<8x1xf32> to vector<1x8x1xf32>
      tpu.vector_store %arg12[%c0_36, %c0_37, %c0_38], %74 {strides = array<i32>} : memref<4x8x1xf32, #tpu.memory_space<vmem>>, vector<1x8x1xf32>,
      %75 = vector.extract_strided_slice %11 {offsets = [0, 32], sizes = [8, 16], strides = [1, 1]} : vector<8x128xf32> to vector<8x16xf32>
      %76 = vector.extract_strided_slice %11 {offsets = [0, 48], sizes = [8, 16], strides = [1, 1]} : vector<8x128xf32> to vector<8x16xf32>
      %77 = arith.mulf %75, %14 : vector<8x16xf32>
      %78 = arith.mulf %76, %15 : vector<8x16xf32>
      %79 = arith.subf %77, %78 : vector<8x16xf32>
      %80 = arith.truncf %79 : vector<8x16xf32> to vector<8x16xbf16>
      %81 = arith.mulf %76, %14 : vector<8x16xf32>
      %82 = arith.mulf %75, %15 : vector<8x16xf32>
      %83 = arith.addf %81, %82 : vector<8x16xf32>
      %84 = arith.truncf %83 : vector<8x16xf32> to vector<8x16xbf16>
      %c0_39 = arith.constant 0 : index
      %c32 = arith.constant 32 : index
      %85 = vector.load %arg11[%c0_39, %c32] : memref<8x128xbf16, #tpu.memory_space<vmem>>, vector<8x16xbf16>
      %c0_40 = arith.constant 0 : index
      %c48 = arith.constant 48 : index
      %86 = vector.load %arg11[%c0_40, %c48] : memref<8x128xbf16, #tpu.memory_space<vmem>>, vector<8x16xbf16>
      %cst_41 = arith.constant dense<0.000000e+00> : vector<8x8xf32>
      %87 = tpu.matmul %85, %80, %cst_41 {dimension_numbers = #tpu.dot_dimension_numbers<[1], [1], [0], [0], [0, 0, 1, 0], [], []>} : vector<8x16xbf16>, vector<8x16xbf16>, vector<8x8xf32> -> vector<8x8xf32>
      %cst_42 = arith.constant dense<0.000000e+00> : vector<8x8xf32>
      %88 = tpu.matmul %86, %84, %cst_42 {dimension_numbers = #tpu.dot_dimension_numbers<[1], [1], [0], [0], [0, 0, 1, 0], [], []>} : vector<8x16xbf16>, vector<8x16xbf16>, vector<8x8xf32> -> vector<8x8xf32>
      %89 = arith.addf %87, %88 : vector<8x8xf32>
      %cst_43 = arith.constant -1.000000e+30 : f32
      %90 = vector.broadcast %cst_43 : f32 to vector<8x8xf32>
      %91 = arith.select %24, %89, %90 : vector<8x8xi1>, vector<8x8xf32>
      %c1 = arith.constant 1 : index
      %c0_44 = arith.constant 0 : index
      %c0_45 = arith.constant 0 : index
      %92 = vector.load %arg12[%c1, %c0_44, %c0_45] : memref<4x8x1xf32, #tpu.memory_space<vmem>>, vector<1x8x1xf32>
      %93 = vector.shape_cast %92 : vector<1x8x1xf32> to vector<8x1xf32>
      %cst_46 = arith.constant dense<0xFF800000> : vector<8xf32>
      %94 = vector.multi_reduction <maximumf>, %91, %cst_46 [1] : vector<8x8xf32> to vector<8xf32>
      %95 = vector.shape_cast %94 : vector<8xf32> to vector<8x1xf32>
      %96 = arith.maximumf %93, %95 : vector<8x1xf32>
      %97 = arith.subf %93, %96 : vector<8x1xf32>
      %98 = math.exp %97 : vector<8x1xf32>
      %99 = vector.broadcast %96 : vector<8x1xf32> to vector<8x8xf32>
      %100 = arith.subf %91, %99 : vector<8x8xf32>
      %101 = math.exp %100 : vector<8x8xf32>
      %c1_47 = arith.constant 1 : index
      %c0_48 = arith.constant 0 : index
      %c0_49 = arith.constant 0 : index
      %102 = vector.load %arg13[%c1_47, %c0_48, %c0_49] : memref<4x8x1xf32, #tpu.memory_space<vmem>>, vector<1x8x1xf32>
      %103 = vector.shape_cast %102 : vector<1x8x1xf32> to vector<8x1xf32>
      %104 = arith.mulf %98, %103 : vector<8x1xf32>
      %cst_50 = arith.constant dense<0.000000e+00> : vector<8xf32>
      %105 = vector.multi_reduction <add>, %101, %cst_50 [1] : vector<8x8xf32> to vector<8xf32>
      %106 = vector.shape_cast %105 : vector<8xf32> to vector<8x1xf32>
      %107 = arith.addf %104, %106 : vector<8x1xf32>
      %c1_51 = arith.constant 1 : index
      %c0_52 = arith.constant 0 : index
      %c0_53 = arith.constant 0 : index
      %108 = vector.load %arg13[%c1_51, %c0_52, %c0_53] : memref<4x8x1xf32, #tpu.memory_space<vmem>>, vector<1x8x1xf32>
      %109 = vector.shape_cast %108 : vector<1x8x1xf32> to vector<8x1xf32>
      %110 = vector.shape_cast %107 : vector<8x1xf32> to vector<1x8x1xf32>
      tpu.vector_store %arg13[%c1_51, %c0_52, %c0_53], %110 {strides = array<i32>} : memref<4x8x1xf32, #tpu.memory_space<vmem>>, vector<1x8x1xf32>,
      %c1_54 = arith.constant 1 : index
      %c0_55 = arith.constant 0 : index
      %c0_56 = arith.constant 0 : index
      %111 = vector.load %arg14[%c1_54, %c0_55, %c0_56] : memref<4x8x32xf32, #tpu.memory_space<vmem>>, vector<1x8x32xf32>
      %112 = vector.shape_cast %111 : vector<1x8x32xf32> to vector<8x32xf32>
      %113 = vector.broadcast %98 : vector<8x1xf32> to vector<8x32xf32>
      %114 = arith.mulf %113, %112 : vector<8x32xf32>
      %115 = arith.truncf %101 : vector<8x8xf32> to vector<8x8xbf16>
      %116 = vector.extract_strided_slice %13 {offsets = [0, 32], sizes = [8, 32], strides = [1, 1]} : vector<8x128xbf16> to vector<8x32xbf16>
      %cst_57 = arith.constant dense<0.000000e+00> : vector<8x32xf32>
      %117 = tpu.matmul %115, %116, %cst_57 {dimension_numbers = #tpu.dot_dimension_numbers<[1], [0], [0], [1], [0, 0, 1, 1], [], []>} : vector<8x8xbf16>, vector<8x32xbf16>, vector<8x32xf32> -> vector<8x32xf32>
      %118 = arith.addf %114, %117 : vector<8x32xf32>
      %c1_58 = arith.constant 1 : index
      %c0_59 = arith.constant 0 : index
      %c0_60 = arith.constant 0 : index
      %119 = vector.load %arg14[%c1_58, %c0_59, %c0_60] : memref<4x8x32xf32, #tpu.memory_space<vmem>>, vector<1x8x32xf32>
      %120 = vector.shape_cast %119 : vector<1x8x32xf32> to vector<8x32xf32>
      %121 = vector.shape_cast %118 : vector<8x32xf32> to vector<1x8x32xf32>
      tpu.vector_store %arg14[%c1_58, %c0_59, %c0_60], %121 {strides = array<i32>} : memref<4x8x32xf32, #tpu.memory_space<vmem>>, vector<1x8x32xf32>,
      %c1_61 = arith.constant 1 : index
      %c0_62 = arith.constant 0 : index
      %c0_63 = arith.constant 0 : index
      %122 = vector.load %arg12[%c1_61, %c0_62, %c0_63] : memref<4x8x1xf32, #tpu.memory_space<vmem>>, vector<1x8x1xf32>
      %123 = vector.shape_cast %122 : vector<1x8x1xf32> to vector<8x1xf32>
      %124 = vector.shape_cast %96 : vector<8x1xf32> to vector<1x8x1xf32>
      tpu.vector_store %arg12[%c1_61, %c0_62, %c0_63], %124 {strides = array<i32>} : memref<4x8x1xf32, #tpu.memory_space<vmem>>, vector<1x8x1xf32>,
      %125 = vector.extract_strided_slice %11 {offsets = [0, 64], sizes = [8, 16], strides = [1, 1]} : vector<8x128xf32> to vector<8x16xf32>
      %126 = vector.extract_strided_slice %11 {offsets = [0, 80], sizes = [8, 16], strides = [1, 1]} : vector<8x128xf32> to vector<8x16xf32>
      %127 = arith.mulf %125, %14 : vector<8x16xf32>
      %128 = arith.mulf %126, %15 : vector<8x16xf32>
      %129 = arith.subf %127, %128 : vector<8x16xf32>
      %130 = arith.truncf %129 : vector<8x16xf32> to vector<8x16xbf16>
      %131 = arith.mulf %126, %14 : vector<8x16xf32>
      %132 = arith.mulf %125, %15 : vector<8x16xf32>
      %133 = arith.addf %131, %132 : vector<8x16xf32>
      %134 = arith.truncf %133 : vector<8x16xf32> to vector<8x16xbf16>
      %c0_64 = arith.constant 0 : index
      %c64 = arith.constant 64 : index
      %135 = vector.load %arg11[%c0_64, %c64] : memref<8x128xbf16, #tpu.memory_space<vmem>>, vector<8x16xbf16>
      %c0_65 = arith.constant 0 : index
      %c80 = arith.constant 80 : index
      %136 = vector.load %arg11[%c0_65, %c80] : memref<8x128xbf16, #tpu.memory_space<vmem>>, vector<8x16xbf16>
      %cst_66 = arith.constant dense<0.000000e+00> : vector<8x8xf32>
      %137 = tpu.matmul %135, %130, %cst_66 {dimension_numbers = #tpu.dot_dimension_numbers<[1], [1], [0], [0], [0, 0, 1, 0], [], []>} : vector<8x16xbf16>, vector<8x16xbf16>, vector<8x8xf32> -> vector<8x8xf32>
      %cst_67 = arith.constant dense<0.000000e+00> : vector<8x8xf32>
      %138 = tpu.matmul %136, %134, %cst_67 {dimension_numbers = #tpu.dot_dimension_numbers<[1], [1], [0], [0], [0, 0, 1, 0], [], []>} : vector<8x16xbf16>, vector<8x16xbf16>, vector<8x8xf32> -> vector<8x8xf32>
      %139 = arith.addf %137, %138 : vector<8x8xf32>
      %cst_68 = arith.constant -1.000000e+30 : f32
      %140 = vector.broadcast %cst_68 : f32 to vector<8x8xf32>
      %141 = arith.select %24, %139, %140 : vector<8x8xi1>, vector<8x8xf32>
      %c2 = arith.constant 2 : index
      %c0_69 = arith.constant 0 : index
      %c0_70 = arith.constant 0 : index
      %142 = vector.load %arg12[%c2, %c0_69, %c0_70] : memref<4x8x1xf32, #tpu.memory_space<vmem>>, vector<1x8x1xf32>
      %143 = vector.shape_cast %142 : vector<1x8x1xf32> to vector<8x1xf32>
      %cst_71 = arith.constant dense<0xFF800000> : vector<8xf32>
      %144 = vector.multi_reduction <maximumf>, %141, %cst_71 [1] : vector<8x8xf32> to vector<8xf32>
      %145 = vector.shape_cast %144 : vector<8xf32> to vector<8x1xf32>
      %146 = arith.maximumf %143, %145 : vector<8x1xf32>
      %147 = arith.subf %143, %146 : vector<8x1xf32>
      %148 = math.exp %147 : vector<8x1xf32>
      %149 = vector.broadcast %146 : vector<8x1xf32> to vector<8x8xf32>
      %150 = arith.subf %141, %149 : vector<8x8xf32>
      %151 = math.exp %150 : vector<8x8xf32>
      %c2_72 = arith.constant 2 : index
      %c0_73 = arith.constant 0 : index
      %c0_74 = arith.constant 0 : index
      %152 = vector.load %arg13[%c2_72, %c0_73, %c0_74] : memref<4x8x1xf32, #tpu.memory_space<vmem>>, vector<1x8x1xf32>
      %153 = vector.shape_cast %152 : vector<1x8x1xf32> to vector<8x1xf32>
      %154 = arith.mulf %148, %153 : vector<8x1xf32>
      %cst_75 = arith.constant dense<0.000000e+00> : vector<8xf32>
      %155 = vector.multi_reduction <add>, %151, %cst_75 [1] : vector<8x8xf32> to vector<8xf32>
      %156 = vector.shape_cast %155 : vector<8xf32> to vector<8x1xf32>
      %157 = arith.addf %154, %156 : vector<8x1xf32>
      %c2_76 = arith.constant 2 : index
      %c0_77 = arith.constant 0 : index
      %c0_78 = arith.constant 0 : index
      %158 = vector.load %arg13[%c2_76, %c0_77, %c0_78] : memref<4x8x1xf32, #tpu.memory_space<vmem>>, vector<1x8x1xf32>
      %159 = vector.shape_cast %158 : vector<1x8x1xf32> to vector<8x1xf32>
      %160 = vector.shape_cast %157 : vector<8x1xf32> to vector<1x8x1xf32>
      tpu.vector_store %arg13[%c2_76, %c0_77, %c0_78], %160 {strides = array<i32>} : memref<4x8x1xf32, #tpu.memory_space<vmem>>, vector<1x8x1xf32>,
      %c2_79 = arith.constant 2 : index
      %c0_80 = arith.constant 0 : index
      %c0_81 = arith.constant 0 : index
      %161 = vector.load %arg14[%c2_79, %c0_80, %c0_81] : memref<4x8x32xf32, #tpu.memory_space<vmem>>, vector<1x8x32xf32>
      %162 = vector.shape_cast %161 : vector<1x8x32xf32> to vector<8x32xf32>
      %163 = vector.broadcast %148 : vector<8x1xf32> to vector<8x32xf32>
      %164 = arith.mulf %163, %162 : vector<8x32xf32>
      %165 = arith.truncf %151 : vector<8x8xf32> to vector<8x8xbf16>
      %166 = vector.extract_strided_slice %13 {offsets = [0, 64], sizes = [8, 32], strides = [1, 1]} : vector<8x128xbf16> to vector<8x32xbf16>
      %cst_82 = arith.constant dense<0.000000e+00> : vector<8x32xf32>
      %167 = tpu.matmul %165, %166, %cst_82 {dimension_numbers = #tpu.dot_dimension_numbers<[1], [0], [0], [1], [0, 0, 1, 1], [], []>} : vector<8x8xbf16>, vector<8x32xbf16>, vector<8x32xf32> -> vector<8x32xf32>
      %168 = arith.addf %164, %167 : vector<8x32xf32>
      %c2_83 = arith.constant 2 : index
      %c0_84 = arith.constant 0 : index
      %c0_85 = arith.constant 0 : index
      %169 = vector.load %arg14[%c2_83, %c0_84, %c0_85] : memref<4x8x32xf32, #tpu.memory_space<vmem>>, vector<1x8x32xf32>
      %170 = vector.shape_cast %169 : vector<1x8x32xf32> to vector<8x32xf32>
      %171 = vector.shape_cast %168 : vector<8x32xf32> to vector<1x8x32xf32>
      tpu.vector_store %arg14[%c2_83, %c0_84, %c0_85], %171 {strides = array<i32>} : memref<4x8x32xf32, #tpu.memory_space<vmem>>, vector<1x8x32xf32>,
      %c2_86 = arith.constant 2 : index
      %c0_87 = arith.constant 0 : index
      %c0_88 = arith.constant 0 : index
      %172 = vector.load %arg12[%c2_86, %c0_87, %c0_88] : memref<4x8x1xf32, #tpu.memory_space<vmem>>, vector<1x8x1xf32>
      %173 = vector.shape_cast %172 : vector<1x8x1xf32> to vector<8x1xf32>
      %174 = vector.shape_cast %146 : vector<8x1xf32> to vector<1x8x1xf32>
      tpu.vector_store %arg12[%c2_86, %c0_87, %c0_88], %174 {strides = array<i32>} : memref<4x8x1xf32, #tpu.memory_space<vmem>>, vector<1x8x1xf32>,
      %175 = vector.extract_strided_slice %11 {offsets = [0, 96], sizes = [8, 16], strides = [1, 1]} : vector<8x128xf32> to vector<8x16xf32>
      %176 = vector.extract_strided_slice %11 {offsets = [0, 112], sizes = [8, 16], strides = [1, 1]} : vector<8x128xf32> to vector<8x16xf32>
      %177 = arith.mulf %175, %14 : vector<8x16xf32>
      %178 = arith.mulf %176, %15 : vector<8x16xf32>
      %179 = arith.subf %177, %178 : vector<8x16xf32>
      %180 = arith.truncf %179 : vector<8x16xf32> to vector<8x16xbf16>
      %181 = arith.mulf %176, %14 : vector<8x16xf32>
      %182 = arith.mulf %175, %15 : vector<8x16xf32>
      %183 = arith.addf %181, %182 : vector<8x16xf32>
      %184 = arith.truncf %183 : vector<8x16xf32> to vector<8x16xbf16>
      %c0_89 = arith.constant 0 : index
      %c96 = arith.constant 96 : index
      %185 = vector.load %arg11[%c0_89, %c96] : memref<8x128xbf16, #tpu.memory_space<vmem>>, vector<8x16xbf16>
      %c0_90 = arith.constant 0 : index
      %c112 = arith.constant 112 : index
      %186 = vector.load %arg11[%c0_90, %c112] : memref<8x128xbf16, #tpu.memory_space<vmem>>, vector<8x16xbf16>
      %cst_91 = arith.constant dense<0.000000e+00> : vector<8x8xf32>
      %187 = tpu.matmul %185, %180, %cst_91 {dimension_numbers = #tpu.dot_dimension_numbers<[1], [1], [0], [0], [0, 0, 1, 0], [], []>} : vector<8x16xbf16>, vector<8x16xbf16>, vector<8x8xf32> -> vector<8x8xf32>
      %cst_92 = arith.constant dense<0.000000e+00> : vector<8x8xf32>
      %188 = tpu.matmul %186, %184, %cst_92 {dimension_numbers = #tpu.dot_dimension_numbers<[1], [1], [0], [0], [0, 0, 1, 0], [], []>} : vector<8x16xbf16>, vector<8x16xbf16>, vector<8x8xf32> -> vector<8x8xf32>
      %189 = arith.addf %187, %188 : vector<8x8xf32>
      %cst_93 = arith.constant -1.000000e+30 : f32
      %190 = vector.broadcast %cst_93 : f32 to vector<8x8xf32>
      %191 = arith.select %24, %189, %190 : vector<8x8xi1>, vector<8x8xf32>
      %c3 = arith.constant 3 : index
      %c0_94 = arith.constant 0 : index
      %c0_95 = arith.constant 0 : index
      %192 = vector.load %arg12[%c3, %c0_94, %c0_95] : memref<4x8x1xf32, #tpu.memory_space<vmem>>, vector<1x8x1xf32>
      %193 = vector.shape_cast %192 : vector<1x8x1xf32> to vector<8x1xf32>
      %cst_96 = arith.constant dense<0xFF800000> : vector<8xf32>
      %194 = vector.multi_reduction <maximumf>, %191, %cst_96 [1] : vector<8x8xf32> to vector<8xf32>
      %195 = vector.shape_cast %194 : vector<8xf32> to vector<8x1xf32>
      %196 = arith.maximumf %193, %195 : vector<8x1xf32>
      %197 = arith.subf %193, %196 : vector<8x1xf32>
      %198 = math.exp %197 : vector<8x1xf32>
      %199 = vector.broadcast %196 : vector<8x1xf32> to vector<8x8xf32>
      %200 = arith.subf %191, %199 : vector<8x8xf32>
      %201 = math.exp %200 : vector<8x8xf32>
      %c3_97 = arith.constant 3 : index
      %c0_98 = arith.constant 0 : index
      %c0_99 = arith.constant 0 : index
      %202 = vector.load %arg13[%c3_97, %c0_98, %c0_99] : memref<4x8x1xf32, #tpu.memory_space<vmem>>, vector<1x8x1xf32>
      %203 = vector.shape_cast %202 : vector<1x8x1xf32> to vector<8x1xf32>
      %204 = arith.mulf %198, %203 : vector<8x1xf32>
      %cst_100 = arith.constant dense<0.000000e+00> : vector<8xf32>
      %205 = vector.multi_reduction <add>, %201, %cst_100 [1] : vector<8x8xf32> to vector<8xf32>
      %206 = vector.shape_cast %205 : vector<8xf32> to vector<8x1xf32>
      %207 = arith.addf %204, %206 : vector<8x1xf32>
      %c3_101 = arith.constant 3 : index
      %c0_102 = arith.constant 0 : index
      %c0_103 = arith.constant 0 : index
      %208 = vector.load %arg13[%c3_101, %c0_102, %c0_103] : memref<4x8x1xf32, #tpu.memory_space<vmem>>, vector<1x8x1xf32>
      %209 = vector.shape_cast %208 : vector<1x8x1xf32> to vector<8x1xf32>
      %210 = vector.shape_cast %207 : vector<8x1xf32> to vector<1x8x1xf32>
      tpu.vector_store %arg13[%c3_101, %c0_102, %c0_103], %210 {strides = array<i32>} : memref<4x8x1xf32, #tpu.memory_space<vmem>>, vector<1x8x1xf32>,
      %c3_104 = arith.constant 3 : index
      %c0_105 = arith.constant 0 : index
      %c0_106 = arith.constant 0 : index
      %211 = vector.load %arg14[%c3_104, %c0_105, %c0_106] : memref<4x8x32xf32, #tpu.memory_space<vmem>>, vector<1x8x32xf32>
      %212 = vector.shape_cast %211 : vector<1x8x32xf32> to vector<8x32xf32>
      %213 = vector.broadcast %198 : vector<8x1xf32> to vector<8x32xf32>
      %214 = arith.mulf %213, %212 : vector<8x32xf32>
      %215 = arith.truncf %201 : vector<8x8xf32> to vector<8x8xbf16>
      %216 = vector.extract_strided_slice %13 {offsets = [0, 96], sizes = [8, 32], strides = [1, 1]} : vector<8x128xbf16> to vector<8x32xbf16>
      %cst_107 = arith.constant dense<0.000000e+00> : vector<8x32xf32>
      %217 = tpu.matmul %215, %216, %cst_107 {dimension_numbers = #tpu.dot_dimension_numbers<[1], [0], [0], [1], [0, 0, 1, 1], [], []>} : vector<8x8xbf16>, vector<8x32xbf16>, vector<8x32xf32> -> vector<8x32xf32>
      %218 = arith.addf %214, %217 : vector<8x32xf32>
      %c3_108 = arith.constant 3 : index
      %c0_109 = arith.constant 0 : index
      %c0_110 = arith.constant 0 : index
      %219 = vector.load %arg14[%c3_108, %c0_109, %c0_110] : memref<4x8x32xf32, #tpu.memory_space<vmem>>, vector<1x8x32xf32>
      %220 = vector.shape_cast %219 : vector<1x8x32xf32> to vector<8x32xf32>
      %221 = vector.shape_cast %218 : vector<8x32xf32> to vector<1x8x32xf32>
      tpu.vector_store %arg14[%c3_108, %c0_109, %c0_110], %221 {strides = array<i32>} : memref<4x8x32xf32, #tpu.memory_space<vmem>>, vector<1x8x32xf32>,
      %c3_111 = arith.constant 3 : index
      %c0_112 = arith.constant 0 : index
      %c0_113 = arith.constant 0 : index
      %222 = vector.load %arg12[%c3_111, %c0_112, %c0_113] : memref<4x8x1xf32, #tpu.memory_space<vmem>>, vector<1x8x1xf32>
      %223 = vector.shape_cast %222 : vector<1x8x1xf32> to vector<8x1xf32>
      %224 = vector.shape_cast %196 : vector<8x1xf32> to vector<1x8x1xf32>
      tpu.vector_store %arg12[%c3_111, %c0_112, %c0_113], %224 {strides = array<i32>} : memref<4x8x1xf32, #tpu.memory_space<vmem>>, vector<1x8x1xf32>,
      %c0_114 = arith.constant 0 : index
      %c0_115 = arith.constant 0 : index
      %c0_116 = arith.constant 0 : index
      %225 = vector.load %arg13[%c0_114, %c0_115, %c0_116] : memref<4x8x1xf32, #tpu.memory_space<vmem>>, vector<4x8x1xf32>
      %226 = tpu.reciprocal %225 {approx = true} : vector<4x8x1xf32> -> vector<4x8x1xf32>
      %c0_117 = arith.constant 0 : index
      %c0_118 = arith.constant 0 : index
      %c0_119 = arith.constant 0 : index
      %227 = vector.load %arg14[%c0_117, %c0_118, %c0_119] : memref<4x8x32xf32, #tpu.memory_space<vmem>>, vector<1x8x32xf32>
      %228 = vector.shape_cast %227 : vector<1x8x32xf32> to vector<8x32xf32>
      %229 = vector.extract_strided_slice %226 {offsets = [0, 0, 0], sizes = [1, 8, 1], strides = [1, 1, 1]} : vector<4x8x1xf32> to vector<1x8x1xf32>
      %230 = vector.shape_cast %229 : vector<1x8x1xf32> to vector<8x1xf32>
      %231 = vector.broadcast %230 : vector<8x1xf32> to vector<8x32xf32>
      %232 = arith.mulf %228, %231 : vector<8x32xf32>
      %c1_120 = arith.constant 1 : index
      %c0_121 = arith.constant 0 : index
      %c0_122 = arith.constant 0 : index
      %233 = vector.load %arg14[%c1_120, %c0_121, %c0_122] : memref<4x8x32xf32, #tpu.memory_space<vmem>>, vector<1x8x32xf32>
      %234 = vector.shape_cast %233 : vector<1x8x32xf32> to vector<8x32xf32>
      %235 = vector.extract_strided_slice %226 {offsets = [1, 0, 0], sizes = [1, 8, 1], strides = [1, 1, 1]} : vector<4x8x1xf32> to vector<1x8x1xf32>
      %236 = vector.shape_cast %235 : vector<1x8x1xf32> to vector<8x1xf32>
      %237 = vector.broadcast %236 : vector<8x1xf32> to vector<8x32xf32>
      %238 = arith.mulf %234, %237 : vector<8x32xf32>
      %c2_123 = arith.constant 2 : index
      %c0_124 = arith.constant 0 : index
      %c0_125 = arith.constant 0 : index
      %239 = vector.load %arg14[%c2_123, %c0_124, %c0_125] : memref<4x8x32xf32, #tpu.memory_space<vmem>>, vector<1x8x32xf32>
      %240 = vector.shape_cast %239 : vector<1x8x32xf32> to vector<8x32xf32>
      %241 = vector.extract_strided_slice %226 {offsets = [2, 0, 0], sizes = [1, 8, 1], strides = [1, 1, 1]} : vector<4x8x1xf32> to vector<1x8x1xf32>
      %242 = vector.shape_cast %241 : vector<1x8x1xf32> to vector<8x1xf32>
      %243 = vector.broadcast %242 : vector<8x1xf32> to vector<8x32xf32>
      %244 = arith.mulf %240, %243 : vector<8x32xf32>
      %c3_126 = arith.constant 3 : index
      %c0_127 = arith.constant 0 : index
      %c0_128 = arith.constant 0 : index
      %245 = vector.load %arg14[%c3_126, %c0_127, %c0_128] : memref<4x8x32xf32, #tpu.memory_space<vmem>>, vector<1x8x32xf32>
      %246 = vector.shape_cast %245 : vector<1x8x32xf32> to vector<8x32xf32>
      %247 = vector.extract_strided_slice %226 {offsets = [3, 0, 0], sizes = [1, 8, 1], strides = [1, 1, 1]} : vector<4x8x1xf32> to vector<1x8x1xf32>
      %248 = vector.shape_cast %247 : vector<1x8x1xf32> to vector<8x1xf32>
      %249 = vector.broadcast %248 : vector<8x1xf32> to vector<8x32xf32>
      %250 = arith.mulf %246, %249 : vector<8x32xf32>
      %251 = tpu.concatenate %232, %238, %244, %250 in 1 : vector<8x32xf32>, vector<8x32xf32>, vector<8x32xf32>, vector<8x32xf32> -> vector<8x128xf32>
      %252 = arith.truncf %251 : vector<8x128xf32> to vector<8x128xbf16>
      %c0_129 = arith.constant 0 : index
      %c0_130 = arith.constant 0 : index
      %c0_131 = arith.constant 0 : index
      %253 = vector.load %arg10[%c0_129, %c0_130, %c0_131] : memref<1x8x128xbf16, #tpu.memory_space<vmem>>, vector<1x8x128xbf16>
      %254 = vector.shape_cast %253 : vector<1x8x128xbf16> to vector<8x128xbf16>
      %255 = vector.shape_cast %252 : vector<8x128xbf16> to vector<1x8x128xbf16>
      tpu.vector_store %arg10[%c0_129, %c0_130, %c0_131], %255 {strides = array<i32>} : memref<1x8x128xbf16, #tpu.memory_space<vmem>>, vector<1x8x128xbf16>,
    } else {
    }
    return
  }
  func.func @transform_0(%arg0: i32, %arg1: i32, %arg2: i32) -> (i32, i32, i32) {
    %c0_i32 = arith.constant 0 : i32
    %c0_i32_0 = arith.constant 0 : i32
    return %arg0, %arg1, %c0_i32 : i32, i32, i32
  }
  func.func @transform_1(%arg0: i32, %arg1: i32, %arg2: i32) -> (i32, i32, i32) {
    %0 = arith.minsi %arg2, %arg1 : i32
    %c1_i32 = arith.constant 1 : i32
    %c0_i32 = arith.constant 0 : i32
    return %arg0, %0, %c1_i32 : i32, i32, i32
  }
  func.func @transform_2(%arg0: i32, %arg1: i32, %arg2: i32) -> (i32, i32, i32) {
    %0 = arith.minsi %arg2, %arg1 : i32
    %c2_i32 = arith.constant 2 : i32
    %c0_i32 = arith.constant 0 : i32
    return %arg0, %0, %c2_i32 : i32, i32, i32
  }
  func.func @transform_3(%arg0: i32, %arg1: i32, %arg2: i32) -> (i32, i32) {
    %c0_i32 = arith.constant 0 : i32
    %c0_i32_0 = arith.constant 0 : i32
    return %arg1, %c0_i32 : i32, i32
  }
  func.func @transform_4(%arg0: i32, %arg1: i32, %arg2: i32) -> (i32, i32) {
    %c0_i32 = arith.constant 0 : i32
    %c0_i32_0 = arith.constant 0 : i32
    return %arg1, %c0_i32 : i32, i32
  }
  func.func @transform_5(%arg0: i32, %arg1: i32, %arg2: i32) -> (i32, i32) {
    %0 = arith.minsi %arg2, %arg1 : i32
    %c0_i32 = arith.constant 0 : i32
    %c0_i32_0 = arith.constant 0 : i32
    return %0, %c0_i32 : i32, i32
  }
  func.func @transform_6(%arg0: i32, %arg1: i32, %arg2: i32) -> (i32, i32) {
    %0 = arith.minsi %arg2, %arg1 : i32
    %c0_i32 = arith.constant 0 : i32
    %c0_i32_0 = arith.constant 0 : i32
    return %0, %c0_i32 : i32, i32
  }
  func.func @transform_7(%arg0: i32, %arg1: i32, %arg2: i32) -> (i32, i32, i32) {
    %c0_i32 = arith.constant 0 : i32
    %c0_i32_0 = arith.constant 0 : i32
    return %arg0, %arg1, %c0_i32 : i32, i32, i32
  }
}

module attributes {stable_mosaic.version = 11 : i64} {
  func.func @_matmul_kernel_direct(%arg0: i32, %arg1: i32, %arg2: i32, %arg3: memref<32x128xbf16, #tpu.memory_space<vmem>>, %arg4: memref<128x128xbf16, #tpu.memory_space<vmem>>, %arg5: memref<32x128xf32, #tpu.memory_space<vmem>>) attributes {dimension_semantics = [#tpu.dimension_semantics<parallel>, #tpu.dimension_semantics<parallel>, #tpu.dimension_semantics<arbitrary>], iteration_bounds = array<i64: 1, 1, 1>, scalar_prefetch = 0 : i64, scratch_operands = 0 : i64, tpu.core_type = #tpu.core_type<tc>, window_params = [{transform_indices = @transform_0, window_bounds = array<i64: 32, 128>}, {transform_indices = @transform_1, window_bounds = array<i64: 128, 128>}, {transform_indices = @transform_2, window_bounds = array<i64: 32, 128>}]} {
    %c0_i32 = arith.constant 0 : i32
    %0 = arith.cmpi eq, %arg2, %c0_i32 : i32
    %1 = arith.extui %0 : i1 to i32
    %c0_i32_0 = arith.constant 0 : i32
    %2 = arith.cmpi ne, %1, %c0_i32_0 : i32
    scf.if %2 {
      %cst_8 = arith.constant 0.000000e+00 : f32
      %9 = vector.broadcast %cst_8 : f32 to vector<32x128xf32>
      %c0_9 = arith.constant 0 : index
      %c0_10 = arith.constant 0 : index
      %10 = vector.load %arg5[%c0_9, %c0_10] : memref<32x128xf32, #tpu.memory_space<vmem>>, vector<32x128xf32>
      tpu.vector_store %arg5[%c0_9, %c0_10], %9 {strides = array<i32>} : memref<32x128xf32, #tpu.memory_space<vmem>>, vector<32x128xf32>,
    } else {
    }
    %c0 = arith.constant 0 : index
    %c0_1 = arith.constant 0 : index
    %3 = vector.load %arg5[%c0, %c0_1] : memref<32x128xf32, #tpu.memory_space<vmem>>, vector<32x128xf32>
    %c0_2 = arith.constant 0 : index
    %c0_3 = arith.constant 0 : index
    %4 = vector.load %arg3[%c0_2, %c0_3] : memref<32x128xbf16, #tpu.memory_space<vmem>>, vector<32x128xbf16>
    %c0_4 = arith.constant 0 : index
    %c0_5 = arith.constant 0 : index
    %5 = vector.load %arg4[%c0_4, %c0_5] : memref<128x128xbf16, #tpu.memory_space<vmem>>, vector<128x128xbf16>
    %cst = arith.constant dense<0.000000e+00> : vector<32x128xf32>
    %6 = tpu.matmul %4, %5, %cst {dimension_numbers = #tpu.dot_dimension_numbers<[1], [0], [0], [1], [0, 0, 1, 1], [], []>} : vector<32x128xbf16>, vector<128x128xbf16>, vector<32x128xf32> -> vector<32x128xf32>
    %7 = arith.addf %3, %6 : vector<32x128xf32>
    %c0_6 = arith.constant 0 : index
    %c0_7 = arith.constant 0 : index
    %8 = vector.load %arg5[%c0_6, %c0_7] : memref<32x128xf32, #tpu.memory_space<vmem>>, vector<32x128xf32>
    tpu.vector_store %arg5[%c0_6, %c0_7], %7 {strides = array<i32>} : memref<32x128xf32, #tpu.memory_space<vmem>>, vector<32x128xf32>,
    return
  }
  func.func @transform_0(%arg0: i32, %arg1: i32, %arg2: i32) -> (i32, i32) {
    %c0_i32 = arith.constant 0 : i32
    return %arg0, %arg2 : i32, i32
  }
  func.func @transform_1(%arg0: i32, %arg1: i32, %arg2: i32) -> (i32, i32) {
    %c0_i32 = arith.constant 0 : i32
    return %arg2, %arg1 : i32, i32
  }
  func.func @transform_2(%arg0: i32, %arg1: i32, %arg2: i32) -> (i32, i32) {
    %c0_i32 = arith.constant 0 : i32
    return %arg0, %arg1 : i32, i32
  }
}

module attributes {stable_mosaic.version = 11 : i64} {
  func.func @_matmul_kernel_acc(%arg0: i32, %arg1: i32, %arg2: i32, %arg3: memref<32x128xbf16, #tpu.memory_space<vmem>>, %arg4: memref<128x256xbf16, #tpu.memory_space<vmem>>, %arg5: memref<32x256xbf16, #tpu.memory_space<vmem>>, %arg6: memref<32x256xf32, #tpu.memory_space<vmem>>) attributes {dimension_semantics = [#tpu.dimension_semantics<parallel>, #tpu.dimension_semantics<parallel>, #tpu.dimension_semantics<arbitrary>], iteration_bounds = array<i64: 1, 2, 1>, scalar_prefetch = 0 : i64, scratch_operands = 1 : i64, tpu.core_type = #tpu.core_type<tc>, window_params = [{transform_indices = @transform_0, window_bounds = array<i64: 32, 128>}, {transform_indices = @transform_1, window_bounds = array<i64: 128, 256>}, {transform_indices = @transform_2, window_bounds = array<i64: 32, 256>}]} {
    %c0_i32 = arith.constant 0 : i32
    %0 = arith.cmpi eq, %arg2, %c0_i32 : i32
    %1 = arith.extui %0 : i1 to i32
    %c0_i32_0 = arith.constant 0 : i32
    %2 = arith.cmpi ne, %1, %c0_i32_0 : i32
    scf.if %2 {
      %cst_10 = arith.constant 0.000000e+00 : f32
      %12 = vector.broadcast %cst_10 : f32 to vector<32x256xf32>
      %c0_11 = arith.constant 0 : index
      %c0_12 = arith.constant 0 : index
      %13 = vector.load %arg6[%c0_11, %c0_12] : memref<32x256xf32, #tpu.memory_space<vmem>>, vector<32x256xf32>
      tpu.vector_store %arg6[%c0_11, %c0_12], %12 {strides = array<i32>} : memref<32x256xf32, #tpu.memory_space<vmem>>, vector<32x256xf32>,
    } else {
    }
    %c0 = arith.constant 0 : index
    %c0_1 = arith.constant 0 : index
    %3 = vector.load %arg6[%c0, %c0_1] : memref<32x256xf32, #tpu.memory_space<vmem>>, vector<32x256xf32>
    %c0_2 = arith.constant 0 : index
    %c0_3 = arith.constant 0 : index
    %4 = vector.load %arg3[%c0_2, %c0_3] : memref<32x128xbf16, #tpu.memory_space<vmem>>, vector<32x128xbf16>
    %c0_4 = arith.constant 0 : index
    %c0_5 = arith.constant 0 : index
    %5 = vector.load %arg4[%c0_4, %c0_5] : memref<128x256xbf16, #tpu.memory_space<vmem>>, vector<128x256xbf16>
    %cst = arith.constant dense<0.000000e+00> : vector<32x256xf32>
    %6 = tpu.matmul %4, %5, %cst {dimension_numbers = #tpu.dot_dimension_numbers<[1], [0], [0], [1], [0, 0, 1, 1], [], []>} : vector<32x128xbf16>, vector<128x256xbf16>, vector<32x256xf32> -> vector<32x256xf32>
    %7 = arith.addf %3, %6 : vector<32x256xf32>
    %c0_6 = arith.constant 0 : index
    %c0_7 = arith.constant 0 : index
    %8 = vector.load %arg6[%c0_6, %c0_7] : memref<32x256xf32, #tpu.memory_space<vmem>>, vector<32x256xf32>
    tpu.vector_store %arg6[%c0_6, %c0_7], %7 {strides = array<i32>} : memref<32x256xf32, #tpu.memory_space<vmem>>, vector<32x256xf32>,
    %c0_i32_8 = arith.constant 0 : i32
    %9 = arith.cmpi eq, %arg2, %c0_i32_8 : i32
    %10 = arith.extui %9 : i1 to i32
    %c0_i32_9 = arith.constant 0 : i32
    %11 = arith.cmpi ne, %10, %c0_i32_9 : i32
    scf.if %11 {
      %c0_10 = arith.constant 0 : index
      %c0_11 = arith.constant 0 : index
      %12 = vector.load %arg6[%c0_10, %c0_11] : memref<32x256xf32, #tpu.memory_space<vmem>>, vector<32x256xf32>
      %cst_12 = arith.constant 5.000000e-01 : f32
      %13 = vector.broadcast %cst_12 : f32 to vector<32x256xf32>
      %14 = arith.mulf %13, %12 : vector<32x256xf32>
      %cst_13 = arith.constant 4.471500e-02 : f32
      %15 = vector.broadcast %cst_13 : f32 to vector<32x256xf32>
      %16 = arith.mulf %15, %12 : vector<32x256xf32>
      %17 = arith.mulf %16, %12 : vector<32x256xf32>
      %18 = arith.mulf %17, %12 : vector<32x256xf32>
      %19 = arith.addf %12, %18 : vector<32x256xf32>
      %cst_14 = arith.constant 0.797884583 : f32
      %20 = vector.broadcast %cst_14 : f32 to vector<32x256xf32>
      %21 = arith.mulf %20, %19 : vector<32x256xf32>
      %22 = math.tanh %21 : vector<32x256xf32>
      %cst_15 = arith.constant 1.000000e+00 : f32
      %23 = vector.broadcast %cst_15 : f32 to vector<32x256xf32>
      %24 = arith.addf %23, %22 : vector<32x256xf32>
      %25 = arith.mulf %14, %24 : vector<32x256xf32>
      %26 = arith.truncf %25 : vector<32x256xf32> to vector<32x256xbf16>
      %c0_16 = arith.constant 0 : index
      %c0_17 = arith.constant 0 : index
      %27 = vector.load %arg5[%c0_16, %c0_17] : memref<32x256xbf16, #tpu.memory_space<vmem>>, vector<32x256xbf16>
      tpu.vector_store %arg5[%c0_16, %c0_17], %26 {strides = array<i32>} : memref<32x256xbf16, #tpu.memory_space<vmem>>, vector<32x256xbf16>,
    } else {
    }
    return
  }
  func.func @transform_0(%arg0: i32, %arg1: i32, %arg2: i32) -> (i32, i32) {
    %c0_i32 = arith.constant 0 : i32
    return %arg0, %arg2 : i32, i32
  }
  func.func @transform_1(%arg0: i32, %arg1: i32, %arg2: i32) -> (i32, i32) {
    %c0_i32 = arith.constant 0 : i32
    return %arg2, %arg1 : i32, i32
  }
  func.func @transform_2(%arg0: i32, %arg1: i32, %arg2: i32) -> (i32, i32) {
    %c0_i32 = arith.constant 0 : i32
    return %arg0, %arg1 : i32, i32
  }
}

module attributes {stable_mosaic.version = 11 : i64} {
  func.func @_matmul_kernel_direct(%arg0: i32, %arg1: i32, %arg2: i32, %arg3: memref<32x256xbf16, #tpu.memory_space<vmem>>, %arg4: memref<256x128xbf16, #tpu.memory_space<vmem>>, %arg5: memref<32x128xf32, #tpu.memory_space<vmem>>) attributes {dimension_semantics = [#tpu.dimension_semantics<parallel>, #tpu.dimension_semantics<parallel>, #tpu.dimension_semantics<arbitrary>], iteration_bounds = array<i64: 1, 1, 2>, scalar_prefetch = 0 : i64, scratch_operands = 0 : i64, tpu.core_type = #tpu.core_type<tc>, window_params = [{transform_indices = @transform_0, window_bounds = array<i64: 32, 256>}, {transform_indices = @transform_1, window_bounds = array<i64: 256, 128>}, {transform_indices = @transform_2, window_bounds = array<i64: 32, 128>}]} {
    %c0_i32 = arith.constant 0 : i32
    %0 = arith.cmpi eq, %arg2, %c0_i32 : i32
    %1 = arith.extui %0 : i1 to i32
    %c0_i32_0 = arith.constant 0 : i32
    %2 = arith.cmpi ne, %1, %c0_i32_0 : i32
    scf.if %2 {
      %cst_8 = arith.constant 0.000000e+00 : f32
      %9 = vector.broadcast %cst_8 : f32 to vector<32x128xf32>
      %c0_9 = arith.constant 0 : index
      %c0_10 = arith.constant 0 : index
      %10 = vector.load %arg5[%c0_9, %c0_10] : memref<32x128xf32, #tpu.memory_space<vmem>>, vector<32x128xf32>
      tpu.vector_store %arg5[%c0_9, %c0_10], %9 {strides = array<i32>} : memref<32x128xf32, #tpu.memory_space<vmem>>, vector<32x128xf32>,
    } else {
    }
    %c0 = arith.constant 0 : index
    %c0_1 = arith.constant 0 : index
    %3 = vector.load %arg5[%c0, %c0_1] : memref<32x128xf32, #tpu.memory_space<vmem>>, vector<32x128xf32>
    %c0_2 = arith.constant 0 : index
    %c0_3 = arith.constant 0 : index
    %4 = vector.load %arg3[%c0_2, %c0_3] : memref<32x256xbf16, #tpu.memory_space<vmem>>, vector<32x256xbf16>
    %c0_4 = arith.constant 0 : index
    %c0_5 = arith.constant 0 : index
    %5 = vector.load %arg4[%c0_4, %c0_5] : memref<256x128xbf16, #tpu.memory_space<vmem>>, vector<256x128xbf16>
    %cst = arith.constant dense<0.000000e+00> : vector<32x128xf32>
    %6 = tpu.matmul %4, %5, %cst {dimension_numbers = #tpu.dot_dimension_numbers<[1], [0], [0], [1], [0, 0, 1, 1], [], []>} : vector<32x256xbf16>, vector<256x128xbf16>, vector<32x128xf32> -> vector<32x128xf32>
    %7 = arith.addf %3, %6 : vector<32x128xf32>
    %c0_6 = arith.constant 0 : index
    %c0_7 = arith.constant 0 : index
    %8 = vector.load %arg5[%c0_6, %c0_7] : memref<32x128xf32, #tpu.memory_space<vmem>>, vector<32x128xf32>
    tpu.vector_store %arg5[%c0_6, %c0_7], %7 {strides = array<i32>} : memref<32x128xf32, #tpu.memory_space<vmem>>, vector<32x128xf32>,
    return
  }
  func.func @transform_0(%arg0: i32, %arg1: i32, %arg2: i32) -> (i32, i32) {
    %c0_i32 = arith.constant 0 : i32
    return %arg0, %arg2 : i32, i32
  }
  func.func @transform_1(%arg0: i32, %arg1: i32, %arg2: i32) -> (i32, i32) {
    %c0_i32 = arith.constant 0 : i32
    return %arg2, %arg1 : i32, i32
  }
  func.func @transform_2(%arg0: i32, %arg1: i32, %arg2: i32) -> (i32, i32) {
    %c0_i32 = arith.constant 0 : i32
    return %arg0, %arg1 : i32, i32
  }
}

module attributes {stable_mosaic.version = 11 : i64} {
  func.func @_matmul_kernel_direct(%arg0: i32, %arg1: i32, %arg2: i32, %arg3: memref<32x128xbf16, #tpu.memory_space<vmem>>, %arg4: memref<128x256xbf16, #tpu.memory_space<vmem>>, %arg5: memref<32x256xf32, #tpu.memory_space<vmem>>) attributes {dimension_semantics = [#tpu.dimension_semantics<parallel>, #tpu.dimension_semantics<parallel>, #tpu.dimension_semantics<arbitrary>], iteration_bounds = array<i64: 1, 1, 1>, scalar_prefetch = 0 : i64, scratch_operands = 0 : i64, tpu.core_type = #tpu.core_type<tc>, window_params = [{transform_indices = @transform_0, window_bounds = array<i64: 32, 128>}, {transform_indices = @transform_1, window_bounds = array<i64: 128, 256>}, {transform_indices = @transform_2, window_bounds = array<i64: 32, 256>}]} {
    %c0_i32 = arith.constant 0 : i32
    %0 = arith.cmpi eq, %arg2, %c0_i32 : i32
    %1 = arith.extui %0 : i1 to i32
    %c0_i32_0 = arith.constant 0 : i32
    %2 = arith.cmpi ne, %1, %c0_i32_0 : i32
    scf.if %2 {
      %cst_8 = arith.constant 0.000000e+00 : f32
      %9 = vector.broadcast %cst_8 : f32 to vector<32x256xf32>
      %c0_9 = arith.constant 0 : index
      %c0_10 = arith.constant 0 : index
      %10 = vector.load %arg5[%c0_9, %c0_10] : memref<32x256xf32, #tpu.memory_space<vmem>>, vector<32x256xf32>
      tpu.vector_store %arg5[%c0_9, %c0_10], %9 {strides = array<i32>} : memref<32x256xf32, #tpu.memory_space<vmem>>, vector<32x256xf32>,
    } else {
    }
    %c0 = arith.constant 0 : index
    %c0_1 = arith.constant 0 : index
    %3 = vector.load %arg5[%c0, %c0_1] : memref<32x256xf32, #tpu.memory_space<vmem>>, vector<32x256xf32>
    %c0_2 = arith.constant 0 : index
    %c0_3 = arith.constant 0 : index
    %4 = vector.load %arg3[%c0_2, %c0_3] : memref<32x128xbf16, #tpu.memory_space<vmem>>, vector<32x128xbf16>
    %c0_4 = arith.constant 0 : index
    %c0_5 = arith.constant 0 : index
    %5 = vector.load %arg4[%c0_4, %c0_5] : memref<128x256xbf16, #tpu.memory_space<vmem>>, vector<128x256xbf16>
    %cst = arith.constant dense<0.000000e+00> : vector<32x256xf32>
    %6 = tpu.matmul %4, %5, %cst {dimension_numbers = #tpu.dot_dimension_numbers<[1], [0], [0], [1], [0, 0, 1, 1], [], []>} : vector<32x128xbf16>, vector<128x256xbf16>, vector<32x256xf32> -> vector<32x256xf32>
    %7 = arith.addf %3, %6 : vector<32x256xf32>
    %c0_6 = arith.constant 0 : index
    %c0_7 = arith.constant 0 : index
    %8 = vector.load %arg5[%c0_6, %c0_7] : memref<32x256xf32, #tpu.memory_space<vmem>>, vector<32x256xf32>
    tpu.vector_store %arg5[%c0_6, %c0_7], %7 {strides = array<i32>} : memref<32x256xf32, #tpu.memory_space<vmem>>, vector<32x256xf32>,
    return
  }
  func.func @transform_0(%arg0: i32, %arg1: i32, %arg2: i32) -> (i32, i32) {
    %c0_i32 = arith.constant 0 : i32
    return %arg0, %arg2 : i32, i32
  }
  func.func @transform_1(%arg0: i32, %arg1: i32, %arg2: i32) -> (i32, i32) {
    %c0_i32 = arith.constant 0 : i32
    return %arg2, %arg1 : i32, i32
  }
  func.func @transform_2(%arg0: i32, %arg1: i32, %arg2: i32) -> (i32, i32) {
    %c0_i32 = arith.constant 0 : i32
    return %arg0, %arg1 : i32, i32
  }
}

</mosaic_0001>

<llo_original>
// kernel: _lambda_.16
$region0: #{_lambda_.16}
  #allocation0 [shape = 'u32[]', space=smem, size = 0x4, offset = 0x4, fixed_abs, tag = 'smem constant byte address 0x4 - core index']
  #allocation1 [shape = 'u32[144,128]{1,0:T(1,128)}', space=vmem, size = 0x12000, scoped, tag = 'internal scratch']
  %s0 = inlined_call_operand.vmem [shape: f32[32,128], index: 0, kind: input, shape index: {}]
  %s1 = inlined_call_operand.vmem [shape: f32[1,128], index: 1, kind: input, shape index: {}]
  %s2 = inlined_call_operand.vmem [shape: f32[1,128], index: 2, kind: input, shape index: {}]
  %s3 = inlined_call_operand.vmem [shape: bf16[32,128], index: 3, kind: output, shape index: {}]
  %s4 = sld [smem:[#allocation0]]
  $region22: #{_lambda_.16} parent=0
    _
  %s6 = ssub.s32 1, %s4
  %s7 = scalar_select 0, %s6, %s4
  // Predicated region
  $region2: #{_lambda_.16} parent=0 // pred_check
    _
  $region3: #{_lambda_.16} parent=0 // pred_check_branch
    %9 = sbr.rel (0) target = $region5
  $region4: #{_lambda_.16} parent=0 // pred_region
    _
  $region5: #{_lambda_.16} parent=0 // pred_fallthru
    _
  // Predicated region
  $region6: #{_lambda_.16} parent=0 // pred_check
    _
  $region7: #{_lambda_.16} parent=0 // pred_check_branch
    %11 = sbr.rel (0) target = $region9
  $region8: #{_lambda_.16} parent=0 // pred_region
    _
  $region9: #{_lambda_.16} parent=0 // pred_fallthru
    _
  // Predicated region
  $region10: #{_lambda_.16} parent=0 // pred_check
    _
  $region11: #{_lambda_.16} parent=0 // pred_check_branch
    %13 = sbr.rel (0) target = $region13
  $region12: #{_lambda_.16} parent=0 // pred_region
    _
  $region13: #{_lambda_.16} parent=0 // pred_fallthru
    _
  %v14 = vld [vmem:[%s0] sm:$0xff]
  %v15 = vld [vmem:[%s0 + $0x8] sm:$0xff]
  %v16 = vld [vmem:[%s0 + $0x10] sm:$0xff]
  %v17 = vld [vmem:[%s0 + $0x18] sm:$0xff]
  %18 = vadd.xlane.f32.xlu0 %v14
  %v19 = vpop.xlane.xlu0 %18
  %20 = vadd.xlane.f32.xlu0 %v15
  %v21 = vpop.xlane.xlu0 %20
  %22 = vadd.xlane.f32.xlu0 %v16
  %v23 = vpop.xlane.xlu0 %22
  %24 = vadd.xlane.f32.xlu0 %v17
  %v25 = vpop.xlane.xlu0 %24
  %v26 = vrcp.pop 128.0
  %v27 = vmul.f32 %v19, %v26
  %v28 = vmul.f32 %v21, %v26
  %v29 = vmul.f32 %v23, %v26
  %v30 = vmul.f32 %v25, %v26
  %v31 = vsub.f32 %v14, %v27
  %v32 = vsub.f32 %v15, %v28
  %v33 = vsub.f32 %v16, %v29
  %v34 = vsub.f32 %v17, %v30
  %v35 = vmul.f32 %v31, %v31
  %v36 = vmul.f32 %v32, %v32
  %v37 = vmul.f32 %v33, %v33
  %v38 = vmul.f32 %v34, %v34
  %39 = vadd.xlane.f32.xlu0 %v35
  %v40 = vpop.xlane.xlu0 %39
  %41 = vadd.xlane.f32.xlu0 %v36
  %v42 = vpop.xlane.xlu0 %41
  %43 = vadd.xlane.f32.xlu0 %v37
  %v44 = vpop.xlane.xlu0 %43
  %45 = vadd.xlane.f32.xlu0 %v38
  %v46 = vpop.xlane.xlu0 %45
  %v47 = vmul.f32 %v40, %v26
  %v48 = vmul.f32 %v42, %v26
  %v49 = vmul.f32 %v44, %v26
  %v50 = vmul.f32 %v46, %v26
  %v51 = vadd.f32 %v47, 1e-05
  %v52 = vadd.f32 %v48, 1e-05
  %v53 = vadd.f32 %v49, 1e-05
  %v54 = vadd.f32 %v50, 1e-05
  %v55 = vrsqrt.pop %v51
  %v56 = vrsqrt.pop %v52
  %v57 = vrsqrt.pop %v53
  %v58 = vrsqrt.pop %v54
  %v59 = vmul.f32 %v31, %v55
  %v60 = vmul.f32 %v32, %v56
  %v61 = vmul.f32 %v33, %v57
  %v62 = vmul.f32 %v34, %v58
  %v63 = vld [vmem:[%s1] sm:$0x1]
  %v65 = vlaneseq
  %v66 = vshrl.u32 %v65, 7
  %v67 = vsub.s32 0, %v66
  %v68 = vrot.slane %v63, %v67
  %v70 = vmul.f32 %v59, %v68
  %v71 = vmul.f32 %v60, %v68
  %v72 = vmul.f32 %v61, %v68
  %v73 = vmul.f32 %v62, %v68
  %v74 = vld [vmem:[%s2] sm:$0x1]
  %v76 = vlaneseq
  %v77 = vshrl.u32 %v76, 7
  %v78 = vsub.s32 0, %v77
  %v79 = vrot.slane %v74, %v78
  %v81 = vadd.f32 %v70, %v79
  %v82 = vadd.f32 %v71, %v79
  %v83 = vadd.f32 %v72, %v79
  %v84 = vadd.f32 %v73, %v79
  %v85 = vpack.c.bf16 %v82, %v81
  %v86 = vpack.c.bf16 %v84, %v83
  %v89 = vunpack.c.l.b16 %v85
  %v90 = vunpack.c.h.b16 %v85
  %v91 = vunpack.c.l.b16 %v86
  %v92 = vunpack.c.h.b16 %v86
  %v93 = vpack.c.b16 %v89, %v89
  %v94 = vpack.c.b16 %v90, %v90
  %v95 = vpack.c.b16 %v91, %v91
  %v96 = vpack.c.b16 %v92, %v92
  %101 = vst [vmem:[%s3] sm:$0xf] %v93
  %102 = vst [vmem:[%s3 + $0x4] sm:$0xf] %v94
  %103 = vst [vmem:[%s3 + $0x8] sm:$0xf] %v95
  %104 = vst [vmem:[%s3 + $0xc] sm:$0xf] %v96
  // Predicated region
  $region14: #{_lambda_.16} parent=0 // pred_check
    _
  $region15: #{_lambda_.16} parent=0 // pred_check_branch
    %106 = sbr.rel (0) target = $region17
  $region16: #{_lambda_.16} parent=0 // pred_region
    _
  $region17: #{_lambda_.16} parent=0 // pred_fallthru
    _
  // Predicated region
  $region18: #{_lambda_.16} parent=0 // pred_check
    _
  $region19: #{_lambda_.16} parent=0 // pred_check_branch
    %108 = sbr.rel (0) target = $region21
  $region20: #{_lambda_.16} parent=0 // pred_region
    _
  $region21: #{_lambda_.16} parent=0 // pred_fallthru
    _

// kernel: _lambda_.17
$region0: #{_lambda_.17}
  #allocation0 [shape = 'u32[]', space=smem, size = 0x4, offset = 0x4, fixed_abs, tag = 'smem constant byte address 0x4 - core index']
  #allocation1 [shape = 'u32[144,128]{1,0:T(1,128)}', space=vmem, size = 0x12000, scoped, tag = 'internal scratch']
  #allocation2 [shape = 'f32[32,128]{1,0:T(8,128)}', space=vmem, size = 0x4000, scoped, tag = 'scratch operand']
  %s0 = inlined_call_operand.vmem [shape: bf16[32,128], index: 0, kind: input, shape index: {}]
  %s1 = inlined_call_operand.vmem [shape: bf16[128,384], index: 1, kind: input, shape index: {}]
  %s2 = inlined_call_operand.vmem [shape: bf16[32,384], index: 2, kind: output, shape index: {}]
  %s3 = sld [smem:[#allocation0]]
  $region127: #{_lambda_.17} parent=0
    _
  %s5 = ssub.s32 1, %s3
  %s6 = scalar_select 0, %s5, %s3
  $region1: #{_lambda_.17} parent=0
    #allocation3 [shape = 'u8[65536]{0}', space=vmem, size = 0x10000, scoped, tag = 'input window, operand 1']
    #allocation4 [shape = 'u8[16384]{0}', space=vmem, size = 0x4000, scoped, tag = 'output window, operand 0']
    loop: start=0, step=1, limit=5
    $region2: #{_lambda_.17} parent=1 // loop_pre_header
      _
    $region3: #{_lambda_.17} parent=1 // loop_header
      %s8 = sphi 0, %s12
      %p9 = scmp.ge.s32.totalorder %s8, 5
      %s15 = sphi 0, %s34
      %s16 = sphi 0, %s30
      %s17 = sphi 0, %s26
      %s18 = sphi 0, %s15
      %s19 = sphi 0, %s16
      %s20 = sphi 0, %s17
      %s21 = sphi 0, %s18
      %s22 = sphi 0, %s19
      %s23 = sphi 0, %s20
      %s39 = sphi 0, %s41
      %s42 = sphi 0, %s39
      %s43 = sphi 0, %s42
      %s59 = sphi 0, %s43
      %s67 = sphi 0, %s69
      %s70 = sphi 0, %s67
      %s71 = sphi 0, %s70
      %s87 = sphi 0, %s71
      %s95 = sphi 0, %s97
      %s98 = sphi 0, %s95
      %s99 = sphi 0, %s98
      %s115 = sphi 0, %s99
    $region4: #{_lambda_.17} parent=1 // loop_header_branch
      %11 = sbr.rel (%p9) target = $region8
    $region5: #{_lambda_.17} parent=1 // loop_body
      %s13 = ssub.s32 %s8, 1
      %s14 = ssub.s32 %s8, 2
      %s24 = sadd.s32 1, %s17
      %p25 = scmp.ge.s32.totalorder %s24, 1
      %s26 = scalar_select %p25, 0, %s24
      %s27 = sadd.s32 1, %s16
      %s28 = scalar_select %p25, %s27, %s16
      %p29 = scmp.ge.s32.totalorder %s28, 3
      %s30 = scalar_select %p29, 0, %s28
      %s31 = sadd.s32 1, %s15
      %s32 = scalar_select %p29, %s31, %s15
      %p33 = scmp.ge.s32.totalorder %s32, 1
      %s34 = scalar_select %p33, 0, %s32
      %s35 = ssub.s32 %s15, %s34
      %s36 = ssub.s32 %s17, %s26
      %s37 = sor.u32 %s35, %s36
      %p38 = scmp.eq.s32.totalorder %s37, 0
      %s40 = sadd.s32 %s39, 1
      %s41 = scalar_select %p38, %s39, %s40
      %p44 = pneg %p38
      %p45 = scmp.eq.s32.totalorder %s8, 2
      %p46 = por %p44, %p45
      %p47 = scmp.ne.s32.totalorder %s39, %s42
      %p48 = scmp.eq.s32.totalorder %s8, 0
      %p49 = por %p47, %p48
      %p50 = scmp.ne.s32.totalorder %s39, %s42
      %p51 = scmp.eq.s32.totalorder %s13, 2
      %p52 = por %p50, %p51
      %p53 = scmp.ne.s32.totalorder %s42, %s43
      %p54 = scmp.eq.s32.totalorder %s13, 0
      %p55 = por %p53, %p54
      %p56 = scmp.ne.s32.totalorder %s42, %s43
      %p57 = scmp.eq.s32.totalorder %s14, 2
      %p58 = por %p56, %p57
      %p60 = scmp.ne.s32.totalorder %s43, %s59
      %p61 = scmp.eq.s32.totalorder %s14, 0
      %p62 = por %p60, %p61
      %s63 = ssub.s32 %s17, %s26
      %s64 = ssub.s32 %s16, %s30
      %s65 = sor.u32 %s63, %s64
      %p66 = scmp.eq.s32.totalorder %s65, 0
      %s68 = sadd.s32 %s67, 1
      %s69 = scalar_select %p66, %s67, %s68
      %p72 = pneg %p66
      %p73 = scmp.eq.s32.totalorder %s8, 2
      %p74 = por %p72, %p73
      %p75 = scmp.ne.s32.totalorder %s67, %s70
      %p76 = scmp.eq.s32.totalorder %s8, 0
      %p77 = por %p75, %p76
      %p78 = scmp.ne.s32.totalorder %s67, %s70
      %p79 = scmp.eq.s32.totalorder %s13, 2
      %p80 = por %p78, %p79
      %p81 = scmp.ne.s32.totalorder %s70, %s71
      %p82 = scmp.eq.s32.totalorder %s13, 0
      %p83 = por %p81, %p82
      %p84 = scmp.ne.s32.totalorder %s70, %s71
      %p85 = scmp.eq.s32.totalorder %s14, 2
      %p86 = por %p84, %p85
      %p88 = scmp.ne.s32.totalorder %s71, %s87
      %p89 = scmp.eq.s32.totalorder %s14, 0
      %p90 = por %p88, %p89
      %s91 = ssub.s32 %s15, %s34
      %s92 = ssub.s32 %s16, %s30
      %s93 = sor.u32 %s91, %s92
      %p94 = scmp.eq.s32.totalorder %s93, 0
      %s96 = sadd.s32 %s95, 1
      %s97 = scalar_select %p94, %s95, %s96
      %p100 = pneg %p94
      %p101 = scmp.eq.s32.totalorder %s8, 2
      %p102 = por %p100, %p101
      %p103 = scmp.ne.s32.totalorder %s95, %s98
      %p104 = scmp.eq.s32.totalorder %s8, 0
      %p105 = por %p103, %p104
      %p106 = scmp.ne.s32.totalorder %s95, %s98
      %p107 = scmp.eq.s32.totalorder %s13, 2
      %p108 = por %p106, %p107
      %p109 = scmp.ne.s32.totalorder %s98, %s99
      %p110 = scmp.eq.s32.totalorder %s13, 0
      %p111 = por %p109, %p110
      %p112 = scmp.ne.s32.totalorder %s98, %s99
      %p113 = scmp.eq.s32.totalorder %s14, 2
      %p114 = por %p112, %p113
      %p116 = scmp.ne.s32.totalorder %s99, %s115
      %p117 = scmp.eq.s32.totalorder %s14, 0
      %p118 = por %p116, %p117
      %p119 = scmp.le.s32.totalorder 1, %s8
      %p120 = scmp.lt.s32.totalorder %s8, 4
      %p121 = pnand %p119, %p120
      %p122 = pneg %p121
      // Predicated region
      $region9: #{_lambda_.17} parent=5 // pred_check
        _
      $region10: #{_lambda_.17} parent=5 // pred_check_branch
        %124 = sbr.rel (%p121) target = $region12
      $region11: #{_lambda_.17} parent=5 // pred_region
        %s125 = ssub.s32 %s8, 1
        // Predicated region
        $region13: #{_lambda_.17} parent=11 // pred_check
          %p126 = pneg %p55
        $region14: #{_lambda_.17} parent=11 // pred_check_branch
          %128 = sbr.rel (%p126) target = $region16
        $region15: #{_lambda_.17} parent=11 // pred_region
          %s129 = smul.u32 4, %s18
          %p130 = scmp.lt.s32.totalorder %s129, 3
          %s131 = scalar_select %p130, %s129, 3
          %p132 = scmp.lt.s32.totalorder %s20, 0
          %s133 = scalar_select %p132, %s20, 0
          %s134 = sadd.s32 %s133, %s131
          %s135 = smul.addr %s134, 4
          %s136 = scalar_lea.vmem %s0, %s135
          %s137 = smul.u32 4, %s18
        $region16: #{_lambda_.17} parent=11 // pred_fallthru
          _
      $region12: #{_lambda_.17} parent=5 // pred_fallthru
        _
      %p138 = scmp.lt.s32.totalorder %s8, 3
      // Predicated region
      $region17: #{_lambda_.17} parent=5 // pred_check
        %p139 = pneg %p138
      $region18: #{_lambda_.17} parent=5 // pred_check_branch
        %141 = sbr.rel (%p139) target = $region20
      $region19: #{_lambda_.17} parent=5 // pred_region
        // Predicated region
        $region21: #{_lambda_.17} parent=19 // pred_check
          %p142 = pneg %p77
        $region22: #{_lambda_.17} parent=19 // pred_check_branch
          %144 = sbr.rel (%p142) target = $region24
        $region23: #{_lambda_.17} parent=19 // pred_region
          %s145 = sand.u32 %s67, 1
          %s146 = sand.u32 %s67, 1
          %s147 = smul.addr %s146, 64
          %s148 = scalar_lea.vmem [#allocation3], %s147
          %s149 = smul.u32 16, %s17
          %s150 = smul.addr %s149, 3
          %s151 = sadd.s32 %s16, %s150
          %s152 = smul.addr %s151, 4
          %s153 = scalar_lea.vmem %s1, %s152
          // Predicated region
          $region25: #{_lambda_.17} parent=23 // pred_check
            _
          $region26: #{_lambda_.17} parent=23 // pred_check_branch
            %155 = sbr.rel (0) target = $region28
          $region27: #{_lambda_.17} parent=23 // pred_region
            // Predicated region
            $region29: #{_lambda_.17} parent=27 // pred_check
              _
            $region30: #{_lambda_.17} parent=27 // pred_check_branch
              %157 = sbr.rel target = $region32
            $region31: #{_lambda_.17} parent=27 // pred_region
              // Predicated region
              $region44: #{_lambda_.17} parent=31 // pred_check
                _
              $region45: #{_lambda_.17} parent=31 // pred_check_branch
                %202 = sbr.rel (0) target = $region47
              $region46: #{_lambda_.17} parent=31 // pred_region
                loop: start=0, step=1, limit=1
                $region48: #{_lambda_.17} parent=46 // loop_pre_header
                  _
                $region49: #{_lambda_.17} parent=46 // loop_header
                  %s204 = sphi 0, %s208
                  %p205 = scmp.ge.s32.totalorder %s204, 1
                  %s209 = sphi %s153, %s153
                  %s210 = sphi %s148, %s148
                $region50: #{_lambda_.17} parent=46 // loop_header_branch
                  %207 = sbr.rel (%p205) target = $region54
                $region51: #{_lambda_.17} parent=46 // loop_body
                  _
                $region52: #{_lambda_.17} parent=46 // loop_footer
                  %s208 = sadd.s32 1, %s204
                $region53: #{_lambda_.17} parent=46 // loop_footer_branch
                  %203 = sbr.rel target = $region49
                $region54: #{_lambda_.17} parent=46 // loop_exit
                  _
                loop: start=0, step=1, limit=1
                $region55: #{_lambda_.17} parent=46 // loop_pre_header
                  _
                $region56: #{_lambda_.17} parent=46 // loop_header
                  %s213 = sphi 0, %s217
                  %p214 = scmp.ge.s32.totalorder %s213, 1
                  %s218 = sphi %s153, %s153
                  %s219 = sphi %s148, %s148
                $region57: #{_lambda_.17} parent=46 // loop_header_branch
                  %216 = sbr.rel (%p214) target = $region61
                $region58: #{_lambda_.17} parent=46 // loop_body
                  %v220 = vld [vmem:[%s218] sm:$0xf]
                  %221 = vst [vmem:[%s219] sm:$0xf] %v220
                  %v222 = vld [vmem:[%s218 + $0xc] sm:$0xf]
                  %223 = vst [vmem:[%s219 + $0x4] sm:$0xf] %v222
                  %v224 = vld [vmem:[%s218 + $0x18] sm:$0xf]
                  %225 = vst [vmem:[%s219 + $0x8] sm:$0xf] %v224
                  %v226 = vld [vmem:[%s218 + $0x24] sm:$0xf]
                  %227 = vst [vmem:[%s219 + $0xc] sm:$0xf] %v226
                  %v228 = vld [vmem:[%s218 + $0x30] sm:$0xf]
                  %229 = vst [vmem:[%s219 + $0x10] sm:$0xf] %v228
                  %v230 = vld [vmem:[%s218 + $0x3c] sm:$0xf]
                  %231 = vst [vmem:[%s219 + $0x14] sm:$0xf] %v230
                  %v232 = vld [vmem:[%s218 + $0x48] sm:$0xf]
                  %233 = vst [vmem:[%s219 + $0x18] sm:$0xf] %v232
                  %v234 = vld [vmem:[%s218 + $0x54] sm:$0xf]
                  %235 = vst [vmem:[%s219 + $0x1c] sm:$0xf] %v234
                  %v236 = vld [vmem:[%s218 + $0x60] sm:$0xf]
                  %237 = vst [vmem:[%s219 + $0x20] sm:$0xf] %v236
                  %v238 = vld [vmem:[%s218 + $0x6c] sm:$0xf]
                  %239 = vst [vmem:[%s219 + $0x24] sm:$0xf] %v238
                  %v240 = vld [vmem:[%s218 + $0x78] sm:$0xf]
                  %241 = vst [vmem:[%s219 + $0x28] sm:$0xf] %v240
                  %v242 = vld [vmem:[%s218 + $0x84] sm:$0xf]
                  %243 = vst [vmem:[%s219 + $0x2c] sm:$0xf] %v242
                  %v244 = vld [vmem:[%s218 + $0x90] sm:$0xf]
                  %245 = vst [vmem:[%s219 + $0x30] sm:$0xf] %v244
                  %v246 = vld [vmem:[%s218 + $0x9c] sm:$0xf]
                  %247 = vst [vmem:[%s219 + $0x34] sm:$0xf] %v246
                  %v248 = vld [vmem:[%s218 + $0xa8] sm:$0xf]
                  %249 = vst [vmem:[%s219 + $0x38] sm:$0xf] %v248
                  %v250 = vld [vmem:[%s218 + $0xb4] sm:$0xf]
                  %251 = vst [vmem:[%s219 + $0x3c] sm:$0xf] %v250
                $region59: #{_lambda_.17} parent=46 // loop_footer
                  %s217 = sadd.s32 1, %s213
                $region60: #{_lambda_.17} parent=46 // loop_footer_branch
                  %212 = sbr.rel target = $region56
                $region61: #{_lambda_.17} parent=46 // loop_exit
                  _
              $region47: #{_lambda_.17} parent=31 // pred_fallthru
                _
            $region32: #{_lambda_.17} parent=27 // pred_fallthru
              _
            // Predicated region
            $region33: #{_lambda_.17} parent=27 // pred_check
              _
            $region34: #{_lambda_.17} parent=27 // pred_check_branch
              %159 = sbr.rel (0) target = $region36
            $region35: #{_lambda_.17} parent=27 // pred_region
              loop: start=0, step=1, limit=1
              $region37: #{_lambda_.17} parent=35 // loop_pre_header
                _
              $region38: #{_lambda_.17} parent=35 // loop_header
                %s162 = sphi 0, %s166
                %p163 = scmp.ge.s32.totalorder %s162, 1
                %s167 = sphi %s153, %s153
                %s168 = sphi %s148, %s148
              $region39: #{_lambda_.17} parent=35 // loop_header_branch
                %165 = sbr.rel (%p163) target = $region43
              $region40: #{_lambda_.17} parent=35 // loop_body
                %v169 = vld [vmem:[%s167] sm:$0xf]
                %170 = vst [vmem:[%s168] sm:$0xf] %v169
                %v171 = vld [vmem:[%s167 + $0xc] sm:$0xf]
                %172 = vst [vmem:[%s168 + $0x4] sm:$0xf] %v171
                %v173 = vld [vmem:[%s167 + $0x18] sm:$0xf]
                %174 = vst [vmem:[%s168 + $0x8] sm:$0xf] %v173
                %v175 = vld [vmem:[%s167 + $0x24] sm:$0xf]
                %176 = vst [vmem:[%s168 + $0xc] sm:$0xf] %v175
                %v177 = vld [vmem:[%s167 + $0x30] sm:$0xf]
                %178 = vst [vmem:[%s168 + $0x10] sm:$0xf] %v177
                %v179 = vld [vmem:[%s167 + $0x3c] sm:$0xf]
                %180 = vst [vmem:[%s168 + $0x14] sm:$0xf] %v179
                %v181 = vld [vmem:[%s167 + $0x48] sm:$0xf]
                %182 = vst [vmem:[%s168 + $0x18] sm:$0xf] %v181
                %v183 = vld [vmem:[%s167 + $0x54] sm:$0xf]
                %184 = vst [vmem:[%s168 + $0x1c] sm:$0xf] %v183
                %v185 = vld [vmem:[%s167 + $0x60] sm:$0xf]
                %186 = vst [vmem:[%s168 + $0x20] sm:$0xf] %v185
                %v187 = vld [vmem:[%s167 + $0x6c] sm:$0xf]
                %188 = vst [vmem:[%s168 + $0x24] sm:$0xf] %v187
                %v189 = vld [vmem:[%s167 + $0x78] sm:$0xf]
                %190 = vst [vmem:[%s168 + $0x28] sm:$0xf] %v189
                %v191 = vld [vmem:[%s167 + $0x84] sm:$0xf]
                %192 = vst [vmem:[%s168 + $0x2c] sm:$0xf] %v191
                %v193 = vld [vmem:[%s167 + $0x90] sm:$0xf]
                %194 = vst [vmem:[%s168 + $0x30] sm:$0xf] %v193
                %v195 = vld [vmem:[%s167 + $0x9c] sm:$0xf]
                %196 = vst [vmem:[%s168 + $0x34] sm:$0xf] %v195
                %v197 = vld [vmem:[%s167 + $0xa8] sm:$0xf]
                %198 = vst [vmem:[%s168 + $0x38] sm:$0xf] %v197
                %v199 = vld [vmem:[%s167 + $0xb4] sm:$0xf]
                %200 = vst [vmem:[%s168 + $0x3c] sm:$0xf] %v199
              $region41: #{_lambda_.17} parent=35 // loop_footer
                %s166 = sadd.s32 1, %s162
              $region42: #{_lambda_.17} parent=35 // loop_footer_branch
                %161 = sbr.rel target = $region38
              $region43: #{_lambda_.17} parent=35 // loop_exit
                _
            $region36: #{_lambda_.17} parent=27 // pred_fallthru
              _
          $region28: #{_lambda_.17} parent=23 // pred_fallthru
            _
          %252 = vnop
        $region24: #{_lambda_.17} parent=19 // pred_fallthru
          _
      $region20: #{_lambda_.17} parent=5 // pred_fallthru
        _
      %p253 = scmp.le.s32.totalorder 1, %s8
      %p254 = scmp.lt.s32.totalorder %s8, 4
      %p255 = pnand %p253, %p254
      %p256 = pneg %p255
      // Predicated region
      $region62: #{_lambda_.17} parent=5 // pred_check
        _
      $region63: #{_lambda_.17} parent=5 // pred_check_branch
        %258 = sbr.rel (%p255) target = $region65
      $region64: #{_lambda_.17} parent=5 // pred_region
        %s259 = ssub.s32 %s8, 1
        %s260 = sand.u32 %s70, 1
        %s261 = sand.u32 %s70, 1
        %s262 = smul.addr %s261, 64
        %s263 = scalar_lea.vmem [#allocation3], %s262
        // Predicated region
        $region66: #{_lambda_.17} parent=64 // pred_check
          %p264 = pneg %p83
        $region67: #{_lambda_.17} parent=64 // pred_check_branch
          %266 = sbr.rel (%p264) target = $region69
        $region68: #{_lambda_.17} parent=64 // pred_region
          _
        $region69: #{_lambda_.17} parent=64 // pred_fallthru
          _
        %s267 = smul.u32 4, %s18
        %p268 = scmp.lt.s32.totalorder %s267, 3
        %s269 = scalar_select %p268, %s267, 3
        %p270 = scmp.lt.s32.totalorder %s20, 0
        %s271 = scalar_select %p270, %s20, 0
        %s272 = sadd.s32 %s271, %s269
        %s273 = smul.addr %s272, 4
        %s274 = scalar_lea.vmem %s0, %s273
        %p275 = pneg %p55
        %p276 = pneg %p52
        %s277 = sand.u32 %s70, 1
        %s278 = sand.u32 %s70, 1
        %s279 = smul.addr %s278, 64
        %s280 = scalar_lea.vmem [#allocation3], %s279
        %p281 = pneg %p83
        %p282 = pneg %p80
        %p283 = pneg %p111
        %p284 = pneg %p108
        %s285 = sand.u32 %s98, 1
        %s286 = sand.u32 %s98, 1
        %s287 = smul.addr %s286, 16
        %s288 = scalar_lea.vmem [#allocation4], %s287
        %s289 = smul.u32 4, %s18
        %p290 = scmp.lt.s32.totalorder %s289, 3
        %s291 = scalar_select %p290, %s289, 3
        %p292 = scmp.lt.s32.totalorder %s20, 0
        %s293 = scalar_select %p292, %s20, 0
        %s294 = sadd.s32 %s293, %s291
        %s295 = smul.addr %s294, 4
        %s296 = scalar_lea.vmem %s0, %s295
        %s297 = smul.u32 4, %s18
        %s298 = smul.u32 16, %s20
        %s299 = smul.u32 4, %s18
        %p301 = scmp.eq.s32.totalorder %s20, 0
        // Predicated region
        $region70: #{_lambda_.17} parent=64 // pred_check
          %p302 = pneg %p301
        $region71: #{_lambda_.17} parent=64 // pred_check_branch
          %304 = sbr.rel (%p302) target = $region73
        $region72: #{_lambda_.17} parent=64 // pred_region
          %305 = vst [vmem:[#allocation2] sm:$0xff] 0.0
          %306 = vst [vmem:[#allocation2 + $0x8] sm:$0xff] 0.0
          %307 = vst [vmem:[#allocation2 + $0x10] sm:$0xff] 0.0
          %308 = vst [vmem:[#allocation2 + $0x18] sm:$0xff] 0.0
        $region73: #{_lambda_.17} parent=64 // pred_fallthru
          _
        %v309 = vld [vmem:[#allocation2] sm:$0xff]
        %v310 = vld [vmem:[#allocation2 + $0x8] sm:$0xff]
        %v311 = vld [vmem:[#allocation2 + $0x10] sm:$0xff]
        %v312 = vld [vmem:[#allocation2 + $0x18] sm:$0xff]
        %v313 = vld [vmem:[%s296] sm:$0xf]
        %v314 = vld [vmem:[%s296 + $0x4] sm:$0xf]
        %v315 = vld [vmem:[%s296 + $0x8] sm:$0xf]
        %v316 = vld [vmem:[%s296 + $0xc] sm:$0xf]
        %v317 = vld [vmem:[%s263] sm:$0xf]
        %v318 = vld [vmem:[%s263 + $0x4] sm:$0xf]
        %v319 = vld [vmem:[%s263 + $0x8] sm:$0xf]
        %v320 = vld [vmem:[%s263 + $0xc] sm:$0xf]
        %v321 = vld [vmem:[%s263 + $0x10] sm:$0xf]
        %v322 = vld [vmem:[%s263 + $0x14] sm:$0xf]
        %v323 = vld [vmem:[%s263 + $0x18] sm:$0xf]
        %v324 = vld [vmem:[%s263 + $0x1c] sm:$0xf]
        %v325 = vld [vmem:[%s263 + $0x20] sm:$0xf]
        %v326 = vld [vmem:[%s263 + $0x24] sm:$0xf]
        %v327 = vld [vmem:[%s263 + $0x28] sm:$0xf]
        %v328 = vld [vmem:[%s263 + $0x2c] sm:$0xf]
        %v329 = vld [vmem:[%s263 + $0x30] sm:$0xf]
        %v330 = vld [vmem:[%s263 + $0x34] sm:$0xf]
        %v331 = vld [vmem:[%s263 + $0x38] sm:$0xf]
        %v332 = vld [vmem:[%s263 + $0x3c] sm:$0xf]
        %v337 = vunpack.c.l.b16 %v313
        %v338 = vunpack.c.l.b16 %v314
        %v339 = vunpack.c.l.b16 %v315
        %v340 = vunpack.c.l.b16 %v316
        %v341 = vpack.c.b16 %v338, %v337
        %v342 = vpack.c.b16 %v340, %v339
        %v361 = vunpack.c.l.b16 %v317
        %v362 = vunpack.c.l.b16 %v318
        %v363 = vunpack.c.l.b16 %v319
        %v364 = vunpack.c.l.b16 %v320
        %v365 = vunpack.c.l.b16 %v321
        %v366 = vunpack.c.l.b16 %v322
        %v367 = vunpack.c.l.b16 %v323
        %v368 = vunpack.c.l.b16 %v324
        %v369 = vunpack.c.l.b16 %v325
        %v370 = vunpack.c.l.b16 %v326
        %v371 = vunpack.c.l.b16 %v327
        %v372 = vunpack.c.l.b16 %v328
        %v373 = vunpack.c.l.b16 %v329
        %v374 = vunpack.c.l.b16 %v330
        %v375 = vunpack.c.l.b16 %v331
        %v376 = vunpack.c.l.b16 %v332
        %v377 = vpack.c.b16 %v362, %v361
        %v378 = vpack.c.b16 %v364, %v363
        %v379 = vpack.c.b16 %v366, %v365
        %v380 = vpack.c.b16 %v368, %v367
        %v381 = vpack.c.b16 %v370, %v369
        %v382 = vpack.c.b16 %v372, %v371
        %v383 = vpack.c.b16 %v374, %v373
        %v384 = vpack.c.b16 %v376, %v375
        %393 = vmatprep.subr.bf16.mxu0 0
        %394 = vmatpush1.bf16.msra.mxu0 %v377
        %395 = vmatprep.subr.bf16.mxu0 0
        %396 = vmatpush1.bf16.msra.mxu0 %v378
        %397 = vmatprep.subr.bf16.mxu0 0
        %398 = vmatpush1.bf16.msra.mxu0 %v379
        %399 = vmatprep.subr.bf16.mxu0 0
        %400 = vmatpush1.bf16.msra.mxu0 %v380
        %401 = vmatprep.subr.bf16.mxu0 0
        %402 = vmatpush1.bf16.msra.mxu0 %v381
        %403 = vmatprep.subr.bf16.mxu0 0
        %404 = vmatpush1.bf16.msra.mxu0 %v382
        %405 = vmatprep.subr.bf16.mxu0 0
        %406 = vmatpush1.bf16.msra.mxu0 %v383
        %407 = vmatprep.subr.bf16.mxu0 0
        %408 = vmatpush1.bf16.msra.mxu0 %v384
        %409 = vmatprep.subr.bf16.mxu0 0
        %410 = vmatpush1.bf16.msra.mxu0 0
        %411 = vmatprep.subr.bf16.mxu0 0
        %412 = vmatpush1.bf16.msra.mxu0 0
        %413 = vmatprep.subr.bf16.mxu0 0
        %414 = vmatpush1.bf16.msra.mxu0 0
        %415 = vmatprep.subr.bf16.mxu0 0
        %416 = vmatpush1.bf16.msra.mxu0 0
        %417 = vmatprep.subr.bf16.mxu0 0
        %418 = vmatpush1.bf16.msra.mxu0 0
        %419 = vmatprep.subr.bf16.mxu0 0
        %420 = vmatpush1.bf16.msra.mxu0 0
        %421 = vmatprep.subr.bf16.mxu0 0
        %422 = vmatpush1.bf16.msra.mxu0 0
        %423 = vmatprep.subr.bf16.mxu0 0
        %424 = vmatpush1.bf16.msra.mxu0 0
        %425 = vmatprep.mubr.bf16.mxu0 0
        %426 = vmatmul.mubr.bf16.gmra.mrb[0].mxu0 %v341
        %v427 = vpop.f32.mrb[0].mxu0
        %v428 = vadd.f32 0.0, %v427
        %v429 = vpop.f32.mrb[0].mxu0
        %v430 = vpop.f32.mrb[0].mxu0
        %v431 = vadd.f32 0.0, %v430
        %v432 = vpop.f32.mrb[0].mxu0
        %433 = vmatprep.mubr.bf16.mxu0 0
        %434 = vmatmul.mubr.bf16.gmra.mrb[0].mxu0 %v342
        %v435 = vpop.f32.mrb[0].mxu0
        %v436 = vadd.f32 0.0, %v435
        %v437 = vpop.f32.mrb[0].mxu0
        %v438 = vpop.f32.mrb[0].mxu0
        %v439 = vadd.f32 0.0, %v438
        %v440 = vpop.f32.mrb[0].mxu0
        %441 = vdwg.mxu0
        %v442 = vadd.f32 %v309, %v428
        %v443 = vadd.f32 %v310, %v431
        %v444 = vadd.f32 %v311, %v436
        %v445 = vadd.f32 %v312, %v439
        %446 = vst [vmem:[#allocation2] sm:$0xff] %v442
        %447 = vst [vmem:[#allocation2 + $0x8] sm:$0xff] %v443
        %448 = vst [vmem:[#allocation2 + $0x10] sm:$0xff] %v444
        %449 = vst [vmem:[#allocation2 + $0x18] sm:$0xff] %v445
        // Predicated region
        $region74: #{_lambda_.17} parent=64 // pred_check
          %p450 = pneg %p301
        $region75: #{_lambda_.17} parent=64 // pred_check_branch
          %452 = sbr.rel (%p450) target = $region77
        $region76: #{_lambda_.17} parent=64 // pred_region
          %v453 = vld [vmem:[#allocation2] sm:$0xff]
          %v454 = vld [vmem:[#allocation2 + $0x8] sm:$0xff]
          %v455 = vld [vmem:[#allocation2 + $0x10] sm:$0xff]
          %v456 = vld [vmem:[#allocation2 + $0x18] sm:$0xff]
          %v457 = vpack.c.bf16 %v454, %v453
          %v458 = vpack.c.bf16 %v456, %v455
          %v461 = vunpack.c.l.b16 %v457
          %v462 = vunpack.c.h.b16 %v457
          %v463 = vunpack.c.l.b16 %v458
          %v464 = vunpack.c.h.b16 %v458
          %v465 = vpack.c.b16 %v461, %v461
          %v466 = vpack.c.b16 %v462, %v462
          %v467 = vpack.c.b16 %v463, %v463
          %v468 = vpack.c.b16 %v464, %v464
          %473 = vst [vmem:[%s288] sm:$0xf] %v465
          %474 = vst [vmem:[%s288 + $0x4] sm:$0xf] %v466
          %475 = vst [vmem:[%s288 + $0x8] sm:$0xf] %v467
          %476 = vst [vmem:[%s288 + $0xc] sm:$0xf] %v468
        $region77: #{_lambda_.17} parent=64 // pred_fallthru
          _
        %s477 = sand.u32 %s98, 1
        %s478 = sand.u32 %s98, 1
        %s479 = smul.addr %s478, 16
        %s480 = scalar_lea.vmem [#allocation4], %s479
        // Predicated region
        $region78: #{_lambda_.17} parent=64 // pred_check
          %p481 = pneg %p108
        $region79: #{_lambda_.17} parent=64 // pred_check_branch
          %483 = sbr.rel (%p481) target = $region81
        $region80: #{_lambda_.17} parent=64 // pred_region
          %s484 = smul.u32 4, %s18
          %s485 = smul.addr %s484, 3
          %s486 = sadd.s32 %s19, %s485
          %s487 = smul.addr %s486, 4
          %s488 = scalar_lea.vmem %s2, %s487
          // Predicated region
          $region82: #{_lambda_.17} parent=80 // pred_check
            _
          $region83: #{_lambda_.17} parent=80 // pred_check_branch
            %490 = sbr.rel (0) target = $region85
          $region84: #{_lambda_.17} parent=80 // pred_region
            // Predicated region
            $region86: #{_lambda_.17} parent=84 // pred_check
              _
            $region87: #{_lambda_.17} parent=84 // pred_check_branch
              %492 = sbr.rel target = $region89
            $region88: #{_lambda_.17} parent=84 // pred_region
              // Predicated region
              $region101: #{_lambda_.17} parent=88 // pred_check
                _
              $region102: #{_lambda_.17} parent=88 // pred_check_branch
                %513 = sbr.rel (0) target = $region104
              $region103: #{_lambda_.17} parent=88 // pred_region
                loop: start=0, step=1, limit=1
                $region105: #{_lambda_.17} parent=103 // loop_pre_header
                  _
                $region106: #{_lambda_.17} parent=103 // loop_header
                  %s515 = sphi 0, %s519
                  %p516 = scmp.ge.s32.totalorder %s515, 1
                  %s520 = sphi %s480, %s480
                  %s521 = sphi %s488, %s488
                $region107: #{_lambda_.17} parent=103 // loop_header_branch
                  %518 = sbr.rel (%p516) target = $region111
                $region108: #{_lambda_.17} parent=103 // loop_body
                  _
                $region109: #{_lambda_.17} parent=103 // loop_footer
                  %s519 = sadd.s32 1, %s515
                $region110: #{_lambda_.17} parent=103 // loop_footer_branch
                  %514 = sbr.rel target = $region106
                $region111: #{_lambda_.17} parent=103 // loop_exit
                  _
                loop: start=0, step=1, limit=1
                $region112: #{_lambda_.17} parent=103 // loop_pre_header
                  _
                $region113: #{_lambda_.17} parent=103 // loop_header
                  %s524 = sphi 0, %s528
                  %p525 = scmp.ge.s32.totalorder %s524, 1
                  %s529 = sphi %s480, %s480
                  %s530 = sphi %s488, %s488
                $region114: #{_lambda_.17} parent=103 // loop_header_branch
                  %527 = sbr.rel (%p525) target = $region118
                $region115: #{_lambda_.17} parent=103 // loop_body
                  %v531 = vld [vmem:[%s529] sm:$0xf]
                  %532 = vst [vmem:[%s530] sm:$0xf] %v531
                  %v533 = vld [vmem:[%s529 + $0x4] sm:$0xf]
                  %534 = vst [vmem:[%s530 + $0xc] sm:$0xf] %v533
                  %v535 = vld [vmem:[%s529 + $0x8] sm:$0xf]
                  %536 = vst [vmem:[%s530 + $0x18] sm:$0xf] %v535
                  %v537 = vld [vmem:[%s529 + $0xc] sm:$0xf]
                  %538 = vst [vmem:[%s530 + $0x24] sm:$0xf] %v537
                $region116: #{_lambda_.17} parent=103 // loop_footer
                  %s528 = sadd.s32 1, %s524
                $region117: #{_lambda_.17} parent=103 // loop_footer_branch
                  %523 = sbr.rel target = $region113
                $region118: #{_lambda_.17} parent=103 // loop_exit
                  _
              $region104: #{_lambda_.17} parent=88 // pred_fallthru
                _
            $region89: #{_lambda_.17} parent=84 // pred_fallthru
              _
            // Predicated region
            $region90: #{_lambda_.17} parent=84 // pred_check
              _
            $region91: #{_lambda_.17} parent=84 // pred_check_branch
              %494 = sbr.rel (0) target = $region93
            $region92: #{_lambda_.17} parent=84 // pred_region
              loop: start=0, step=1, limit=1
              $region94: #{_lambda_.17} parent=92 // loop_pre_header
                _
              $region95: #{_lambda_.17} parent=92 // loop_header
                %s497 = sphi 0, %s501
                %p498 = scmp.ge.s32.totalorder %s497, 1
                %s502 = sphi %s480, %s480
                %s503 = sphi %s488, %s488
              $region96: #{_lambda_.17} parent=92 // loop_header_branch
                %500 = sbr.rel (%p498) target = $region100
              $region97: #{_lambda_.17} parent=92 // loop_body
                %v504 = vld [vmem:[%s502] sm:$0xf]
                %505 = vst [vmem:[%s503] sm:$0xf] %v504
                %v506 = vld [vmem:[%s502 + $0x4] sm:$0xf]
                %507 = vst [vmem:[%s503 + $0xc] sm:$0xf] %v506
                %v508 = vld [vmem:[%s502 + $0x8] sm:$0xf]
                %509 = vst [vmem:[%s503 + $0x18] sm:$0xf] %v508
                %v510 = vld [vmem:[%s502 + $0xc] sm:$0xf]
                %511 = vst [vmem:[%s503 + $0x24] sm:$0xf] %v510
              $region98: #{_lambda_.17} parent=92 // loop_footer
                %s501 = sadd.s32 1, %s497
              $region99: #{_lambda_.17} parent=92 // loop_footer_branch
                %496 = sbr.rel target = $region95
              $region100: #{_lambda_.17} parent=92 // loop_exit
                _
            $region93: #{_lambda_.17} parent=84 // pred_fallthru
              _
          $region85: #{_lambda_.17} parent=80 // pred_fallthru
            _
          %539 = vnop
        $region81: #{_lambda_.17} parent=64 // pred_fallthru
          _
      $region65: #{_lambda_.17} parent=5 // pred_fallthru
        _
      %p540 = scmp.le.s32.totalorder 2, %s8
      // Predicated region
      $region119: #{_lambda_.17} parent=5 // pred_check
        %p541 = pneg %p540
      $region120: #{_lambda_.17} parent=5 // pred_check_branch
        %543 = sbr.rel (%p541) target = $region122
      $region121: #{_lambda_.17} parent=5 // pred_region
        %s544 = ssub.s32 %s8, 2
        // Predicated region
        $region123: #{_lambda_.17} parent=121 // pred_check
          %p545 = pneg %p114
        $region124: #{_lambda_.17} parent=121 // pred_check_branch
          %547 = sbr.rel (%p545) target = $region126
        $region125: #{_lambda_.17} parent=121 // pred_region
          %s548 = sand.u32 %s99, 1
          %s549 = sand.u32 %s99, 1
          %s550 = smul.addr %s549, 16
          %s551 = scalar_lea.vmem [#allocation4], %s550
        $region126: #{_lambda_.17} parent=121 // pred_fallthru
          _
      $region122: #{_lambda_.17} parent=5 // pred_fallthru
        _
    $region6: #{_lambda_.17} parent=1 // loop_footer
      %s12 = sadd.s32 1, %s8
    $region7: #{_lambda_.17} parent=1 // loop_footer_branch
      %7 = sbr.rel target = $region3
    $region8: #{_lambda_.17} parent=1 // loop_exit
      _

// kernel: _lambda_.19
$region0: #{_lambda_.19}
  #allocation0 [shape = 'u32[]', space=smem, size = 0x4, offset = 0x4, fixed_abs, tag = 'smem constant byte address 0x4 - core index']
  #allocation1 [shape = 'u32[144,128]{1,0:T(1,128)}', space=vmem, size = 0x12000, scoped, tag = 'internal scratch']
  %s0 = inlined_call_operand.vmem [shape: bf16[32,128], index: 0, kind: input, shape index: {}]
  %s1 = inlined_call_operand.vmem [shape: bf16[128,128], index: 1, kind: input, shape index: {}]
  %s2 = inlined_call_operand.vmem [shape: f32[32,128], index: 2, kind: output, shape index: {}]
  %s3 = sld [smem:[#allocation0]]
  $region22: #{_lambda_.19} parent=0
    _
  %s5 = ssub.s32 1, %s3
  %s6 = scalar_select 0, %s5, %s3
  // Predicated region
  $region2: #{_lambda_.19} parent=0 // pred_check
    _
  $region3: #{_lambda_.19} parent=0 // pred_check_branch
    %8 = sbr.rel (0) target = $region5
  $region4: #{_lambda_.19} parent=0 // pred_region
    _
  $region5: #{_lambda_.19} parent=0 // pred_fallthru
    _
  // Predicated region
  $region6: #{_lambda_.19} parent=0 // pred_check
    _
  $region7: #{_lambda_.19} parent=0 // pred_check_branch
    %10 = sbr.rel (0) target = $region9
  $region8: #{_lambda_.19} parent=0 // pred_region
    _
  $region9: #{_lambda_.19} parent=0 // pred_fallthru
    _
  %p12 = scmp.eq.s32.totalorder 0, 0
  // Predicated region
  $region10: #{_lambda_.19} parent=0 // pred_check
    %p13 = pneg %p12
  $region11: #{_lambda_.19} parent=0 // pred_check_branch
    %15 = sbr.rel (%p13) target = $region13
  $region12: #{_lambda_.19} parent=0 // pred_region
    %16 = vst [vmem:[%s2] sm:$0xff] 0.0
    %17 = vst [vmem:[%s2 + $0x8] sm:$0xff] 0.0
    %18 = vst [vmem:[%s2 + $0x10] sm:$0xff] 0.0
    %19 = vst [vmem:[%s2 + $0x18] sm:$0xff] 0.0
  $region13: #{_lambda_.19} parent=0 // pred_fallthru
    _
  %v20 = vld [vmem:[%s2] sm:$0xff]
  %v21 = vld [vmem:[%s2 + $0x8] sm:$0xff]
  %v22 = vld [vmem:[%s2 + $0x10] sm:$0xff]
  %v23 = vld [vmem:[%s2 + $0x18] sm:$0xff]
  %v24 = vld [vmem:[%s0] sm:$0xf]
  %v25 = vld [vmem:[%s0 + $0x4] sm:$0xf]
  %v26 = vld [vmem:[%s0 + $0x8] sm:$0xf]
  %v27 = vld [vmem:[%s0 + $0xc] sm:$0xf]
  %v28 = vld [vmem:[%s1] sm:$0xf]
  %v29 = vld [vmem:[%s1 + $0x4] sm:$0xf]
  %v30 = vld [vmem:[%s1 + $0x8] sm:$0xf]
  %v31 = vld [vmem:[%s1 + $0xc] sm:$0xf]
  %v32 = vld [vmem:[%s1 + $0x10] sm:$0xf]
  %v33 = vld [vmem:[%s1 + $0x14] sm:$0xf]
  %v34 = vld [vmem:[%s1 + $0x18] sm:$0xf]
  %v35 = vld [vmem:[%s1 + $0x1c] sm:$0xf]
  %v36 = vld [vmem:[%s1 + $0x20] sm:$0xf]
  %v37 = vld [vmem:[%s1 + $0x24] sm:$0xf]
  %v38 = vld [vmem:[%s1 + $0x28] sm:$0xf]
  %v39 = vld [vmem:[%s1 + $0x2c] sm:$0xf]
  %v40 = vld [vmem:[%s1 + $0x30] sm:$0xf]
  %v41 = vld [vmem:[%s1 + $0x34] sm:$0xf]
  %v42 = vld [vmem:[%s1 + $0x38] sm:$0xf]
  %v43 = vld [vmem:[%s1 + $0x3c] sm:$0xf]
  %v48 = vunpack.c.l.b16 %v24
  %v49 = vunpack.c.l.b16 %v25
  %v50 = vunpack.c.l.b16 %v26
  %v51 = vunpack.c.l.b16 %v27
  %v52 = vpack.c.b16 %v49, %v48
  %v53 = vpack.c.b16 %v51, %v50
  %v72 = vunpack.c.l.b16 %v28
  %v73 = vunpack.c.l.b16 %v29
  %v74 = vunpack.c.l.b16 %v30
  %v75 = vunpack.c.l.b16 %v31
  %v76 = vunpack.c.l.b16 %v32
  %v77 = vunpack.c.l.b16 %v33
  %v78 = vunpack.c.l.b16 %v34
  %v79 = vunpack.c.l.b16 %v35
  %v80 = vunpack.c.l.b16 %v36
  %v81 = vunpack.c.l.b16 %v37
  %v82 = vunpack.c.l.b16 %v38
  %v83 = vunpack.c.l.b16 %v39
  %v84 = vunpack.c.l.b16 %v40
  %v85 = vunpack.c.l.b16 %v41
  %v86 = vunpack.c.l.b16 %v42
  %v87 = vunpack.c.l.b16 %v43
  %v88 = vpack.c.b16 %v73, %v72
  %v89 = vpack.c.b16 %v75, %v74
  %v90 = vpack.c.b16 %v77, %v76
  %v91 = vpack.c.b16 %v79, %v78
  %v92 = vpack.c.b16 %v81, %v80
  %v93 = vpack.c.b16 %v83, %v82
  %v94 = vpack.c.b16 %v85, %v84
  %v95 = vpack.c.b16 %v87, %v86
  %104 = vmatprep.subr.bf16.mxu0 0
  %105 = vmatpush1.bf16.msra.mxu0 %v88
  %106 = vmatprep.subr.bf16.mxu0 0
  %107 = vmatpush1.bf16.msra.mxu0 %v89
  %108 = vmatprep.subr.bf16.mxu0 0
  %109 = vmatpush1.bf16.msra.mxu0 %v90
  %110 = vmatprep.subr.bf16.mxu0 0
  %111 = vmatpush1.bf16.msra.mxu0 %v91
  %112 = vmatprep.subr.bf16.mxu0 0
  %113 = vmatpush1.bf16.msra.mxu0 %v92
  %114 = vmatprep.subr.bf16.mxu0 0
  %115 = vmatpush1.bf16.msra.mxu0 %v93
  %116 = vmatprep.subr.bf16.mxu0 0
  %117 = vmatpush1.bf16.msra.mxu0 %v94
  %118 = vmatprep.subr.bf16.mxu0 0
  %119 = vmatpush1.bf16.msra.mxu0 %v95
  %120 = vmatprep.subr.bf16.mxu0 0
  %121 = vmatpush1.bf16.msra.mxu0 0
  %122 = vmatprep.subr.bf16.mxu0 0
  %123 = vmatpush1.bf16.msra.mxu0 0
  %124 = vmatprep.subr.bf16.mxu0 0
  %125 = vmatpush1.bf16.msra.mxu0 0
  %126 = vmatprep.subr.bf16.mxu0 0
  %127 = vmatpush1.bf16.msra.mxu0 0
  %128 = vmatprep.subr.bf16.mxu0 0
  %129 = vmatpush1.bf16.msra.mxu0 0
  %130 = vmatprep.subr.bf16.mxu0 0
  %131 = vmatpush1.bf16.msra.mxu0 0
  %132 = vmatprep.subr.bf16.mxu0 0
  %133 = vmatpush1.bf16.msra.mxu0 0
  %134 = vmatprep.subr.bf16.mxu0 0
  %135 = vmatpush1.bf16.msra.mxu0 0
  %136 = vmatprep.mubr.bf16.mxu0 0
  %137 = vmatmul.mubr.bf16.gmra.mrb[0].mxu0 %v52
  %v138 = vpop.f32.mrb[0].mxu0
  %v139 = vadd.f32 0.0, %v138
  %v140 = vpop.f32.mrb[0].mxu0
  %v141 = vpop.f32.mrb[0].mxu0
  %v142 = vadd.f32 0.0, %v141
  %v143 = vpop.f32.mrb[0].mxu0
  %144 = vmatprep.mubr.bf16.mxu0 0
  %145 = vmatmul.mubr.bf16.gmra.mrb[0].mxu0 %v53
  %v146 = vpop.f32.mrb[0].mxu0
  %v147 = vadd.f32 0.0, %v146
  %v148 = vpop.f32.mrb[0].mxu0
  %v149 = vpop.f32.mrb[0].mxu0
  %v150 = vadd.f32 0.0, %v149
  %v151 = vpop.f32.mrb[0].mxu0
  %152 = vdwg.mxu0
  %v153 = vadd.f32 %v20, %v139
  %v154 = vadd.f32 %v21, %v142
  %v155 = vadd.f32 %v22, %v147
  %v156 = vadd.f32 %v23, %v150
  %157 = vst [vmem:[%s2] sm:$0xff] %v153
  %158 = vst [vmem:[%s2 + $0x8] sm:$0xff] %v154
  %159 = vst [vmem:[%s2 + $0x10] sm:$0xff] %v155
  %160 = vst [vmem:[%s2 + $0x18] sm:$0xff] %v156
  // Predicated region
  $region14: #{_lambda_.19} parent=0 // pred_check
    _
  $region15: #{_lambda_.19} parent=0 // pred_check_branch
    %162 = sbr.rel (0) target = $region17
  $region16: #{_lambda_.19} parent=0 // pred_region
    _
  $region17: #{_lambda_.19} parent=0 // pred_fallthru
    _
  // Predicated region
  $region18: #{_lambda_.19} parent=0 // pred_check
    _
  $region19: #{_lambda_.19} parent=0 // pred_check_branch
    %164 = sbr.rel (0) target = $region21
  $region20: #{_lambda_.19} parent=0 // pred_region
    _
  $region21: #{_lambda_.19} parent=0 // pred_fallthru
    _

// kernel: _lambda_.22
$region0: #{_lambda_.22}
  #allocation0 [shape = 'u32[]', space=smem, size = 0x4, offset = 0x4, fixed_abs, tag = 'smem constant byte address 0x4 - core index']
  #allocation1 [shape = 'u32[144,128]{1,0:T(1,128)}', space=vmem, size = 0x12000, scoped, tag = 'internal scratch']
  %s0 = inlined_call_operand.vmem [shape: bf16[32,512], index: 0, kind: input, shape index: {}]
  %s1 = inlined_call_operand.vmem [shape: bf16[512,128], index: 1, kind: input, shape index: {}]
  %s2 = inlined_call_operand.vmem [shape: f32[32,128], index: 2, kind: output, shape index: {}]
  %s3 = sld [smem:[#allocation0]]
  $region83: #{_lambda_.22} parent=0
    _
  %s5 = ssub.s32 1, %s3
  %s6 = scalar_select 0, %s5, %s3
  $region1: #{_lambda_.22} parent=0
    #allocation2 [shape = 'u8[32768]{0}', space=vmem, size = 0x8000, scoped, tag = 'input window, operand 0']
    loop: start=0, step=1, limit=4
    $region2: #{_lambda_.22} parent=1 // loop_pre_header
      _
    $region3: #{_lambda_.22} parent=1 // loop_header
      %s8 = sphi 0, %s12
      %p9 = scmp.ge.s32.totalorder %s8, 4
      %s15 = sphi 0, %s34
      %s16 = sphi 0, %s30
      %s17 = sphi 0, %s26
      %s18 = sphi 0, %s15
      %s19 = sphi 0, %s16
      %s20 = sphi 0, %s17
      %s21 = sphi 0, %s18
      %s22 = sphi 0, %s19
      %s23 = sphi 0, %s20
      %s39 = sphi 0, %s41
      %s42 = sphi 0, %s39
      %s43 = sphi 0, %s42
      %s59 = sphi 0, %s43
      %s67 = sphi 0, %s69
      %s70 = sphi 0, %s67
      %s71 = sphi 0, %s70
      %s87 = sphi 0, %s71
      %s95 = sphi 0, %s97
      %s98 = sphi 0, %s95
      %s99 = sphi 0, %s98
      %s115 = sphi 0, %s99
    $region4: #{_lambda_.22} parent=1 // loop_header_branch
      %11 = sbr.rel (%p9) target = $region8
    $region5: #{_lambda_.22} parent=1 // loop_body
      %s13 = ssub.s32 %s8, 1
      %s14 = ssub.s32 %s8, 2
      %s24 = sadd.s32 1, %s17
      %p25 = scmp.ge.s32.totalorder %s24, 2
      %s26 = scalar_select %p25, 0, %s24
      %s27 = sadd.s32 1, %s16
      %s28 = scalar_select %p25, %s27, %s16
      %p29 = scmp.ge.s32.totalorder %s28, 1
      %s30 = scalar_select %p29, 0, %s28
      %s31 = sadd.s32 1, %s15
      %s32 = scalar_select %p29, %s31, %s15
      %p33 = scmp.ge.s32.totalorder %s32, 1
      %s34 = scalar_select %p33, 0, %s32
      %s35 = ssub.s32 %s15, %s34
      %s36 = ssub.s32 %s17, %s26
      %s37 = sor.u32 %s35, %s36
      %p38 = scmp.eq.s32.totalorder %s37, 0
      %s40 = sadd.s32 %s39, 1
      %s41 = scalar_select %p38, %s39, %s40
      %p44 = pneg %p38
      %p45 = scmp.eq.s32.totalorder %s8, 1
      %p46 = por %p44, %p45
      %p47 = scmp.ne.s32.totalorder %s39, %s42
      %p48 = scmp.eq.s32.totalorder %s8, 0
      %p49 = por %p47, %p48
      %p50 = scmp.ne.s32.totalorder %s39, %s42
      %p51 = scmp.eq.s32.totalorder %s13, 1
      %p52 = por %p50, %p51
      %p53 = scmp.ne.s32.totalorder %s42, %s43
      %p54 = scmp.eq.s32.totalorder %s13, 0
      %p55 = por %p53, %p54
      %p56 = scmp.ne.s32.totalorder %s42, %s43
      %p57 = scmp.eq.s32.totalorder %s14, 1
      %p58 = por %p56, %p57
      %p60 = scmp.ne.s32.totalorder %s43, %s59
      %p61 = scmp.eq.s32.totalorder %s14, 0
      %p62 = por %p60, %p61
      %s63 = ssub.s32 %s17, %s26
      %s64 = ssub.s32 %s16, %s30
      %s65 = sor.u32 %s63, %s64
      %p66 = scmp.eq.s32.totalorder %s65, 0
      %s68 = sadd.s32 %s67, 1
      %s69 = scalar_select %p66, %s67, %s68
      %p72 = pneg %p66
      %p73 = scmp.eq.s32.totalorder %s8, 1
      %p74 = por %p72, %p73
      %p75 = scmp.ne.s32.totalorder %s67, %s70
      %p76 = scmp.eq.s32.totalorder %s8, 0
      %p77 = por %p75, %p76
      %p78 = scmp.ne.s32.totalorder %s67, %s70
      %p79 = scmp.eq.s32.totalorder %s13, 1
      %p80 = por %p78, %p79
      %p81 = scmp.ne.s32.totalorder %s70, %s71
      %p82 = scmp.eq.s32.totalorder %s13, 0
      %p83 = por %p81, %p82
      %p84 = scmp.ne.s32.totalorder %s70, %s71
      %p85 = scmp.eq.s32.totalorder %s14, 1
      %p86 = por %p84, %p85
      %p88 = scmp.ne.s32.totalorder %s71, %s87
      %p89 = scmp.eq.s32.totalorder %s14, 0
      %p90 = por %p88, %p89
      %s91 = ssub.s32 %s15, %s34
      %s92 = ssub.s32 %s16, %s30
      %s93 = sor.u32 %s91, %s92
      %p94 = scmp.eq.s32.totalorder %s93, 0
      %s96 = sadd.s32 %s95, 1
      %s97 = scalar_select %p94, %s95, %s96
      %p100 = pneg %p94
      %p101 = scmp.eq.s32.totalorder %s8, 1
      %p102 = por %p100, %p101
      %p103 = scmp.ne.s32.totalorder %s95, %s98
      %p104 = scmp.eq.s32.totalorder %s8, 0
      %p105 = por %p103, %p104
      %p106 = scmp.ne.s32.totalorder %s95, %s98
      %p107 = scmp.eq.s32.totalorder %s13, 1
      %p108 = por %p106, %p107
      %p109 = scmp.ne.s32.totalorder %s98, %s99
      %p110 = scmp.eq.s32.totalorder %s13, 0
      %p111 = por %p109, %p110
      %p112 = scmp.ne.s32.totalorder %s98, %s99
      %p113 = scmp.eq.s32.totalorder %s14, 1
      %p114 = por %p112, %p113
      %p116 = scmp.ne.s32.totalorder %s99, %s115
      %p117 = scmp.eq.s32.totalorder %s14, 0
      %p118 = por %p116, %p117
      %p119 = scmp.le.s32.totalorder 1, %s8
      %p120 = scmp.lt.s32.totalorder %s8, 3
      %p121 = pnand %p119, %p120
      %p122 = pneg %p121
      // Predicated region
      $region9: #{_lambda_.22} parent=5 // pred_check
        _
      $region10: #{_lambda_.22} parent=5 // pred_check_branch
        %124 = sbr.rel (%p121) target = $region12
      $region11: #{_lambda_.22} parent=5 // pred_region
        %s125 = ssub.s32 %s8, 1
      $region12: #{_lambda_.22} parent=5 // pred_fallthru
        _
      %p126 = scmp.lt.s32.totalorder %s8, 2
      // Predicated region
      $region13: #{_lambda_.22} parent=5 // pred_check
        %p127 = pneg %p126
      $region14: #{_lambda_.22} parent=5 // pred_check_branch
        %129 = sbr.rel (%p127) target = $region16
      $region15: #{_lambda_.22} parent=5 // pred_region
        // Predicated region
        $region17: #{_lambda_.22} parent=15 // pred_check
          %p130 = pneg %p49
        $region18: #{_lambda_.22} parent=15 // pred_check_branch
          %132 = sbr.rel (%p130) target = $region20
        $region19: #{_lambda_.22} parent=15 // pred_region
          %s133 = sand.u32 %s39, 1
          %s134 = sand.u32 %s39, 1
          %s135 = smul.addr %s134, 32
          %s136 = scalar_lea.vmem [#allocation2], %s135
          %s137 = smul.u32 4, %s15
          %s138 = smul.u32 2, %s17
          %s139 = smul.addr %s137, 4
          %s140 = sadd.s32 %s138, %s139
          %s141 = smul.addr %s140, 4
          %s142 = scalar_lea.vmem %s0, %s141
          // Predicated region
          $region21: #{_lambda_.22} parent=19 // pred_check
            _
          $region22: #{_lambda_.22} parent=19 // pred_check_branch
            %144 = sbr.rel (0) target = $region24
          $region23: #{_lambda_.22} parent=19 // pred_region
            // Predicated region
            $region25: #{_lambda_.22} parent=23 // pred_check
              _
            $region26: #{_lambda_.22} parent=23 // pred_check_branch
              %146 = sbr.rel (0) target = $region28
            $region27: #{_lambda_.22} parent=23 // pred_region
              // Predicated region
              $region40: #{_lambda_.22} parent=27 // pred_check
                _
              $region41: #{_lambda_.22} parent=27 // pred_check_branch
                %167 = sbr.rel (0) target = $region43
              $region42: #{_lambda_.22} parent=27 // pred_region
                loop: start=0, step=1, limit=1
                $region44: #{_lambda_.22} parent=42 // loop_pre_header
                  _
                $region45: #{_lambda_.22} parent=42 // loop_header
                  %s169 = sphi 0, %s173
                  %p170 = scmp.ge.s32.totalorder %s169, 1
                  %s174 = sphi %s142, %s142
                  %s175 = sphi %s136, %s136
                $region46: #{_lambda_.22} parent=42 // loop_header_branch
                  %172 = sbr.rel (%p170) target = $region50
                $region47: #{_lambda_.22} parent=42 // loop_body
                  %v176 = vld [vmem:[%s174] sm:$0xff]
                  %177 = vst [vmem:[%s175] sm:$0xff] %v176
                  %v178 = vld [vmem:[%s174 + $0x10] sm:$0xff]
                  %179 = vst [vmem:[%s175 + $0x8] sm:$0xff] %v178
                  %v180 = vld [vmem:[%s174 + $0x20] sm:$0xff]
                  %181 = vst [vmem:[%s175 + $0x10] sm:$0xff] %v180
                  %v182 = vld [vmem:[%s174 + $0x30] sm:$0xff]
                  %183 = vst [vmem:[%s175 + $0x18] sm:$0xff] %v182
                $region48: #{_lambda_.22} parent=42 // loop_footer
                  %s173 = sadd.s32 1, %s169
                $region49: #{_lambda_.22} parent=42 // loop_footer_branch
                  %168 = sbr.rel target = $region45
                $region50: #{_lambda_.22} parent=42 // loop_exit
                  _
              $region43: #{_lambda_.22} parent=27 // pred_fallthru
                _
              // Predicated region
              $region51: #{_lambda_.22} parent=27 // pred_check
                _
              $region52: #{_lambda_.22} parent=27 // pred_check_branch
                %185 = sbr.rel target = $region54
              $region53: #{_lambda_.22} parent=27 // pred_region
                _
              $region54: #{_lambda_.22} parent=27 // pred_fallthru
                _
            $region28: #{_lambda_.22} parent=23 // pred_fallthru
              _
            // Predicated region
            $region29: #{_lambda_.22} parent=23 // pred_check
              _
            $region30: #{_lambda_.22} parent=23 // pred_check_branch
              %148 = sbr.rel target = $region32
            $region31: #{_lambda_.22} parent=23 // pred_region
              loop: start=0, step=1, limit=1
              $region33: #{_lambda_.22} parent=31 // loop_pre_header
                _
              $region34: #{_lambda_.22} parent=31 // loop_header
                %s151 = sphi 0, %s155
                %p152 = scmp.ge.s32.totalorder %s151, 1
                %s156 = sphi %s142, %s142
                %s157 = sphi %s136, %s136
              $region35: #{_lambda_.22} parent=31 // loop_header_branch
                %154 = sbr.rel (%p152) target = $region39
              $region36: #{_lambda_.22} parent=31 // loop_body
                %v158 = vld [vmem:[%s156] sm:$0xff]
                %159 = vst [vmem:[%s157] sm:$0xff] %v158
                %v160 = vld [vmem:[%s156 + $0x10] sm:$0xff]
                %161 = vst [vmem:[%s157 + $0x8] sm:$0xff] %v160
                %v162 = vld [vmem:[%s156 + $0x20] sm:$0xff]
                %163 = vst [vmem:[%s157 + $0x10] sm:$0xff] %v162
                %v164 = vld [vmem:[%s156 + $0x30] sm:$0xff]
                %165 = vst [vmem:[%s157 + $0x18] sm:$0xff] %v164
              $region37: #{_lambda_.22} parent=31 // loop_footer
                %s155 = sadd.s32 1, %s151
              $region38: #{_lambda_.22} parent=31 // loop_footer_branch
                %150 = sbr.rel target = $region34
              $region39: #{_lambda_.22} parent=31 // loop_exit
                _
            $region32: #{_lambda_.22} parent=23 // pred_fallthru
              _
          $region24: #{_lambda_.22} parent=19 // pred_fallthru
            _
          %186 = vnop
        $region20: #{_lambda_.22} parent=15 // pred_fallthru
          _
        // Predicated region
        $region55: #{_lambda_.22} parent=15 // pred_check
          %p187 = pneg %p77
        $region56: #{_lambda_.22} parent=15 // pred_check_branch
          %189 = sbr.rel (%p187) target = $region58
        $region57: #{_lambda_.22} parent=15 // pred_region
          %s190 = smul.u32 32, %s17
          %p191 = scmp.lt.s32.totalorder %s190, 63
          %s192 = scalar_select %p191, %s190, 63
          %p193 = scmp.lt.s32.totalorder %s16, 0
          %s194 = scalar_select %p193, %s16, 0
          %s195 = sadd.s32 %s194, %s192
          %s196 = smul.addr %s195, 4
          %s197 = scalar_lea.vmem %s1, %s196
          %s198 = smul.u32 32, %s17
        $region58: #{_lambda_.22} parent=15 // pred_fallthru
          _
      $region16: #{_lambda_.22} parent=5 // pred_fallthru
        _
      %p199 = scmp.le.s32.totalorder 1, %s8
      %p200 = scmp.lt.s32.totalorder %s8, 3
      %p201 = pnand %p199, %p200
      %p202 = pneg %p201
      // Predicated region
      $region59: #{_lambda_.22} parent=5 // pred_check
        _
      $region60: #{_lambda_.22} parent=5 // pred_check_branch
        %204 = sbr.rel (%p201) target = $region62
      $region61: #{_lambda_.22} parent=5 // pred_region
        %s205 = ssub.s32 %s8, 1
        %s206 = sand.u32 %s42, 1
        %s207 = sand.u32 %s42, 1
        %s208 = smul.addr %s207, 32
        %s209 = scalar_lea.vmem [#allocation2], %s208
        // Predicated region
        $region63: #{_lambda_.22} parent=61 // pred_check
          %p210 = pneg %p55
        $region64: #{_lambda_.22} parent=61 // pred_check_branch
          %212 = sbr.rel (%p210) target = $region66
        $region65: #{_lambda_.22} parent=61 // pred_region
          _
        $region66: #{_lambda_.22} parent=61 // pred_fallthru
          _
        %s213 = sand.u32 %s42, 1
        %s214 = sand.u32 %s42, 1
        %s215 = smul.addr %s214, 32
        %s216 = scalar_lea.vmem [#allocation2], %s215
        %p217 = pneg %p55
        %p218 = pneg %p52
        %s219 = smul.u32 32, %s20
        %p220 = scmp.lt.s32.totalorder %s219, 63
        %s221 = scalar_select %p220, %s219, 63
        %p222 = scmp.lt.s32.totalorder %s19, 0
        %s223 = scalar_select %p222, %s19, 0
        %s224 = sadd.s32 %s223, %s221
        %s225 = smul.addr %s224, 4
        %s226 = scalar_lea.vmem %s1, %s225
        %p227 = pneg %p83
        %p228 = pneg %p80
        %p229 = pneg %p111
        %p230 = pneg %p108
        %s231 = smul.u32 4, %s18
        %p232 = scmp.lt.s32.totalorder %s231, 3
        %s233 = scalar_select %p232, %s231, 3
        %p234 = scmp.lt.s32.totalorder %s19, 0
        %s235 = scalar_select %p234, %s19, 0
        %s236 = sadd.s32 %s235, %s233
        %s237 = smul.addr %s236, 8
        %s238 = scalar_lea.vmem %s2, %s237
        %s239 = smul.u32 4, %s18
        %s240 = smul.u32 2, %s20
        %s241 = smul.u32 32, %s20
        %p242 = scmp.lt.s32.totalorder %s241, 63
        %s243 = scalar_select %p242, %s241, 63
        %p244 = scmp.lt.s32.totalorder %s19, 0
        %s245 = scalar_select %p244, %s19, 0
        %s246 = sadd.s32 %s245, %s243
        %s247 = smul.addr %s246, 4
        %s248 = scalar_lea.vmem %s1, %s247
        %s249 = smul.u32 32, %s20
        %s250 = smul.u32 4, %s18
        %p251 = scmp.lt.s32.totalorder %s250, 3
        %s252 = scalar_select %p251, %s250, 3
        %p253 = scmp.lt.s32.totalorder %s19, 0
        %s254 = scalar_select %p253, %s19, 0
        %s255 = sadd.s32 %s254, %s252
        %s256 = smul.addr %s255, 8
        %s257 = scalar_lea.vmem %s2, %s256
        %s258 = smul.u32 4, %s18
        %p260 = scmp.eq.s32.totalorder %s20, 0
        // Predicated region
        $region67: #{_lambda_.22} parent=61 // pred_check
          %p261 = pneg %p260
        $region68: #{_lambda_.22} parent=61 // pred_check_branch
          %263 = sbr.rel (%p261) target = $region70
        $region69: #{_lambda_.22} parent=61 // pred_region
          %264 = vst [vmem:[%s257] sm:$0xff] 0.0
          %265 = vst [vmem:[%s257 + $0x8] sm:$0xff] 0.0
          %266 = vst [vmem:[%s257 + $0x10] sm:$0xff] 0.0
          %267 = vst [vmem:[%s257 + $0x18] sm:$0xff] 0.0
        $region70: #{_lambda_.22} parent=61 // pred_fallthru
          _
        %v268 = vld [vmem:[%s257] sm:$0xff]
        %v269 = vld [vmem:[%s257 + $0x8] sm:$0xff]
        %v270 = vld [vmem:[%s257 + $0x10] sm:$0xff]
        %v271 = vld [vmem:[%s257 + $0x18] sm:$0xff]
        %v272 = vld [vmem:[%s209] sm:$0xff]
        %v273 = vld [vmem:[%s209 + $0x8] sm:$0xff]
        %v274 = vld [vmem:[%s209 + $0x10] sm:$0xff]
        %v275 = vld [vmem:[%s209 + $0x18] sm:$0xff]
        %v276 = vld [vmem:[%s248] sm:$0xf]
        %v277 = vld [vmem:[%s248 + $0x4] sm:$0xf]
        %v278 = vld [vmem:[%s248 + $0x8] sm:$0xf]
        %v279 = vld [vmem:[%s248 + $0xc] sm:$0xf]
        %v280 = vld [vmem:[%s248 + $0x10] sm:$0xf]
        %v281 = vld [vmem:[%s248 + $0x14] sm:$0xf]
        %v282 = vld [vmem:[%s248 + $0x18] sm:$0xf]
        %v283 = vld [vmem:[%s248 + $0x1c] sm:$0xf]
        %v284 = vld [vmem:[%s248 + $0x20] sm:$0xf]
        %v285 = vld [vmem:[%s248 + $0x24] sm:$0xf]
        %v286 = vld [vmem:[%s248 + $0x28] sm:$0xf]
        %v287 = vld [vmem:[%s248 + $0x2c] sm:$0xf]
        %v288 = vld [vmem:[%s248 + $0x30] sm:$0xf]
        %v289 = vld [vmem:[%s248 + $0x34] sm:$0xf]
        %v290 = vld [vmem:[%s248 + $0x38] sm:$0xf]
        %v291 = vld [vmem:[%s248 + $0x3c] sm:$0xf]
        %v292 = vld [vmem:[%s248 + $0x40] sm:$0xf]
        %v293 = vld [vmem:[%s248 + $0x44] sm:$0xf]
        %v294 = vld [vmem:[%s248 + $0x48] sm:$0xf]
        %v295 = vld [vmem:[%s248 + $0x4c] sm:$0xf]
        %v296 = vld [vmem:[%s248 + $0x50] sm:$0xf]
        %v297 = vld [vmem:[%s248 + $0x54] sm:$0xf]
        %v298 = vld [vmem:[%s248 + $0x58] sm:$0xf]
        %v299 = vld [vmem:[%s248 + $0x5c] sm:$0xf]
        %v300 = vld [vmem:[%s248 + $0x60] sm:$0xf]
        %v301 = vld [vmem:[%s248 + $0x64] sm:$0xf]
        %v302 = vld [vmem:[%s248 + $0x68] sm:$0xf]
        %v303 = vld [vmem:[%s248 + $0x6c] sm:$0xf]
        %v304 = vld [vmem:[%s248 + $0x70] sm:$0xf]
        %v305 = vld [vmem:[%s248 + $0x74] sm:$0xf]
        %v306 = vld [vmem:[%s248 + $0x78] sm:$0xf]
        %v307 = vld [vmem:[%s248 + $0x7c] sm:$0xf]
        %v312 = vunpack.c.l.b16 %v272
        %v313 = vunpack.c.h.b16 %v272
        %v314 = vunpack.c.l.b16 %v273
        %v315 = vunpack.c.h.b16 %v273
        %v316 = vunpack.c.l.b16 %v274
        %v317 = vunpack.c.h.b16 %v274
        %v318 = vunpack.c.l.b16 %v275
        %v319 = vunpack.c.h.b16 %v275
        %v320 = vpack.c.b16 %v314, %v312
        %v321 = vpack.c.b16 %v315, %v313
        %v322 = vpack.c.b16 %v318, %v316
        %v323 = vpack.c.b16 %v319, %v317
        %v360 = vunpack.c.l.b16 %v276
        %v361 = vunpack.c.l.b16 %v277
        %v362 = vunpack.c.l.b16 %v278
        %v363 = vunpack.c.l.b16 %v279
        %v364 = vunpack.c.l.b16 %v280
        %v365 = vunpack.c.l.b16 %v281
        %v366 = vunpack.c.l.b16 %v282
        %v367 = vunpack.c.l.b16 %v283
        %v368 = vunpack.c.l.b16 %v284
        %v369 = vunpack.c.l.b16 %v285
        %v370 = vunpack.c.l.b16 %v286
        %v371 = vunpack.c.l.b16 %v287
        %v372 = vunpack.c.l.b16 %v288
        %v373 = vunpack.c.l.b16 %v289
        %v374 = vunpack.c.l.b16 %v290
        %v375 = vunpack.c.l.b16 %v291
        %v376 = vunpack.c.l.b16 %v292
        %v377 = vunpack.c.l.b16 %v293
        %v378 = vunpack.c.l.b16 %v294
        %v379 = vunpack.c.l.b16 %v295
        %v380 = vunpack.c.l.b16 %v296
        %v381 = vunpack.c.l.b16 %v297
        %v382 = vunpack.c.l.b16 %v298
        %v383 = vunpack.c.l.b16 %v299
        %v384 = vunpack.c.l.b16 %v300
        %v385 = vunpack.c.l.b16 %v301
        %v386 = vunpack.c.l.b16 %v302
        %v387 = vunpack.c.l.b16 %v303
        %v388 = vunpack.c.l.b16 %v304
        %v389 = vunpack.c.l.b16 %v305
        %v390 = vunpack.c.l.b16 %v306
        %v391 = vunpack.c.l.b16 %v307
        %v392 = vpack.c.b16 %v361, %v360
        %v393 = vpack.c.b16 %v363, %v362
        %v394 = vpack.c.b16 %v365, %v364
        %v395 = vpack.c.b16 %v367, %v366
        %v396 = vpack.c.b16 %v369, %v368
        %v397 = vpack.c.b16 %v371, %v370
        %v398 = vpack.c.b16 %v373, %v372
        %v399 = vpack.c.b16 %v375, %v374
        %v400 = vpack.c.b16 %v377, %v376
        %v401 = vpack.c.b16 %v379, %v378
        %v402 = vpack.c.b16 %v381, %v380
        %v403 = vpack.c.b16 %v383, %v382
        %v404 = vpack.c.b16 %v385, %v384
        %v405 = vpack.c.b16 %v387, %v386
        %v406 = vpack.c.b16 %v389, %v388
        %v407 = vpack.c.b16 %v391, %v390
        %424 = vmatprep.subr.bf16.mxu0 0
        %425 = vmatpush1.bf16.msra.mxu0 %v392
        %426 = vmatprep.subr.bf16.mxu0 0
        %427 = vmatpush1.bf16.msra.mxu0 %v393
        %428 = vmatprep.subr.bf16.mxu0 0
        %429 = vmatpush1.bf16.msra.mxu0 %v394
        %430 = vmatprep.subr.bf16.mxu0 0
        %431 = vmatpush1.bf16.msra.mxu0 %v395
        %432 = vmatprep.subr.bf16.mxu0 0
        %433 = vmatpush1.bf16.msra.mxu0 %v396
        %434 = vmatprep.subr.bf16.mxu0 0
        %435 = vmatpush1.bf16.msra.mxu0 %v397
        %436 = vmatprep.subr.bf16.mxu0 0
        %437 = vmatpush1.bf16.msra.mxu0 %v398
        %438 = vmatprep.subr.bf16.mxu0 0
        %439 = vmatpush1.bf16.msra.mxu0 %v399
        %440 = vmatprep.subr.bf16.mxu0 0
        %441 = vmatpush1.bf16.msra.mxu0 %v400
        %442 = vmatprep.subr.bf16.mxu0 0
        %443 = vmatpush1.bf16.msra.mxu0 %v401
        %444 = vmatprep.subr.bf16.mxu0 0
        %445 = vmatpush1.bf16.msra.mxu0 %v402
        %446 = vmatprep.subr.bf16.mxu0 0
        %447 = vmatpush1.bf16.msra.mxu0 %v403
        %448 = vmatprep.subr.bf16.mxu0 0
        %449 = vmatpush1.bf16.msra.mxu0 %v404
        %450 = vmatprep.subr.bf16.mxu0 0
        %451 = vmatpush1.bf16.msra.mxu0 %v405
        %452 = vmatprep.subr.bf16.mxu0 0
        %453 = vmatpush1.bf16.msra.mxu0 %v406
        %454 = vmatprep.subr.bf16.mxu0 0
        %455 = vmatpush1.bf16.msra.mxu0 %v407
        %456 = vmatprep.mubr.bf16.mxu0 %v321
        %457 = vmatmul.mubr.bf16.gmra.mrb[0].mxu0 %v320
        %v458 = vpop.f32.mrb[0].mxu0
        %v459 = vadd.f32 0.0, %v458
        %v460 = vpop.f32.mrb[0].mxu0
        %v461 = vpop.f32.mrb[0].mxu0
        %v462 = vadd.f32 0.0, %v461
        %v463 = vpop.f32.mrb[0].mxu0
        %464 = vmatprep.mubr.bf16.mxu0 %v323
        %465 = vmatmul.mubr.bf16.gmra.mrb[0].mxu0 %v322
        %v466 = vpop.f32.mrb[0].mxu0
        %v467 = vadd.f32 0.0, %v466
        %v468 = vpop.f32.mrb[0].mxu0
        %v469 = vpop.f32.mrb[0].mxu0
        %v470 = vadd.f32 0.0, %v469
        %v471 = vpop.f32.mrb[0].mxu0
        %472 = vdwg.mxu0
        %v473 = vadd.f32 %v268, %v459
        %v474 = vadd.f32 %v269, %v462
        %v475 = vadd.f32 %v270, %v467
        %v476 = vadd.f32 %v271, %v470
        %477 = vst [vmem:[%s257] sm:$0xff] %v473
        %478 = vst [vmem:[%s257 + $0x8] sm:$0xff] %v474
        %479 = vst [vmem:[%s257 + $0x10] sm:$0xff] %v475
        %480 = vst [vmem:[%s257 + $0x18] sm:$0xff] %v476
        %s481 = smul.u32 4, %s18
        %p482 = scmp.lt.s32.totalorder %s481, 3
        %s483 = scalar_select %p482, %s481, 3
        %p484 = scmp.lt.s32.totalorder %s19, 0
        %s485 = scalar_select %p484, %s19, 0
        %s486 = sadd.s32 %s485, %s483
        %s487 = smul.addr %s486, 8
        %s488 = scalar_lea.vmem %s2, %s487
        // Predicated region
        $region71: #{_lambda_.22} parent=61 // pred_check
          %p489 = pneg %p108
        $region72: #{_lambda_.22} parent=61 // pred_check_branch
          %491 = sbr.rel (%p489) target = $region74
        $region73: #{_lambda_.22} parent=61 // pred_region
          %s492 = smul.u32 4, %s18
        $region74: #{_lambda_.22} parent=61 // pred_fallthru
          _
        // Predicated region
        $region75: #{_lambda_.22} parent=61 // pred_check
          %p493 = pneg %p108
        $region76: #{_lambda_.22} parent=61 // pred_check_branch
          %495 = sbr.rel (%p493) target = $region78
        $region77: #{_lambda_.22} parent=61 // pred_region
          %s496 = smul.u32 4, %s18
          %p497 = scmp.lt.s32.totalorder %s496, 3
          %s498 = scalar_select %p497, %s496, 3
          %p499 = scmp.lt.s32.totalorder %s19, 0
          %s500 = scalar_select %p499, %s19, 0
          %s501 = sadd.s32 %s500, %s498
          %s502 = smul.addr %s501, 8
          %s503 = scalar_lea.vmem %s2, %s502
        $region78: #{_lambda_.22} parent=61 // pred_fallthru
          _
      $region62: #{_lambda_.22} parent=5 // pred_fallthru
        _
      %p504 = scmp.le.s32.totalorder 2, %s8
      // Predicated region
      $region79: #{_lambda_.22} parent=5 // pred_check
        %p505 = pneg %p504
      $region80: #{_lambda_.22} parent=5 // pred_check_branch
        %507 = sbr.rel (%p505) target = $region82
      $region81: #{_lambda_.22} parent=5 // pred_region
        %s508 = ssub.s32 %s8, 2
      $region82: #{_lambda_.22} parent=5 // pred_fallthru
        _
    $region6: #{_lambda_.22} parent=1 // loop_footer
      %s12 = sadd.s32 1, %s8
    $region7: #{_lambda_.22} parent=1 // loop_footer_branch
      %7 = sbr.rel target = $region3
    $region8: #{_lambda_.22} parent=1 // loop_exit
      _

// kernel: _lambda_.21
$region0: #{_lambda_.21}
  #allocation0 [shape = 'u32[]', space=smem, size = 0x4, offset = 0x4, fixed_abs, tag = 'smem constant byte address 0x4 - core index']
  #allocation1 [shape = 'u32[144,128]{1,0:T(1,128)}', space=vmem, size = 0x12000, scoped, tag = 'internal scratch']
  #allocation2 [shape = 'f32[32,256]{1,0:T(8,128)}', space=vmem, size = 0x8000, scoped, tag = 'scratch operand']
  %s0 = inlined_call_operand.vmem [shape: bf16[32,128], index: 0, kind: input, shape index: {}]
  %s1 = inlined_call_operand.vmem [shape: bf16[128,512], index: 1, kind: input, shape index: {}]
  %s2 = inlined_call_operand.vmem [shape: bf16[32,512], index: 2, kind: output, shape index: {}]
  %s3 = sld [smem:[#allocation0]]
  $region121: #{_lambda_.21} parent=0
    _
  %s5 = ssub.s32 1, %s3
  %s6 = scalar_select 0, %s5, %s3
  $region1: #{_lambda_.21} parent=0
    #allocation3 [shape = 'u8[131072]{0}', space=vmem, size = 0x20000, scoped, tag = 'input window, operand 1']
    #allocation4 [shape = 'u8[32768]{0}', space=vmem, size = 0x8000, scoped, tag = 'output window, operand 0']
    loop: start=0, step=1, limit=4
    $region2: #{_lambda_.21} parent=1 // loop_pre_header
      _
    $region3: #{_lambda_.21} parent=1 // loop_header
      %s8 = sphi 0, %s12
      %p9 = scmp.ge.s32.totalorder %s8, 4
      %s15 = sphi 0, %s34
      %s16 = sphi 0, %s30
      %s17 = sphi 0, %s26
      %s18 = sphi 0, %s15
      %s19 = sphi 0, %s16
      %s20 = sphi 0, %s17
      %s21 = sphi 0, %s18
      %s22 = sphi 0, %s19
      %s23 = sphi 0, %s20
      %s39 = sphi 0, %s41
      %s42 = sphi 0, %s39
      %s43 = sphi 0, %s42
      %s59 = sphi 0, %s43
      %s67 = sphi 0, %s69
      %s70 = sphi 0, %s67
      %s71 = sphi 0, %s70
      %s87 = sphi 0, %s71
      %s95 = sphi 0, %s97
      %s98 = sphi 0, %s95
      %s99 = sphi 0, %s98
      %s115 = sphi 0, %s99
    $region4: #{_lambda_.21} parent=1 // loop_header_branch
      %11 = sbr.rel (%p9) target = $region8
    $region5: #{_lambda_.21} parent=1 // loop_body
      %s13 = ssub.s32 %s8, 1
      %s14 = ssub.s32 %s8, 2
      %s24 = sadd.s32 1, %s17
      %p25 = scmp.ge.s32.totalorder %s24, 1
      %s26 = scalar_select %p25, 0, %s24
      %s27 = sadd.s32 1, %s16
      %s28 = scalar_select %p25, %s27, %s16
      %p29 = scmp.ge.s32.totalorder %s28, 2
      %s30 = scalar_select %p29, 0, %s28
      %s31 = sadd.s32 1, %s15
      %s32 = scalar_select %p29, %s31, %s15
      %p33 = scmp.ge.s32.totalorder %s32, 1
      %s34 = scalar_select %p33, 0, %s32
      %s35 = ssub.s32 %s15, %s34
      %s36 = ssub.s32 %s17, %s26
      %s37 = sor.u32 %s35, %s36
      %p38 = scmp.eq.s32.totalorder %s37, 0
      %s40 = sadd.s32 %s39, 1
      %s41 = scalar_select %p38, %s39, %s40
      %p44 = pneg %p38
      %p45 = scmp.eq.s32.totalorder %s8, 1
      %p46 = por %p44, %p45
      %p47 = scmp.ne.s32.totalorder %s39, %s42
      %p48 = scmp.eq.s32.totalorder %s8, 0
      %p49 = por %p47, %p48
      %p50 = scmp.ne.s32.totalorder %s39, %s42
      %p51 = scmp.eq.s32.totalorder %s13, 1
      %p52 = por %p50, %p51
      %p53 = scmp.ne.s32.totalorder %s42, %s43
      %p54 = scmp.eq.s32.totalorder %s13, 0
      %p55 = por %p53, %p54
      %p56 = scmp.ne.s32.totalorder %s42, %s43
      %p57 = scmp.eq.s32.totalorder %s14, 1
      %p58 = por %p56, %p57
      %p60 = scmp.ne.s32.totalorder %s43, %s59
      %p61 = scmp.eq.s32.totalorder %s14, 0
      %p62 = por %p60, %p61
      %s63 = ssub.s32 %s17, %s26
      %s64 = ssub.s32 %s16, %s30
      %s65 = sor.u32 %s63, %s64
      %p66 = scmp.eq.s32.totalorder %s65, 0
      %s68 = sadd.s32 %s67, 1
      %s69 = scalar_select %p66, %s67, %s68
      %p72 = pneg %p66
      %p73 = scmp.eq.s32.totalorder %s8, 1
      %p74 = por %p72, %p73
      %p75 = scmp.ne.s32.totalorder %s67, %s70
      %p76 = scmp.eq.s32.totalorder %s8, 0
      %p77 = por %p75, %p76
      %p78 = scmp.ne.s32.totalorder %s67, %s70
      %p79 = scmp.eq.s32.totalorder %s13, 1
      %p80 = por %p78, %p79
      %p81 = scmp.ne.s32.totalorder %s70, %s71
      %p82 = scmp.eq.s32.totalorder %s13, 0
      %p83 = por %p81, %p82
      %p84 = scmp.ne.s32.totalorder %s70, %s71
      %p85 = scmp.eq.s32.totalorder %s14, 1
      %p86 = por %p84, %p85
      %p88 = scmp.ne.s32.totalorder %s71, %s87
      %p89 = scmp.eq.s32.totalorder %s14, 0
      %p90 = por %p88, %p89
      %s91 = ssub.s32 %s15, %s34
      %s92 = ssub.s32 %s16, %s30
      %s93 = sor.u32 %s91, %s92
      %p94 = scmp.eq.s32.totalorder %s93, 0
      %s96 = sadd.s32 %s95, 1
      %s97 = scalar_select %p94, %s95, %s96
      %p100 = pneg %p94
      %p101 = scmp.eq.s32.totalorder %s8, 1
      %p102 = por %p100, %p101
      %p103 = scmp.ne.s32.totalorder %s95, %s98
      %p104 = scmp.eq.s32.totalorder %s8, 0
      %p105 = por %p103, %p104
      %p106 = scmp.ne.s32.totalorder %s95, %s98
      %p107 = scmp.eq.s32.totalorder %s13, 1
      %p108 = por %p106, %p107
      %p109 = scmp.ne.s32.totalorder %s98, %s99
      %p110 = scmp.eq.s32.totalorder %s13, 0
      %p111 = por %p109, %p110
      %p112 = scmp.ne.s32.totalorder %s98, %s99
      %p113 = scmp.eq.s32.totalorder %s14, 1
      %p114 = por %p112, %p113
      %p116 = scmp.ne.s32.totalorder %s99, %s115
      %p117 = scmp.eq.s32.totalorder %s14, 0
      %p118 = por %p116, %p117
      %p119 = scmp.le.s32.totalorder 1, %s8
      %p120 = scmp.lt.s32.totalorder %s8, 3
      %p121 = pnand %p119, %p120
      %p122 = pneg %p121
      // Predicated region
      $region9: #{_lambda_.21} parent=5 // pred_check
        _
      $region10: #{_lambda_.21} parent=5 // pred_check_branch
        %124 = sbr.rel (%p121) target = $region12
      $region11: #{_lambda_.21} parent=5 // pred_region
        %s125 = ssub.s32 %s8, 1
        // Predicated region
        $region13: #{_lambda_.21} parent=11 // pred_check
          %p126 = pneg %p55
        $region14: #{_lambda_.21} parent=11 // pred_check_branch
          %128 = sbr.rel (%p126) target = $region16
        $region15: #{_lambda_.21} parent=11 // pred_region
          %s129 = smul.u32 4, %s18
          %p130 = scmp.lt.s32.totalorder %s129, 3
          %s131 = scalar_select %p130, %s129, 3
          %p132 = scmp.lt.s32.totalorder %s20, 0
          %s133 = scalar_select %p132, %s20, 0
          %s134 = sadd.s32 %s133, %s131
          %s135 = smul.addr %s134, 4
          %s136 = scalar_lea.vmem %s0, %s135
          %s137 = smul.u32 4, %s18
        $region16: #{_lambda_.21} parent=11 // pred_fallthru
          _
      $region12: #{_lambda_.21} parent=5 // pred_fallthru
        _
      %p138 = scmp.lt.s32.totalorder %s8, 2
      // Predicated region
      $region17: #{_lambda_.21} parent=5 // pred_check
        %p139 = pneg %p138
      $region18: #{_lambda_.21} parent=5 // pred_check_branch
        %141 = sbr.rel (%p139) target = $region20
      $region19: #{_lambda_.21} parent=5 // pred_region
        // Predicated region
        $region21: #{_lambda_.21} parent=19 // pred_check
          %p142 = pneg %p77
        $region22: #{_lambda_.21} parent=19 // pred_check_branch
          %144 = sbr.rel (%p142) target = $region24
        $region23: #{_lambda_.21} parent=19 // pred_region
          %s145 = sand.u32 %s67, 1
          %s146 = sand.u32 %s67, 1
          %s147 = smul.addr %s146, 128
          %s148 = scalar_lea.vmem [#allocation3], %s147
          %s149 = smul.u32 16, %s17
          %s150 = smul.u32 2, %s16
          %s151 = smul.addr %s149, 4
          %s152 = sadd.s32 %s150, %s151
          %s153 = smul.addr %s152, 4
          %s154 = scalar_lea.vmem %s1, %s153
          // Predicated region
          $region25: #{_lambda_.21} parent=23 // pred_check
            _
          $region26: #{_lambda_.21} parent=23 // pred_check_branch
            %156 = sbr.rel (0) target = $region28
          $region27: #{_lambda_.21} parent=23 // pred_region
            // Predicated region
            $region29: #{_lambda_.21} parent=27 // pred_check
              _
            $region30: #{_lambda_.21} parent=27 // pred_check_branch
              %158 = sbr.rel (0) target = $region32
            $region31: #{_lambda_.21} parent=27 // pred_region
              // Predicated region
              $region44: #{_lambda_.21} parent=31 // pred_check
                _
              $region45: #{_lambda_.21} parent=31 // pred_check_branch
                %203 = sbr.rel (0) target = $region47
              $region46: #{_lambda_.21} parent=31 // pred_region
                loop: start=0, step=1, limit=1
                $region48: #{_lambda_.21} parent=46 // loop_pre_header
                  _
                $region49: #{_lambda_.21} parent=46 // loop_header
                  %s205 = sphi 0, %s209
                  %p206 = scmp.ge.s32.totalorder %s205, 1
                  %s210 = sphi %s154, %s154
                  %s211 = sphi %s148, %s148
                $region50: #{_lambda_.21} parent=46 // loop_header_branch
                  %208 = sbr.rel (%p206) target = $region54
                $region51: #{_lambda_.21} parent=46 // loop_body
                  %v212 = vld [vmem:[%s210] sm:$0xff]
                  %213 = vst [vmem:[%s211] sm:$0xff] %v212
                  %v214 = vld [vmem:[%s210 + $0x10] sm:$0xff]
                  %215 = vst [vmem:[%s211 + $0x8] sm:$0xff] %v214
                  %v216 = vld [vmem:[%s210 + $0x20] sm:$0xff]
                  %217 = vst [vmem:[%s211 + $0x10] sm:$0xff] %v216
                  %v218 = vld [vmem:[%s210 + $0x30] sm:$0xff]
                  %219 = vst [vmem:[%s211 + $0x18] sm:$0xff] %v218
                  %v220 = vld [vmem:[%s210 + $0x40] sm:$0xff]
                  %221 = vst [vmem:[%s211 + $0x20] sm:$0xff] %v220
                  %v222 = vld [vmem:[%s210 + $0x50] sm:$0xff]
                  %223 = vst [vmem:[%s211 + $0x28] sm:$0xff] %v222
                  %v224 = vld [vmem:[%s210 + $0x60] sm:$0xff]
                  %225 = vst [vmem:[%s211 + $0x30] sm:$0xff] %v224
                  %v226 = vld [vmem:[%s210 + $0x70] sm:$0xff]
                  %227 = vst [vmem:[%s211 + $0x38] sm:$0xff] %v226
                  %v228 = vld [vmem:[%s210 + $0x80] sm:$0xff]
                  %229 = vst [vmem:[%s211 + $0x40] sm:$0xff] %v228
                  %v230 = vld [vmem:[%s210 + $0x90] sm:$0xff]
                  %231 = vst [vmem:[%s211 + $0x48] sm:$0xff] %v230
                  %v232 = vld [vmem:[%s210 + $0xa0] sm:$0xff]
                  %233 = vst [vmem:[%s211 + $0x50] sm:$0xff] %v232
                  %v234 = vld [vmem:[%s210 + $0xb0] sm:$0xff]
                  %235 = vst [vmem:[%s211 + $0x58] sm:$0xff] %v234
                  %v236 = vld [vmem:[%s210 + $0xc0] sm:$0xff]
                  %237 = vst [vmem:[%s211 + $0x60] sm:$0xff] %v236
                  %v238 = vld [vmem:[%s210 + $0xd0] sm:$0xff]
                  %239 = vst [vmem:[%s211 + $0x68] sm:$0xff] %v238
                  %v240 = vld [vmem:[%s210 + $0xe0] sm:$0xff]
                  %241 = vst [vmem:[%s211 + $0x70] sm:$0xff] %v240
                  %v242 = vld [vmem:[%s210 + $0xf0] sm:$0xff]
                  %243 = vst [vmem:[%s211 + $0x78] sm:$0xff] %v242
                $region52: #{_lambda_.21} parent=46 // loop_footer
                  %s209 = sadd.s32 1, %s205
                $region53: #{_lambda_.21} parent=46 // loop_footer_branch
                  %204 = sbr.rel target = $region49
                $region54: #{_lambda_.21} parent=46 // loop_exit
                  _
              $region47: #{_lambda_.21} parent=31 // pred_fallthru
                _
              // Predicated region
              $region55: #{_lambda_.21} parent=31 // pred_check
                _
              $region56: #{_lambda_.21} parent=31 // pred_check_branch
                %245 = sbr.rel target = $region58
              $region57: #{_lambda_.21} parent=31 // pred_region
                _
              $region58: #{_lambda_.21} parent=31 // pred_fallthru
                _
            $region32: #{_lambda_.21} parent=27 // pred_fallthru
              _
            // Predicated region
            $region33: #{_lambda_.21} parent=27 // pred_check
              _
            $region34: #{_lambda_.21} parent=27 // pred_check_branch
              %160 = sbr.rel target = $region36
            $region35: #{_lambda_.21} parent=27 // pred_region
              loop: start=0, step=1, limit=1
              $region37: #{_lambda_.21} parent=35 // loop_pre_header
                _
              $region38: #{_lambda_.21} parent=35 // loop_header
                %s163 = sphi 0, %s167
                %p164 = scmp.ge.s32.totalorder %s163, 1
                %s168 = sphi %s154, %s154
                %s169 = sphi %s148, %s148
              $region39: #{_lambda_.21} parent=35 // loop_header_branch
                %166 = sbr.rel (%p164) target = $region43
              $region40: #{_lambda_.21} parent=35 // loop_body
                %v170 = vld [vmem:[%s168] sm:$0xff]
                %171 = vst [vmem:[%s169] sm:$0xff] %v170
                %v172 = vld [vmem:[%s168 + $0x10] sm:$0xff]
                %173 = vst [vmem:[%s169 + $0x8] sm:$0xff] %v172
                %v174 = vld [vmem:[%s168 + $0x20] sm:$0xff]
                %175 = vst [vmem:[%s169 + $0x10] sm:$0xff] %v174
                %v176 = vld [vmem:[%s168 + $0x30] sm:$0xff]
                %177 = vst [vmem:[%s169 + $0x18] sm:$0xff] %v176
                %v178 = vld [vmem:[%s168 + $0x40] sm:$0xff]
                %179 = vst [vmem:[%s169 + $0x20] sm:$0xff] %v178
                %v180 = vld [vmem:[%s168 + $0x50] sm:$0xff]
                %181 = vst [vmem:[%s169 + $0x28] sm:$0xff] %v180
                %v182 = vld [vmem:[%s168 + $0x60] sm:$0xff]
                %183 = vst [vmem:[%s169 + $0x30] sm:$0xff] %v182
                %v184 = vld [vmem:[%s168 + $0x70] sm:$0xff]
                %185 = vst [vmem:[%s169 + $0x38] sm:$0xff] %v184
                %v186 = vld [vmem:[%s168 + $0x80] sm:$0xff]
                %187 = vst [vmem:[%s169 + $0x40] sm:$0xff] %v186
                %v188 = vld [vmem:[%s168 + $0x90] sm:$0xff]
                %189 = vst [vmem:[%s169 + $0x48] sm:$0xff] %v188
                %v190 = vld [vmem:[%s168 + $0xa0] sm:$0xff]
                %191 = vst [vmem:[%s169 + $0x50] sm:$0xff] %v190
                %v192 = vld [vmem:[%s168 + $0xb0] sm:$0xff]
                %193 = vst [vmem:[%s169 + $0x58] sm:$0xff] %v192
                %v194 = vld [vmem:[%s168 + $0xc0] sm:$0xff]
                %195 = vst [vmem:[%s169 + $0x60] sm:$0xff] %v194
                %v196 = vld [vmem:[%s168 + $0xd0] sm:$0xff]
                %197 = vst [vmem:[%s169 + $0x68] sm:$0xff] %v196
                %v198 = vld [vmem:[%s168 + $0xe0] sm:$0xff]
                %199 = vst [vmem:[%s169 + $0x70] sm:$0xff] %v198
                %v200 = vld [vmem:[%s168 + $0xf0] sm:$0xff]
                %201 = vst [vmem:[%s169 + $0x78] sm:$0xff] %v200
              $region41: #{_lambda_.21} parent=35 // loop_footer
                %s167 = sadd.s32 1, %s163
              $region42: #{_lambda_.21} parent=35 // loop_footer_branch
                %162 = sbr.rel target = $region38
              $region43: #{_lambda_.21} parent=35 // loop_exit
                _
            $region36: #{_lambda_.21} parent=27 // pred_fallthru
              _
          $region28: #{_lambda_.21} parent=23 // pred_fallthru
            _
          %246 = vnop
        $region24: #{_lambda_.21} parent=19 // pred_fallthru
          _
      $region20: #{_lambda_.21} parent=5 // pred_fallthru
        _
      %p247 = scmp.le.s32.totalorder 1, %s8
      %p248 = scmp.lt.s32.totalorder %s8, 3
      %p249 = pnand %p247, %p248
      %p250 = pneg %p249
      // Predicated region
      $region59: #{_lambda_.21} parent=5 // pred_check
        _
      $region60: #{_lambda_.21} parent=5 // pred_check_branch
        %252 = sbr.rel (%p249) target = $region62
      $region61: #{_lambda_.21} parent=5 // pred_region
        %s253 = ssub.s32 %s8, 1
        %s254 = sand.u32 %s70, 1
        %s255 = sand.u32 %s70, 1
        %s256 = smul.addr %s255, 128
        %s257 = scalar_lea.vmem [#allocation3], %s256
        // Predicated region
        $region63: #{_lambda_.21} parent=61 // pred_check
          %p258 = pneg %p83
        $region64: #{_lambda_.21} parent=61 // pred_check_branch
          %260 = sbr.rel (%p258) target = $region66
        $region65: #{_lambda_.21} parent=61 // pred_region
          _
        $region66: #{_lambda_.21} parent=61 // pred_fallthru
          _
        %s261 = smul.u32 4, %s18
        %p262 = scmp.lt.s32.totalorder %s261, 3
        %s263 = scalar_select %p262, %s261, 3
        %p264 = scmp.lt.s32.totalorder %s20, 0
        %s265 = scalar_select %p264, %s20, 0
        %s266 = sadd.s32 %s265, %s263
        %s267 = smul.addr %s266, 4
        %s268 = scalar_lea.vmem %s0, %s267
        %p269 = pneg %p55
        %p270 = pneg %p52
        %s271 = sand.u32 %s70, 1
        %s272 = sand.u32 %s70, 1
        %s273 = smul.addr %s272, 128
        %s274 = scalar_lea.vmem [#allocation3], %s273
        %p275 = pneg %p83
        %p276 = pneg %p80
        %p277 = pneg %p111
        %p278 = pneg %p108
        %s279 = sand.u32 %s98, 1
        %s280 = sand.u32 %s98, 1
        %s281 = smul.addr %s280, 32
        %s282 = scalar_lea.vmem [#allocation4], %s281
        %s283 = smul.u32 4, %s18
        %p284 = scmp.lt.s32.totalorder %s283, 3
        %s285 = scalar_select %p284, %s283, 3
        %p286 = scmp.lt.s32.totalorder %s20, 0
        %s287 = scalar_select %p286, %s20, 0
        %s288 = sadd.s32 %s287, %s285
        %s289 = smul.addr %s288, 4
        %s290 = scalar_lea.vmem %s0, %s289
        %s291 = smul.u32 4, %s18
        %s292 = smul.u32 16, %s20
        %s293 = smul.u32 2, %s19
        %s294 = smul.u32 4, %s18
        %s295 = smul.u32 2, %s19
        %p297 = scmp.eq.s32.totalorder %s20, 0
        // Predicated region
        $region67: #{_lambda_.21} parent=61 // pred_check
          %p298 = pneg %p297
        $region68: #{_lambda_.21} parent=61 // pred_check_branch
          %300 = sbr.rel (%p298) target = $region70
        $region69: #{_lambda_.21} parent=61 // pred_region
          %301 = vst [vmem:[#allocation2] sm:$0xff] 0.0
          %302 = vst [vmem:[#allocation2 + $0x8] sm:$0xff] 0.0
          %303 = vst [vmem:[#allocation2 + $0x10] sm:$0xff] 0.0
          %304 = vst [vmem:[#allocation2 + $0x18] sm:$0xff] 0.0
          %305 = vst [vmem:[#allocation2 + $0x20] sm:$0xff] 0.0
          %306 = vst [vmem:[#allocation2 + $0x28] sm:$0xff] 0.0
          %307 = vst [vmem:[#allocation2 + $0x30] sm:$0xff] 0.0
          %308 = vst [vmem:[#allocation2 + $0x38] sm:$0xff] 0.0
        $region70: #{_lambda_.21} parent=61 // pred_fallthru
          _
        %v309 = vld [vmem:[#allocation2] sm:$0xff]
        %v310 = vld [vmem:[#allocation2 + $0x8] sm:$0xff]
        %v311 = vld [vmem:[#allocation2 + $0x10] sm:$0xff]
        %v312 = vld [vmem:[#allocation2 + $0x18] sm:$0xff]
        %v313 = vld [vmem:[#allocation2 + $0x20] sm:$0xff]
        %v314 = vld [vmem:[#allocation2 + $0x28] sm:$0xff]
        %v315 = vld [vmem:[#allocation2 + $0x30] sm:$0xff]
        %v316 = vld [vmem:[#allocation2 + $0x38] sm:$0xff]
        %v317 = vld [vmem:[%s290] sm:$0xf]
        %v318 = vld [vmem:[%s290 + $0x4] sm:$0xf]
        %v319 = vld [vmem:[%s290 + $0x8] sm:$0xf]
        %v320 = vld [vmem:[%s290 + $0xc] sm:$0xf]
        %v321 = vld [vmem:[%s257] sm:$0xff]
        %v322 = vld [vmem:[%s257 + $0x8] sm:$0xff]
        %v323 = vld [vmem:[%s257 + $0x10] sm:$0xff]
        %v324 = vld [vmem:[%s257 + $0x18] sm:$0xff]
        %v325 = vld [vmem:[%s257 + $0x20] sm:$0xff]
        %v326 = vld [vmem:[%s257 + $0x28] sm:$0xff]
        %v327 = vld [vmem:[%s257 + $0x30] sm:$0xff]
        %v328 = vld [vmem:[%s257 + $0x38] sm:$0xff]
        %v329 = vld [vmem:[%s257 + $0x40] sm:$0xff]
        %v330 = vld [vmem:[%s257 + $0x48] sm:$0xff]
        %v331 = vld [vmem:[%s257 + $0x50] sm:$0xff]
        %v332 = vld [vmem:[%s257 + $0x58] sm:$0xff]
        %v333 = vld [vmem:[%s257 + $0x60] sm:$0xff]
        %v334 = vld [vmem:[%s257 + $0x68] sm:$0xff]
        %v335 = vld [vmem:[%s257 + $0x70] sm:$0xff]
        %v336 = vld [vmem:[%s257 + $0x78] sm:$0xff]
        %v341 = vunpack.c.l.b16 %v317
        %v342 = vunpack.c.l.b16 %v318
        %v343 = vunpack.c.l.b16 %v319
        %v344 = vunpack.c.l.b16 %v320
        %v345 = vpack.c.b16 %v342, %v341
        %v346 = vpack.c.b16 %v344, %v343
        %v365 = vunpack.c.l.b16 %v321
        %v366 = vunpack.c.h.b16 %v321
        %v367 = vunpack.c.l.b16 %v322
        %v368 = vunpack.c.h.b16 %v322
        %v369 = vunpack.c.l.b16 %v323
        %v370 = vunpack.c.h.b16 %v323
        %v371 = vunpack.c.l.b16 %v324
        %v372 = vunpack.c.h.b16 %v324
        %v373 = vunpack.c.l.b16 %v325
        %v374 = vunpack.c.h.b16 %v325
        %v375 = vunpack.c.l.b16 %v326
        %v376 = vunpack.c.h.b16 %v326
        %v377 = vunpack.c.l.b16 %v327
        %v378 = vunpack.c.h.b16 %v327
        %v379 = vunpack.c.l.b16 %v328
        %v380 = vunpack.c.h.b16 %v328
        %v381 = vunpack.c.l.b16 %v329
        %v382 = vunpack.c.h.b16 %v329
        %v383 = vunpack.c.l.b16 %v330
        %v384 = vunpack.c.h.b16 %v330
        %v385 = vunpack.c.l.b16 %v331
        %v386 = vunpack.c.h.b16 %v331
        %v387 = vunpack.c.l.b16 %v332
        %v388 = vunpack.c.h.b16 %v332
        %v389 = vunpack.c.l.b16 %v333
        %v390 = vunpack.c.h.b16 %v333
        %v391 = vunpack.c.l.b16 %v334
        %v392 = vunpack.c.h.b16 %v334
        %v393 = vunpack.c.l.b16 %v335
        %v394 = vunpack.c.h.b16 %v335
        %v395 = vunpack.c.l.b16 %v336
        %v396 = vunpack.c.h.b16 %v336
        %v397 = vpack.c.b16 %v367, %v365
        %v398 = vpack.c.b16 %v368, %v366
        %v399 = vpack.c.b16 %v371, %v369
        %v400 = vpack.c.b16 %v372, %v370
        %v401 = vpack.c.b16 %v375, %v373
        %v402 = vpack.c.b16 %v376, %v374
        %v403 = vpack.c.b16 %v379, %v377
        %v404 = vpack.c.b16 %v380, %v378
        %v405 = vpack.c.b16 %v383, %v381
        %v406 = vpack.c.b16 %v384, %v382
        %v407 = vpack.c.b16 %v387, %v385
        %v408 = vpack.c.b16 %v388, %v386
        %v409 = vpack.c.b16 %v391, %v389
        %v410 = vpack.c.b16 %v392, %v390
        %v411 = vpack.c.b16 %v395, %v393
        %v412 = vpack.c.b16 %v396, %v394
        %429 = vmatprep.subr.bf16.mxu0 %v398
        %430 = vmatpush1.bf16.msra.mxu0 %v397
        %431 = vmatprep.subr.bf16.mxu0 %v400
        %432 = vmatpush1.bf16.msra.mxu0 %v399
        %433 = vmatprep.subr.bf16.mxu0 %v402
        %434 = vmatpush1.bf16.msra.mxu0 %v401
        %435 = vmatprep.subr.bf16.mxu0 %v404
        %436 = vmatpush1.bf16.msra.mxu0 %v403
        %437 = vmatprep.subr.bf16.mxu0 %v406
        %438 = vmatpush1.bf16.msra.mxu0 %v405
        %439 = vmatprep.subr.bf16.mxu0 %v408
        %440 = vmatpush1.bf16.msra.mxu0 %v407
        %441 = vmatprep.subr.bf16.mxu0 %v410
        %442 = vmatpush1.bf16.msra.mxu0 %v409
        %443 = vmatprep.subr.bf16.mxu0 %v412
        %444 = vmatpush1.bf16.msra.mxu0 %v411
        %445 = vmatprep.subr.bf16.mxu0 0
        %446 = vmatpush1.bf16.msra.mxu0 0
        %447 = vmatprep.subr.bf16.mxu0 0
        %448 = vmatpush1.bf16.msra.mxu0 0
        %449 = vmatprep.subr.bf16.mxu0 0
        %450 = vmatpush1.bf16.msra.mxu0 0
        %451 = vmatprep.subr.bf16.mxu0 0
        %452 = vmatpush1.bf16.msra.mxu0 0
        %453 = vmatprep.subr.bf16.mxu0 0
        %454 = vmatpush1.bf16.msra.mxu0 0
        %455 = vmatprep.subr.bf16.mxu0 0
        %456 = vmatpush1.bf16.msra.mxu0 0
        %457 = vmatprep.subr.bf16.mxu0 0
        %458 = vmatpush1.bf16.msra.mxu0 0
        %459 = vmatprep.subr.bf16.mxu0 0
        %460 = vmatpush1.bf16.msra.mxu0 0
        %461 = vmatprep.mubr.bf16.mxu0 0
        %462 = vmatmul.mubr.bf16.gmra.mrb[0].mxu0 %v345
        %v463 = vpop.f32.mrb[0].mxu0
        %v464 = vadd.f32 0.0, %v463
        %v465 = vpop.f32.mrb[0].mxu0
        %v466 = vadd.f32 0.0, %v465
        %v467 = vpop.f32.mrb[0].mxu0
        %v468 = vadd.f32 0.0, %v467
        %v469 = vpop.f32.mrb[0].mxu0
        %v470 = vadd.f32 0.0, %v469
        %471 = vmatprep.mubr.bf16.mxu0 0
        %472 = vmatmul.mubr.bf16.gmra.mrb[0].mxu0 %v346
        %v473 = vpop.f32.mrb[0].mxu0
        %v474 = vadd.f32 0.0, %v473
        %v475 = vpop.f32.mrb[0].mxu0
        %v476 = vadd.f32 0.0, %v475
        %v477 = vpop.f32.mrb[0].mxu0
        %v478 = vadd.f32 0.0, %v477
        %v479 = vpop.f32.mrb[0].mxu0
        %v480 = vadd.f32 0.0, %v479
        %481 = vdwg.mxu0
        %v482 = vadd.f32 %v309, %v464
        %v483 = vadd.f32 %v310, %v466
        %v484 = vadd.f32 %v311, %v468
        %v485 = vadd.f32 %v312, %v470
        %v486 = vadd.f32 %v313, %v474
        %v487 = vadd.f32 %v314, %v476
        %v488 = vadd.f32 %v315, %v478
        %v489 = vadd.f32 %v316, %v480
        %490 = vst [vmem:[#allocation2] sm:$0xff] %v482
        %491 = vst [vmem:[#allocation2 + $0x8] sm:$0xff] %v483
        %492 = vst [vmem:[#allocation2 + $0x10] sm:$0xff] %v484
        %493 = vst [vmem:[#allocation2 + $0x18] sm:$0xff] %v485
        %494 = vst [vmem:[#allocation2 + $0x20] sm:$0xff] %v486
        %495 = vst [vmem:[#allocation2 + $0x28] sm:$0xff] %v487
        %496 = vst [vmem:[#allocation2 + $0x30] sm:$0xff] %v488
        %497 = vst [vmem:[#allocation2 + $0x38] sm:$0xff] %v489
        // Predicated region
        $region71: #{_lambda_.21} parent=61 // pred_check
          %p498 = pneg %p297
        $region72: #{_lambda_.21} parent=61 // pred_check_branch
          %500 = sbr.rel (%p498) target = $region74
        $region73: #{_lambda_.21} parent=61 // pred_region
          %v501 = vld [vmem:[#allocation2] sm:$0xff]
          %v502 = vld [vmem:[#allocation2 + $0x8] sm:$0xff]
          %v503 = vld [vmem:[#allocation2 + $0x10] sm:$0xff]
          %v504 = vld [vmem:[#allocation2 + $0x18] sm:$0xff]
          %v505 = vld [vmem:[#allocation2 + $0x20] sm:$0xff]
          %v506 = vld [vmem:[#allocation2 + $0x28] sm:$0xff]
          %v507 = vld [vmem:[#allocation2 + $0x30] sm:$0xff]
          %v508 = vld [vmem:[#allocation2 + $0x38] sm:$0xff]
          %v509 = vmul.f32 %v501, 0.5
          %v510 = vmul.f32 %v502, 0.5
          %v511 = vmul.f32 %v503, 0.5
          %v512 = vmul.f32 %v504, 0.5
          %v513 = vmul.f32 %v505, 0.5
          %v514 = vmul.f32 %v506, 0.5
          %v515 = vmul.f32 %v507, 0.5
          %v516 = vmul.f32 %v508, 0.5
          %v517 = vmul.f32 %v501, 0.044715
          %v518 = vmul.f32 %v502, 0.044715
          %v519 = vmul.f32 %v503, 0.044715
          %v520 = vmul.f32 %v504, 0.044715
          %v521 = vmul.f32 %v505, 0.044715
          %v522 = vmul.f32 %v506, 0.044715
          %v523 = vmul.f32 %v507, 0.044715
          %v524 = vmul.f32 %v508, 0.044715
          %v525 = vmul.f32 %v517, %v501
          %v526 = vmul.f32 %v518, %v502
          %v527 = vmul.f32 %v519, %v503
          %v528 = vmul.f32 %v520, %v504
          %v529 = vmul.f32 %v521, %v505
          %v530 = vmul.f32 %v522, %v506
          %v531 = vmul.f32 %v523, %v507
          %v532 = vmul.f32 %v524, %v508
          %v533 = vmul.f32 %v525, %v501
          %v534 = vmul.f32 %v526, %v502
          %v535 = vmul.f32 %v527, %v503
          %v536 = vmul.f32 %v528, %v504
          %v537 = vmul.f32 %v529, %v505
          %v538 = vmul.f32 %v530, %v506
          %v539 = vmul.f32 %v531, %v507
          %v540 = vmul.f32 %v532, %v508
          %v541 = vadd.f32 %v501, %v533
          %v542 = vadd.f32 %v502, %v534
          %v543 = vadd.f32 %v503, %v535
          %v544 = vadd.f32 %v504, %v536
          %v545 = vadd.f32 %v505, %v537
          %v546 = vadd.f32 %v506, %v538
          %v547 = vadd.f32 %v507, %v539
          %v548 = vadd.f32 %v508, %v540
          %v549 = vmul.f32 %v541, 0.7978846
          %v550 = vmul.f32 %v542, 0.7978846
          %v551 = vmul.f32 %v543, 0.7978846
          %v552 = vmul.f32 %v544, 0.7978846
          %v553 = vmul.f32 %v545, 0.7978846
          %v554 = vmul.f32 %v546, 0.7978846
          %v555 = vmul.f32 %v547, 0.7978846
          %v556 = vmul.f32 %v548, 0.7978846
          %v557 = vtanh.pop %v549
          %v558 = vtanh.pop %v550
          %v559 = vtanh.pop %v551
          %v560 = vtanh.pop %v552
          %v561 = vtanh.pop %v553
          %v562 = vtanh.pop %v554
          %v563 = vtanh.pop %v555
          %v564 = vtanh.pop %v556
          %v565 = vadd.f32 %v557, 1.0
          %v566 = vadd.f32 %v558, 1.0
          %v567 = vadd.f32 %v559, 1.0
          %v568 = vadd.f32 %v560, 1.0
          %v569 = vadd.f32 %v561, 1.0
          %v570 = vadd.f32 %v562, 1.0
          %v571 = vadd.f32 %v563, 1.0
          %v572 = vadd.f32 %v564, 1.0
          %v573 = vmul.f32 %v509, %v565
          %v574 = vmul.f32 %v510, %v566
          %v575 = vmul.f32 %v511, %v567
          %v576 = vmul.f32 %v512, %v568
          %v577 = vmul.f32 %v513, %v569
          %v578 = vmul.f32 %v514, %v570
          %v579 = vmul.f32 %v515, %v571
          %v580 = vmul.f32 %v516, %v572
          %v581 = vpack.c.bf16 %v575, %v573
          %v582 = vpack.c.bf16 %v576, %v574
          %v583 = vpack.c.bf16 %v579, %v577
          %v584 = vpack.c.bf16 %v580, %v578
          %v589 = vunpack.c.l.b16 %v581
          %v590 = vunpack.c.l.b16 %v582
          %v591 = vunpack.c.h.b16 %v581
          %v592 = vunpack.c.h.b16 %v582
          %v593 = vunpack.c.l.b16 %v583
          %v594 = vunpack.c.l.b16 %v584
          %v595 = vunpack.c.h.b16 %v583
          %v596 = vunpack.c.h.b16 %v584
          %v597 = vpack.c.b16 %v590, %v589
          %v598 = vpack.c.b16 %v592, %v591
          %v599 = vpack.c.b16 %v594, %v593
          %v600 = vpack.c.b16 %v596, %v595
          %605 = vst [vmem:[%s282] sm:$0xff] %v597
          %606 = vst [vmem:[%s282 + $0x8] sm:$0xff] %v598
          %607 = vst [vmem:[%s282 + $0x10] sm:$0xff] %v599
          %608 = vst [vmem:[%s282 + $0x18] sm:$0xff] %v600
        $region74: #{_lambda_.21} parent=61 // pred_fallthru
          _
        %s609 = sand.u32 %s98, 1
        %s610 = sand.u32 %s98, 1
        %s611 = smul.addr %s610, 32
        %s612 = scalar_lea.vmem [#allocation4], %s611
        // Predicated region
        $region75: #{_lambda_.21} parent=61 // pred_check
          %p613 = pneg %p108
        $region76: #{_lambda_.21} parent=61 // pred_check_branch
          %615 = sbr.rel (%p613) target = $region78
        $region77: #{_lambda_.21} parent=61 // pred_region
          %s616 = smul.u32 4, %s18
          %s617 = smul.u32 2, %s19
          %s618 = smul.addr %s616, 4
          %s619 = sadd.s32 %s617, %s618
          %s620 = smul.addr %s619, 4
          %s621 = scalar_lea.vmem %s2, %s620
          // Predicated region
          $region79: #{_lambda_.21} parent=77 // pred_check
            _
          $region80: #{_lambda_.21} parent=77 // pred_check_branch
            %623 = sbr.rel (0) target = $region82
          $region81: #{_lambda_.21} parent=77 // pred_region
            // Predicated region
            $region83: #{_lambda_.21} parent=81 // pred_check
              _
            $region84: #{_lambda_.21} parent=81 // pred_check_branch
              %625 = sbr.rel (0) target = $region86
            $region85: #{_lambda_.21} parent=81 // pred_region
              // Predicated region
              $region98: #{_lambda_.21} parent=85 // pred_check
                _
              $region99: #{_lambda_.21} parent=85 // pred_check_branch
                %646 = sbr.rel (0) target = $region101
              $region100: #{_lambda_.21} parent=85 // pred_region
                loop: start=0, step=1, limit=1
                $region102: #{_lambda_.21} parent=100 // loop_pre_header
                  _
                $region103: #{_lambda_.21} parent=100 // loop_header
                  %s648 = sphi 0, %s652
                  %p649 = scmp.ge.s32.totalorder %s648, 1
                  %s653 = sphi %s612, %s612
                  %s654 = sphi %s621, %s621
                $region104: #{_lambda_.21} parent=100 // loop_header_branch
                  %651 = sbr.rel (%p649) target = $region108
                $region105: #{_lambda_.21} parent=100 // loop_body
                  %v655 = vld [vmem:[%s653] sm:$0xff]
                  %656 = vst [vmem:[%s654] sm:$0xff] %v655
                  %v657 = vld [vmem:[%s653 + $0x8] sm:$0xff]
                  %658 = vst [vmem:[%s654 + $0x10] sm:$0xff] %v657
                  %v659 = vld [vmem:[%s653 + $0x10] sm:$0xff]
                  %660 = vst [vmem:[%s654 + $0x20] sm:$0xff] %v659
                  %v661 = vld [vmem:[%s653 + $0x18] sm:$0xff]
                  %662 = vst [vmem:[%s654 + $0x30] sm:$0xff] %v661
                $region106: #{_lambda_.21} parent=100 // loop_footer
                  %s652 = sadd.s32 1, %s648
                $region107: #{_lambda_.21} parent=100 // loop_footer_branch
                  %647 = sbr.rel target = $region103
                $region108: #{_lambda_.21} parent=100 // loop_exit
                  _
              $region101: #{_lambda_.21} parent=85 // pred_fallthru
                _
              // Predicated region
              $region109: #{_lambda_.21} parent=85 // pred_check
                _
              $region110: #{_lambda_.21} parent=85 // pred_check_branch
                %664 = sbr.rel target = $region112
              $region111: #{_lambda_.21} parent=85 // pred_region
                _
              $region112: #{_lambda_.21} parent=85 // pred_fallthru
                _
            $region86: #{_lambda_.21} parent=81 // pred_fallthru
              _
            // Predicated region
            $region87: #{_lambda_.21} parent=81 // pred_check
              _
            $region88: #{_lambda_.21} parent=81 // pred_check_branch
              %627 = sbr.rel target = $region90
            $region89: #{_lambda_.21} parent=81 // pred_region
              loop: start=0, step=1, limit=1
              $region91: #{_lambda_.21} parent=89 // loop_pre_header
                _
              $region92: #{_lambda_.21} parent=89 // loop_header
                %s630 = sphi 0, %s634
                %p631 = scmp.ge.s32.totalorder %s630, 1
                %s635 = sphi %s612, %s612
                %s636 = sphi %s621, %s621
              $region93: #{_lambda_.21} parent=89 // loop_header_branch
                %633 = sbr.rel (%p631) target = $region97
              $region94: #{_lambda_.21} parent=89 // loop_body
                %v637 = vld [vmem:[%s635] sm:$0xff]
                %638 = vst [vmem:[%s636] sm:$0xff] %v637
                %v639 = vld [vmem:[%s635 + $0x8] sm:$0xff]
                %640 = vst [vmem:[%s636 + $0x10] sm:$0xff] %v639
                %v641 = vld [vmem:[%s635 + $0x10] sm:$0xff]
                %642 = vst [vmem:[%s636 + $0x20] sm:$0xff] %v641
                %v643 = vld [vmem:[%s635 + $0x18] sm:$0xff]
                %644 = vst [vmem:[%s636 + $0x30] sm:$0xff] %v643
              $region95: #{_lambda_.21} parent=89 // loop_footer
                %s634 = sadd.s32 1, %s630
              $region96: #{_lambda_.21} parent=89 // loop_footer_branch
                %629 = sbr.rel target = $region92
              $region97: #{_lambda_.21} parent=89 // loop_exit
                _
            $region90: #{_lambda_.21} parent=81 // pred_fallthru
              _
          $region82: #{_lambda_.21} parent=77 // pred_fallthru
            _
          %665 = vnop
        $region78: #{_lambda_.21} parent=61 // pred_fallthru
          _
      $region62: #{_lambda_.21} parent=5 // pred_fallthru
        _
      %p666 = scmp.le.s32.totalorder 2, %s8
      // Predicated region
      $region113: #{_lambda_.21} parent=5 // pred_check
        %p667 = pneg %p666
      $region114: #{_lambda_.21} parent=5 // pred_check_branch
        %669 = sbr.rel (%p667) target = $region116
      $region115: #{_lambda_.21} parent=5 // pred_region
        %s670 = ssub.s32 %s8, 2
        // Predicated region
        $region117: #{_lambda_.21} parent=115 // pred_check
          %p671 = pneg %p114
        $region118: #{_lambda_.21} parent=115 // pred_check_branch
          %673 = sbr.rel (%p671) target = $region120
        $region119: #{_lambda_.21} parent=115 // pred_region
          %s674 = sand.u32 %s99, 1
          %s675 = sand.u32 %s99, 1
          %s676 = smul.addr %s675, 32
          %s677 = scalar_lea.vmem [#allocation4], %s676
        $region120: #{_lambda_.21} parent=115 // pred_fallthru
          _
      $region116: #{_lambda_.21} parent=5 // pred_fallthru
        _
    $region6: #{_lambda_.21} parent=1 // loop_footer
      %s12 = sadd.s32 1, %s8
    $region7: #{_lambda_.21} parent=1 // loop_footer_branch
      %7 = sbr.rel target = $region3
    $region8: #{_lambda_.21} parent=1 // loop_exit
      _

// kernel: _lambda_.31
$region0: #{_lambda_.31}
  #allocation0 [shape = 'u32[]', space=smem, size = 0x4, offset = 0x4, fixed_abs, tag = 'smem constant byte address 0x4 - core index']
  #allocation1 [shape = 'u32[144,128]{1,0:T(1,128)}', space=vmem, size = 0x12000, scoped, tag = 'internal scratch']
  %s0 = inlined_call_operand.vmem [shape: bf16[32,128], index: 0, kind: input, shape index: {}]
  %s1 = inlined_call_operand.vmem [shape: bf16[128,256], index: 1, kind: input, shape index: {}]
  %s2 = inlined_call_operand.hbm [shape: f32[32,256], index: 2, kind: output, shape index: {}]
  %s3 = sld [smem:[#allocation0]]
  $region22: #{_lambda_.31} parent=0
    _
  %s5 = ssub.s32 1, %s3
  %s6 = scalar_select 0, %s5, %s3
  $region1: #{_lambda_.31} parent=0
    #allocation2 [shape = 'u8[32768]{0}', space=vmem, size = 0x8000, scoped, tag = 'output window, operand 0, single buffered']
    #allocation3 [shape = 's32[1]{0}', space=sflag, size = 0x4, scoped, tag = 'scoped memory for _lambda_.31']
    %7 = vsyncpa [#allocation3], 0
    // Predicated region
    $region2: #{_lambda_.31} parent=1 // pred_check
      _
    $region3: #{_lambda_.31} parent=1 // pred_check_branch
      %9 = sbr.rel (0) target = $region5
    $region4: #{_lambda_.31} parent=1 // pred_region
      _
    $region5: #{_lambda_.31} parent=1 // pred_fallthru
      _
    // Predicated region
    $region6: #{_lambda_.31} parent=1 // pred_check
      _
    $region7: #{_lambda_.31} parent=1 // pred_check_branch
      %11 = sbr.rel (0) target = $region9
    $region8: #{_lambda_.31} parent=1 // pred_region
      _
    $region9: #{_lambda_.31} parent=1 // pred_fallthru
      _
    %p13 = scmp.eq.s32.totalorder 0, 0
    // Predicated region
    $region10: #{_lambda_.31} parent=1 // pred_check
      %p14 = pneg %p13
    $region11: #{_lambda_.31} parent=1 // pred_check_branch
      %16 = sbr.rel (%p14) target = $region13
    $region12: #{_lambda_.31} parent=1 // pred_region
      %17 = vst [vmem:[#allocation2] sm:$0xff] 0.0
      %18 = vst [vmem:[#allocation2 + $0x8] sm:$0xff] 0.0
      %19 = vst [vmem:[#allocation2 + $0x10] sm:$0xff] 0.0
      %20 = vst [vmem:[#allocation2 + $0x18] sm:$0xff] 0.0
      %21 = vst [vmem:[#allocation2 + $0x20] sm:$0xff] 0.0
      %22 = vst [vmem:[#allocation2 + $0x28] sm:$0xff] 0.0
      %23 = vst [vmem:[#allocation2 + $0x30] sm:$0xff] 0.0
      %24 = vst [vmem:[#allocation2 + $0x38] sm:$0xff] 0.0
    $region13: #{_lambda_.31} parent=1 // pred_fallthru
      _
    %v25 = vld [vmem:[#allocation2] sm:$0xff]
    %v26 = vld [vmem:[#allocation2 + $0x8] sm:$0xff]
    %v27 = vld [vmem:[#allocation2 + $0x10] sm:$0xff]
    %v28 = vld [vmem:[#allocation2 + $0x18] sm:$0xff]
    %v29 = vld [vmem:[#allocation2 + $0x20] sm:$0xff]
    %v30 = vld [vmem:[#allocation2 + $0x28] sm:$0xff]
    %v31 = vld [vmem:[#allocation2 + $0x30] sm:$0xff]
    %v32 = vld [vmem:[#allocation2 + $0x38] sm:$0xff]
    %v33 = vld [vmem:[%s0] sm:$0xf]
    %v34 = vld [vmem:[%s0 + $0x4] sm:$0xf]
    %v35 = vld [vmem:[%s0 + $0x8] sm:$0xf]
    %v36 = vld [vmem:[%s0 + $0xc] sm:$0xf]
    %v37 = vld [vmem:[%s1] sm:$0xff]
    %v38 = vld [vmem:[%s1 + $0x8] sm:$0xff]
    %v39 = vld [vmem:[%s1 + $0x10] sm:$0xff]
    %v40 = vld [vmem:[%s1 + $0x18] sm:$0xff]
    %v41 = vld [vmem:[%s1 + $0x20] sm:$0xff]
    %v42 = vld [vmem:[%s1 + $0x28] sm:$0xff]
    %v43 = vld [vmem:[%s1 + $0x30] sm:$0xff]
    %v44 = vld [vmem:[%s1 + $0x38] sm:$0xff]
    %v45 = vld [vmem:[%s1 + $0x40] sm:$0xff]
    %v46 = vld [vmem:[%s1 + $0x48] sm:$0xff]
    %v47 = vld [vmem:[%s1 + $0x50] sm:$0xff]
    %v48 = vld [vmem:[%s1 + $0x58] sm:$0xff]
    %v49 = vld [vmem:[%s1 + $0x60] sm:$0xff]
    %v50 = vld [vmem:[%s1 + $0x68] sm:$0xff]
    %v51 = vld [vmem:[%s1 + $0x70] sm:$0xff]
    %v52 = vld [vmem:[%s1 + $0x78] sm:$0xff]
    %v57 = vunpack.c.l.b16 %v33
    %v58 = vunpack.c.l.b16 %v34
    %v59 = vunpack.c.l.b16 %v35
    %v60 = vunpack.c.l.b16 %v36
    %v61 = vpack.c.b16 %v58, %v57
    %v62 = vpack.c.b16 %v60, %v59
    %v81 = vunpack.c.l.b16 %v37
    %v82 = vunpack.c.h.b16 %v37
    %v83 = vunpack.c.l.b16 %v38
    %v84 = vunpack.c.h.b16 %v38
    %v85 = vunpack.c.l.b16 %v39
    %v86 = vunpack.c.h.b16 %v39
    %v87 = vunpack.c.l.b16 %v40
    %v88 = vunpack.c.h.b16 %v40
    %v89 = vunpack.c.l.b16 %v41
    %v90 = vunpack.c.h.b16 %v41
    %v91 = vunpack.c.l.b16 %v42
    %v92 = vunpack.c.h.b16 %v42
    %v93 = vunpack.c.l.b16 %v43
    %v94 = vunpack.c.h.b16 %v43
    %v95 = vunpack.c.l.b16 %v44
    %v96 = vunpack.c.h.b16 %v44
    %v97 = vunpack.c.l.b16 %v45
    %v98 = vunpack.c.h.b16 %v45
    %v99 = vunpack.c.l.b16 %v46
    %v100 = vunpack.c.h.b16 %v46
    %v101 = vunpack.c.l.b16 %v47
    %v102 = vunpack.c.h.b16 %v47
    %v103 = vunpack.c.l.b16 %v48
    %v104 = vunpack.c.h.b16 %v48
    %v105 = vunpack.c.l.b16 %v49
    %v106 = vunpack.c.h.b16 %v49
    %v107 = vunpack.c.l.b16 %v50
    %v108 = vunpack.c.h.b16 %v50
    %v109 = vunpack.c.l.b16 %v51
    %v110 = vunpack.c.h.b16 %v51
    %v111 = vunpack.c.l.b16 %v52
    %v112 = vunpack.c.h.b16 %v52
    %v113 = vpack.c.b16 %v83, %v81
    %v114 = vpack.c.b16 %v84, %v82
    %v115 = vpack.c.b16 %v87, %v85
    %v116 = vpack.c.b16 %v88, %v86
    %v117 = vpack.c.b16 %v91, %v89
    %v118 = vpack.c.b16 %v92, %v90
    %v119 = vpack.c.b16 %v95, %v93
    %v120 = vpack.c.b16 %v96, %v94
    %v121 = vpack.c.b16 %v99, %v97
    %v122 = vpack.c.b16 %v100, %v98
    %v123 = vpack.c.b16 %v103, %v101
    %v124 = vpack.c.b16 %v104, %v102
    %v125 = vpack.c.b16 %v107, %v105
    %v126 = vpack.c.b16 %v108, %v106
    %v127 = vpack.c.b16 %v111, %v109
    %v128 = vpack.c.b16 %v112, %v110
    %145 = vmatprep.subr.bf16.mxu0 %v114
    %146 = vmatpush1.bf16.msra.mxu0 %v113
    %147 = vmatprep.subr.bf16.mxu0 %v116
    %148 = vmatpush1.bf16.msra.mxu0 %v115
    %149 = vmatprep.subr.bf16.mxu0 %v118
    %150 = vmatpush1.bf16.msra.mxu0 %v117
    %151 = vmatprep.subr.bf16.mxu0 %v120
    %152 = vmatpush1.bf16.msra.mxu0 %v119
    %153 = vmatprep.subr.bf16.mxu0 %v122
    %154 = vmatpush1.bf16.msra.mxu0 %v121
    %155 = vmatprep.subr.bf16.mxu0 %v124
    %156 = vmatpush1.bf16.msra.mxu0 %v123
    %157 = vmatprep.subr.bf16.mxu0 %v126
    %158 = vmatpush1.bf16.msra.mxu0 %v125
    %159 = vmatprep.subr.bf16.mxu0 %v128
    %160 = vmatpush1.bf16.msra.mxu0 %v127
    %161 = vmatprep.subr.bf16.mxu0 0
    %162 = vmatpush1.bf16.msra.mxu0 0
    %163 = vmatprep.subr.bf16.mxu0 0
    %164 = vmatpush1.bf16.msra.mxu0 0
    %165 = vmatprep.subr.bf16.mxu0 0
    %166 = vmatpush1.bf16.msra.mxu0 0
    %167 = vmatprep.subr.bf16.mxu0 0
    %168 = vmatpush1.bf16.msra.mxu0 0
    %169 = vmatprep.subr.bf16.mxu0 0
    %170 = vmatpush1.bf16.msra.mxu0 0
    %171 = vmatprep.subr.bf16.mxu0 0
    %172 = vmatpush1.bf16.msra.mxu0 0
    %173 = vmatprep.subr.bf16.mxu0 0
    %174 = vmatpush1.bf16.msra.mxu0 0
    %175 = vmatprep.subr.bf16.mxu0 0
    %176 = vmatpush1.bf16.msra.mxu0 0
    %177 = vmatprep.mubr.bf16.mxu0 0
    %178 = vmatmul.mubr.bf16.gmra.mrb[0].mxu0 %v61
    %v179 = vpop.f32.mrb[0].mxu0
    %v180 = vadd.f32 0.0, %v179
    %v181 = vpop.f32.mrb[0].mxu0
    %v182 = vadd.f32 0.0, %v181
    %v183 = vpop.f32.mrb[0].mxu0
    %v184 = vadd.f32 0.0, %v183
    %v185 = vpop.f32.mrb[0].mxu0
    %v186 = vadd.f32 0.0, %v185
    %187 = vmatprep.mubr.bf16.mxu0 0
    %188 = vmatmul.mubr.bf16.gmra.mrb[0].mxu0 %v62
    %v189 = vpop.f32.mrb[0].mxu0
    %v190 = vadd.f32 0.0, %v189
    %v191 = vpop.f32.mrb[0].mxu0
    %v192 = vadd.f32 0.0, %v191
    %v193 = vpop.f32.mrb[0].mxu0
    %v194 = vadd.f32 0.0, %v193
    %v195 = vpop.f32.mrb[0].mxu0
    %v196 = vadd.f32 0.0, %v195
    %197 = vdwg.mxu0
    %v198 = vadd.f32 %v25, %v180
    %v199 = vadd.f32 %v26, %v182
    %v200 = vadd.f32 %v27, %v184
    %v201 = vadd.f32 %v28, %v186
    %v202 = vadd.f32 %v29, %v190
    %v203 = vadd.f32 %v30, %v192
    %v204 = vadd.f32 %v31, %v194
    %v205 = vadd.f32 %v32, %v196
    %206 = vst [vmem:[#allocation2] sm:$0xff] %v198
    %207 = vst [vmem:[#allocation2 + $0x8] sm:$0xff] %v199
    %208 = vst [vmem:[#allocation2 + $0x10] sm:$0xff] %v200
    %209 = vst [vmem:[#allocation2 + $0x18] sm:$0xff] %v201
    %210 = vst [vmem:[#allocation2 + $0x20] sm:$0xff] %v202
    %211 = vst [vmem:[#allocation2 + $0x28] sm:$0xff] %v203
    %212 = vst [vmem:[#allocation2 + $0x30] sm:$0xff] %v204
    %213 = vst [vmem:[#allocation2 + $0x38] sm:$0xff] %v205
    // Predicated region
    $region14: #{_lambda_.31} parent=1 // pred_check
      _
    $region15: #{_lambda_.31} parent=1 // pred_check_branch
      %215 = sbr.rel (0) target = $region17
    $region16: #{_lambda_.31} parent=1 // pred_region
      %s217 = ssub.s32 1024, 1024
      %218 = vsyncadd [#allocation3], %s217
      %s219 = sshll.u32 [#allocation2], 4
      %s220 = int_to_ptr.vmem [resolvable:$true] %s219
      %225 = dma.vmem_to_hbm [thread:$0]  %s220, 1024, %s2, [#allocation3], 256, 256, 16
    $region17: #{_lambda_.31} parent=1 // pred_fallthru
      _
    // Predicated region
    $region18: #{_lambda_.31} parent=1 // pred_check
      _
    $region19: #{_lambda_.31} parent=1 // pred_check_branch
      %227 = sbr.rel (0) target = $region21
    $region20: #{_lambda_.31} parent=1 // pred_region
      %228 = dma.done [#allocation3], 1024
    $region21: #{_lambda_.31} parent=1 // pred_fallthru
      _
    %229 = vsyncpa [#allocation3], 1

// kernel: _lambda_.18
$region0: #{_lambda_.18}
  #allocation0 [shape = 'u32[]', space=smem, size = 0x4, offset = 0x4, fixed_abs, tag = 'smem constant byte address 0x4 - core index']
  #allocation1 [shape = 'u32[144,128]{1,0:T(1,128)}', space=vmem, size = 0x12000, scoped, tag = 'internal scratch']
  #allocation2 [shape = 'bf16[8,128]{1,0:T(8,128)(2,1)}', space=vmem, size = 0x800, scoped, tag = 'scratch operand']
  #allocation3 [shape = 'f32[4,8,1]{2,1,0:T(8,128)}', space=vmem, size = 0x4000, scoped, tag = 'scratch operand']
  #allocation4 [shape = 'f32[4,8,1]{2,1,0:T(8,128)}', space=vmem, size = 0x4000, scoped, tag = 'scratch operand']
  #allocation5 [shape = 'f32[4,8,32]{2,1,0:T(8,128)}', space=vmem, size = 0x4000, scoped, tag = 'scratch operand']
  %s0 = inlined_call_operand.vmem [shape: bf16[2,16,384], index: 0, kind: input, shape index: {}, may-alias: {0,1,2}]
  %s1 = inlined_call_operand.vmem [shape: bf16[2,16,384], index: 1, kind: input, shape index: {}, may-alias: {0,1,2}]
  %s2 = inlined_call_operand.vmem [shape: bf16[2,16,384], index: 2, kind: input, shape index: {}, may-alias: {0,1,2}]
  %s3 = inlined_call_operand.vmem [shape: f32[16,16], index: 3, kind: input, shape index: {}, may-alias: {3,5}]
  %s4 = inlined_call_operand.vmem [shape: f32[16,16], index: 4, kind: input, shape index: {}, may-alias: {4,6}]
  %s5 = inlined_call_operand.vmem [shape: f32[16,16], index: 5, kind: input, shape index: {}, may-alias: {3,5}]
  %s6 = inlined_call_operand.vmem [shape: f32[16,16], index: 6, kind: input, shape index: {}, may-alias: {4,6}]
  %s7 = inlined_call_operand.vmem [shape: bf16[2,16,128], index: 7, kind: output, shape index: {}]
  %s8 = sld [smem:[#allocation0]]
  $region73: #{_lambda_.18} parent=0
    _
  %s10 = ssub.s32 1, %s8
  %s11 = scalar_select 0, %s10, %s8
  loop: start=0, step=1, limit=10
  $region2: #{_lambda_.18} parent=0 // loop_pre_header
    _
  $region3: #{_lambda_.18} parent=0 // loop_header
    %s13 = sphi 0, %s17
    %p14 = scmp.ge.s32.totalorder %s13, 10
    %s20 = sphi 0, %s39
    %s21 = sphi 0, %s35
    %s22 = sphi 0, %s31
    %s23 = sphi 0, %s20
    %s24 = sphi 0, %s21
    %s25 = sphi 0, %s22
    %s26 = sphi 0, %s23
    %s27 = sphi 0, %s24
    %s28 = sphi 0, %s25
    %s44 = sphi 0, %s46
    %s47 = sphi 0, %s44
    %s48 = sphi 0, %s47
    %s64 = sphi 0, %s48
    %s76 = sphi 0, %s78
    %s79 = sphi 0, %s76
    %s80 = sphi 0, %s79
    %s96 = sphi 0, %s80
    %s108 = sphi 0, %s110
    %s111 = sphi 0, %s108
    %s112 = sphi 0, %s111
    %s128 = sphi 0, %s112
    %s134 = sphi 0, %s136
    %s137 = sphi 0, %s134
    %s138 = sphi 0, %s137
    %s154 = sphi 0, %s138
    %s160 = sphi 0, %s162
    %s163 = sphi 0, %s160
    %s164 = sphi 0, %s163
    %s180 = sphi 0, %s164
    %s190 = sphi 0, %s192
    %s193 = sphi 0, %s190
    %s194 = sphi 0, %s193
    %s210 = sphi 0, %s194
    %s220 = sphi 0, %s222
    %s223 = sphi 0, %s220
    %s224 = sphi 0, %s223
    %s240 = sphi 0, %s224
    %s248 = sphi 0, %s250
    %s251 = sphi 0, %s248
    %s252 = sphi 0, %s251
    %s268 = sphi 0, %s252
  $region4: #{_lambda_.18} parent=0 // loop_header_branch
    %16 = sbr.rel (%p14) target = $region8
  $region5: #{_lambda_.18} parent=0 // loop_body
    %s18 = ssub.s32 %s13, 1
    %s19 = ssub.s32 %s13, 2
    %s29 = sadd.s32 1, %s22
    %p30 = scmp.ge.s32.totalorder %s29, 2
    %s31 = scalar_select %p30, 0, %s29
    %s32 = sadd.s32 1, %s21
    %s33 = scalar_select %p30, %s32, %s21
    %p34 = scmp.ge.s32.totalorder %s33, 2
    %s35 = scalar_select %p34, 0, %s33
    %s36 = sadd.s32 1, %s20
    %s37 = scalar_select %p34, %s36, %s20
    %p38 = scmp.ge.s32.totalorder %s37, 2
    %s39 = scalar_select %p38, 0, %s37
    %s40 = ssub.s32 %s20, %s39
    %s41 = ssub.s32 %s21, %s35
    %s42 = sor.u32 %s40, %s41
    %p43 = scmp.eq.s32.totalorder %s42, 0
    %s45 = sadd.s32 %s44, 1
    %s46 = scalar_select %p43, %s44, %s45
    %p49 = pneg %p43
    %p50 = scmp.eq.s32.totalorder %s13, 7
    %p51 = por %p49, %p50
    %p52 = scmp.ne.s32.totalorder %s44, %s47
    %p53 = scmp.eq.s32.totalorder %s13, 0
    %p54 = por %p52, %p53
    %p55 = scmp.ne.s32.totalorder %s44, %s47
    %p56 = scmp.eq.s32.totalorder %s18, 7
    %p57 = por %p55, %p56
    %p58 = scmp.ne.s32.totalorder %s47, %s48
    %p59 = scmp.eq.s32.totalorder %s18, 0
    %p60 = por %p58, %p59
    %p61 = scmp.ne.s32.totalorder %s47, %s48
    %p62 = scmp.eq.s32.totalorder %s19, 7
    %p63 = por %p61, %p62
    %p65 = scmp.ne.s32.totalorder %s48, %s64
    %p66 = scmp.eq.s32.totalorder %s19, 0
    %p67 = por %p65, %p66
    %p68 = scmp.lt.s32.totalorder %s22, %s21
    %s69 = scalar_select %p68, %s22, %s21
    %p70 = scmp.lt.s32.totalorder %s31, %s35
    %s71 = scalar_select %p70, %s31, %s35
    %s72 = ssub.s32 %s20, %s39
    %s73 = ssub.s32 %s69, %s71
    %s74 = sor.u32 %s72, %s73
    %p75 = scmp.eq.s32.totalorder %s74, 0
    %s77 = sadd.s32 %s76, 1
    %s78 = scalar_select %p75, %s76, %s77
    %p81 = pneg %p75
    %p82 = scmp.eq.s32.totalorder %s13, 7
    %p83 = por %p81, %p82
    %p84 = scmp.ne.s32.totalorder %s76, %s79
    %p85 = scmp.eq.s32.totalorder %s13, 0
    %p86 = por %p84, %p85
    %p87 = scmp.ne.s32.totalorder %s76, %s79
    %p88 = scmp.eq.s32.totalorder %s18, 7
    %p89 = por %p87, %p88
    %p90 = scmp.ne.s32.totalorder %s79, %s80
    %p91 = scmp.eq.s32.totalorder %s18, 0
    %p92 = por %p90, %p91
    %p93 = scmp.ne.s32.totalorder %s79, %s80
    %p94 = scmp.eq.s32.totalorder %s19, 7
    %p95 = por %p93, %p94
    %p97 = scmp.ne.s32.totalorder %s80, %s96
    %p98 = scmp.eq.s32.totalorder %s19, 0
    %p99 = por %p97, %p98
    %p100 = scmp.lt.s32.totalorder %s22, %s21
    %s101 = scalar_select %p100, %s22, %s21
    %p102 = scmp.lt.s32.totalorder %s31, %s35
    %s103 = scalar_select %p102, %s31, %s35
    %s104 = ssub.s32 %s20, %s39
    %s105 = ssub.s32 %s101, %s103
    %s106 = sor.u32 %s104, %s105
    %p107 = scmp.eq.s32.totalorder %s106, 0
    %s109 = sadd.s32 %s108, 1
    %s110 = scalar_select %p107, %s108, %s109
    %p113 = pneg %p107
    %p114 = scmp.eq.s32.totalorder %s13, 7
    %p115 = por %p113, %p114
    %p116 = scmp.ne.s32.totalorder %s108, %s111
    %p117 = scmp.eq.s32.totalorder %s13, 0
    %p118 = por %p116, %p117
    %p119 = scmp.ne.s32.totalorder %s108, %s111
    %p120 = scmp.eq.s32.totalorder %s18, 7
    %p121 = por %p119, %p120
    %p122 = scmp.ne.s32.totalorder %s111, %s112
    %p123 = scmp.eq.s32.totalorder %s18, 0
    %p124 = por %p122, %p123
    %p125 = scmp.ne.s32.totalorder %s111, %s112
    %p126 = scmp.eq.s32.totalorder %s19, 7
    %p127 = por %p125, %p126
    %p129 = scmp.ne.s32.totalorder %s112, %s128
    %p130 = scmp.eq.s32.totalorder %s19, 0
    %p131 = por %p129, %p130
    %s132 = ssub.s32 %s21, %s35
    %p133 = scmp.eq.s32.totalorder %s132, 0
    %s135 = sadd.s32 %s134, 1
    %s136 = scalar_select %p133, %s134, %s135
    %p139 = pneg %p133
    %p140 = scmp.eq.s32.totalorder %s13, 7
    %p141 = por %p139, %p140
    %p142 = scmp.ne.s32.totalorder %s134, %s137
    %p143 = scmp.eq.s32.totalorder %s13, 0
    %p144 = por %p142, %p143
    %p145 = scmp.ne.s32.totalorder %s134, %s137
    %p146 = scmp.eq.s32.totalorder %s18, 7
    %p147 = por %p145, %p146
    %p148 = scmp.ne.s32.totalorder %s137, %s138
    %p149 = scmp.eq.s32.totalorder %s18, 0
    %p150 = por %p148, %p149
    %p151 = scmp.ne.s32.totalorder %s137, %s138
    %p152 = scmp.eq.s32.totalorder %s19, 7
    %p153 = por %p151, %p152
    %p155 = scmp.ne.s32.totalorder %s138, %s154
    %p156 = scmp.eq.s32.totalorder %s19, 0
    %p157 = por %p155, %p156
    %s158 = ssub.s32 %s21, %s35
    %p159 = scmp.eq.s32.totalorder %s158, 0
    %s161 = sadd.s32 %s160, 1
    %s162 = scalar_select %p159, %s160, %s161
    %p165 = pneg %p159
    %p166 = scmp.eq.s32.totalorder %s13, 7
    %p167 = por %p165, %p166
    %p168 = scmp.ne.s32.totalorder %s160, %s163
    %p169 = scmp.eq.s32.totalorder %s13, 0
    %p170 = por %p168, %p169
    %p171 = scmp.ne.s32.totalorder %s160, %s163
    %p172 = scmp.eq.s32.totalorder %s18, 7
    %p173 = por %p171, %p172
    %p174 = scmp.ne.s32.totalorder %s163, %s164
    %p175 = scmp.eq.s32.totalorder %s18, 0
    %p176 = por %p174, %p175
    %p177 = scmp.ne.s32.totalorder %s163, %s164
    %p178 = scmp.eq.s32.totalorder %s19, 7
    %p179 = por %p177, %p178
    %p181 = scmp.ne.s32.totalorder %s164, %s180
    %p182 = scmp.eq.s32.totalorder %s19, 0
    %p183 = por %p181, %p182
    %p184 = scmp.lt.s32.totalorder %s22, %s21
    %s185 = scalar_select %p184, %s22, %s21
    %p186 = scmp.lt.s32.totalorder %s31, %s35
    %s187 = scalar_select %p186, %s31, %s35
    %s188 = ssub.s32 %s185, %s187
    %p189 = scmp.eq.s32.totalorder %s188, 0
    %s191 = sadd.s32 %s190, 1
    %s192 = scalar_select %p189, %s190, %s191
    %p195 = pneg %p189
    %p196 = scmp.eq.s32.totalorder %s13, 7
    %p197 = por %p195, %p196
    %p198 = scmp.ne.s32.totalorder %s190, %s193
    %p199 = scmp.eq.s32.totalorder %s13, 0
    %p200 = por %p198, %p199
    %p201 = scmp.ne.s32.totalorder %s190, %s193
    %p202 = scmp.eq.s32.totalorder %s18, 7
    %p203 = por %p201, %p202
    %p204 = scmp.ne.s32.totalorder %s193, %s194
    %p205 = scmp.eq.s32.totalorder %s18, 0
    %p206 = por %p204, %p205
    %p207 = scmp.ne.s32.totalorder %s193, %s194
    %p208 = scmp.eq.s32.totalorder %s19, 7
    %p209 = por %p207, %p208
    %p211 = scmp.ne.s32.totalorder %s194, %s210
    %p212 = scmp.eq.s32.totalorder %s19, 0
    %p213 = por %p211, %p212
    %p214 = scmp.lt.s32.totalorder %s22, %s21
    %s215 = scalar_select %p214, %s22, %s21
    %p216 = scmp.lt.s32.totalorder %s31, %s35
    %s217 = scalar_select %p216, %s31, %s35
    %s218 = ssub.s32 %s215, %s217
    %p219 = scmp.eq.s32.totalorder %s218, 0
    %s221 = sadd.s32 %s220, 1
    %s222 = scalar_select %p219, %s220, %s221
    %p225 = pneg %p219
    %p226 = scmp.eq.s32.totalorder %s13, 7
    %p227 = por %p225, %p226
    %p228 = scmp.ne.s32.totalorder %s220, %s223
    %p229 = scmp.eq.s32.totalorder %s13, 0
    %p230 = por %p228, %p229
    %p231 = scmp.ne.s32.totalorder %s220, %s223
    %p232 = scmp.eq.s32.totalorder %s18, 7
    %p233 = por %p231, %p232
    %p234 = scmp.ne.s32.totalorder %s223, %s224
    %p235 = scmp.eq.s32.totalorder %s18, 0
    %p236 = por %p234, %p235
    %p237 = scmp.ne.s32.totalorder %s223, %s224
    %p238 = scmp.eq.s32.totalorder %s19, 7
    %p239 = por %p237, %p238
    %p241 = scmp.ne.s32.totalorder %s224, %s240
    %p242 = scmp.eq.s32.totalorder %s19, 0
    %p243 = por %p241, %p242
    %s244 = ssub.s32 %s20, %s39
    %s245 = ssub.s32 %s21, %s35
    %s246 = sor.u32 %s244, %s245
    %p247 = scmp.eq.s32.totalorder %s246, 0
    %s249 = sadd.s32 %s248, 1
    %s250 = scalar_select %p247, %s248, %s249
    %p253 = pneg %p247
    %p254 = scmp.eq.s32.totalorder %s13, 7
    %p255 = por %p253, %p254
    %p256 = scmp.ne.s32.totalorder %s248, %s251
    %p257 = scmp.eq.s32.totalorder %s13, 0
    %p258 = por %p256, %p257
    %p259 = scmp.ne.s32.totalorder %s248, %s251
    %p260 = scmp.eq.s32.totalorder %s18, 7
    %p261 = por %p259, %p260
    %p262 = scmp.ne.s32.totalorder %s251, %s252
    %p263 = scmp.eq.s32.totalorder %s18, 0
    %p264 = por %p262, %p263
    %p265 = scmp.ne.s32.totalorder %s251, %s252
    %p266 = scmp.eq.s32.totalorder %s19, 7
    %p267 = por %p265, %p266
    %p269 = scmp.ne.s32.totalorder %s252, %s268
    %p270 = scmp.eq.s32.totalorder %s19, 0
    %p271 = por %p269, %p270
    %p272 = scmp.le.s32.totalorder 1, %s13
    %p273 = scmp.lt.s32.totalorder %s13, 9
    %p274 = pnand %p272, %p273
    %p275 = pneg %p274
    // Predicated region
    $region9: #{_lambda_.18} parent=5 // pred_check
      _
    $region10: #{_lambda_.18} parent=5 // pred_check_branch
      %277 = sbr.rel (%p274) target = $region12
    $region11: #{_lambda_.18} parent=5 // pred_region
      %s278 = ssub.s32 %s13, 1
    $region12: #{_lambda_.18} parent=5 // pred_fallthru
      _
    %p279 = scmp.lt.s32.totalorder %s13, 8
    // Predicated region
    $region13: #{_lambda_.18} parent=5 // pred_check
      %p280 = pneg %p279
    $region14: #{_lambda_.18} parent=5 // pred_check_branch
      %282 = sbr.rel (%p280) target = $region16
    $region15: #{_lambda_.18} parent=5 // pred_region
      // Predicated region
      $region17: #{_lambda_.18} parent=15 // pred_check
        %p283 = pneg %p54
      $region18: #{_lambda_.18} parent=15 // pred_check_branch
        %285 = sbr.rel (%p283) target = $region20
      $region19: #{_lambda_.18} parent=15 // pred_region
        %p286 = scmp.lt.s32.totalorder %s20, 1
        %s287 = scalar_select %p286, %s20, 1
        %p288 = scmp.lt.s32.totalorder %s21, 1
        %s289 = scalar_select %p288, %s21, 1
        %s290 = smul.addr %s289, 3
        %s291 = smul.addr %s287, 6
        %s292 = sadd.s32 %s290, %s291
        %s293 = smul.addr %s292, 4
        %s294 = scalar_lea.vmem %s0, %s293
      $region20: #{_lambda_.18} parent=15 // pred_fallthru
        _
      // Predicated region
      $region21: #{_lambda_.18} parent=15 // pred_check
        %p295 = pneg %p86
      $region22: #{_lambda_.18} parent=15 // pred_check_branch
        %297 = sbr.rel (%p295) target = $region24
      $region23: #{_lambda_.18} parent=15 // pred_region
        %p298 = scmp.lt.s32.totalorder %s22, %s21
        %s299 = scalar_select %p298, %s22, %s21
        %p300 = scmp.lt.s32.totalorder %s20, 1
        %s301 = scalar_select %p300, %s20, 1
        %p302 = scmp.lt.s32.totalorder %s299, 1
        %s303 = scalar_select %p302, %s299, 1
        %s304 = smul.addr %s303, 3
        %s305 = sadd.s32 1, %s304
        %s306 = smul.addr %s301, 6
        %s307 = sadd.s32 %s305, %s306
        %s308 = smul.addr %s307, 4
        %s309 = scalar_lea.vmem %s1, %s308
        %p310 = scmp.lt.s32.totalorder %s22, %s21
        %s311 = scalar_select %p310, %s22, %s21
      $region24: #{_lambda_.18} parent=15 // pred_fallthru
        _
      // Predicated region
      $region25: #{_lambda_.18} parent=15 // pred_check
        %p312 = pneg %p118
      $region26: #{_lambda_.18} parent=15 // pred_check_branch
        %314 = sbr.rel (%p312) target = $region28
      $region27: #{_lambda_.18} parent=15 // pred_region
        %p315 = scmp.lt.s32.totalorder %s22, %s21
        %s316 = scalar_select %p315, %s22, %s21
        %p317 = scmp.lt.s32.totalorder %s20, 1
        %s318 = scalar_select %p317, %s20, 1
        %p319 = scmp.lt.s32.totalorder %s316, 1
        %s320 = scalar_select %p319, %s316, 1
        %s321 = smul.addr %s320, 3
        %s322 = sadd.s32 2, %s321
        %s323 = smul.addr %s318, 6
        %s324 = sadd.s32 %s322, %s323
        %s325 = smul.addr %s324, 4
        %s326 = scalar_lea.vmem %s2, %s325
        %p327 = scmp.lt.s32.totalorder %s22, %s21
        %s328 = scalar_select %p327, %s22, %s21
      $region28: #{_lambda_.18} parent=15 // pred_fallthru
        _
      // Predicated region
      $region29: #{_lambda_.18} parent=15 // pred_check
        %p329 = pneg %p144
      $region30: #{_lambda_.18} parent=15 // pred_check_branch
        %331 = sbr.rel (%p329) target = $region32
      $region31: #{_lambda_.18} parent=15 // pred_region
        %p332 = scmp.lt.s32.totalorder %s21, 1
        %s333 = scalar_select %p332, %s21, 1
        %s334 = smul.addr %s333, 8
        %s335 = scalar_lea.vmem %s3, %s334
      $region32: #{_lambda_.18} parent=15 // pred_fallthru
        _
      // Predicated region
      $region33: #{_lambda_.18} parent=15 // pred_check
        %p336 = pneg %p170
      $region34: #{_lambda_.18} parent=15 // pred_check_branch
        %338 = sbr.rel (%p336) target = $region36
      $region35: #{_lambda_.18} parent=15 // pred_region
        %p339 = scmp.lt.s32.totalorder %s21, 1
        %s340 = scalar_select %p339, %s21, 1
        %s341 = smul.addr %s340, 8
        %s342 = scalar_lea.vmem %s4, %s341
      $region36: #{_lambda_.18} parent=15 // pred_fallthru
        _
      // Predicated region
      $region37: #{_lambda_.18} parent=15 // pred_check
        %p343 = pneg %p200
      $region38: #{_lambda_.18} parent=15 // pred_check_branch
        %345 = sbr.rel (%p343) target = $region40
      $region39: #{_lambda_.18} parent=15 // pred_region
        %p346 = scmp.lt.s32.totalorder %s22, %s21
        %s347 = scalar_select %p346, %s22, %s21
        %p348 = scmp.lt.s32.totalorder %s347, 1
        %s349 = scalar_select %p348, %s347, 1
        %s350 = smul.addr %s349, 8
        %s351 = scalar_lea.vmem %s5, %s350
        %p352 = scmp.lt.s32.totalorder %s22, %s21
        %s353 = scalar_select %p352, %s22, %s21
      $region40: #{_lambda_.18} parent=15 // pred_fallthru
        _
      // Predicated region
      $region41: #{_lambda_.18} parent=15 // pred_check
        %p354 = pneg %p230
      $region42: #{_lambda_.18} parent=15 // pred_check_branch
        %356 = sbr.rel (%p354) target = $region44
      $region43: #{_lambda_.18} parent=15 // pred_region
        %p357 = scmp.lt.s32.totalorder %s22, %s21
        %s358 = scalar_select %p357, %s22, %s21
        %p359 = scmp.lt.s32.totalorder %s358, 1
        %s360 = scalar_select %p359, %s358, 1
        %s361 = smul.addr %s360, 8
        %s362 = scalar_lea.vmem %s6, %s361
        %p363 = scmp.lt.s32.totalorder %s22, %s21
        %s364 = scalar_select %p363, %s22, %s21
      $region44: #{_lambda_.18} parent=15 // pred_fallthru
        _
    $region16: #{_lambda_.18} parent=5 // pred_fallthru
      _
    %p365 = scmp.le.s32.totalorder 1, %s13
    %p366 = scmp.lt.s32.totalorder %s13, 9
    %p367 = pnand %p365, %p366
    %p368 = pneg %p367
    // Predicated region
    $region45: #{_lambda_.18} parent=5 // pred_check
      _
    $region46: #{_lambda_.18} parent=5 // pred_check_branch
      %370 = sbr.rel (%p367) target = $region48
    $region47: #{_lambda_.18} parent=5 // pred_region
      %s371 = ssub.s32 %s13, 1
      %p372 = scmp.lt.s32.totalorder %s23, 1
      %s373 = scalar_select %p372, %s23, 1
      %p374 = scmp.lt.s32.totalorder %s24, 1
      %s375 = scalar_select %p374, %s24, 1
      %s376 = smul.addr %s375, 3
      %s377 = smul.addr %s373, 6
      %s378 = sadd.s32 %s376, %s377
      %s379 = smul.addr %s378, 4
      %s380 = scalar_lea.vmem %s0, %s379
      %p381 = pneg %p60
      %p382 = pneg %p57
      %p383 = scmp.lt.s32.totalorder %s25, %s24
      %s384 = scalar_select %p383, %s25, %s24
      %p385 = scmp.lt.s32.totalorder %s23, 1
      %s386 = scalar_select %p385, %s23, 1
      %p387 = scmp.lt.s32.totalorder %s384, 1
      %s388 = scalar_select %p387, %s384, 1
      %s389 = smul.addr %s388, 3
      %s390 = sadd.s32 1, %s389
      %s391 = smul.addr %s386, 6
      %s392 = sadd.s32 %s390, %s391
      %s393 = smul.addr %s392, 4
      %s394 = scalar_lea.vmem %s1, %s393
      %p395 = pneg %p92
      %p396 = pneg %p89
      %p397 = scmp.lt.s32.totalorder %s25, %s24
      %s398 = scalar_select %p397, %s25, %s24
      %p399 = scmp.lt.s32.totalorder %s23, 1
      %s400 = scalar_select %p399, %s23, 1
      %p401 = scmp.lt.s32.totalorder %s398, 1
      %s402 = scalar_select %p401, %s398, 1
      %s403 = smul.addr %s402, 3
      %s404 = sadd.s32 2, %s403
      %s405 = smul.addr %s400, 6
      %s406 = sadd.s32 %s404, %s405
      %s407 = smul.addr %s406, 4
      %s408 = scalar_lea.vmem %s2, %s407
      %p409 = pneg %p124
      %p410 = pneg %p121
      %p411 = scmp.lt.s32.totalorder %s24, 1
      %s412 = scalar_select %p411, %s24, 1
      %s413 = smul.addr %s412, 8
      %s414 = scalar_lea.vmem %s3, %s413
      %p415 = pneg %p150
      %p416 = pneg %p147
      %p417 = scmp.lt.s32.totalorder %s24, 1
      %s418 = scalar_select %p417, %s24, 1
      %s419 = smul.addr %s418, 8
      %s420 = scalar_lea.vmem %s4, %s419
      %p421 = pneg %p176
      %p422 = pneg %p173
      %p423 = scmp.lt.s32.totalorder %s25, %s24
      %s424 = scalar_select %p423, %s25, %s24
      %p425 = scmp.lt.s32.totalorder %s424, 1
      %s426 = scalar_select %p425, %s424, 1
      %s427 = smul.addr %s426, 8
      %s428 = scalar_lea.vmem %s5, %s427
      %p429 = pneg %p206
      %p430 = pneg %p203
      %p431 = scmp.lt.s32.totalorder %s25, %s24
      %s432 = scalar_select %p431, %s25, %s24
      %p433 = scmp.lt.s32.totalorder %s432, 1
      %s434 = scalar_select %p433, %s432, 1
      %s435 = smul.addr %s434, 8
      %s436 = scalar_lea.vmem %s6, %s435
      %p437 = pneg %p236
      %p438 = pneg %p233
      %p439 = pneg %p264
      %p440 = pneg %p261
      %p441 = scmp.lt.s32.totalorder %s23, 1
      %s442 = scalar_select %p441, %s23, 1
      %p443 = scmp.lt.s32.totalorder %s24, 1
      %s444 = scalar_select %p443, %s24, 1
      %s445 = smul.addr %s442, 2
      %s446 = sadd.s32 %s444, %s445
      %s447 = smul.addr %s446, 4
      %s448 = scalar_lea.vmem %s7, %s447
      %p449 = scmp.lt.s32.totalorder %s23, 1
      %s450 = scalar_select %p449, %s23, 1
      %p451 = scmp.lt.s32.totalorder %s24, 1
      %s452 = scalar_select %p451, %s24, 1
      %s453 = smul.addr %s452, 3
      %s454 = smul.addr %s450, 6
      %s455 = sadd.s32 %s453, %s454
      %s456 = smul.addr %s455, 4
      %s457 = scalar_lea.vmem %s0, %s456
      %p458 = scmp.lt.s32.totalorder %s25, %s24
      %s459 = scalar_select %p458, %s25, %s24
      %p460 = scmp.lt.s32.totalorder %s23, 1
      %s461 = scalar_select %p460, %s23, 1
      %p462 = scmp.lt.s32.totalorder %s459, 1
      %s463 = scalar_select %p462, %s459, 1
      %s464 = smul.addr %s463, 3
      %s465 = sadd.s32 1, %s464
      %s466 = smul.addr %s461, 6
      %s467 = sadd.s32 %s465, %s466
      %s468 = smul.addr %s467, 4
      %s469 = scalar_lea.vmem %s1, %s468
      %p470 = scmp.lt.s32.totalorder %s25, %s24
      %s471 = scalar_select %p470, %s25, %s24
      %p472 = scmp.lt.s32.totalorder %s25, %s24
      %s473 = scalar_select %p472, %s25, %s24
      %p474 = scmp.lt.s32.totalorder %s23, 1
      %s475 = scalar_select %p474, %s23, 1
      %p476 = scmp.lt.s32.totalorder %s473, 1
      %s477 = scalar_select %p476, %s473, 1
      %s478 = smul.addr %s477, 3
      %s479 = sadd.s32 2, %s478
      %s480 = smul.addr %s475, 6
      %s481 = sadd.s32 %s479, %s480
      %s482 = smul.addr %s481, 4
      %s483 = scalar_lea.vmem %s2, %s482
      %p484 = scmp.lt.s32.totalorder %s25, %s24
      %s485 = scalar_select %p484, %s25, %s24
      %p486 = scmp.lt.s32.totalorder %s24, 1
      %s487 = scalar_select %p486, %s24, 1
      %s488 = smul.addr %s487, 8
      %s489 = scalar_lea.vmem %s3, %s488
      %p490 = scmp.lt.s32.totalorder %s24, 1
      %s491 = scalar_select %p490, %s24, 1
      %s492 = smul.addr %s491, 8
      %s493 = scalar_lea.vmem %s4, %s492
      %p494 = scmp.lt.s32.totalorder %s25, %s24
      %s495 = scalar_select %p494, %s25, %s24
      %p496 = scmp.lt.s32.totalorder %s495, 1
      %s497 = scalar_select %p496, %s495, 1
      %s498 = smul.addr %s497, 8
      %s499 = scalar_lea.vmem %s5, %s498
      %p500 = scmp.lt.s32.totalorder %s25, %s24
      %s501 = scalar_select %p500, %s25, %s24
      %p502 = scmp.lt.s32.totalorder %s25, %s24
      %s503 = scalar_select %p502, %s25, %s24
      %p504 = scmp.lt.s32.totalorder %s503, 1
      %s505 = scalar_select %p504, %s503, 1
      %s506 = smul.addr %s505, 8
      %s507 = scalar_lea.vmem %s6, %s506
      %p508 = scmp.lt.s32.totalorder %s25, %s24
      %s509 = scalar_select %p508, %s25, %s24
      %p510 = scmp.lt.s32.totalorder %s23, 1
      %s511 = scalar_select %p510, %s23, 1
      %p512 = scmp.lt.s32.totalorder %s24, 1
      %s513 = scalar_select %p512, %s24, 1
      %s514 = smul.addr %s511, 2
      %s515 = sadd.s32 %s513, %s514
      %s516 = smul.addr %s515, 4
      %s517 = scalar_lea.vmem %s7, %s516
      %p519 = scmp.eq.s32.totalorder %s25, 0
      // Predicated region
      $region49: #{_lambda_.18} parent=47 // pred_check
        %p520 = pneg %p519
      $region50: #{_lambda_.18} parent=47 // pred_check_branch
        %522 = sbr.rel (%p520) target = $region52
      $region51: #{_lambda_.18} parent=47 // pred_region
        %vm523 = vcmask 7168
        %524 = vst.msk [vmem:[#allocation3] sm:$0xff] %vm523, -1e+30
        %525 = vst.msk [vmem:[#allocation3 + $0x8] sm:$0xff] %vm523, -1e+30
        %526 = vst.msk [vmem:[#allocation3 + $0x10] sm:$0xff] %vm523, -1e+30
        %527 = vst.msk [vmem:[#allocation3 + $0x18] sm:$0xff] %vm523, -1e+30
        %528 = vst.msk [vmem:[#allocation4] sm:$0xff] %vm523, 0.0
        %529 = vst.msk [vmem:[#allocation4 + $0x8] sm:$0xff] %vm523, 0.0
        %530 = vst.msk [vmem:[#allocation4 + $0x10] sm:$0xff] %vm523, 0.0
        %531 = vst.msk [vmem:[#allocation4 + $0x18] sm:$0xff] %vm523, 0.0
        %vm532 = vcmask 261120
        %533 = vst.msk [vmem:[#allocation5] sm:$0xff] %vm532, 0.0
        %534 = vst.msk [vmem:[#allocation5 + $0x8] sm:$0xff] %vm532, 0.0
        %535 = vst.msk [vmem:[#allocation5 + $0x10] sm:$0xff] %vm532, 0.0
        %536 = vst.msk [vmem:[#allocation5 + $0x18] sm:$0xff] %vm532, 0.0
        %v537 = vld [vmem:[%s457] sm:$0xf]
        %v538 = vunpack.c.l.bf16 %v537
        %v539 = vld [vmem:[%s489] sm:$0xff]
        %v540 = vmul.f32 %v539, 0.17677669
        %v541 = vld [vmem:[%s493] sm:$0xff]
        %v542 = vmul.f32 %v541, 0.17677669
        %v543 = vmul.f32 %v538, %v540
        %545 = vrot.lane.b32.xlu0 %v542, 16
        %v546 = vpop.permute.xlu0 %545
        %v548 = vmul.f32 %v538, %v546
        %550 = vrot.lane.b32.xlu0 %v548, 112
        %v551 = vpop.permute.xlu0 %550
        %v553 = vsub.f32 %v543, %v551
        %v554 = vpack.c.bf16 %v553, %v553
        %vm555 = vcmask 125952
        %556 = vst.msk [vmem:[#allocation2] sm:$0xf] %vm555, %v554
        %558 = vrot.lane.b32.xlu0 %v540, 16
        %v559 = vpop.permute.xlu0 %558
        %v561 = vmul.f32 %v538, %v559
        %v562 = vmul.f32 %v538, %v542
        %564 = vrot.lane.b32.xlu0 %v562, 16
        %v565 = vpop.permute.xlu0 %564
        %v567 = vadd.f32 %v561, %v565
        %v568 = vpack.c.bf16 %v567, %v567
        %vm569 = vcmask 257152
        %570 = vst.msk [vmem:[#allocation2] sm:$0xf] %vm569, %v568
        %571 = vrot.lane.b32.xlu0 %v540, 32
        %v572 = vpop.permute.xlu0 %571
        %v574 = vmul.f32 %v538, %v572
        %575 = vrot.lane.b32.xlu0 %v542, 48
        %v576 = vpop.permute.xlu0 %575
        %v578 = vmul.f32 %v538, %v576
        %580 = vrot.lane.b32.xlu0 %v578, 112
        %v581 = vpop.permute.xlu0 %580
        %v583 = vsub.f32 %v574, %v581
        %v584 = vpack.c.bf16 %v583, %v583
        %vm585 = vcmask 388352
        %586 = vst.msk [vmem:[#allocation2] sm:$0xf] %vm585, %v584
        %587 = vrot.lane.b32.xlu0 %v540, 48
        %v588 = vpop.permute.xlu0 %587
        %v590 = vmul.f32 %v538, %v588
        %591 = vrot.lane.b32.xlu0 %v542, 32
        %v592 = vpop.permute.xlu0 %591
        %v594 = vmul.f32 %v538, %v592
        %596 = vrot.lane.b32.xlu0 %v594, 16
        %v597 = vpop.permute.xlu0 %596
        %v599 = vadd.f32 %v590, %v597
        %v600 = vpack.c.bf16 %v599, %v599
        %vm601 = vcmask 519552
        %602 = vst.msk [vmem:[#allocation2] sm:$0xf] %vm601, %v600
        %603 = vrot.lane.b32.xlu0 %v540, 64
        %v604 = vpop.permute.xlu0 %603
        %v606 = vmul.f32 %v538, %v604
        %607 = vrot.lane.b32.xlu0 %v542, 80
        %v608 = vpop.permute.xlu0 %607
        %v610 = vmul.f32 %v538, %v608
        %612 = vrot.lane.b32.xlu0 %v610, 112
        %v613 = vpop.permute.xlu0 %612
        %v615 = vsub.f32 %v606, %v613
        %v616 = vpack.c.bf16 %v615, %v615
        %vm617 = vcmask 650752
        %618 = vst.msk [vmem:[#allocation2] sm:$0xf] %vm617, %v616
        %619 = vrot.lane.b32.xlu0 %v540, 80
        %v620 = vpop.permute.xlu0 %619
        %v622 = vmul.f32 %v538, %v620
        %623 = vrot.lane.b32.xlu0 %v542, 64
        %v624 = vpop.permute.xlu0 %623
        %v626 = vmul.f32 %v538, %v624
        %628 = vrot.lane.b32.xlu0 %v626, 16
        %v629 = vpop.permute.xlu0 %628
        %v631 = vadd.f32 %v622, %v629
        %v632 = vpack.c.bf16 %v631, %v631
        %vm633 = vcmask 781952
        %634 = vst.msk [vmem:[#allocation2] sm:$0xf] %vm633, %v632
        %635 = vrot.lane.b32.xlu0 %v540, 96
        %v636 = vpop.permute.xlu0 %635
        %v638 = vmul.f32 %v538, %v636
        %639 = vrot.lane.b32.xlu0 %v542, 112
        %v640 = vpop.permute.xlu0 %639
        %v642 = vmul.f32 %v538, %v640
        %644 = vrot.lane.b32.xlu0 %v642, 112
        %v645 = vpop.permute.xlu0 %644
        %v647 = vsub.f32 %v638, %v645
        %v648 = vpack.c.bf16 %v647, %v647
        %vm649 = vcmask 913152
        %650 = vst.msk [vmem:[#allocation2] sm:$0xf] %vm649, %v648
        %651 = vrot.lane.b32.xlu0 %v540, 112
        %v652 = vpop.permute.xlu0 %651
        %v654 = vmul.f32 %v538, %v652
        %655 = vrot.lane.b32.xlu0 %v542, 96
        %v656 = vpop.permute.xlu0 %655
        %v658 = vmul.f32 %v538, %v656
        %660 = vrot.lane.b32.xlu0 %v658, 16
        %v661 = vpop.permute.xlu0 %660
        %v663 = vadd.f32 %v654, %v661
        %v664 = vpack.c.bf16 %v663, %v663
        %vm665 = vcmask 1044352
        %666 = vst.msk [vmem:[#allocation2] sm:$0xf] %vm665, %v664
      $region52: #{_lambda_.18} parent=47 // pred_fallthru
        _
      %p667 = scmp.lt.s32.totalorder %s25, %s24
      // Predicated region
      $region53: #{_lambda_.18} parent=47 // pred_check
        %p668 = pneg %p667
      $region54: #{_lambda_.18} parent=47 // pred_check_branch
        %670 = sbr.rel (%p668) target = $region56
      $region55: #{_lambda_.18} parent=47 // pred_region
        %v671 = vld [vmem:[%s469] sm:$0xf]
        %v672 = vunpack.c.l.bf16 %v671
        %v673 = vld [vmem:[%s483] sm:$0xf]
        %v674 = vld [vmem:[%s499] sm:$0xff]
        %v675 = vld [vmem:[%s507] sm:$0xff]
        %v676 = vmul.f32 %v672, %v674
        %678 = vrot.lane.b32.xlu0 %v675, 16
        %v679 = vpop.permute.xlu0 %678
        %v681 = vmul.f32 %v672, %v679
        %683 = vrot.lane.b32.xlu0 %v681, 112
        %v684 = vpop.permute.xlu0 %683
        %v686 = vsub.f32 %v676, %v684
        %v687 = vpack.c.bf16 %v686, %v686
        %689 = vrot.lane.b32.xlu0 %v674, 16
        %v690 = vpop.permute.xlu0 %689
        %v692 = vmul.f32 %v672, %v690
        %v693 = vmul.f32 %v672, %v675
        %695 = vrot.lane.b32.xlu0 %v693, 16
        %v696 = vpop.permute.xlu0 %695
        %v698 = vadd.f32 %v692, %v696
        %v699 = vpack.c.bf16 %v698, %v698
        %v700 = vld [vmem:[#allocation2] sm:$0xf]
        %v702 = vunpack.c.l.b16 %v700
        %v703 = vpack.c.b16 %v702, %v702
        %704 = vrot.lane.b32.xlu0 %v703, 112
        %v705 = vpop.permute.xlu0 %704
        %707 = vrot.lane.b32.xlu0 %v699, 112
        %v708 = vpop.permute.xlu0 %707
        %vm709 = vcmask 130048
        %v711 = vsel %vm709, %v705, 0
        %v714 = vsel %vm709, %v708, 0
        %716 = vmatprep.subr.bf16.mxu0 0
        %717 = vmatpush1.bf16.xpose.msra.mxu0 %v714
        %718 = vmatprep.subr.bf16.mxu0 0
        %719 = vmatpush1.bf16.xpose.msra.mxu0 0
        %720 = vmatprep.subr.bf16.mxu0 0
        %721 = vmatpush1.bf16.xpose.msra.mxu0 0
        %722 = vmatprep.subr.bf16.mxu0 0
        %723 = vmatpush1.bf16.xpose.msra.mxu0 0
        %724 = vmatprep.subr.bf16.mxu0 0
        %725 = vmatpush1.bf16.xpose.msra.mxu0 0
        %726 = vmatprep.subr.bf16.mxu0 0
        %727 = vmatpush1.bf16.xpose.msra.mxu0 0
        %728 = vmatprep.subr.bf16.mxu0 0
        %729 = vmatpush1.bf16.xpose.msra.mxu0 0
        %730 = vmatprep.subr.bf16.mxu0 0
        %731 = vmatpush1.bf16.xpose.msra.mxu0 0
        %732 = vmatprep.subr.bf16.mxu0 0
        %733 = vmatpush1.bf16.xpose.msra.mxu0 0
        %734 = vmatprep.subr.bf16.mxu0 0
        %735 = vmatpush1.bf16.xpose.msra.mxu0 0
        %736 = vmatprep.subr.bf16.mxu0 0
        %737 = vmatpush1.bf16.xpose.msra.mxu0 0
        %738 = vmatprep.subr.bf16.mxu0 0
        %739 = vmatpush1.bf16.xpose.msra.mxu0 0
        %740 = vmatprep.subr.bf16.mxu0 0
        %741 = vmatpush1.bf16.xpose.msra.mxu0 0
        %742 = vmatprep.subr.bf16.mxu0 0
        %743 = vmatpush1.bf16.xpose.msra.mxu0 0
        %744 = vmatprep.subr.bf16.mxu0 0
        %745 = vmatpush1.bf16.xpose.msra.mxu0 0
        %746 = vmatprep.subr.bf16.mxu0 0
        %747 = vmatpush1.bf16.xpose.msra.mxu0 0
        %748 = vmatprep.mubr.bf16.mxu0 0
        %749 = vmatmul.mubr.bf16.gmra.mrb[0].mxu0 %v711
        %v750 = vpop.f32.mrb[0].mxu0
        %v751 = vadd.f32 0.0, %v750
        %v752 = vpop.f32.mrb[0].mxu0
        %v753 = vpop.f32.mrb[0].mxu0
        %v754 = vpop.f32.mrb[0].mxu0
        %755 = vdwg.mxu0
        %v757 = vsel %vm709, %v700, 0
        %v760 = vsel %vm709, %v687, 0
        %762 = vmatprep.subr.bf16.mxu0 0
        %763 = vmatpush1.bf16.xpose.msra.mxu0 %v760
        %764 = vmatprep.subr.bf16.mxu0 0
        %765 = vmatpush1.bf16.xpose.msra.mxu0 0
        %766 = vmatprep.subr.bf16.mxu0 0
        %767 = vmatpush1.bf16.xpose.msra.mxu0 0
        %768 = vmatprep.subr.bf16.mxu0 0
        %769 = vmatpush1.bf16.xpose.msra.mxu0 0
        %770 = vmatprep.subr.bf16.mxu0 0
        %771 = vmatpush1.bf16.xpose.msra.mxu0 0
        %772 = vmatprep.subr.bf16.mxu0 0
        %773 = vmatpush1.bf16.xpose.msra.mxu0 0
        %774 = vmatprep.subr.bf16.mxu0 0
        %775 = vmatpush1.bf16.xpose.msra.mxu0 0
        %776 = vmatprep.subr.bf16.mxu0 0
        %777 = vmatpush1.bf16.xpose.msra.mxu0 0
        %778 = vmatprep.subr.bf16.mxu0 0
        %779 = vmatpush1.bf16.xpose.msra.mxu0 0
        %780 = vmatprep.subr.bf16.mxu0 0
        %781 = vmatpush1.bf16.xpose.msra.mxu0 0
        %782 = vmatprep.subr.bf16.mxu0 0
        %783 = vmatpush1.bf16.xpose.msra.mxu0 0
        %784 = vmatprep.subr.bf16.mxu0 0
        %785 = vmatpush1.bf16.xpose.msra.mxu0 0
        %786 = vmatprep.subr.bf16.mxu0 0
        %787 = vmatpush1.bf16.xpose.msra.mxu0 0
        %788 = vmatprep.subr.bf16.mxu0 0
        %789 = vmatpush1.bf16.xpose.msra.mxu0 0
        %790 = vmatprep.subr.bf16.mxu0 0
        %791 = vmatpush1.bf16.xpose.msra.mxu0 0
        %792 = vmatprep.subr.bf16.mxu0 0
        %793 = vmatpush1.bf16.xpose.msra.mxu0 0
        %794 = vmatprep.mubr.bf16.mxu0 0
        %795 = vmatmul.mubr.bf16.gmra.mrb[0].mxu0 %v757
        %v796 = vpop.f32.mrb[0].mxu0
        %v797 = vadd.f32 %v751, %v796
        %v798 = vpop.f32.mrb[0].mxu0
        %v799 = vpop.f32.mrb[0].mxu0
        %v800 = vpop.f32.mrb[0].mxu0
        %801 = vdwg.mxu0
        %v802 = vld [vmem:[#allocation3] sm:$0xff]
        %vm803 = vcmask 64512
        %v804 = vsel %vm803, %v797, -inf
        %805 = vmax.xlane.f32.xlu0 %v804
        %v806 = vpop.xlane.xlu0 %805
        %v807 = vmax.f32 %v802, %v806
        %v808 = vsub.f32 %v802, %v807
        %v809 = vmul.f32 %v808, 1.442695
        %v810 = vpow.pop %v809
        %812 = vset.pattern.permute.xlu0 0
        %813 = vperm.xlu0 %812, %v807
        %v814 = vpop.permute.xlu0 %813
        %v816 = vsub.f32 %v797, %v814
        %v817 = vmul.f32 %v816, 1.442695
        %v818 = vpow.pop %v817
        %v819 = vld [vmem:[#allocation4] sm:$0xff]
        %v820 = vmul.f32 %v810, %v819
        %v821 = vsel %vm803, %v818, 0.0
        %822 = vadd.xlane.f32.xlu0 %v821
        %v823 = vpop.xlane.xlu0 %822
        %v824 = vadd.f32 %v820, %v823
        %vm825 = vcmask 7168
        %826 = vst.msk [vmem:[#allocation4] sm:$0xff] %vm825, %v824
        %v827 = vld [vmem:[#allocation5] sm:$0xff]
        %829 = vset.pattern.permute.xlu0 0
        %830 = vperm.xlu0 %829, %v810
        %v831 = vpop.permute.xlu0 %830
        %v833 = vmul.f32 %v831, %v827
        %v834 = vpack.c.bf16 %v818, %v818
        %v836 = vsel %vm803, %v834, 0
        %vm838 = vcmask 1043456
        %v840 = vsel %vm838, %v673, 0
        %842 = vmatprep.subr.bf16.mxu0 0
        %843 = vmatpush1.bf16.msra.mxu0 %v840
        %844 = vmatprep.subr.bf16.mxu0 0
        %845 = vmatpush1.bf16.msra.mxu0 0
        %846 = vmatprep.subr.bf16.mxu0 0
        %847 = vmatpush1.bf16.msra.mxu0 0
        %848 = vmatprep.subr.bf16.mxu0 0
        %849 = vmatpush1.bf16.msra.mxu0 0
        %850 = vmatprep.subr.bf16.mxu0 0
        %851 = vmatpush1.bf16.msra.mxu0 0
        %852 = vmatprep.subr.bf16.mxu0 0
        %853 = vmatpush1.bf16.msra.mxu0 0
        %854 = vmatprep.subr.bf16.mxu0 0
        %855 = vmatpush1.bf16.msra.mxu0 0
        %856 = vmatprep.subr.bf16.mxu0 0
        %857 = vmatpush1.bf16.msra.mxu0 0
        %858 = vmatprep.subr.bf16.mxu0 0
        %859 = vmatpush1.bf16.msra.mxu0 0
        %860 = vmatprep.subr.bf16.mxu0 0
        %861 = vmatpush1.bf16.msra.mxu0 0
        %862 = vmatprep.subr.bf16.mxu0 0
        %863 = vmatpush1.bf16.msra.mxu0 0
        %864 = vmatprep.subr.bf16.mxu0 0
        %865 = vmatpush1.bf16.msra.mxu0 0
        %866 = vmatprep.subr.bf16.mxu0 0
        %867 = vmatpush1.bf16.msra.mxu0 0
        %868 = vmatprep.subr.bf16.mxu0 0
        %869 = vmatpush1.bf16.msra.mxu0 0
        %870 = vmatprep.subr.bf16.mxu0 0
        %871 = vmatpush1.bf16.msra.mxu0 0
        %872 = vmatprep.subr.bf16.mxu0 0
        %873 = vmatpush1.bf16.msra.mxu0 0
        %874 = vmatprep.mubr.bf16.mxu0 0
        %875 = vmatmul.mubr.bf16.gmra.mrb[0].mxu0 %v836
        %v876 = vpop.f32.mrb[0].mxu0
        %v877 = vadd.f32 0.0, %v876
        %v878 = vpop.f32.mrb[0].mxu0
        %v879 = vpop.f32.mrb[0].mxu0
        %v880 = vpop.f32.mrb[0].mxu0
        %881 = vdwg.mxu0
        %v882 = vadd.f32 %v833, %v877
        %vm883 = vcmask 261120
        %884 = vst.msk [vmem:[#allocation5] sm:$0xff] %vm883, %v882
        %885 = vst.msk [vmem:[#allocation3] sm:$0xff] %vm825, %v807
        %886 = vrot.lane.b32.xlu0 %v674, 32
        %v887 = vpop.permute.xlu0 %886
        %v889 = vmul.f32 %v672, %v887
        %890 = vrot.lane.b32.xlu0 %v675, 48
        %v891 = vpop.permute.xlu0 %890
        %v893 = vmul.f32 %v672, %v891
        %895 = vrot.lane.b32.xlu0 %v893, 112
        %v896 = vpop.permute.xlu0 %895
        %v898 = vsub.f32 %v889, %v896
        %v899 = vpack.c.bf16 %v898, %v898
        %900 = vrot.lane.b32.xlu0 %v674, 48
        %v901 = vpop.permute.xlu0 %900
        %v903 = vmul.f32 %v672, %v901
        %904 = vrot.lane.b32.xlu0 %v675, 32
        %v905 = vpop.permute.xlu0 %904
        %v907 = vmul.f32 %v672, %v905
        %909 = vrot.lane.b32.xlu0 %v907, 16
        %v910 = vpop.permute.xlu0 %909
        %v912 = vadd.f32 %v903, %v910
        %v913 = vpack.c.bf16 %v912, %v912
        %v914 = vld [vmem:[#allocation2] sm:$0xf]
        %v916 = vunpack.c.l.b16 %v914
        %v917 = vpack.c.b16 %v916, %v916
        %918 = vrot.lane.b32.xlu0 %v917, 80
        %v919 = vpop.permute.xlu0 %918
        %921 = vrot.lane.b32.xlu0 %v913, 80
        %v922 = vpop.permute.xlu0 %921
        %v924 = vsel %vm709, %v919, 0
        %v927 = vsel %vm709, %v922, 0
        %929 = vmatprep.subr.bf16.mxu0 0
        %930 = vmatpush1.bf16.xpose.msra.mxu0 %v927
        %931 = vmatprep.subr.bf16.mxu0 0
        %932 = vmatpush1.bf16.xpose.msra.mxu0 0
        %933 = vmatprep.subr.bf16.mxu0 0
        %934 = vmatpush1.bf16.xpose.msra.mxu0 0
        %935 = vmatprep.subr.bf16.mxu0 0
        %936 = vmatpush1.bf16.xpose.msra.mxu0 0
        %937 = vmatprep.subr.bf16.mxu0 0
        %938 = vmatpush1.bf16.xpose.msra.mxu0 0
        %939 = vmatprep.subr.bf16.mxu0 0
        %940 = vmatpush1.bf16.xpose.msra.mxu0 0
        %941 = vmatprep.subr.bf16.mxu0 0
        %942 = vmatpush1.bf16.xpose.msra.mxu0 0
        %943 = vmatprep.subr.bf16.mxu0 0
        %944 = vmatpush1.bf16.xpose.msra.mxu0 0
        %945 = vmatprep.subr.bf16.mxu0 0
        %946 = vmatpush1.bf16.xpose.msra.mxu0 0
        %947 = vmatprep.subr.bf16.mxu0 0
        %948 = vmatpush1.bf16.xpose.msra.mxu0 0
        %949 = vmatprep.subr.bf16.mxu0 0
        %950 = vmatpush1.bf16.xpose.msra.mxu0 0
        %951 = vmatprep.subr.bf16.mxu0 0
        %952 = vmatpush1.bf16.xpose.msra.mxu0 0
        %953 = vmatprep.subr.bf16.mxu0 0
        %954 = vmatpush1.bf16.xpose.msra.mxu0 0
        %955 = vmatprep.subr.bf16.mxu0 0
        %956 = vmatpush1.bf16.xpose.msra.mxu0 0
        %957 = vmatprep.subr.bf16.mxu0 0
        %958 = vmatpush1.bf16.xpose.msra.mxu0 0
        %959 = vmatprep.subr.bf16.mxu0 0
        %960 = vmatpush1.bf16.xpose.msra.mxu0 0
        %961 = vmatprep.mubr.bf16.mxu0 0
        %962 = vmatmul.mubr.bf16.gmra.mrb[0].mxu0 %v924
        %v963 = vpop.f32.mrb[0].mxu0
        %v964 = vadd.f32 0.0, %v963
        %v965 = vpop.f32.mrb[0].mxu0
        %v966 = vpop.f32.mrb[0].mxu0
        %v967 = vpop.f32.mrb[0].mxu0
        %968 = vdwg.mxu0
        %969 = vrot.lane.b32.xlu0 %v917, 96
        %v970 = vpop.permute.xlu0 %969
        %972 = vrot.lane.b32.xlu0 %v899, 96
        %v973 = vpop.permute.xlu0 %972
        %v975 = vsel %vm709, %v970, 0
        %v978 = vsel %vm709, %v973, 0
        %980 = vmatprep.subr.bf16.mxu0 0
        %981 = vmatpush1.bf16.xpose.msra.mxu0 %v978
        %982 = vmatprep.subr.bf16.mxu0 0
        %983 = vmatpush1.bf16.xpose.msra.mxu0 0
        %984 = vmatprep.subr.bf16.mxu0 0
        %985 = vmatpush1.bf16.xpose.msra.mxu0 0
        %986 = vmatprep.subr.bf16.mxu0 0
        %987 = vmatpush1.bf16.xpose.msra.mxu0 0
        %988 = vmatprep.subr.bf16.mxu0 0
        %989 = vmatpush1.bf16.xpose.msra.mxu0 0
        %990 = vmatprep.subr.bf16.mxu0 0
        %991 = vmatpush1.bf16.xpose.msra.mxu0 0
        %992 = vmatprep.subr.bf16.mxu0 0
        %993 = vmatpush1.bf16.xpose.msra.mxu0 0
        %994 = vmatprep.subr.bf16.mxu0 0
        %995 = vmatpush1.bf16.xpose.msra.mxu0 0
        %996 = vmatprep.subr.bf16.mxu0 0
        %997 = vmatpush1.bf16.xpose.msra.mxu0 0
        %998 = vmatprep.subr.bf16.mxu0 0
        %999 = vmatpush1.bf16.xpose.msra.mxu0 0
        %1000 = vmatprep.subr.bf16.mxu0 0
        %1001 = vmatpush1.bf16.xpose.msra.mxu0 0
        %1002 = vmatprep.subr.bf16.mxu0 0
        %1003 = vmatpush1.bf16.xpose.msra.mxu0 0
        %1004 = vmatprep.subr.bf16.mxu0 0
        %1005 = vmatpush1.bf16.xpose.msra.mxu0 0
        %1006 = vmatprep.subr.bf16.mxu0 0
        %1007 = vmatpush1.bf16.xpose.msra.mxu0 0
        %1008 = vmatprep.subr.bf16.mxu0 0
        %1009 = vmatpush1.bf16.xpose.msra.mxu0 0
        %1010 = vmatprep.subr.bf16.mxu0 0
        %1011 = vmatpush1.bf16.xpose.msra.mxu0 0
        %1012 = vmatprep.mubr.bf16.mxu0 0
        %1013 = vmatmul.mubr.bf16.gmra.mrb[0].mxu0 %v975
        %v1014 = vpop.f32.mrb[0].mxu0
        %v1015 = vadd.f32 %v964, %v1014
        %v1016 = vpop.f32.mrb[0].mxu0
        %v1017 = vpop.f32.mrb[0].mxu0
        %v1018 = vpop.f32.mrb[0].mxu0
        %1019 = vdwg.mxu0
        %s1020 = scalar_lea.vmem [#allocation3], 8
        %v1021 = vld [vmem:[%s1020] sm:$0xff]
        %v1022 = vsel %vm803, %v1015, -inf
        %1023 = vmax.xlane.f32.xlu0 %v1022
        %v1024 = vpop.xlane.xlu0 %1023
        %v1025 = vmax.f32 %v1021, %v1024
        %v1026 = vsub.f32 %v1021, %v1025
        %v1027 = vmul.f32 %v1026, 1.442695
        %v1028 = vpow.pop %v1027
        %1030 = vset.pattern.permute.xlu0 0
        %1031 = vperm.xlu0 %1030, %v1025
        %v1032 = vpop.permute.xlu0 %1031
        %v1034 = vsub.f32 %v1015, %v1032
        %v1035 = vmul.f32 %v1034, 1.442695
        %v1036 = vpow.pop %v1035
        %s1037 = scalar_lea.vmem [#allocation4], 8
        %v1038 = vld [vmem:[%s1037] sm:$0xff]
        %v1039 = vmul.f32 %v1028, %v1038
        %v1040 = vsel %vm803, %v1036, 0.0
        %1041 = vadd.xlane.f32.xlu0 %v1040
        %v1042 = vpop.xlane.xlu0 %1041
        %v1043 = vadd.f32 %v1039, %v1042
        %1044 = vst.msk [vmem:[%s1037] sm:$0xff] %vm825, %v1043
        %s1045 = scalar_lea.vmem [#allocation5], 8
        %v1046 = vld [vmem:[%s1045] sm:$0xff]
        %1048 = vset.pattern.permute.xlu0 0
        %1049 = vperm.xlu0 %1048, %v1028
        %v1050 = vpop.permute.xlu0 %1049
        %v1052 = vmul.f32 %v1050, %v1046
        %v1053 = vpack.c.bf16 %v1036, %v1036
        %v1055 = vunpack.c.l.b16 %v673
        %v1056 = vpack.c.b16 %v1055, %v1055
        %1057 = vrot.lane.b32.xlu0 %v1056, 96
        %v1058 = vpop.permute.xlu0 %1057
        %v1060 = vsel %vm803, %v1053, 0
        %v1063 = vsel %vm838, %v1058, 0
        %1065 = vmatprep.subr.bf16.mxu0 0
        %1066 = vmatpush1.bf16.msra.mxu0 %v1063
        %1067 = vmatprep.subr.bf16.mxu0 0
        %1068 = vmatpush1.bf16.msra.mxu0 0
        %1069 = vmatprep.subr.bf16.mxu0 0
        %1070 = vmatpush1.bf16.msra.mxu0 0
        %1071 = vmatprep.subr.bf16.mxu0 0
        %1072 = vmatpush1.bf16.msra.mxu0 0
        %1073 = vmatprep.subr.bf16.mxu0 0
        %1074 = vmatpush1.bf16.msra.mxu0 0
        %1075 = vmatprep.subr.bf16.mxu0 0
        %1076 = vmatpush1.bf16.msra.mxu0 0
        %1077 = vmatprep.subr.bf16.mxu0 0
        %1078 = vmatpush1.bf16.msra.mxu0 0
        %1079 = vmatprep.subr.bf16.mxu0 0
        %1080 = vmatpush1.bf16.msra.mxu0 0
        %1081 = vmatprep.subr.bf16.mxu0 0
        %1082 = vmatpush1.bf16.msra.mxu0 0
        %1083 = vmatprep.subr.bf16.mxu0 0
        %1084 = vmatpush1.bf16.msra.mxu0 0
        %1085 = vmatprep.subr.bf16.mxu0 0
        %1086 = vmatpush1.bf16.msra.mxu0 0
        %1087 = vmatprep.subr.bf16.mxu0 0
        %1088 = vmatpush1.bf16.msra.mxu0 0
        %1089 = vmatprep.subr.bf16.mxu0 0
        %1090 = vmatpush1.bf16.msra.mxu0 0
        %1091 = vmatprep.subr.bf16.mxu0 0
        %1092 = vmatpush1.bf16.msra.mxu0 0
        %1093 = vmatprep.subr.bf16.mxu0 0
        %1094 = vmatpush1.bf16.msra.mxu0 0
        %1095 = vmatprep.subr.bf16.mxu0 0
        %1096 = vmatpush1.bf16.msra.mxu0 0
        %1097 = vmatprep.mubr.bf16.mxu0 0
        %1098 = vmatmul.mubr.bf16.gmra.mrb[0].mxu0 %v1060
        %v1099 = vpop.f32.mrb[0].mxu0
        %v1100 = vadd.f32 0.0, %v1099
        %v1101 = vpop.f32.mrb[0].mxu0
        %v1102 = vpop.f32.mrb[0].mxu0
        %v1103 = vpop.f32.mrb[0].mxu0
        %1104 = vdwg.mxu0
        %v1105 = vadd.f32 %v1052, %v1100
        %1106 = vst.msk [vmem:[%s1045] sm:$0xff] %vm883, %v1105
        %1107 = vst.msk [vmem:[%s1020] sm:$0xff] %vm825, %v1025
        %1108 = vrot.lane.b32.xlu0 %v674, 64
        %v1109 = vpop.permute.xlu0 %1108
        %v1111 = vmul.f32 %v672, %v1109
        %1112 = vrot.lane.b32.xlu0 %v675, 80
        %v1113 = vpop.permute.xlu0 %1112
        %v1115 = vmul.f32 %v672, %v1113
        %1117 = vrot.lane.b32.xlu0 %v1115, 112
        %v1118 = vpop.permute.xlu0 %1117
        %v1120 = vsub.f32 %v1111, %v1118
        %v1121 = vpack.c.bf16 %v1120, %v1120
        %1122 = vrot.lane.b32.xlu0 %v674, 80
        %v1123 = vpop.permute.xlu0 %1122
        %v1125 = vmul.f32 %v672, %v1123
        %1126 = vrot.lane.b32.xlu0 %v675, 64
        %v1127 = vpop.permute.xlu0 %1126
        %v1129 = vmul.f32 %v672, %v1127
        %1131 = vrot.lane.b32.xlu0 %v1129, 16
        %v1132 = vpop.permute.xlu0 %1131
        %v1134 = vadd.f32 %v1125, %v1132
        %v1135 = vpack.c.bf16 %v1134, %v1134
        %v1136 = vld [vmem:[#allocation2] sm:$0xf]
        %v1138 = vunpack.c.l.b16 %v1136
        %v1139 = vpack.c.b16 %v1138, %v1138
        %1140 = vrot.lane.b32.xlu0 %v1139, 48
        %v1141 = vpop.permute.xlu0 %1140
        %1143 = vrot.lane.b32.xlu0 %v1135, 48
        %v1144 = vpop.permute.xlu0 %1143
        %v1146 = vsel %vm709, %v1141, 0
        %v1149 = vsel %vm709, %v1144, 0
        %1151 = vmatprep.subr.bf16.mxu0 0
        %1152 = vmatpush1.bf16.xpose.msra.mxu0 %v1149
        %1153 = vmatprep.subr.bf16.mxu0 0
        %1154 = vmatpush1.bf16.xpose.msra.mxu0 0
        %1155 = vmatprep.subr.bf16.mxu0 0
        %1156 = vmatpush1.bf16.xpose.msra.mxu0 0
        %1157 = vmatprep.subr.bf16.mxu0 0
        %1158 = vmatpush1.bf16.xpose.msra.mxu0 0
        %1159 = vmatprep.subr.bf16.mxu0 0
        %1160 = vmatpush1.bf16.xpose.msra.mxu0 0
        %1161 = vmatprep.subr.bf16.mxu0 0
        %1162 = vmatpush1.bf16.xpose.msra.mxu0 0
        %1163 = vmatprep.subr.bf16.mxu0 0
        %1164 = vmatpush1.bf16.xpose.msra.mxu0 0
        %1165 = vmatprep.subr.bf16.mxu0 0
        %1166 = vmatpush1.bf16.xpose.msra.mxu0 0
        %1167 = vmatprep.subr.bf16.mxu0 0
        %1168 = vmatpush1.bf16.xpose.msra.mxu0 0
        %1169 = vmatprep.subr.bf16.mxu0 0
        %1170 = vmatpush1.bf16.xpose.msra.mxu0 0
        %1171 = vmatprep.subr.bf16.mxu0 0
        %1172 = vmatpush1.bf16.xpose.msra.mxu0 0
        %1173 = vmatprep.subr.bf16.mxu0 0
        %1174 = vmatpush1.bf16.xpose.msra.mxu0 0
        %1175 = vmatprep.subr.bf16.mxu0 0
        %1176 = vmatpush1.bf16.xpose.msra.mxu0 0
        %1177 = vmatprep.subr.bf16.mxu0 0
        %1178 = vmatpush1.bf16.xpose.msra.mxu0 0
        %1179 = vmatprep.subr.bf16.mxu0 0
        %1180 = vmatpush1.bf16.xpose.msra.mxu0 0
        %1181 = vmatprep.subr.bf16.mxu0 0
        %1182 = vmatpush1.bf16.xpose.msra.mxu0 0
        %1183 = vmatprep.mubr.bf16.mxu0 0
        %1184 = vmatmul.mubr.bf16.gmra.mrb[0].mxu0 %v1146
        %v1185 = vpop.f32.mrb[0].mxu0
        %v1186 = vadd.f32 0.0, %v1185
        %v1187 = vpop.f32.mrb[0].mxu0
        %v1188 = vpop.f32.mrb[0].mxu0
        %v1189 = vpop.f32.mrb[0].mxu0
        %1190 = vdwg.mxu0
        %1191 = vrot.lane.b32.xlu0 %v1139, 64
        %v1192 = vpop.permute.xlu0 %1191
        %1194 = vrot.lane.b32.xlu0 %v1121, 64
        %v1195 = vpop.permute.xlu0 %1194
        %v1197 = vsel %vm709, %v1192, 0
        %v1200 = vsel %vm709, %v1195, 0
        %1202 = vmatprep.subr.bf16.mxu0 0
        %1203 = vmatpush1.bf16.xpose.msra.mxu0 %v1200
        %1204 = vmatprep.subr.bf16.mxu0 0
        %1205 = vmatpush1.bf16.xpose.msra.mxu0 0
        %1206 = vmatprep.subr.bf16.mxu0 0
        %1207 = vmatpush1.bf16.xpose.msra.mxu0 0
        %1208 = vmatprep.subr.bf16.mxu0 0
        %1209 = vmatpush1.bf16.xpose.msra.mxu0 0
        %1210 = vmatprep.subr.bf16.mxu0 0
        %1211 = vmatpush1.bf16.xpose.msra.mxu0 0
        %1212 = vmatprep.subr.bf16.mxu0 0
        %1213 = vmatpush1.bf16.xpose.msra.mxu0 0
        %1214 = vmatprep.subr.bf16.mxu0 0
        %1215 = vmatpush1.bf16.xpose.msra.mxu0 0
        %1216 = vmatprep.subr.bf16.mxu0 0
        %1217 = vmatpush1.bf16.xpose.msra.mxu0 0
        %1218 = vmatprep.subr.bf16.mxu0 0
        %1219 = vmatpush1.bf16.xpose.msra.mxu0 0
        %1220 = vmatprep.subr.bf16.mxu0 0
        %1221 = vmatpush1.bf16.xpose.msra.mxu0 0
        %1222 = vmatprep.subr.bf16.mxu0 0
        %1223 = vmatpush1.bf16.xpose.msra.mxu0 0
        %1224 = vmatprep.subr.bf16.mxu0 0
        %1225 = vmatpush1.bf16.xpose.msra.mxu0 0
        %1226 = vmatprep.subr.bf16.mxu0 0
        %1227 = vmatpush1.bf16.xpose.msra.mxu0 0
        %1228 = vmatprep.subr.bf16.mxu0 0
        %1229 = vmatpush1.bf16.xpose.msra.mxu0 0
        %1230 = vmatprep.subr.bf16.mxu0 0
        %1231 = vmatpush1.bf16.xpose.msra.mxu0 0
        %1232 = vmatprep.subr.bf16.mxu0 0
        %1233 = vmatpush1.bf16.xpose.msra.mxu0 0
        %1234 = vmatprep.mubr.bf16.mxu0 0
        %1235 = vmatmul.mubr.bf16.gmra.mrb[0].mxu0 %v1197
        %v1236 = vpop.f32.mrb[0].mxu0
        %v1237 = vadd.f32 %v1186, %v1236
        %v1238 = vpop.f32.mrb[0].mxu0
        %v1239 = vpop.f32.mrb[0].mxu0
        %v1240 = vpop.f32.mrb[0].mxu0
        %1241 = vdwg.mxu0
        %s1242 = scalar_lea.vmem [#allocation3], 16
        %v1243 = vld [vmem:[%s1242] sm:$0xff]
        %v1244 = vsel %vm803, %v1237, -inf
        %1245 = vmax.xlane.f32.xlu0 %v1244
        %v1246 = vpop.xlane.xlu0 %1245
        %v1247 = vmax.f32 %v1243, %v1246
        %v1248 = vsub.f32 %v1243, %v1247
        %v1249 = vmul.f32 %v1248, 1.442695
        %v1250 = vpow.pop %v1249
        %1252 = vset.pattern.permute.xlu0 0
        %1253 = vperm.xlu0 %1252, %v1247
        %v1254 = vpop.permute.xlu0 %1253
        %v1256 = vsub.f32 %v1237, %v1254
        %v1257 = vmul.f32 %v1256, 1.442695
        %v1258 = vpow.pop %v1257
        %s1259 = scalar_lea.vmem [#allocation4], 16
        %v1260 = vld [vmem:[%s1259] sm:$0xff]
        %v1261 = vmul.f32 %v1250, %v1260
        %v1262 = vsel %vm803, %v1258, 0.0
        %1263 = vadd.xlane.f32.xlu0 %v1262
        %v1264 = vpop.xlane.xlu0 %1263
        %v1265 = vadd.f32 %v1261, %v1264
        %1266 = vst.msk [vmem:[%s1259] sm:$0xff] %vm825, %v1265
        %s1267 = scalar_lea.vmem [#allocation5], 16
        %v1268 = vld [vmem:[%s1267] sm:$0xff]
        %1270 = vset.pattern.permute.xlu0 0
        %1271 = vperm.xlu0 %1270, %v1250
        %v1272 = vpop.permute.xlu0 %1271
        %v1274 = vmul.f32 %v1272, %v1268
        %v1275 = vpack.c.bf16 %v1258, %v1258
        %1276 = vrot.lane.b32.xlu0 %v1056, 64
        %v1277 = vpop.permute.xlu0 %1276
        %v1279 = vsel %vm803, %v1275, 0
        %v1282 = vsel %vm838, %v1277, 0
        %1284 = vmatprep.subr.bf16.mxu0 0
        %1285 = vmatpush1.bf16.msra.mxu0 %v1282
        %1286 = vmatprep.subr.bf16.mxu0 0
        %1287 = vmatpush1.bf16.msra.mxu0 0
        %1288 = vmatprep.subr.bf16.mxu0 0
        %1289 = vmatpush1.bf16.msra.mxu0 0
        %1290 = vmatprep.subr.bf16.mxu0 0
        %1291 = vmatpush1.bf16.msra.mxu0 0
        %1292 = vmatprep.subr.bf16.mxu0 0
        %1293 = vmatpush1.bf16.msra.mxu0 0
        %1294 = vmatprep.subr.bf16.mxu0 0
        %1295 = vmatpush1.bf16.msra.mxu0 0
        %1296 = vmatprep.subr.bf16.mxu0 0
        %1297 = vmatpush1.bf16.msra.mxu0 0
        %1298 = vmatprep.subr.bf16.mxu0 0
        %1299 = vmatpush1.bf16.msra.mxu0 0
        %1300 = vmatprep.subr.bf16.mxu0 0
        %1301 = vmatpush1.bf16.msra.mxu0 0
        %1302 = vmatprep.subr.bf16.mxu0 0
        %1303 = vmatpush1.bf16.msra.mxu0 0
        %1304 = vmatprep.subr.bf16.mxu0 0
        %1305 = vmatpush1.bf16.msra.mxu0 0
        %1306 = vmatprep.subr.bf16.mxu0 0
        %1307 = vmatpush1.bf16.msra.mxu0 0
        %1308 = vmatprep.subr.bf16.mxu0 0
        %1309 = vmatpush1.bf16.msra.mxu0 0
        %1310 = vmatprep.subr.bf16.mxu0 0
        %1311 = vmatpush1.bf16.msra.mxu0 0
        %1312 = vmatprep.subr.bf16.mxu0 0
        %1313 = vmatpush1.bf16.msra.mxu0 0
        %1314 = vmatprep.subr.bf16.mxu0 0
        %1315 = vmatpush1.bf16.msra.mxu0 0
        %1316 = vmatprep.mubr.bf16.mxu0 0
        %1317 = vmatmul.mubr.bf16.gmra.mrb[0].mxu0 %v1279
        %v1318 = vpop.f32.mrb[0].mxu0
        %v1319 = vadd.f32 0.0, %v1318
        %v1320 = vpop.f32.mrb[0].mxu0
        %v1321 = vpop.f32.mrb[0].mxu0
        %v1322 = vpop.f32.mrb[0].mxu0
        %1323 = vdwg.mxu0
        %v1324 = vadd.f32 %v1274, %v1319
        %1325 = vst.msk [vmem:[%s1267] sm:$0xff] %vm883, %v1324
        %1326 = vst.msk [vmem:[%s1242] sm:$0xff] %vm825, %v1247
        %1327 = vrot.lane.b32.xlu0 %v674, 96
        %v1328 = vpop.permute.xlu0 %1327
        %v1330 = vmul.f32 %v672, %v1328
        %1331 = vrot.lane.b32.xlu0 %v675, 112
        %v1332 = vpop.permute.xlu0 %1331
        %v1334 = vmul.f32 %v672, %v1332
        %1336 = vrot.lane.b32.xlu0 %v1334, 112
        %v1337 = vpop.permute.xlu0 %1336
        %v1339 = vsub.f32 %v1330, %v1337
        %v1340 = vpack.c.bf16 %v1339, %v1339
        %1341 = vrot.lane.b32.xlu0 %v674, 112
        %v1342 = vpop.permute.xlu0 %1341
        %v1344 = vmul.f32 %v672, %v1342
        %1345 = vrot.lane.b32.xlu0 %v675, 96
        %v1346 = vpop.permute.xlu0 %1345
        %v1348 = vmul.f32 %v672, %v1346
        %1350 = vrot.lane.b32.xlu0 %v1348, 16
        %v1351 = vpop.permute.xlu0 %1350
        %v1353 = vadd.f32 %v1344, %v1351
        %v1354 = vpack.c.bf16 %v1353, %v1353
        %v1355 = vld [vmem:[#allocation2] sm:$0xf]
        %v1357 = vunpack.c.l.b16 %v1355
        %v1358 = vpack.c.b16 %v1357, %v1357
        %1359 = vrot.lane.b32.xlu0 %v1358, 16
        %v1360 = vpop.permute.xlu0 %1359
        %1362 = vrot.lane.b32.xlu0 %v1354, 16
        %v1363 = vpop.permute.xlu0 %1362
        %v1365 = vsel %vm709, %v1360, 0
        %v1368 = vsel %vm709, %v1363, 0
        %1370 = vmatprep.subr.bf16.mxu0 0
        %1371 = vmatpush1.bf16.xpose.msra.mxu0 %v1368
        %1372 = vmatprep.subr.bf16.mxu0 0
        %1373 = vmatpush1.bf16.xpose.msra.mxu0 0
        %1374 = vmatprep.subr.bf16.mxu0 0
        %1375 = vmatpush1.bf16.xpose.msra.mxu0 0
        %1376 = vmatprep.subr.bf16.mxu0 0
        %1377 = vmatpush1.bf16.xpose.msra.mxu0 0
        %1378 = vmatprep.subr.bf16.mxu0 0
        %1379 = vmatpush1.bf16.xpose.msra.mxu0 0
        %1380 = vmatprep.subr.bf16.mxu0 0
        %1381 = vmatpush1.bf16.xpose.msra.mxu0 0
        %1382 = vmatprep.subr.bf16.mxu0 0
        %1383 = vmatpush1.bf16.xpose.msra.mxu0 0
        %1384 = vmatprep.subr.bf16.mxu0 0
        %1385 = vmatpush1.bf16.xpose.msra.mxu0 0
        %1386 = vmatprep.subr.bf16.mxu0 0
        %1387 = vmatpush1.bf16.xpose.msra.mxu0 0
        %1388 = vmatprep.subr.bf16.mxu0 0
        %1389 = vmatpush1.bf16.xpose.msra.mxu0 0
        %1390 = vmatprep.subr.bf16.mxu0 0
        %1391 = vmatpush1.bf16.xpose.msra.mxu0 0
        %1392 = vmatprep.subr.bf16.mxu0 0
        %1393 = vmatpush1.bf16.xpose.msra.mxu0 0
        %1394 = vmatprep.subr.bf16.mxu0 0
        %1395 = vmatpush1.bf16.xpose.msra.mxu0 0
        %1396 = vmatprep.subr.bf16.mxu0 0
        %1397 = vmatpush1.bf16.xpose.msra.mxu0 0
        %1398 = vmatprep.subr.bf16.mxu0 0
        %1399 = vmatpush1.bf16.xpose.msra.mxu0 0
        %1400 = vmatprep.subr.bf16.mxu0 0
        %1401 = vmatpush1.bf16.xpose.msra.mxu0 0
        %1402 = vmatprep.mubr.bf16.mxu0 0
        %1403 = vmatmul.mubr.bf16.gmra.mrb[0].mxu0 %v1365
        %v1404 = vpop.f32.mrb[0].mxu0
        %v1405 = vadd.f32 0.0, %v1404
        %v1406 = vpop.f32.mrb[0].mxu0
        %v1407 = vpop.f32.mrb[0].mxu0
        %v1408 = vpop.f32.mrb[0].mxu0
        %1409 = vdwg.mxu0
        %1410 = vrot.lane.b32.xlu0 %v1358, 32
        %v1411 = vpop.permute.xlu0 %1410
        %1413 = vrot.lane.b32.xlu0 %v1340, 32
        %v1414 = vpop.permute.xlu0 %1413
        %v1416 = vsel %vm709, %v1411, 0
        %v1419 = vsel %vm709, %v1414, 0
        %1421 = vmatprep.subr.bf16.mxu0 0
        %1422 = vmatpush1.bf16.xpose.msra.mxu0 %v1419
        %1423 = vmatprep.subr.bf16.mxu0 0
        %1424 = vmatpush1.bf16.xpose.msra.mxu0 0
        %1425 = vmatprep.subr.bf16.mxu0 0
        %1426 = vmatpush1.bf16.xpose.msra.mxu0 0
        %1427 = vmatprep.subr.bf16.mxu0 0
        %1428 = vmatpush1.bf16.xpose.msra.mxu0 0
        %1429 = vmatprep.subr.bf16.mxu0 0
        %1430 = vmatpush1.bf16.xpose.msra.mxu0 0
        %1431 = vmatprep.subr.bf16.mxu0 0
        %1432 = vmatpush1.bf16.xpose.msra.mxu0 0
        %1433 = vmatprep.subr.bf16.mxu0 0
        %1434 = vmatpush1.bf16.xpose.msra.mxu0 0
        %1435 = vmatprep.subr.bf16.mxu0 0
        %1436 = vmatpush1.bf16.xpose.msra.mxu0 0
        %1437 = vmatprep.subr.bf16.mxu0 0
        %1438 = vmatpush1.bf16.xpose.msra.mxu0 0
        %1439 = vmatprep.subr.bf16.mxu0 0
        %1440 = vmatpush1.bf16.xpose.msra.mxu0 0
        %1441 = vmatprep.subr.bf16.mxu0 0
        %1442 = vmatpush1.bf16.xpose.msra.mxu0 0
        %1443 = vmatprep.subr.bf16.mxu0 0
        %1444 = vmatpush1.bf16.xpose.msra.mxu0 0
        %1445 = vmatprep.subr.bf16.mxu0 0
        %1446 = vmatpush1.bf16.xpose.msra.mxu0 0
        %1447 = vmatprep.subr.bf16.mxu0 0
        %1448 = vmatpush1.bf16.xpose.msra.mxu0 0
        %1449 = vmatprep.subr.bf16.mxu0 0
        %1450 = vmatpush1.bf16.xpose.msra.mxu0 0
        %1451 = vmatprep.subr.bf16.mxu0 0
        %1452 = vmatpush1.bf16.xpose.msra.mxu0 0
        %1453 = vmatprep.mubr.bf16.mxu0 0
        %1454 = vmatmul.mubr.bf16.gmra.mrb[0].mxu0 %v1416
        %v1455 = vpop.f32.mrb[0].mxu0
        %v1456 = vadd.f32 %v1405, %v1455
        %v1457 = vpop.f32.mrb[0].mxu0
        %v1458 = vpop.f32.mrb[0].mxu0
        %v1459 = vpop.f32.mrb[0].mxu0
        %1460 = vdwg.mxu0
        %s1461 = scalar_lea.vmem [#allocation3], 24
        %v1462 = vld [vmem:[%s1461] sm:$0xff]
        %v1463 = vsel %vm803, %v1456, -inf
        %1464 = vmax.xlane.f32.xlu0 %v1463
        %v1465 = vpop.xlane.xlu0 %1464
        %v1466 = vmax.f32 %v1462, %v1465
        %v1467 = vsub.f32 %v1462, %v1466
        %v1468 = vmul.f32 %v1467, 1.442695
        %v1469 = vpow.pop %v1468
        %1471 = vset.pattern.permute.xlu0 0
        %1472 = vperm.xlu0 %1471, %v1466
        %v1473 = vpop.permute.xlu0 %1472
        %v1475 = vsub.f32 %v1456, %v1473
        %v1476 = vmul.f32 %v1475, 1.442695
        %v1477 = vpow.pop %v1476
        %s1478 = scalar_lea.vmem [#allocation4], 24
        %v1479 = vld [vmem:[%s1478] sm:$0xff]
        %v1480 = vmul.f32 %v1469, %v1479
        %v1481 = vsel %vm803, %v1477, 0.0
        %1482 = vadd.xlane.f32.xlu0 %v1481
        %v1483 = vpop.xlane.xlu0 %1482
        %v1484 = vadd.f32 %v1480, %v1483
        %1485 = vst.msk [vmem:[%s1478] sm:$0xff] %vm825, %v1484
        %s1486 = scalar_lea.vmem [#allocation5], 24
        %v1487 = vld [vmem:[%s1486] sm:$0xff]
        %1489 = vset.pattern.permute.xlu0 0
        %1490 = vperm.xlu0 %1489, %v1469
        %v1491 = vpop.permute.xlu0 %1490
        %v1493 = vmul.f32 %v1491, %v1487
        %v1494 = vpack.c.bf16 %v1477, %v1477
        %1495 = vrot.lane.b32.xlu0 %v1056, 32
        %v1496 = vpop.permute.xlu0 %1495
        %v1498 = vsel %vm803, %v1494, 0
        %v1501 = vsel %vm838, %v1496, 0
        %1503 = vmatprep.subr.bf16.mxu0 0
        %1504 = vmatpush1.bf16.msra.mxu0 %v1501
        %1505 = vmatprep.subr.bf16.mxu0 0
        %1506 = vmatpush1.bf16.msra.mxu0 0
        %1507 = vmatprep.subr.bf16.mxu0 0
        %1508 = vmatpush1.bf16.msra.mxu0 0
        %1509 = vmatprep.subr.bf16.mxu0 0
        %1510 = vmatpush1.bf16.msra.mxu0 0
        %1511 = vmatprep.subr.bf16.mxu0 0
        %1512 = vmatpush1.bf16.msra.mxu0 0
        %1513 = vmatprep.subr.bf16.mxu0 0
        %1514 = vmatpush1.bf16.msra.mxu0 0
        %1515 = vmatprep.subr.bf16.mxu0 0
        %1516 = vmatpush1.bf16.msra.mxu0 0
        %1517 = vmatprep.subr.bf16.mxu0 0
        %1518 = vmatpush1.bf16.msra.mxu0 0
        %1519 = vmatprep.subr.bf16.mxu0 0
        %1520 = vmatpush1.bf16.msra.mxu0 0
        %1521 = vmatprep.subr.bf16.mxu0 0
        %1522 = vmatpush1.bf16.msra.mxu0 0
        %1523 = vmatprep.subr.bf16.mxu0 0
        %1524 = vmatpush1.bf16.msra.mxu0 0
        %1525 = vmatprep.subr.bf16.mxu0 0
        %1526 = vmatpush1.bf16.msra.mxu0 0
        %1527 = vmatprep.subr.bf16.mxu0 0
        %1528 = vmatpush1.bf16.msra.mxu0 0
        %1529 = vmatprep.subr.bf16.mxu0 0
        %1530 = vmatpush1.bf16.msra.mxu0 0
        %1531 = vmatprep.subr.bf16.mxu0 0
        %1532 = vmatpush1.bf16.msra.mxu0 0
        %1533 = vmatprep.subr.bf16.mxu0 0
        %1534 = vmatpush1.bf16.msra.mxu0 0
        %1535 = vmatprep.mubr.bf16.mxu0 0
        %1536 = vmatmul.mubr.bf16.gmra.mrb[0].mxu0 %v1498
        %v1537 = vpop.f32.mrb[0].mxu0
        %v1538 = vadd.f32 0.0, %v1537
        %v1539 = vpop.f32.mrb[0].mxu0
        %v1540 = vpop.f32.mrb[0].mxu0
        %v1541 = vpop.f32.mrb[0].mxu0
        %1542 = vdwg.mxu0
        %v1543 = vadd.f32 %v1493, %v1538
        %1544 = vst.msk [vmem:[%s1486] sm:$0xff] %vm883, %v1543
        %1545 = vst.msk [vmem:[%s1461] sm:$0xff] %vm825, %v1466
      $region56: #{_lambda_.18} parent=47 // pred_fallthru
        _
      %p1546 = scmp.eq.s32.totalorder %s25, %s24
      // Predicated region
      $region57: #{_lambda_.18} parent=47 // pred_check
        %p1547 = pneg %p1546
      $region58: #{_lambda_.18} parent=47 // pred_check_branch
        %1549 = sbr.rel (%p1547) target = $region60
      $region59: #{_lambda_.18} parent=47 // pred_region
        %v1550 = vld [vmem:[%s469] sm:$0xf]
        %v1551 = vunpack.c.l.bf16 %v1550
        %v1552 = vld [vmem:[%s483] sm:$0xf]
        %v1553 = vld [vmem:[%s499] sm:$0xff]
        %v1554 = vld [vmem:[%s507] sm:$0xff]
        %s1555 = smul.u32 %s24, 8
        %v1556 = vlaneseq
        %v1557 = vshrl.u32 %v1556, 7
        %v1558 = vstv %s1555
        %v1559 = vadd.s32 %v1558, %v1557
        %s1560 = smul.u32 %s25, 8
        %v1561 = vlaneseq
        %v1562 = vand.u32 %v1561, 127
        %v1563 = vstv %s1560
        %v1564 = vadd.s32 %v1563, %v1562
        %vm1565 = vcmp.le.s32.totalorder %v1564, %v1559
        %v1566 = vmul.f32 %v1551, %v1553
        %1568 = vrot.lane.b32.xlu0 %v1554, 16
        %v1569 = vpop.permute.xlu0 %1568
        %v1571 = vmul.f32 %v1551, %v1569
        %1573 = vrot.lane.b32.xlu0 %v1571, 112
        %v1574 = vpop.permute.xlu0 %1573
        %v1576 = vsub.f32 %v1566, %v1574
        %v1577 = vpack.c.bf16 %v1576, %v1576
        %1579 = vrot.lane.b32.xlu0 %v1553, 16
        %v1580 = vpop.permute.xlu0 %1579
        %v1582 = vmul.f32 %v1551, %v1580
        %v1583 = vmul.f32 %v1551, %v1554
        %1585 = vrot.lane.b32.xlu0 %v1583, 16
        %v1586 = vpop.permute.xlu0 %1585
        %v1588 = vadd.f32 %v1582, %v1586
        %v1589 = vpack.c.bf16 %v1588, %v1588
        %v1590 = vld [vmem:[#allocation2] sm:$0xf]
        %v1592 = vunpack.c.l.b16 %v1590
        %v1593 = vpack.c.b16 %v1592, %v1592
        %1594 = vrot.lane.b32.xlu0 %v1593, 112
        %v1595 = vpop.permute.xlu0 %1594
        %1597 = vrot.lane.b32.xlu0 %v1589, 112
        %v1598 = vpop.permute.xlu0 %1597
        %vm1599 = vcmask 130048
        %v1601 = vsel %vm1599, %v1595, 0
        %v1604 = vsel %vm1599, %v1598, 0
        %1606 = vmatprep.subr.bf16.mxu0 0
        %1607 = vmatpush1.bf16.xpose.msra.mxu0 %v1604
        %1608 = vmatprep.subr.bf16.mxu0 0
        %1609 = vmatpush1.bf16.xpose.msra.mxu0 0
        %1610 = vmatprep.subr.bf16.mxu0 0
        %1611 = vmatpush1.bf16.xpose.msra.mxu0 0
        %1612 = vmatprep.subr.bf16.mxu0 0
        %1613 = vmatpush1.bf16.xpose.msra.mxu0 0
        %1614 = vmatprep.subr.bf16.mxu0 0
        %1615 = vmatpush1.bf16.xpose.msra.mxu0 0
        %1616 = vmatprep.subr.bf16.mxu0 0
        %1617 = vmatpush1.bf16.xpose.msra.mxu0 0
        %1618 = vmatprep.subr.bf16.mxu0 0
        %1619 = vmatpush1.bf16.xpose.msra.mxu0 0
        %1620 = vmatprep.subr.bf16.mxu0 0
        %1621 = vmatpush1.bf16.xpose.msra.mxu0 0
        %1622 = vmatprep.subr.bf16.mxu0 0
        %1623 = vmatpush1.bf16.xpose.msra.mxu0 0
        %1624 = vmatprep.subr.bf16.mxu0 0
        %1625 = vmatpush1.bf16.xpose.msra.mxu0 0
        %1626 = vmatprep.subr.bf16.mxu0 0
        %1627 = vmatpush1.bf16.xpose.msra.mxu0 0
        %1628 = vmatprep.subr.bf16.mxu0 0
        %1629 = vmatpush1.bf16.xpose.msra.mxu0 0
        %1630 = vmatprep.subr.bf16.mxu0 0
        %1631 = vmatpush1.bf16.xpose.msra.mxu0 0
        %1632 = vmatprep.subr.bf16.mxu0 0
        %1633 = vmatpush1.bf16.xpose.msra.mxu0 0
        %1634 = vmatprep.subr.bf16.mxu0 0
        %1635 = vmatpush1.bf16.xpose.msra.mxu0 0
        %1636 = vmatprep.subr.bf16.mxu0 0
        %1637 = vmatpush1.bf16.xpose.msra.mxu0 0
        %1638 = vmatprep.mubr.bf16.mxu0 0
        %1639 = vmatmul.mubr.bf16.gmra.mrb[0].mxu0 %v1601
        %v1640 = vpop.f32.mrb[0].mxu0
        %v1641 = vadd.f32 0.0, %v1640
        %v1642 = vpop.f32.mrb[0].mxu0
        %v1643 = vpop.f32.mrb[0].mxu0
        %v1644 = vpop.f32.mrb[0].mxu0
        %1645 = vdwg.mxu0
        %v1647 = vsel %vm1599, %v1590, 0
        %v1650 = vsel %vm1599, %v1577, 0
        %1652 = vmatprep.subr.bf16.mxu0 0
        %1653 = vmatpush1.bf16.xpose.msra.mxu0 %v1650
        %1654 = vmatprep.subr.bf16.mxu0 0
        %1655 = vmatpush1.bf16.xpose.msra.mxu0 0
        %1656 = vmatprep.subr.bf16.mxu0 0
        %1657 = vmatpush1.bf16.xpose.msra.mxu0 0
        %1658 = vmatprep.subr.bf16.mxu0 0
        %1659 = vmatpush1.bf16.xpose.msra.mxu0 0
        %1660 = vmatprep.subr.bf16.mxu0 0
        %1661 = vmatpush1.bf16.xpose.msra.mxu0 0
        %1662 = vmatprep.subr.bf16.mxu0 0
        %1663 = vmatpush1.bf16.xpose.msra.mxu0 0
        %1664 = vmatprep.subr.bf16.mxu0 0
        %1665 = vmatpush1.bf16.xpose.msra.mxu0 0
        %1666 = vmatprep.subr.bf16.mxu0 0
        %1667 = vmatpush1.bf16.xpose.msra.mxu0 0
        %1668 = vmatprep.subr.bf16.mxu0 0
        %1669 = vmatpush1.bf16.xpose.msra.mxu0 0
        %1670 = vmatprep.subr.bf16.mxu0 0
        %1671 = vmatpush1.bf16.xpose.msra.mxu0 0
        %1672 = vmatprep.subr.bf16.mxu0 0
        %1673 = vmatpush1.bf16.xpose.msra.mxu0 0
        %1674 = vmatprep.subr.bf16.mxu0 0
        %1675 = vmatpush1.bf16.xpose.msra.mxu0 0
        %1676 = vmatprep.subr.bf16.mxu0 0
        %1677 = vmatpush1.bf16.xpose.msra.mxu0 0
        %1678 = vmatprep.subr.bf16.mxu0 0
        %1679 = vmatpush1.bf16.xpose.msra.mxu0 0
        %1680 = vmatprep.subr.bf16.mxu0 0
        %1681 = vmatpush1.bf16.xpose.msra.mxu0 0
        %1682 = vmatprep.subr.bf16.mxu0 0
        %1683 = vmatpush1.bf16.xpose.msra.mxu0 0
        %1684 = vmatprep.mubr.bf16.mxu0 0
        %1685 = vmatmul.mubr.bf16.gmra.mrb[0].mxu0 %v1647
        %v1686 = vpop.f32.mrb[0].mxu0
        %v1687 = vadd.f32 %v1641, %v1686
        %v1688 = vpop.f32.mrb[0].mxu0
        %v1689 = vpop.f32.mrb[0].mxu0
        %v1690 = vpop.f32.mrb[0].mxu0
        %1691 = vdwg.mxu0
        %v1692 = vsel %vm1565, %v1687, -1e+30
        %v1693 = vld [vmem:[#allocation3] sm:$0xff]
        %vm1694 = vcmask 64512
        %v1695 = vsel %vm1694, %v1692, -inf
        %1696 = vmax.xlane.f32.xlu0 %v1695
        %v1697 = vpop.xlane.xlu0 %1696
        %v1698 = vmax.f32 %v1693, %v1697
        %v1699 = vsub.f32 %v1693, %v1698
        %v1700 = vmul.f32 %v1699, 1.442695
        %v1701 = vpow.pop %v1700
        %1703 = vset.pattern.permute.xlu0 0
        %1704 = vperm.xlu0 %1703, %v1698
        %v1705 = vpop.permute.xlu0 %1704
        %v1707 = vsub.f32 %v1692, %v1705
        %v1708 = vmul.f32 %v1707, 1.442695
        %v1709 = vpow.pop %v1708
        %v1710 = vld [vmem:[#allocation4] sm:$0xff]
        %v1711 = vmul.f32 %v1701, %v1710
        %v1712 = vsel %vm1694, %v1709, 0.0
        %1713 = vadd.xlane.f32.xlu0 %v1712
        %v1714 = vpop.xlane.xlu0 %1713
        %v1715 = vadd.f32 %v1711, %v1714
        %vm1716 = vcmask 7168
        %1717 = vst.msk [vmem:[#allocation4] sm:$0xff] %vm1716, %v1715
        %v1718 = vld [vmem:[#allocation5] sm:$0xff]
        %1720 = vset.pattern.permute.xlu0 0
        %1721 = vperm.xlu0 %1720, %v1701
        %v1722 = vpop.permute.xlu0 %1721
        %v1724 = vmul.f32 %v1722, %v1718
        %v1725 = vpack.c.bf16 %v1709, %v1709
        %v1727 = vsel %vm1694, %v1725, 0
        %vm1729 = vcmask 1043456
        %v1731 = vsel %vm1729, %v1552, 0
        %1733 = vmatprep.subr.bf16.mxu0 0
        %1734 = vmatpush1.bf16.msra.mxu0 %v1731
        %1735 = vmatprep.subr.bf16.mxu0 0
        %1736 = vmatpush1.bf16.msra.mxu0 0
        %1737 = vmatprep.subr.bf16.mxu0 0
        %1738 = vmatpush1.bf16.msra.mxu0 0
        %1739 = vmatprep.subr.bf16.mxu0 0
        %1740 = vmatpush1.bf16.msra.mxu0 0
        %1741 = vmatprep.subr.bf16.mxu0 0
        %1742 = vmatpush1.bf16.msra.mxu0 0
        %1743 = vmatprep.subr.bf16.mxu0 0
        %1744 = vmatpush1.bf16.msra.mxu0 0
        %1745 = vmatprep.subr.bf16.mxu0 0
        %1746 = vmatpush1.bf16.msra.mxu0 0
        %1747 = vmatprep.subr.bf16.mxu0 0
        %1748 = vmatpush1.bf16.msra.mxu0 0
        %1749 = vmatprep.subr.bf16.mxu0 0
        %1750 = vmatpush1.bf16.msra.mxu0 0
        %1751 = vmatprep.subr.bf16.mxu0 0
        %1752 = vmatpush1.bf16.msra.mxu0 0
        %1753 = vmatprep.subr.bf16.mxu0 0
        %1754 = vmatpush1.bf16.msra.mxu0 0
        %1755 = vmatprep.subr.bf16.mxu0 0
        %1756 = vmatpush1.bf16.msra.mxu0 0
        %1757 = vmatprep.subr.bf16.mxu0 0
        %1758 = vmatpush1.bf16.msra.mxu0 0
        %1759 = vmatprep.subr.bf16.mxu0 0
        %1760 = vmatpush1.bf16.msra.mxu0 0
        %1761 = vmatprep.subr.bf16.mxu0 0
        %1762 = vmatpush1.bf16.msra.mxu0 0
        %1763 = vmatprep.subr.bf16.mxu0 0
        %1764 = vmatpush1.bf16.msra.mxu0 0
        %1765 = vmatprep.mubr.bf16.mxu0 0
        %1766 = vmatmul.mubr.bf16.gmra.mrb[0].mxu0 %v1727
        %v1767 = vpop.f32.mrb[0].mxu0
        %v1768 = vadd.f32 0.0, %v1767
        %v1769 = vpop.f32.mrb[0].mxu0
        %v1770 = vpop.f32.mrb[0].mxu0
        %v1771 = vpop.f32.mrb[0].mxu0
        %1772 = vdwg.mxu0
        %v1773 = vadd.f32 %v1724, %v1768
        %vm1774 = vcmask 261120
        %1775 = vst.msk [vmem:[#allocation5] sm:$0xff] %vm1774, %v1773
        %1776 = vst.msk [vmem:[#allocation3] sm:$0xff] %vm1716, %v1698
        %1777 = vrot.lane.b32.xlu0 %v1553, 32
        %v1778 = vpop.permute.xlu0 %1777
        %v1780 = vmul.f32 %v1551, %v1778
        %1781 = vrot.lane.b32.xlu0 %v1554, 48
        %v1782 = vpop.permute.xlu0 %1781
        %v1784 = vmul.f32 %v1551, %v1782
        %1786 = vrot.lane.b32.xlu0 %v1784, 112
        %v1787 = vpop.permute.xlu0 %1786
        %v1789 = vsub.f32 %v1780, %v1787
        %v1790 = vpack.c.bf16 %v1789, %v1789
        %1791 = vrot.lane.b32.xlu0 %v1553, 48
        %v1792 = vpop.permute.xlu0 %1791
        %v1794 = vmul.f32 %v1551, %v1792
        %1795 = vrot.lane.b32.xlu0 %v1554, 32
        %v1796 = vpop.permute.xlu0 %1795
        %v1798 = vmul.f32 %v1551, %v1796
        %1800 = vrot.lane.b32.xlu0 %v1798, 16
        %v1801 = vpop.permute.xlu0 %1800
        %v1803 = vadd.f32 %v1794, %v1801
        %v1804 = vpack.c.bf16 %v1803, %v1803
        %v1805 = vld [vmem:[#allocation2] sm:$0xf]
        %v1807 = vunpack.c.l.b16 %v1805
        %v1808 = vpack.c.b16 %v1807, %v1807
        %1809 = vrot.lane.b32.xlu0 %v1808, 80
        %v1810 = vpop.permute.xlu0 %1809
        %1812 = vrot.lane.b32.xlu0 %v1804, 80
        %v1813 = vpop.permute.xlu0 %1812
        %v1815 = vsel %vm1599, %v1810, 0
        %v1818 = vsel %vm1599, %v1813, 0
        %1820 = vmatprep.subr.bf16.mxu0 0
        %1821 = vmatpush1.bf16.xpose.msra.mxu0 %v1818
        %1822 = vmatprep.subr.bf16.mxu0 0
        %1823 = vmatpush1.bf16.xpose.msra.mxu0 0
        %1824 = vmatprep.subr.bf16.mxu0 0
        %1825 = vmatpush1.bf16.xpose.msra.mxu0 0
        %1826 = vmatprep.subr.bf16.mxu0 0
        %1827 = vmatpush1.bf16.xpose.msra.mxu0 0
        %1828 = vmatprep.subr.bf16.mxu0 0
        %1829 = vmatpush1.bf16.xpose.msra.mxu0 0
        %1830 = vmatprep.subr.bf16.mxu0 0
        %1831 = vmatpush1.bf16.xpose.msra.mxu0 0
        %1832 = vmatprep.subr.bf16.mxu0 0
        %1833 = vmatpush1.bf16.xpose.msra.mxu0 0
        %1834 = vmatprep.subr.bf16.mxu0 0
        %1835 = vmatpush1.bf16.xpose.msra.mxu0 0
        %1836 = vmatprep.subr.bf16.mxu0 0
        %1837 = vmatpush1.bf16.xpose.msra.mxu0 0
        %1838 = vmatprep.subr.bf16.mxu0 0
        %1839 = vmatpush1.bf16.xpose.msra.mxu0 0
        %1840 = vmatprep.subr.bf16.mxu0 0
        %1841 = vmatpush1.bf16.xpose.msra.mxu0 0
        %1842 = vmatprep.subr.bf16.mxu0 0
        %1843 = vmatpush1.bf16.xpose.msra.mxu0 0
        %1844 = vmatprep.subr.bf16.mxu0 0
        %1845 = vmatpush1.bf16.xpose.msra.mxu0 0
        %1846 = vmatprep.subr.bf16.mxu0 0
        %1847 = vmatpush1.bf16.xpose.msra.mxu0 0
        %1848 = vmatprep.subr.bf16.mxu0 0
        %1849 = vmatpush1.bf16.xpose.msra.mxu0 0
        %1850 = vmatprep.subr.bf16.mxu0 0
        %1851 = vmatpush1.bf16.xpose.msra.mxu0 0
        %1852 = vmatprep.mubr.bf16.mxu0 0
        %1853 = vmatmul.mubr.bf16.gmra.mrb[0].mxu0 %v1815
        %v1854 = vpop.f32.mrb[0].mxu0
        %v1855 = vadd.f32 0.0, %v1854
        %v1856 = vpop.f32.mrb[0].mxu0
        %v1857 = vpop.f32.mrb[0].mxu0
        %v1858 = vpop.f32.mrb[0].mxu0
        %1859 = vdwg.mxu0
        %1860 = vrot.lane.b32.xlu0 %v1808, 96
        %v1861 = vpop.permute.xlu0 %1860
        %1863 = vrot.lane.b32.xlu0 %v1790, 96
        %v1864 = vpop.permute.xlu0 %1863
        %v1866 = vsel %vm1599, %v1861, 0
        %v1869 = vsel %vm1599, %v1864, 0
        %1871 = vmatprep.subr.bf16.mxu0 0
        %1872 = vmatpush1.bf16.xpose.msra.mxu0 %v1869
        %1873 = vmatprep.subr.bf16.mxu0 0
        %1874 = vmatpush1.bf16.xpose.msra.mxu0 0
        %1875 = vmatprep.subr.bf16.mxu0 0
        %1876 = vmatpush1.bf16.xpose.msra.mxu0 0
        %1877 = vmatprep.subr.bf16.mxu0 0
        %1878 = vmatpush1.bf16.xpose.msra.mxu0 0
        %1879 = vmatprep.subr.bf16.mxu0 0
        %1880 = vmatpush1.bf16.xpose.msra.mxu0 0
        %1881 = vmatprep.subr.bf16.mxu0 0
        %1882 = vmatpush1.bf16.xpose.msra.mxu0 0
        %1883 = vmatprep.subr.bf16.mxu0 0
        %1884 = vmatpush1.bf16.xpose.msra.mxu0 0
        %1885 = vmatprep.subr.bf16.mxu0 0
        %1886 = vmatpush1.bf16.xpose.msra.mxu0 0
        %1887 = vmatprep.subr.bf16.mxu0 0
        %1888 = vmatpush1.bf16.xpose.msra.mxu0 0
        %1889 = vmatprep.subr.bf16.mxu0 0
        %1890 = vmatpush1.bf16.xpose.msra.mxu0 0
        %1891 = vmatprep.subr.bf16.mxu0 0
        %1892 = vmatpush1.bf16.xpose.msra.mxu0 0
        %1893 = vmatprep.subr.bf16.mxu0 0
        %1894 = vmatpush1.bf16.xpose.msra.mxu0 0
        %1895 = vmatprep.subr.bf16.mxu0 0
        %1896 = vmatpush1.bf16.xpose.msra.mxu0 0
        %1897 = vmatprep.subr.bf16.mxu0 0
        %1898 = vmatpush1.bf16.xpose.msra.mxu0 0
        %1899 = vmatprep.subr.bf16.mxu0 0
        %1900 = vmatpush1.bf16.xpose.msra.mxu0 0
        %1901 = vmatprep.subr.bf16.mxu0 0
        %1902 = vmatpush1.bf16.xpose.msra.mxu0 0
        %1903 = vmatprep.mubr.bf16.mxu0 0
        %1904 = vmatmul.mubr.bf16.gmra.mrb[0].mxu0 %v1866
        %v1905 = vpop.f32.mrb[0].mxu0
        %v1906 = vadd.f32 %v1855, %v1905
        %v1907 = vpop.f32.mrb[0].mxu0
        %v1908 = vpop.f32.mrb[0].mxu0
        %v1909 = vpop.f32.mrb[0].mxu0
        %1910 = vdwg.mxu0
        %v1911 = vsel %vm1565, %v1906, -1e+30
        %s1912 = scalar_lea.vmem [#allocation3], 8
        %v1913 = vld [vmem:[%s1912] sm:$0xff]
        %v1914 = vsel %vm1694, %v1911, -inf
        %1915 = vmax.xlane.f32.xlu0 %v1914
        %v1916 = vpop.xlane.xlu0 %1915
        %v1917 = vmax.f32 %v1913, %v1916
        %v1918 = vsub.f32 %v1913, %v1917
        %v1919 = vmul.f32 %v1918, 1.442695
        %v1920 = vpow.pop %v1919
        %1922 = vset.pattern.permute.xlu0 0
        %1923 = vperm.xlu0 %1922, %v1917
        %v1924 = vpop.permute.xlu0 %1923
        %v1926 = vsub.f32 %v1911, %v1924
        %v1927 = vmul.f32 %v1926, 1.442695
        %v1928 = vpow.pop %v1927
        %s1929 = scalar_lea.vmem [#allocation4], 8
        %v1930 = vld [vmem:[%s1929] sm:$0xff]
        %v1931 = vmul.f32 %v1920, %v1930
        %v1932 = vsel %vm1694, %v1928, 0.0
        %1933 = vadd.xlane.f32.xlu0 %v1932
        %v1934 = vpop.xlane.xlu0 %1933
        %v1935 = vadd.f32 %v1931, %v1934
        %1936 = vst.msk [vmem:[%s1929] sm:$0xff] %vm1716, %v1935
        %s1937 = scalar_lea.vmem [#allocation5], 8
        %v1938 = vld [vmem:[%s1937] sm:$0xff]
        %1940 = vset.pattern.permute.xlu0 0
        %1941 = vperm.xlu0 %1940, %v1920
        %v1942 = vpop.permute.xlu0 %1941
        %v1944 = vmul.f32 %v1942, %v1938
        %v1945 = vpack.c.bf16 %v1928, %v1928
        %v1947 = vunpack.c.l.b16 %v1552
        %v1948 = vpack.c.b16 %v1947, %v1947
        %1949 = vrot.lane.b32.xlu0 %v1948, 96
        %v1950 = vpop.permute.xlu0 %1949
        %v1952 = vsel %vm1694, %v1945, 0
        %v1955 = vsel %vm1729, %v1950, 0
        %1957 = vmatprep.subr.bf16.mxu0 0
        %1958 = vmatpush1.bf16.msra.mxu0 %v1955
        %1959 = vmatprep.subr.bf16.mxu0 0
        %1960 = vmatpush1.bf16.msra.mxu0 0
        %1961 = vmatprep.subr.bf16.mxu0 0
        %1962 = vmatpush1.bf16.msra.mxu0 0
        %1963 = vmatprep.subr.bf16.mxu0 0
        %1964 = vmatpush1.bf16.msra.mxu0 0
        %1965 = vmatprep.subr.bf16.mxu0 0
        %1966 = vmatpush1.bf16.msra.mxu0 0
        %1967 = vmatprep.subr.bf16.mxu0 0
        %1968 = vmatpush1.bf16.msra.mxu0 0
        %1969 = vmatprep.subr.bf16.mxu0 0
        %1970 = vmatpush1.bf16.msra.mxu0 0
        %1971 = vmatprep.subr.bf16.mxu0 0
        %1972 = vmatpush1.bf16.msra.mxu0 0
        %1973 = vmatprep.subr.bf16.mxu0 0
        %1974 = vmatpush1.bf16.msra.mxu0 0
        %1975 = vmatprep.subr.bf16.mxu0 0
        %1976 = vmatpush1.bf16.msra.mxu0 0
        %1977 = vmatprep.subr.bf16.mxu0 0
        %1978 = vmatpush1.bf16.msra.mxu0 0
        %1979 = vmatprep.subr.bf16.mxu0 0
        %1980 = vmatpush1.bf16.msra.mxu0 0
        %1981 = vmatprep.subr.bf16.mxu0 0
        %1982 = vmatpush1.bf16.msra.mxu0 0
        %1983 = vmatprep.subr.bf16.mxu0 0
        %1984 = vmatpush1.bf16.msra.mxu0 0
        %1985 = vmatprep.subr.bf16.mxu0 0
        %1986 = vmatpush1.bf16.msra.mxu0 0
        %1987 = vmatprep.subr.bf16.mxu0 0
        %1988 = vmatpush1.bf16.msra.mxu0 0
        %1989 = vmatprep.mubr.bf16.mxu0 0
        %1990 = vmatmul.mubr.bf16.gmra.mrb[0].mxu0 %v1952
        %v1991 = vpop.f32.mrb[0].mxu0
        %v1992 = vadd.f32 0.0, %v1991
        %v1993 = vpop.f32.mrb[0].mxu0
        %v1994 = vpop.f32.mrb[0].mxu0
        %v1995 = vpop.f32.mrb[0].mxu0
        %1996 = vdwg.mxu0
        %v1997 = vadd.f32 %v1944, %v1992
        %1998 = vst.msk [vmem:[%s1937] sm:$0xff] %vm1774, %v1997
        %1999 = vst.msk [vmem:[%s1912] sm:$0xff] %vm1716, %v1917
        %2000 = vrot.lane.b32.xlu0 %v1553, 64
        %v2001 = vpop.permute.xlu0 %2000
        %v2003 = vmul.f32 %v1551, %v2001
        %2004 = vrot.lane.b32.xlu0 %v1554, 80
        %v2005 = vpop.permute.xlu0 %2004
        %v2007 = vmul.f32 %v1551, %v2005
        %2009 = vrot.lane.b32.xlu0 %v2007, 112
        %v2010 = vpop.permute.xlu0 %2009
        %v2012 = vsub.f32 %v2003, %v2010
        %v2013 = vpack.c.bf16 %v2012, %v2012
        %2014 = vrot.lane.b32.xlu0 %v1553, 80
        %v2015 = vpop.permute.xlu0 %2014
        %v2017 = vmul.f32 %v1551, %v2015
        %2018 = vrot.lane.b32.xlu0 %v1554, 64
        %v2019 = vpop.permute.xlu0 %2018
        %v2021 = vmul.f32 %v1551, %v2019
        %2023 = vrot.lane.b32.xlu0 %v2021, 16
        %v2024 = vpop.permute.xlu0 %2023
        %v2026 = vadd.f32 %v2017, %v2024
        %v2027 = vpack.c.bf16 %v2026, %v2026
        %v2028 = vld [vmem:[#allocation2] sm:$0xf]
        %v2030 = vunpack.c.l.b16 %v2028
        %v2031 = vpack.c.b16 %v2030, %v2030
        %2032 = vrot.lane.b32.xlu0 %v2031, 48
        %v2033 = vpop.permute.xlu0 %2032
        %2035 = vrot.lane.b32.xlu0 %v2027, 48
        %v2036 = vpop.permute.xlu0 %2035
        %v2038 = vsel %vm1599, %v2033, 0
        %v2041 = vsel %vm1599, %v2036, 0
        %2043 = vmatprep.subr.bf16.mxu0 0
        %2044 = vmatpush1.bf16.xpose.msra.mxu0 %v2041
        %2045 = vmatprep.subr.bf16.mxu0 0
        %2046 = vmatpush1.bf16.xpose.msra.mxu0 0
        %2047 = vmatprep.subr.bf16.mxu0 0
        %2048 = vmatpush1.bf16.xpose.msra.mxu0 0
        %2049 = vmatprep.subr.bf16.mxu0 0
        %2050 = vmatpush1.bf16.xpose.msra.mxu0 0
        %2051 = vmatprep.subr.bf16.mxu0 0
        %2052 = vmatpush1.bf16.xpose.msra.mxu0 0
        %2053 = vmatprep.subr.bf16.mxu0 0
        %2054 = vmatpush1.bf16.xpose.msra.mxu0 0
        %2055 = vmatprep.subr.bf16.mxu0 0
        %2056 = vmatpush1.bf16.xpose.msra.mxu0 0
        %2057 = vmatprep.subr.bf16.mxu0 0
        %2058 = vmatpush1.bf16.xpose.msra.mxu0 0
        %2059 = vmatprep.subr.bf16.mxu0 0
        %2060 = vmatpush1.bf16.xpose.msra.mxu0 0
        %2061 = vmatprep.subr.bf16.mxu0 0
        %2062 = vmatpush1.bf16.xpose.msra.mxu0 0
        %2063 = vmatprep.subr.bf16.mxu0 0
        %2064 = vmatpush1.bf16.xpose.msra.mxu0 0
        %2065 = vmatprep.subr.bf16.mxu0 0
        %2066 = vmatpush1.bf16.xpose.msra.mxu0 0
        %2067 = vmatprep.subr.bf16.mxu0 0
        %2068 = vmatpush1.bf16.xpose.msra.mxu0 0
        %2069 = vmatprep.subr.bf16.mxu0 0
        %2070 = vmatpush1.bf16.xpose.msra.mxu0 0
        %2071 = vmatprep.subr.bf16.mxu0 0
        %2072 = vmatpush1.bf16.xpose.msra.mxu0 0
        %2073 = vmatprep.subr.bf16.mxu0 0
        %2074 = vmatpush1.bf16.xpose.msra.mxu0 0
        %2075 = vmatprep.mubr.bf16.mxu0 0
        %2076 = vmatmul.mubr.bf16.gmra.mrb[0].mxu0 %v2038
        %v2077 = vpop.f32.mrb[0].mxu0
        %v2078 = vadd.f32 0.0, %v2077
        %v2079 = vpop.f32.mrb[0].mxu0
        %v2080 = vpop.f32.mrb[0].mxu0
        %v2081 = vpop.f32.mrb[0].mxu0
        %2082 = vdwg.mxu0
        %2083 = vrot.lane.b32.xlu0 %v2031, 64
        %v2084 = vpop.permute.xlu0 %2083
        %2086 = vrot.lane.b32.xlu0 %v2013, 64
        %v2087 = vpop.permute.xlu0 %2086
        %v2089 = vsel %vm1599, %v2084, 0
        %v2092 = vsel %vm1599, %v2087, 0
        %2094 = vmatprep.subr.bf16.mxu0 0
        %2095 = vmatpush1.bf16.xpose.msra.mxu0 %v2092
        %2096 = vmatprep.subr.bf16.mxu0 0
        %2097 = vmatpush1.bf16.xpose.msra.mxu0 0
        %2098 = vmatprep.subr.bf16.mxu0 0
        %2099 = vmatpush1.bf16.xpose.msra.mxu0 0
        %2100 = vmatprep.subr.bf16.mxu0 0
        %2101 = vmatpush1.bf16.xpose.msra.mxu0 0
        %2102 = vmatprep.subr.bf16.mxu0 0
        %2103 = vmatpush1.bf16.xpose.msra.mxu0 0
        %2104 = vmatprep.subr.bf16.mxu0 0
        %2105 = vmatpush1.bf16.xpose.msra.mxu0 0
        %2106 = vmatprep.subr.bf16.mxu0 0
        %2107 = vmatpush1.bf16.xpose.msra.mxu0 0
        %2108 = vmatprep.subr.bf16.mxu0 0
        %2109 = vmatpush1.bf16.xpose.msra.mxu0 0
        %2110 = vmatprep.subr.bf16.mxu0 0
        %2111 = vmatpush1.bf16.xpose.msra.mxu0 0
        %2112 = vmatprep.subr.bf16.mxu0 0
        %2113 = vmatpush1.bf16.xpose.msra.mxu0 0
        %2114 = vmatprep.subr.bf16.mxu0 0
        %2115 = vmatpush1.bf16.xpose.msra.mxu0 0
        %2116 = vmatprep.subr.bf16.mxu0 0
        %2117 = vmatpush1.bf16.xpose.msra.mxu0 0
        %2118 = vmatprep.subr.bf16.mxu0 0
        %2119 = vmatpush1.bf16.xpose.msra.mxu0 0
        %2120 = vmatprep.subr.bf16.mxu0 0
        %2121 = vmatpush1.bf16.xpose.msra.mxu0 0
        %2122 = vmatprep.subr.bf16.mxu0 0
        %2123 = vmatpush1.bf16.xpose.msra.mxu0 0
        %2124 = vmatprep.subr.bf16.mxu0 0
        %2125 = vmatpush1.bf16.xpose.msra.mxu0 0
        %2126 = vmatprep.mubr.bf16.mxu0 0
        %2127 = vmatmul.mubr.bf16.gmra.mrb[0].mxu0 %v2089
        %v2128 = vpop.f32.mrb[0].mxu0
        %v2129 = vadd.f32 %v2078, %v2128
        %v2130 = vpop.f32.mrb[0].mxu0
        %v2131 = vpop.f32.mrb[0].mxu0
        %v2132 = vpop.f32.mrb[0].mxu0
        %2133 = vdwg.mxu0
        %v2134 = vsel %vm1565, %v2129, -1e+30
        %s2135 = scalar_lea.vmem [#allocation3], 16
        %v2136 = vld [vmem:[%s2135] sm:$0xff]
        %v2137 = vsel %vm1694, %v2134, -inf
        %2138 = vmax.xlane.f32.xlu0 %v2137
        %v2139 = vpop.xlane.xlu0 %2138
        %v2140 = vmax.f32 %v2136, %v2139
        %v2141 = vsub.f32 %v2136, %v2140
        %v2142 = vmul.f32 %v2141, 1.442695
        %v2143 = vpow.pop %v2142
        %2145 = vset.pattern.permute.xlu0 0
        %2146 = vperm.xlu0 %2145, %v2140
        %v2147 = vpop.permute.xlu0 %2146
        %v2149 = vsub.f32 %v2134, %v2147
        %v2150 = vmul.f32 %v2149, 1.442695
        %v2151 = vpow.pop %v2150
        %s2152 = scalar_lea.vmem [#allocation4], 16
        %v2153 = vld [vmem:[%s2152] sm:$0xff]
        %v2154 = vmul.f32 %v2143, %v2153
        %v2155 = vsel %vm1694, %v2151, 0.0
        %2156 = vadd.xlane.f32.xlu0 %v2155
        %v2157 = vpop.xlane.xlu0 %2156
        %v2158 = vadd.f32 %v2154, %v2157
        %2159 = vst.msk [vmem:[%s2152] sm:$0xff] %vm1716, %v2158
        %s2160 = scalar_lea.vmem [#allocation5], 16
        %v2161 = vld [vmem:[%s2160] sm:$0xff]
        %2163 = vset.pattern.permute.xlu0 0
        %2164 = vperm.xlu0 %2163, %v2143
        %v2165 = vpop.permute.xlu0 %2164
        %v2167 = vmul.f32 %v2165, %v2161
        %v2168 = vpack.c.bf16 %v2151, %v2151
        %2169 = vrot.lane.b32.xlu0 %v1948, 64
        %v2170 = vpop.permute.xlu0 %2169
        %v2172 = vsel %vm1694, %v2168, 0
        %v2175 = vsel %vm1729, %v2170, 0
        %2177 = vmatprep.subr.bf16.mxu0 0
        %2178 = vmatpush1.bf16.msra.mxu0 %v2175
        %2179 = vmatprep.subr.bf16.mxu0 0
        %2180 = vmatpush1.bf16.msra.mxu0 0
        %2181 = vmatprep.subr.bf16.mxu0 0
        %2182 = vmatpush1.bf16.msra.mxu0 0
        %2183 = vmatprep.subr.bf16.mxu0 0
        %2184 = vmatpush1.bf16.msra.mxu0 0
        %2185 = vmatprep.subr.bf16.mxu0 0
        %2186 = vmatpush1.bf16.msra.mxu0 0
        %2187 = vmatprep.subr.bf16.mxu0 0
        %2188 = vmatpush1.bf16.msra.mxu0 0
        %2189 = vmatprep.subr.bf16.mxu0 0
        %2190 = vmatpush1.bf16.msra.mxu0 0
        %2191 = vmatprep.subr.bf16.mxu0 0
        %2192 = vmatpush1.bf16.msra.mxu0 0
        %2193 = vmatprep.subr.bf16.mxu0 0
        %2194 = vmatpush1.bf16.msra.mxu0 0
        %2195 = vmatprep.subr.bf16.mxu0 0
        %2196 = vmatpush1.bf16.msra.mxu0 0
        %2197 = vmatprep.subr.bf16.mxu0 0
        %2198 = vmatpush1.bf16.msra.mxu0 0
        %2199 = vmatprep.subr.bf16.mxu0 0
        %2200 = vmatpush1.bf16.msra.mxu0 0
        %2201 = vmatprep.subr.bf16.mxu0 0
        %2202 = vmatpush1.bf16.msra.mxu0 0
        %2203 = vmatprep.subr.bf16.mxu0 0
        %2204 = vmatpush1.bf16.msra.mxu0 0
        %2205 = vmatprep.subr.bf16.mxu0 0
        %2206 = vmatpush1.bf16.msra.mxu0 0
        %2207 = vmatprep.subr.bf16.mxu0 0
        %2208 = vmatpush1.bf16.msra.mxu0 0
        %2209 = vmatprep.mubr.bf16.mxu0 0
        %2210 = vmatmul.mubr.bf16.gmra.mrb[0].mxu0 %v2172
        %v2211 = vpop.f32.mrb[0].mxu0
        %v2212 = vadd.f32 0.0, %v2211
        %v2213 = vpop.f32.mrb[0].mxu0
        %v2214 = vpop.f32.mrb[0].mxu0
        %v2215 = vpop.f32.mrb[0].mxu0
        %2216 = vdwg.mxu0
        %v2217 = vadd.f32 %v2167, %v2212
        %2218 = vst.msk [vmem:[%s2160] sm:$0xff] %vm1774, %v2217
        %2219 = vst.msk [vmem:[%s2135] sm:$0xff] %vm1716, %v2140
        %2220 = vrot.lane.b32.xlu0 %v1553, 96
        %v2221 = vpop.permute.xlu0 %2220
        %v2223 = vmul.f32 %v1551, %v2221
        %2224 = vrot.lane.b32.xlu0 %v1554, 112
        %v2225 = vpop.permute.xlu0 %2224
        %v2227 = vmul.f32 %v1551, %v2225
        %2229 = vrot.lane.b32.xlu0 %v2227, 112
        %v2230 = vpop.permute.xlu0 %2229
        %v2232 = vsub.f32 %v2223, %v2230
        %v2233 = vpack.c.bf16 %v2232, %v2232
        %2234 = vrot.lane.b32.xlu0 %v1553, 112
        %v2235 = vpop.permute.xlu0 %2234
        %v2237 = vmul.f32 %v1551, %v2235
        %2238 = vrot.lane.b32.xlu0 %v1554, 96
        %v2239 = vpop.permute.xlu0 %2238
        %v2241 = vmul.f32 %v1551, %v2239
        %2243 = vrot.lane.b32.xlu0 %v2241, 16
        %v2244 = vpop.permute.xlu0 %2243
        %v2246 = vadd.f32 %v2237, %v2244
        %v2247 = vpack.c.bf16 %v2246, %v2246
        %v2248 = vld [vmem:[#allocation2] sm:$0xf]
        %v2250 = vunpack.c.l.b16 %v2248
        %v2251 = vpack.c.b16 %v2250, %v2250
        %2252 = vrot.lane.b32.xlu0 %v2251, 16
        %v2253 = vpop.permute.xlu0 %2252
        %2255 = vrot.lane.b32.xlu0 %v2247, 16
        %v2256 = vpop.permute.xlu0 %2255
        %v2258 = vsel %vm1599, %v2253, 0
        %v2261 = vsel %vm1599, %v2256, 0
        %2263 = vmatprep.subr.bf16.mxu0 0
        %2264 = vmatpush1.bf16.xpose.msra.mxu0 %v2261
        %2265 = vmatprep.subr.bf16.mxu0 0
        %2266 = vmatpush1.bf16.xpose.msra.mxu0 0
        %2267 = vmatprep.subr.bf16.mxu0 0
        %2268 = vmatpush1.bf16.xpose.msra.mxu0 0
        %2269 = vmatprep.subr.bf16.mxu0 0
        %2270 = vmatpush1.bf16.xpose.msra.mxu0 0
        %2271 = vmatprep.subr.bf16.mxu0 0
        %2272 = vmatpush1.bf16.xpose.msra.mxu0 0
        %2273 = vmatprep.subr.bf16.mxu0 0
        %2274 = vmatpush1.bf16.xpose.msra.mxu0 0
        %2275 = vmatprep.subr.bf16.mxu0 0
        %2276 = vmatpush1.bf16.xpose.msra.mxu0 0
        %2277 = vmatprep.subr.bf16.mxu0 0
        %2278 = vmatpush1.bf16.xpose.msra.mxu0 0
        %2279 = vmatprep.subr.bf16.mxu0 0
        %2280 = vmatpush1.bf16.xpose.msra.mxu0 0
        %2281 = vmatprep.subr.bf16.mxu0 0
        %2282 = vmatpush1.bf16.xpose.msra.mxu0 0
        %2283 = vmatprep.subr.bf16.mxu0 0
        %2284 = vmatpush1.bf16.xpose.msra.mxu0 0
        %2285 = vmatprep.subr.bf16.mxu0 0
        %2286 = vmatpush1.bf16.xpose.msra.mxu0 0
        %2287 = vmatprep.subr.bf16.mxu0 0
        %2288 = vmatpush1.bf16.xpose.msra.mxu0 0
        %2289 = vmatprep.subr.bf16.mxu0 0
        %2290 = vmatpush1.bf16.xpose.msra.mxu0 0
        %2291 = vmatprep.subr.bf16.mxu0 0
        %2292 = vmatpush1.bf16.xpose.msra.mxu0 0
        %2293 = vmatprep.subr.bf16.mxu0 0
        %2294 = vmatpush1.bf16.xpose.msra.mxu0 0
        %2295 = vmatprep.mubr.bf16.mxu0 0
        %2296 = vmatmul.mubr.bf16.gmra.mrb[0].mxu0 %v2258
        %v2297 = vpop.f32.mrb[0].mxu0
        %v2298 = vadd.f32 0.0, %v2297
        %v2299 = vpop.f32.mrb[0].mxu0
        %v2300 = vpop.f32.mrb[0].mxu0
        %v2301 = vpop.f32.mrb[0].mxu0
        %2302 = vdwg.mxu0
        %2303 = vrot.lane.b32.xlu0 %v2251, 32
        %v2304 = vpop.permute.xlu0 %2303
        %2306 = vrot.lane.b32.xlu0 %v2233, 32
        %v2307 = vpop.permute.xlu0 %2306
        %v2309 = vsel %vm1599, %v2304, 0
        %v2312 = vsel %vm1599, %v2307, 0
        %2314 = vmatprep.subr.bf16.mxu0 0
        %2315 = vmatpush1.bf16.xpose.msra.mxu0 %v2312
        %2316 = vmatprep.subr.bf16.mxu0 0
        %2317 = vmatpush1.bf16.xpose.msra.mxu0 0
        %2318 = vmatprep.subr.bf16.mxu0 0
        %2319 = vmatpush1.bf16.xpose.msra.mxu0 0
        %2320 = vmatprep.subr.bf16.mxu0 0
        %2321 = vmatpush1.bf16.xpose.msra.mxu0 0
        %2322 = vmatprep.subr.bf16.mxu0 0
        %2323 = vmatpush1.bf16.xpose.msra.mxu0 0
        %2324 = vmatprep.subr.bf16.mxu0 0
        %2325 = vmatpush1.bf16.xpose.msra.mxu0 0
        %2326 = vmatprep.subr.bf16.mxu0 0
        %2327 = vmatpush1.bf16.xpose.msra.mxu0 0
        %2328 = vmatprep.subr.bf16.mxu0 0
        %2329 = vmatpush1.bf16.xpose.msra.mxu0 0
        %2330 = vmatprep.subr.bf16.mxu0 0
        %2331 = vmatpush1.bf16.xpose.msra.mxu0 0
        %2332 = vmatprep.subr.bf16.mxu0 0
        %2333 = vmatpush1.bf16.xpose.msra.mxu0 0
        %2334 = vmatprep.subr.bf16.mxu0 0
        %2335 = vmatpush1.bf16.xpose.msra.mxu0 0
        %2336 = vmatprep.subr.bf16.mxu0 0
        %2337 = vmatpush1.bf16.xpose.msra.mxu0 0
        %2338 = vmatprep.subr.bf16.mxu0 0
        %2339 = vmatpush1.bf16.xpose.msra.mxu0 0
        %2340 = vmatprep.subr.bf16.mxu0 0
        %2341 = vmatpush1.bf16.xpose.msra.mxu0 0
        %2342 = vmatprep.subr.bf16.mxu0 0
        %2343 = vmatpush1.bf16.xpose.msra.mxu0 0
        %2344 = vmatprep.subr.bf16.mxu0 0
        %2345 = vmatpush1.bf16.xpose.msra.mxu0 0
        %2346 = vmatprep.mubr.bf16.mxu0 0
        %2347 = vmatmul.mubr.bf16.gmra.mrb[0].mxu0 %v2309
        %v2348 = vpop.f32.mrb[0].mxu0
        %v2349 = vadd.f32 %v2298, %v2348
        %v2350 = vpop.f32.mrb[0].mxu0
        %v2351 = vpop.f32.mrb[0].mxu0
        %v2352 = vpop.f32.mrb[0].mxu0
        %2353 = vdwg.mxu0
        %v2354 = vsel %vm1565, %v2349, -1e+30
        %s2355 = scalar_lea.vmem [#allocation3], 24
        %v2356 = vld [vmem:[%s2355] sm:$0xff]
        %v2357 = vsel %vm1694, %v2354, -inf
        %2358 = vmax.xlane.f32.xlu0 %v2357
        %v2359 = vpop.xlane.xlu0 %2358
        %v2360 = vmax.f32 %v2356, %v2359
        %v2361 = vsub.f32 %v2356, %v2360
        %v2362 = vmul.f32 %v2361, 1.442695
        %v2363 = vpow.pop %v2362
        %2365 = vset.pattern.permute.xlu0 0
        %2366 = vperm.xlu0 %2365, %v2360
        %v2367 = vpop.permute.xlu0 %2366
        %v2369 = vsub.f32 %v2354, %v2367
        %v2370 = vmul.f32 %v2369, 1.442695
        %v2371 = vpow.pop %v2370
        %s2372 = scalar_lea.vmem [#allocation4], 24
        %v2373 = vld [vmem:[%s2372] sm:$0xff]
        %v2374 = vmul.f32 %v2363, %v2373
        %v2375 = vsel %vm1694, %v2371, 0.0
        %2376 = vadd.xlane.f32.xlu0 %v2375
        %v2377 = vpop.xlane.xlu0 %2376
        %v2378 = vadd.f32 %v2374, %v2377
        %2379 = vst.msk [vmem:[%s2372] sm:$0xff] %vm1716, %v2378
        %s2380 = scalar_lea.vmem [#allocation5], 24
        %v2381 = vld [vmem:[%s2380] sm:$0xff]
        %2383 = vset.pattern.permute.xlu0 0
        %2384 = vperm.xlu0 %2383, %v2363
        %v2385 = vpop.permute.xlu0 %2384
        %v2387 = vmul.f32 %v2385, %v2381
        %v2388 = vpack.c.bf16 %v2371, %v2371
        %2389 = vrot.lane.b32.xlu0 %v1948, 32
        %v2390 = vpop.permute.xlu0 %2389
        %v2392 = vsel %vm1694, %v2388, 0
        %v2395 = vsel %vm1729, %v2390, 0
        %2397 = vmatprep.subr.bf16.mxu0 0
        %2398 = vmatpush1.bf16.msra.mxu0 %v2395
        %2399 = vmatprep.subr.bf16.mxu0 0
        %2400 = vmatpush1.bf16.msra.mxu0 0
        %2401 = vmatprep.subr.bf16.mxu0 0
        %2402 = vmatpush1.bf16.msra.mxu0 0
        %2403 = vmatprep.subr.bf16.mxu0 0
        %2404 = vmatpush1.bf16.msra.mxu0 0
        %2405 = vmatprep.subr.bf16.mxu0 0
        %2406 = vmatpush1.bf16.msra.mxu0 0
        %2407 = vmatprep.subr.bf16.mxu0 0
        %2408 = vmatpush1.bf16.msra.mxu0 0
        %2409 = vmatprep.subr.bf16.mxu0 0
        %2410 = vmatpush1.bf16.msra.mxu0 0
        %2411 = vmatprep.subr.bf16.mxu0 0
        %2412 = vmatpush1.bf16.msra.mxu0 0
        %2413 = vmatprep.subr.bf16.mxu0 0
        %2414 = vmatpush1.bf16.msra.mxu0 0
        %2415 = vmatprep.subr.bf16.mxu0 0
        %2416 = vmatpush1.bf16.msra.mxu0 0
        %2417 = vmatprep.subr.bf16.mxu0 0
        %2418 = vmatpush1.bf16.msra.mxu0 0
        %2419 = vmatprep.subr.bf16.mxu0 0
        %2420 = vmatpush1.bf16.msra.mxu0 0
        %2421 = vmatprep.subr.bf16.mxu0 0
        %2422 = vmatpush1.bf16.msra.mxu0 0
        %2423 = vmatprep.subr.bf16.mxu0 0
        %2424 = vmatpush1.bf16.msra.mxu0 0
        %2425 = vmatprep.subr.bf16.mxu0 0
        %2426 = vmatpush1.bf16.msra.mxu0 0
        %2427 = vmatprep.subr.bf16.mxu0 0
        %2428 = vmatpush1.bf16.msra.mxu0 0
        %2429 = vmatprep.mubr.bf16.mxu0 0
        %2430 = vmatmul.mubr.bf16.gmra.mrb[0].mxu0 %v2392
        %v2431 = vpop.f32.mrb[0].mxu0
        %v2432 = vadd.f32 0.0, %v2431
        %v2433 = vpop.f32.mrb[0].mxu0
        %v2434 = vpop.f32.mrb[0].mxu0
        %v2435 = vpop.f32.mrb[0].mxu0
        %2436 = vdwg.mxu0
        %v2437 = vadd.f32 %v2387, %v2432
        %2438 = vst.msk [vmem:[%s2380] sm:$0xff] %vm1774, %v2437
        %2439 = vst.msk [vmem:[%s2355] sm:$0xff] %vm1716, %v2360
        %v2440 = vld [vmem:[#allocation4] sm:$0xff]
        %v2441 = vld [vmem:[#allocation4 + $0x8] sm:$0xff]
        %v2442 = vld [vmem:[#allocation4 + $0x10] sm:$0xff]
        %v2443 = vld [vmem:[#allocation4 + $0x18] sm:$0xff]
        %v2444 = vrcp.pop %v2440
        %v2445 = vrcp.pop %v2441
        %v2446 = vrcp.pop %v2442
        %v2447 = vrcp.pop %v2443
        %v2448 = vld [vmem:[#allocation5] sm:$0xff]
        %2450 = vset.pattern.permute.xlu0 0
        %2451 = vperm.xlu0 %2450, %v2444
        %v2452 = vpop.permute.xlu0 %2451
        %v2454 = vmul.f32 %v2448, %v2452
        %v2455 = vld [vmem:[%s1937] sm:$0xff]
        %2457 = vset.pattern.permute.xlu0 0
        %2458 = vperm.xlu0 %2457, %v2445
        %v2459 = vpop.permute.xlu0 %2458
        %v2461 = vmul.f32 %v2455, %v2459
        %v2462 = vld [vmem:[%s2160] sm:$0xff]
        %2464 = vset.pattern.permute.xlu0 0
        %2465 = vperm.xlu0 %2464, %v2446
        %v2466 = vpop.permute.xlu0 %2465
        %v2468 = vmul.f32 %v2462, %v2466
        %v2469 = vld [vmem:[%s2380] sm:$0xff]
        %2471 = vset.pattern.permute.xlu0 0
        %2472 = vperm.xlu0 %2471, %v2447
        %v2473 = vpop.permute.xlu0 %2472
        %v2475 = vmul.f32 %v2469, %v2473
        %2477 = vrot.lane.b32.xlu0 %v2461, 32
        %v2478 = vpop.permute.xlu0 %2477
        %2481 = vrot.lane.b32.xlu0 %v2468, 64
        %v2482 = vpop.permute.xlu0 %2481
        %2485 = vrot.lane.b32.xlu0 %v2475, 96
        %v2486 = vpop.permute.xlu0 %2485
        %v2488 = vsel %vm1774, %v2454, %v2478
        %vm2489 = vcmask 523264
        %v2490 = vsel %vm2489, %v2488, %v2482
        %vm2491 = vcmask 785408
        %v2492 = vsel %vm2491, %v2490, %v2486
        %v2493 = vpack.c.bf16 %v2492, %v2492
        %2494 = vst [vmem:[%s517] sm:$0xf] %v2493
      $region60: #{_lambda_.18} parent=47 // pred_fallthru
        _
      %p2495 = scmp.lt.s32.totalorder %s23, 1
      %s2496 = scalar_select %p2495, %s23, 1
      %p2497 = scmp.lt.s32.totalorder %s24, 1
      %s2498 = scalar_select %p2497, %s24, 1
      %s2499 = smul.addr %s2496, 2
      %s2500 = sadd.s32 %s2498, %s2499
      %s2501 = smul.addr %s2500, 4
      %s2502 = scalar_lea.vmem %s7, %s2501
      // Predicated region
      $region61: #{_lambda_.18} parent=47 // pred_check
        %p2503 = pneg %p261
      $region62: #{_lambda_.18} parent=47 // pred_check_branch
        %2505 = sbr.rel (%p2503) target = $region64
      $region63: #{_lambda_.18} parent=47 // pred_region
        _
      $region64: #{_lambda_.18} parent=47 // pred_fallthru
        _
    $region48: #{_lambda_.18} parent=5 // pred_fallthru
      _
    %p2506 = scmp.le.s32.totalorder 2, %s13
    // Predicated region
    $region65: #{_lambda_.18} parent=5 // pred_check
      %p2507 = pneg %p2506
    $region66: #{_lambda_.18} parent=5 // pred_check_branch
      %2509 = sbr.rel (%p2507) target = $region68
    $region67: #{_lambda_.18} parent=5 // pred_region
      %s2510 = ssub.s32 %s13, 2
      // Predicated region
      $region69: #{_lambda_.18} parent=67 // pred_check
        %p2511 = pneg %p267
      $region70: #{_lambda_.18} parent=67 // pred_check_branch
        %2513 = sbr.rel (%p2511) target = $region72
      $region71: #{_lambda_.18} parent=67 // pred_region
        %p2514 = scmp.lt.s32.totalorder %s26, 1
        %s2515 = scalar_select %p2514, %s26, 1
        %p2516 = scmp.lt.s32.totalorder %s27, 1
        %s2517 = scalar_select %p2516, %s27, 1
        %s2518 = smul.addr %s2515, 2
        %s2519 = sadd.s32 %s2517, %s2518
        %s2520 = smul.addr %s2519, 4
        %s2521 = scalar_lea.vmem %s7, %s2520
      $region72: #{_lambda_.18} parent=67 // pred_fallthru
        _
    $region68: #{_lambda_.18} parent=5 // pred_fallthru
      _
  $region6: #{_lambda_.18} parent=0 // loop_footer
    %s17 = sadd.s32 1, %s13
  $region7: #{_lambda_.18} parent=0 // loop_footer_branch
    %12 = sbr.rel target = $region3
  $region8: #{_lambda_.18} parent=0 // loop_exit
    _

</llo_original>
